<compile_context>
chip_gen: v7x
topology: tpu7x:2x2x1
jax: 0.10.0
libtpu: 0.0.40
codegen_flags: <defaults>
</compile_context>

<pallas_src>
import math

import jax
import jax.numpy as jnp
from jax import lax
from jax.experimental import pallas as pl
from jax.experimental.pallas import tpu as pltpu


# ---------------------------------------------------------------------------
# Fused ResnetBlock kernel (bt batch elements per grid step)
# ---------------------------------------------------------------------------
def _resnet_block_kernel(x_ref, w1_ref, b1_ref, w2_ref, b2_ref, o_ref,
                         xpk_ref, mpk_ref, acc_ref):
    # x_ref  : (bt, H, W, C)        unpadded input (also the residual), f32
    # w1_ref : (3, 3*C, C)          conv1 weights, (kh, kw*Cin+cin, cout), bf16
    # b1_ref : (1, C)               conv1 bias, f32
    # w2_ref : (3, 3*C, C)          conv2 weights, bf16
    # b2_ref : (1, C)               conv2 bias, f32
    # o_ref  : (bt, H, W, C)        output
    # xpk_ref: (bt, H+2, W, 3*C)    VMEM: kw-packed zero-haloed input, bf16
    # mpk_ref: (bt, H+2, W, 3*C)    VMEM: kw-packed zero-haloed conv1 act, bf16
    # acc_ref: (bt*H*W, C)          VMEM: f32 accumulator (shared by both convs)
    Bt, H, W, C = x_ref.shape
    K = 3 * C
    M = Bt * H * W

    def pack(dst_ref, src):
        """Write a kw-packed, zero-haloed bf16 copy of src (Bt,H,W,C).

        dst[b, hp, w, kw*C + c] = src[b, hp-1, w+kw-1, c], zero out of range.
        All ref stores are lane/sublane tile-aligned (the W-shift happens in
        the value-level concatenate, which goes to the XLU, not vst).
        """
        zrow = jnp.zeros((Bt, 1, W, K), dst_ref.dtype)
        zcol = jnp.zeros((Bt, H, 1, C), dst_ref.dtype)
        # Halo rows only (interior is fully overwritten below).  Re-zeroed
        # every step so it stays correct per TensorCore (scratch is per-core
        # and uninitialized) — do NOT guard this with program_id == 0.
        dst_ref[:, 0:1, :, :] = zrow
        dst_ref[:, H + 1:H + 2, :, :] = zrow
        # kw = 0 / 1 / 2 slabs.
        dst_ref[:, 1:H + 1, :, 0:C] = jnp.concatenate(
            [zcol, src[:, :, :W - 1, :]], axis=2)
        dst_ref[:, 1:H + 1, :, C:2 * C] = src
        dst_ref[:, 1:H + 1, :, 2 * C:3 * C] = jnp.concatenate(
            [src[:, :, 1:, :], zcol], axis=2)

    def conv(pk_ref, w_ref):
        # 3 matmuls with K = 3*C; the kh slice is on a leading dim (free).
        for kh in range(3):
            lhs = pk_ref[:, kh:kh + H, :, :].reshape(M, K)
            p = jnp.dot(lhs, w_ref[kh], preferred_element_type=jnp.float32)
            if kh == 0:
                acc_ref[...] = p
            else:
                acc_ref[...] += p

    # ---- conv1 (3x3, SAME) + bias + ReLU; activation never leaves VMEM ----
    pack(xpk_ref, x_ref[...].astype(jnp.bfloat16))
    conv(xpk_ref, w1_ref)
    act = jnp.maximum(acc_ref[...] + b1_ref[...], 0.0)
    pack(mpk_ref, act.astype(jnp.bfloat16).reshape(Bt, H, W, C))

    # ---- conv2 (3x3, SAME) + bias + residual -------------------------------
    conv(mpk_ref, w2_ref)
    out = (acc_ref[...] + b2_ref[...]
           + x_ref[...].reshape(M, C).astype(jnp.float32))
    o_ref[...] = out.reshape(Bt, H, W, C).astype(o_ref.dtype)


# ---------------------------------------------------------------------------
# Wrappers
# ---------------------------------------------------------------------------
def resnet_block_forward_nhwc(x_nhwc, params, *, bt=None):
    """ResnetBlock forward on an NHWC activation (channel on the lane axis)."""
    B, H, W, C = x_nhwc.shape
    Cout = params["w1"].shape[-1]
    assert C == Cout, "residual add requires in_channels == out_channels"
    assert params["w1"].shape == (3, 3, C, Cout)

    # Batch tile: fold several images into the matmul M, but keep >=2 grid
    # steps when possible (pipeline depth / one step per TensorCore).
    if bt is None:
        bt = 1
        for cand in (8, 4, 2):
            if B % cand == 0 and B // cand >= 2:
                bt = cand
                break

    K = 3 * C
    # bf16 weights with kw folded into the contraction dim: (kh, kw*Cin+cin, cout).
    w1 = params["w1"].reshape(3, K, Cout).astype(jnp.bfloat16)
    w2 = params["w2"].reshape(3, 3 * Cout, Cout).astype(jnp.bfloat16)
    b1 = params["b1"].reshape(1, Cout).astype(jnp.float32)
    b2 = params["b2"].reshape(1, Cout).astype(jnp.float32)

    # Constant index_map -> a single buffer is enough (saves VMEM headroom).
    const = dict(pipeline_mode=pl.Buffered(1))

    # TODO(synk): for large H, W tile H with a 1-row halo (keep W and C full so
    # the output stays lane-dense) and raise vmem_limit_bytes — full-image
    # blocks are the first thing to overflow v7x's 64 MiB VMEM.
    out_nhwc = pl.pallas_call(
        _resnet_block_kernel,
        grid=(B // bt,),
        in_specs=[
            pl.BlockSpec((bt, H, W, C), lambda i: (i, 0, 0, 0)),
            pl.BlockSpec((3, K, Cout), lambda i: (0, 0, 0), **const),
            pl.BlockSpec((1, Cout), lambda i: (0, 0), **const),
            pl.BlockSpec((3, 3 * Cout, Cout), lambda i: (0, 0, 0), **const),
            pl.BlockSpec((1, Cout), lambda i: (0, 0), **const),
        ],
        out_specs=pl.BlockSpec((bt, H, W, Cout), lambda i: (i, 0, 0, 0)),
        out_shape=jax.ShapeDtypeStruct((B, H, W, Cout), x_nhwc.dtype),
        scratch_shapes=[
            pltpu.VMEM((bt, H + 2, W, K), jnp.bfloat16),        # packed input
            pltpu.VMEM((bt, H + 2, W, 3 * Cout), jnp.bfloat16),  # packed act
            pltpu.VMEM((bt * H * W, Cout), jnp.float32),         # accumulator
        ],
        compiler_params=pltpu.CompilerParams(
            dimension_semantics=("parallel",)),
    )(x_nhwc, w1, b1, w2, b2)
    return out_nhwc


def resnet_block_forward(x_nchw, params, *, bt=None):
    """PyTorch-compatible NCHW in / NCHW out."""
    # TODO(synk): if the surrounding model runs NHWC, call
    # resnet_block_forward_nhwc directly and drop these two transposes (each
    # is a full HBM read+write of the activation outside the kernel).
    x_nhwc = jnp.transpose(x_nchw, (0, 2, 3, 1))
    out_nhwc = resnet_block_forward_nhwc(x_nhwc, params, bt=bt)
    return jnp.transpose(out_nhwc, (0, 3, 1, 2))


# ---------------------------------------------------------------------------
# Parameter init (mirrors nn.Conv2d defaults: U(-1/sqrt(fan_in), 1/sqrt(fan_in)))
# ---------------------------------------------------------------------------
def init_params(key, in_channels, out_channels, ksize=3):
    k1, k2, k3, k4 = jax.random.split(key, 4)
    bound1 = 1.0 / math.sqrt(in_channels * ksize * ksize)
    w1 = jax.random.uniform(k1, (ksize, ksize, in_channels, out_channels),
                            jnp.float32, -bound1, bound1)
    b1 = jax.random.uniform(k2, (out_channels,), jnp.float32, -bound1, bound1)
    bound2 = 1.0 / math.sqrt(out_channels * ksize * ksize)
    w2 = jax.random.uniform(k3, (ksize, ksize, out_channels, out_channels),
                            jnp.float32, -bound2, bound2)
    b2 = jax.random.uniform(k4, (out_channels,), jnp.float32, -bound2, bound2)
    return dict(w1=w1, b1=b1, w2=w2, b2=b2)


# ---------------------------------------------------------------------------
# Pure-JAX reference (semantics of the PyTorch module) for a correctness check
# ---------------------------------------------------------------------------
def ref_forward(x_nchw, params):
    dn = ("NCHW", "HWIO", "NCHW")
    out = lax.conv_general_dilated(x_nchw, params["w1"], (1, 1), "SAME",
                                   dimension_numbers=dn)
    out = jnp.maximum(out + params["b1"][None, :, None, None], 0.0)
    out = lax.conv_general_dilated(out, params["w2"], (1, 1), "SAME",
                                   dimension_numbers=dn)
    out = out + params["b2"][None, :, None, None]
    return out + x_nchw


# ---------------------------------------------------------------------------
if __name__ == "__main__":
    B, C, H, W = 4, 128, 16, 16          # C=128 -> lane-dense channel axis
    key = jax.random.PRNGKey(0)
    kx, kp = jax.random.split(key)
    x = jax.random.normal(kx, (B, C, H, W), jnp.float32)
    params = init_params(kp, C, C)

    fwd = jax.jit(resnet_block_forward)
    out = jax.block_until_ready(fwd(x, params))

    assert out.shape == (B, C, H, W), out.shape
    assert bool(jnp.all(jnp.isfinite(out)))

    # Loose tolerance: kernel uses bf16 MXU inputs / bf16 mid activation
    # (f32 accumulation) — deliberate precision trade-off.
    ref = ref_forward(x, params)
    max_err = float(jnp.max(jnp.abs(out - ref)))
    assert max_err < 5e-2, f"max abs error vs reference = {max_err}"

    print("KERNEL_OK")
</pallas_src>

<mosaic_0001>
module attributes {stable_mosaic.version = 11 : i64} {
  func.func @_resnet_block_kernel(%arg0: i32, %arg1: memref<2x16x16x128xf32, #tpu.memory_space<vmem>>, %arg2: memref<3x384x128xbf16, #tpu.memory_space<vmem>>, %arg3: memref<1x128xf32, #tpu.memory_space<vmem>>, %arg4: memref<3x384x128xbf16, #tpu.memory_space<vmem>>, %arg5: memref<1x128xf32, #tpu.memory_space<vmem>>, %arg6: memref<2x16x16x128xf32, #tpu.memory_space<vmem>>, %arg7: memref<2x18x16x384xbf16, #tpu.memory_space<vmem>>, %arg8: memref<2x18x16x384xbf16, #tpu.memory_space<vmem>>, %arg9: memref<512x128xf32, #tpu.memory_space<vmem>>) attributes {dimension_semantics = [#tpu.dimension_semantics<parallel>], iteration_bounds = array<i64: 2>, scalar_prefetch = 0 : i64, scratch_operands = 3 : i64, tpu.core_type = #tpu.core_type<tc>, window_params = [{transform_indices = @transform_0, window_bounds = array<i64: 2, 16, 16, 128>}, {pipeline_mode = #tpu.pipeline_mode<synchronous>, transform_indices = @transform_1, window_bounds = array<i64: 3, 384, 128>}, {pipeline_mode = #tpu.pipeline_mode<synchronous>, transform_indices = @transform_2, window_bounds = array<i64: 1, 128>}, {pipeline_mode = #tpu.pipeline_mode<synchronous>, transform_indices = @transform_3, window_bounds = array<i64: 3, 384, 128>}, {pipeline_mode = #tpu.pipeline_mode<synchronous>, transform_indices = @transform_4, window_bounds = array<i64: 1, 128>}, {transform_indices = @transform_5, window_bounds = array<i64: 2, 16, 16, 128>}]} {
    %c0 = arith.constant 0 : index
    %c0_0 = arith.constant 0 : index
    %c0_1 = arith.constant 0 : index
    %c0_2 = arith.constant 0 : index
    %0 = vector.load %arg1[%c0, %c0_0, %c0_1, %c0_2] : memref<2x16x16x128xf32, #tpu.memory_space<vmem>>, vector<2x16x16x128xf32>
    %1 = arith.truncf %0 : vector<2x16x16x128xf32> to vector<2x16x16x128xbf16>
    %cst = arith.constant 0.000000e+00 : bf16
    %2 = vector.broadcast %cst : bf16 to vector<2x1x16x384xbf16>
    %cst_3 = arith.constant 0.000000e+00 : bf16
    %3 = vector.broadcast %cst_3 : bf16 to vector<2x16x1x128xbf16>
    %c0_4 = arith.constant 0 : index
    %c0_5 = arith.constant 0 : index
    %c0_6 = arith.constant 0 : index
    %c0_7 = arith.constant 0 : index
    %4 = vector.load %arg7[%c0_4, %c0_5, %c0_6, %c0_7] : memref<2x18x16x384xbf16, #tpu.memory_space<vmem>>, vector<2x1x16x384xbf16>
    tpu.vector_store %arg7[%c0_4, %c0_5, %c0_6, %c0_7], %2 {strides = array<i32>} : memref<2x18x16x384xbf16, #tpu.memory_space<vmem>>, vector<2x1x16x384xbf16>,
    %c0_8 = arith.constant 0 : index
    %c17 = arith.constant 17 : index
    %c0_9 = arith.constant 0 : index
    %c0_10 = arith.constant 0 : index
    %5 = vector.load %arg7[%c0_8, %c17, %c0_9, %c0_10] : memref<2x18x16x384xbf16, #tpu.memory_space<vmem>>, vector<2x1x16x384xbf16>
    tpu.vector_store %arg7[%c0_8, %c17, %c0_9, %c0_10], %2 {strides = array<i32>} : memref<2x18x16x384xbf16, #tpu.memory_space<vmem>>, vector<2x1x16x384xbf16>,
    %6 = vector.extract_strided_slice %1 {offsets = [0, 0, 0, 0], sizes = [2, 16, 15, 128], strides = [1, 1, 1, 1]} : vector<2x16x16x128xbf16> to vector<2x16x15x128xbf16>
    %7 = tpu.concatenate %3, %6 in 2 : vector<2x16x1x128xbf16>, vector<2x16x15x128xbf16> -> vector<2x16x16x128xbf16>
    %c0_11 = arith.constant 0 : index
    %c1 = arith.constant 1 : index
    %c0_12 = arith.constant 0 : index
    %c0_13 = arith.constant 0 : index
    %8 = vector.load %arg7[%c0_11, %c1, %c0_12, %c0_13] : memref<2x18x16x384xbf16, #tpu.memory_space<vmem>>, vector<2x16x16x128xbf16>
    tpu.vector_store %arg7[%c0_11, %c1, %c0_12, %c0_13], %7 {strides = array<i32>} : memref<2x18x16x384xbf16, #tpu.memory_space<vmem>>, vector<2x16x16x128xbf16>,
    %c0_14 = arith.constant 0 : index
    %c1_15 = arith.constant 1 : index
    %c0_16 = arith.constant 0 : index
    %c128 = arith.constant 128 : index
    %9 = vector.load %arg7[%c0_14, %c1_15, %c0_16, %c128] : memref<2x18x16x384xbf16, #tpu.memory_space<vmem>>, vector<2x16x16x128xbf16>
    tpu.vector_store %arg7[%c0_14, %c1_15, %c0_16, %c128], %1 {strides = array<i32>} : memref<2x18x16x384xbf16, #tpu.memory_space<vmem>>, vector<2x16x16x128xbf16>,
    %10 = vector.extract_strided_slice %1 {offsets = [0, 0, 1, 0], sizes = [2, 16, 15, 128], strides = [1, 1, 1, 1]} : vector<2x16x16x128xbf16> to vector<2x16x15x128xbf16>
    %11 = tpu.concatenate %10, %3 in 2 : vector<2x16x15x128xbf16>, vector<2x16x1x128xbf16> -> vector<2x16x16x128xbf16>
    %c0_17 = arith.constant 0 : index
    %c1_18 = arith.constant 1 : index
    %c0_19 = arith.constant 0 : index
    %c256 = arith.constant 256 : index
    %12 = vector.load %arg7[%c0_17, %c1_18, %c0_19, %c256] : memref<2x18x16x384xbf16, #tpu.memory_space<vmem>>, vector<2x16x16x128xbf16>
    tpu.vector_store %arg7[%c0_17, %c1_18, %c0_19, %c256], %11 {strides = array<i32>} : memref<2x18x16x384xbf16, #tpu.memory_space<vmem>>, vector<2x16x16x128xbf16>,
    %c0_20 = arith.constant 0 : index
    %c0_21 = arith.constant 0 : index
    %c0_22 = arith.constant 0 : index
    %c0_23 = arith.constant 0 : index
    %13 = vector.load %arg7[%c0_20, %c0_21, %c0_22, %c0_23] : memref<2x18x16x384xbf16, #tpu.memory_space<vmem>>, vector<2x16x16x384xbf16>
    %14 = vector.shape_cast %13 : vector<2x16x16x384xbf16> to vector<512x384xbf16>
    %c0_24 = arith.constant 0 : index
    %c0_25 = arith.constant 0 : index
    %c0_26 = arith.constant 0 : index
    %15 = vector.load %arg2[%c0_24, %c0_25, %c0_26] : memref<3x384x128xbf16, #tpu.memory_space<vmem>>, vector<1x384x128xbf16>
    %16 = vector.shape_cast %15 : vector<1x384x128xbf16> to vector<384x128xbf16>
    %cst_27 = arith.constant dense<0.000000e+00> : vector<512x128xf32>
    %17 = tpu.matmul %14, %16, %cst_27 {dimension_numbers = #tpu.dot_dimension_numbers<[1], [0], [0], [1], [0, 0, 1, 1], [], []>} : vector<512x384xbf16>, vector<384x128xbf16>, vector<512x128xf32> -> vector<512x128xf32>
    %c0_28 = arith.constant 0 : index
    %c0_29 = arith.constant 0 : index
    %18 = vector.load %arg9[%c0_28, %c0_29] : memref<512x128xf32, #tpu.memory_space<vmem>>, vector<512x128xf32>
    tpu.vector_store %arg9[%c0_28, %c0_29], %17 {strides = array<i32>} : memref<512x128xf32, #tpu.memory_space<vmem>>, vector<512x128xf32>,
    %c0_30 = arith.constant 0 : index
    %c1_31 = arith.constant 1 : index
    %c0_32 = arith.constant 0 : index
    %c0_33 = arith.constant 0 : index
    %19 = vector.load %arg7[%c0_30, %c1_31, %c0_32, %c0_33] : memref<2x18x16x384xbf16, #tpu.memory_space<vmem>>, vector<2x16x16x384xbf16>
    %20 = vector.shape_cast %19 : vector<2x16x16x384xbf16> to vector<512x384xbf16>
    %c1_34 = arith.constant 1 : index
    %c0_35 = arith.constant 0 : index
    %c0_36 = arith.constant 0 : index
    %21 = vector.load %arg2[%c1_34, %c0_35, %c0_36] : memref<3x384x128xbf16, #tpu.memory_space<vmem>>, vector<1x384x128xbf16>
    %22 = vector.shape_cast %21 : vector<1x384x128xbf16> to vector<384x128xbf16>
    %cst_37 = arith.constant dense<0.000000e+00> : vector<512x128xf32>
    %23 = tpu.matmul %20, %22, %cst_37 {dimension_numbers = #tpu.dot_dimension_numbers<[1], [0], [0], [1], [0, 0, 1, 1], [], []>} : vector<512x384xbf16>, vector<384x128xbf16>, vector<512x128xf32> -> vector<512x128xf32>
    %c0_38 = arith.constant 0 : index
    %c0_39 = arith.constant 0 : index
    %24 = vector.load %arg9[%c0_38, %c0_39] : memref<512x128xf32, #tpu.memory_space<vmem>>, vector<512x128xf32>
    %25 = arith.addf %24, %23 : vector<512x128xf32>
    %c0_40 = arith.constant 0 : index
    %c0_41 = arith.constant 0 : index
    %26 = vector.load %arg9[%c0_40, %c0_41] : memref<512x128xf32, #tpu.memory_space<vmem>>, vector<512x128xf32>
    tpu.vector_store %arg9[%c0_40, %c0_41], %25 {strides = array<i32>} : memref<512x128xf32, #tpu.memory_space<vmem>>, vector<512x128xf32>,
    %c0_42 = arith.constant 0 : index
    %c2 = arith.constant 2 : index
    %c0_43 = arith.constant 0 : index
    %c0_44 = arith.constant 0 : index
    %27 = vector.load %arg7[%c0_42, %c2, %c0_43, %c0_44] : memref<2x18x16x384xbf16, #tpu.memory_space<vmem>>, vector<2x16x16x384xbf16>
    %28 = vector.shape_cast %27 : vector<2x16x16x384xbf16> to vector<512x384xbf16>
    %c2_45 = arith.constant 2 : index
    %c0_46 = arith.constant 0 : index
    %c0_47 = arith.constant 0 : index
    %29 = vector.load %arg2[%c2_45, %c0_46, %c0_47] : memref<3x384x128xbf16, #tpu.memory_space<vmem>>, vector<1x384x128xbf16>
    %30 = vector.shape_cast %29 : vector<1x384x128xbf16> to vector<384x128xbf16>
    %cst_48 = arith.constant dense<0.000000e+00> : vector<512x128xf32>
    %31 = tpu.matmul %28, %30, %cst_48 {dimension_numbers = #tpu.dot_dimension_numbers<[1], [0], [0], [1], [0, 0, 1, 1], [], []>} : vector<512x384xbf16>, vector<384x128xbf16>, vector<512x128xf32> -> vector<512x128xf32>
    %c0_49 = arith.constant 0 : index
    %c0_50 = arith.constant 0 : index
    %32 = vector.load %arg9[%c0_49, %c0_50] : memref<512x128xf32, #tpu.memory_space<vmem>>, vector<512x128xf32>
    %33 = arith.addf %32, %31 : vector<512x128xf32>
    %c0_51 = arith.constant 0 : index
    %c0_52 = arith.constant 0 : index
    %34 = vector.load %arg9[%c0_51, %c0_52] : memref<512x128xf32, #tpu.memory_space<vmem>>, vector<512x128xf32>
    tpu.vector_store %arg9[%c0_51, %c0_52], %33 {strides = array<i32>} : memref<512x128xf32, #tpu.memory_space<vmem>>, vector<512x128xf32>,
    %c0_53 = arith.constant 0 : index
    %c0_54 = arith.constant 0 : index
    %35 = vector.load %arg9[%c0_53, %c0_54] : memref<512x128xf32, #tpu.memory_space<vmem>>, vector<512x128xf32>
    %c0_55 = arith.constant 0 : index
    %c0_56 = arith.constant 0 : index
    %36 = vector.load %arg3[%c0_55, %c0_56] : memref<1x128xf32, #tpu.memory_space<vmem>>, vector<1x128xf32>
    %37 = vector.broadcast %36 : vector<1x128xf32> to vector<512x128xf32>
    %38 = arith.addf %35, %37 : vector<512x128xf32>
    %cst_57 = arith.constant 0.000000e+00 : f32
    %39 = vector.broadcast %cst_57 : f32 to vector<512x128xf32>
    %40 = arith.maximumf %38, %39 : vector<512x128xf32>
    %41 = arith.truncf %40 : vector<512x128xf32> to vector<512x128xbf16>
    %42 = vector.shape_cast %41 : vector<512x128xbf16> to vector<2x16x16x128xbf16>
    %cst_58 = arith.constant 0.000000e+00 : bf16
    %43 = vector.broadcast %cst_58 : bf16 to vector<2x1x16x384xbf16>
    %cst_59 = arith.constant 0.000000e+00 : bf16
    %44 = vector.broadcast %cst_59 : bf16 to vector<2x16x1x128xbf16>
    %c0_60 = arith.constant 0 : index
    %c0_61 = arith.constant 0 : index
    %c0_62 = arith.constant 0 : index
    %c0_63 = arith.constant 0 : index
    %45 = vector.load %arg8[%c0_60, %c0_61, %c0_62, %c0_63] : memref<2x18x16x384xbf16, #tpu.memory_space<vmem>>, vector<2x1x16x384xbf16>
    tpu.vector_store %arg8[%c0_60, %c0_61, %c0_62, %c0_63], %43 {strides = array<i32>} : memref<2x18x16x384xbf16, #tpu.memory_space<vmem>>, vector<2x1x16x384xbf16>,
    %c0_64 = arith.constant 0 : index
    %c17_65 = arith.constant 17 : index
    %c0_66 = arith.constant 0 : index
    %c0_67 = arith.constant 0 : index
    %46 = vector.load %arg8[%c0_64, %c17_65, %c0_66, %c0_67] : memref<2x18x16x384xbf16, #tpu.memory_space<vmem>>, vector<2x1x16x384xbf16>
    tpu.vector_store %arg8[%c0_64, %c17_65, %c0_66, %c0_67], %43 {strides = array<i32>} : memref<2x18x16x384xbf16, #tpu.memory_space<vmem>>, vector<2x1x16x384xbf16>,
    %47 = vector.extract_strided_slice %42 {offsets = [0, 0, 0, 0], sizes = [2, 16, 15, 128], strides = [1, 1, 1, 1]} : vector<2x16x16x128xbf16> to vector<2x16x15x128xbf16>
    %48 = tpu.concatenate %44, %47 in 2 : vector<2x16x1x128xbf16>, vector<2x16x15x128xbf16> -> vector<2x16x16x128xbf16>
    %c0_68 = arith.constant 0 : index
    %c1_69 = arith.constant 1 : index
    %c0_70 = arith.constant 0 : index
    %c0_71 = arith.constant 0 : index
    %49 = vector.load %arg8[%c0_68, %c1_69, %c0_70, %c0_71] : memref<2x18x16x384xbf16, #tpu.memory_space<vmem>>, vector<2x16x16x128xbf16>
    tpu.vector_store %arg8[%c0_68, %c1_69, %c0_70, %c0_71], %48 {strides = array<i32>} : memref<2x18x16x384xbf16, #tpu.memory_space<vmem>>, vector<2x16x16x128xbf16>,
    %c0_72 = arith.constant 0 : index
    %c1_73 = arith.constant 1 : index
    %c0_74 = arith.constant 0 : index
    %c128_75 = arith.constant 128 : index
    %50 = vector.load %arg8[%c0_72, %c1_73, %c0_74, %c128_75] : memref<2x18x16x384xbf16, #tpu.memory_space<vmem>>, vector<2x16x16x128xbf16>
    tpu.vector_store %arg8[%c0_72, %c1_73, %c0_74, %c128_75], %42 {strides = array<i32>} : memref<2x18x16x384xbf16, #tpu.memory_space<vmem>>, vector<2x16x16x128xbf16>,
    %51 = vector.extract_strided_slice %42 {offsets = [0, 0, 1, 0], sizes = [2, 16, 15, 128], strides = [1, 1, 1, 1]} : vector<2x16x16x128xbf16> to vector<2x16x15x128xbf16>
    %52 = tpu.concatenate %51, %44 in 2 : vector<2x16x15x128xbf16>, vector<2x16x1x128xbf16> -> vector<2x16x16x128xbf16>
    %c0_76 = arith.constant 0 : index
    %c1_77 = arith.constant 1 : index
    %c0_78 = arith.constant 0 : index
    %c256_79 = arith.constant 256 : index
    %53 = vector.load %arg8[%c0_76, %c1_77, %c0_78, %c256_79] : memref<2x18x16x384xbf16, #tpu.memory_space<vmem>>, vector<2x16x16x128xbf16>
    tpu.vector_store %arg8[%c0_76, %c1_77, %c0_78, %c256_79], %52 {strides = array<i32>} : memref<2x18x16x384xbf16, #tpu.memory_space<vmem>>, vector<2x16x16x128xbf16>,
    %c0_80 = arith.constant 0 : index
    %c0_81 = arith.constant 0 : index
    %c0_82 = arith.constant 0 : index
    %c0_83 = arith.constant 0 : index
    %54 = vector.load %arg8[%c0_80, %c0_81, %c0_82, %c0_83] : memref<2x18x16x384xbf16, #tpu.memory_space<vmem>>, vector<2x16x16x384xbf16>
    %55 = vector.shape_cast %54 : vector<2x16x16x384xbf16> to vector<512x384xbf16>
    %c0_84 = arith.constant 0 : index
    %c0_85 = arith.constant 0 : index
    %c0_86 = arith.constant 0 : index
    %56 = vector.load %arg4[%c0_84, %c0_85, %c0_86] : memref<3x384x128xbf16, #tpu.memory_space<vmem>>, vector<1x384x128xbf16>
    %57 = vector.shape_cast %56 : vector<1x384x128xbf16> to vector<384x128xbf16>
    %cst_87 = arith.constant dense<0.000000e+00> : vector<512x128xf32>
    %58 = tpu.matmul %55, %57, %cst_87 {dimension_numbers = #tpu.dot_dimension_numbers<[1], [0], [0], [1], [0, 0, 1, 1], [], []>} : vector<512x384xbf16>, vector<384x128xbf16>, vector<512x128xf32> -> vector<512x128xf32>
    %c0_88 = arith.constant 0 : index
    %c0_89 = arith.constant 0 : index
    %59 = vector.load %arg9[%c0_88, %c0_89] : memref<512x128xf32, #tpu.memory_space<vmem>>, vector<512x128xf32>
    tpu.vector_store %arg9[%c0_88, %c0_89], %58 {strides = array<i32>} : memref<512x128xf32, #tpu.memory_space<vmem>>, vector<512x128xf32>,
    %c0_90 = arith.constant 0 : index
    %c1_91 = arith.constant 1 : index
    %c0_92 = arith.constant 0 : index
    %c0_93 = arith.constant 0 : index
    %60 = vector.load %arg8[%c0_90, %c1_91, %c0_92, %c0_93] : memref<2x18x16x384xbf16, #tpu.memory_space<vmem>>, vector<2x16x16x384xbf16>
    %61 = vector.shape_cast %60 : vector<2x16x16x384xbf16> to vector<512x384xbf16>
    %c1_94 = arith.constant 1 : index
    %c0_95 = arith.constant 0 : index
    %c0_96 = arith.constant 0 : index
    %62 = vector.load %arg4[%c1_94, %c0_95, %c0_96] : memref<3x384x128xbf16, #tpu.memory_space<vmem>>, vector<1x384x128xbf16>
    %63 = vector.shape_cast %62 : vector<1x384x128xbf16> to vector<384x128xbf16>
    %cst_97 = arith.constant dense<0.000000e+00> : vector<512x128xf32>
    %64 = tpu.matmul %61, %63, %cst_97 {dimension_numbers = #tpu.dot_dimension_numbers<[1], [0], [0], [1], [0, 0, 1, 1], [], []>} : vector<512x384xbf16>, vector<384x128xbf16>, vector<512x128xf32> -> vector<512x128xf32>
    %c0_98 = arith.constant 0 : index
    %c0_99 = arith.constant 0 : index
    %65 = vector.load %arg9[%c0_98, %c0_99] : memref<512x128xf32, #tpu.memory_space<vmem>>, vector<512x128xf32>
    %66 = arith.addf %65, %64 : vector<512x128xf32>
    %c0_100 = arith.constant 0 : index
    %c0_101 = arith.constant 0 : index
    %67 = vector.load %arg9[%c0_100, %c0_101] : memref<512x128xf32, #tpu.memory_space<vmem>>, vector<512x128xf32>
    tpu.vector_store %arg9[%c0_100, %c0_101], %66 {strides = array<i32>} : memref<512x128xf32, #tpu.memory_space<vmem>>, vector<512x128xf32>,
    %c0_102 = arith.constant 0 : index
    %c2_103 = arith.constant 2 : index
    %c0_104 = arith.constant 0 : index
    %c0_105 = arith.constant 0 : index
    %68 = vector.load %arg8[%c0_102, %c2_103, %c0_104, %c0_105] : memref<2x18x16x384xbf16, #tpu.memory_space<vmem>>, vector<2x16x16x384xbf16>
    %69 = vector.shape_cast %68 : vector<2x16x16x384xbf16> to vector<512x384xbf16>
    %c2_106 = arith.constant 2 : index
    %c0_107 = arith.constant 0 : index
    %c0_108 = arith.constant 0 : index
    %70 = vector.load %arg4[%c2_106, %c0_107, %c0_108] : memref<3x384x128xbf16, #tpu.memory_space<vmem>>, vector<1x384x128xbf16>
    %71 = vector.shape_cast %70 : vector<1x384x128xbf16> to vector<384x128xbf16>
    %cst_109 = arith.constant dense<0.000000e+00> : vector<512x128xf32>
    %72 = tpu.matmul %69, %71, %cst_109 {dimension_numbers = #tpu.dot_dimension_numbers<[1], [0], [0], [1], [0, 0, 1, 1], [], []>} : vector<512x384xbf16>, vector<384x128xbf16>, vector<512x128xf32> -> vector<512x128xf32>
    %c0_110 = arith.constant 0 : index
    %c0_111 = arith.constant 0 : index
    %73 = vector.load %arg9[%c0_110, %c0_111] : memref<512x128xf32, #tpu.memory_space<vmem>>, vector<512x128xf32>
    %74 = arith.addf %73, %72 : vector<512x128xf32>
    %c0_112 = arith.constant 0 : index
    %c0_113 = arith.constant 0 : index
    %75 = vector.load %arg9[%c0_112, %c0_113] : memref<512x128xf32, #tpu.memory_space<vmem>>, vector<512x128xf32>
    tpu.vector_store %arg9[%c0_112, %c0_113], %74 {strides = array<i32>} : memref<512x128xf32, #tpu.memory_space<vmem>>, vector<512x128xf32>,
    %c0_114 = arith.constant 0 : index
    %c0_115 = arith.constant 0 : index
    %76 = vector.load %arg9[%c0_114, %c0_115] : memref<512x128xf32, #tpu.memory_space<vmem>>, vector<512x128xf32>
    %c0_116 = arith.constant 0 : index
    %c0_117 = arith.constant 0 : index
    %77 = vector.load %arg5[%c0_116, %c0_117] : memref<1x128xf32, #tpu.memory_space<vmem>>, vector<1x128xf32>
    %78 = vector.broadcast %77 : vector<1x128xf32> to vector<512x128xf32>
    %79 = arith.addf %76, %78 : vector<512x128xf32>
    %c0_118 = arith.constant 0 : index
    %c0_119 = arith.constant 0 : index
    %c0_120 = arith.constant 0 : index
    %c0_121 = arith.constant 0 : index
    %80 = vector.load %arg1[%c0_118, %c0_119, %c0_120, %c0_121] : memref<2x16x16x128xf32, #tpu.memory_space<vmem>>, vector<2x16x16x128xf32>
    %81 = vector.shape_cast %80 : vector<2x16x16x128xf32> to vector<512x128xf32>
    %82 = arith.addf %79, %81 : vector<512x128xf32>
    %83 = vector.shape_cast %82 : vector<512x128xf32> to vector<2x16x16x128xf32>
    %c0_122 = arith.constant 0 : index
    %c0_123 = arith.constant 0 : index
    %c0_124 = arith.constant 0 : index
    %c0_125 = arith.constant 0 : index
    %84 = vector.load %arg6[%c0_122, %c0_123, %c0_124, %c0_125] : memref<2x16x16x128xf32, #tpu.memory_space<vmem>>, vector<2x16x16x128xf32>
    tpu.vector_store %arg6[%c0_122, %c0_123, %c0_124, %c0_125], %83 {strides = array<i32>} : memref<2x16x16x128xf32, #tpu.memory_space<vmem>>, vector<2x16x16x128xf32>,
    return
  }
  func.func @transform_0(%arg0: i32) -> (i32, i32, i32, i32) {
    %c0_i32 = arith.constant 0 : i32
    %c0_i32_0 = arith.constant 0 : i32
    %c0_i32_1 = arith.constant 0 : i32
    %c0_i32_2 = arith.constant 0 : i32
    return %arg0, %c0_i32, %c0_i32_0, %c0_i32_1 : i32, i32, i32, i32
  }
  func.func @transform_1(%arg0: i32) -> (i32, i32, i32) {
    %c0_i32 = arith.constant 0 : i32
    %c0_i32_0 = arith.constant 0 : i32
    %c0_i32_1 = arith.constant 0 : i32
    %c0_i32_2 = arith.constant 0 : i32
    return %c0_i32, %c0_i32_0, %c0_i32_1 : i32, i32, i32
  }
  func.func @transform_2(%arg0: i32) -> (i32, i32) {
    %c0_i32 = arith.constant 0 : i32
    %c0_i32_0 = arith.constant 0 : i32
    %c0_i32_1 = arith.constant 0 : i32
    return %c0_i32, %c0_i32_0 : i32, i32
  }
  func.func @transform_3(%arg0: i32) -> (i32, i32, i32) {
    %c0_i32 = arith.constant 0 : i32
    %c0_i32_0 = arith.constant 0 : i32
    %c0_i32_1 = arith.constant 0 : i32
    %c0_i32_2 = arith.constant 0 : i32
    return %c0_i32, %c0_i32_0, %c0_i32_1 : i32, i32, i32
  }
  func.func @transform_4(%arg0: i32) -> (i32, i32) {
    %c0_i32 = arith.constant 0 : i32
    %c0_i32_0 = arith.constant 0 : i32
    %c0_i32_1 = arith.constant 0 : i32
    return %c0_i32, %c0_i32_0 : i32, i32
  }
  func.func @transform_5(%arg0: i32) -> (i32, i32, i32, i32) {
    %c0_i32 = arith.constant 0 : i32
    %c0_i32_0 = arith.constant 0 : i32
    %c0_i32_1 = arith.constant 0 : i32
    %c0_i32_2 = arith.constant 0 : i32
    return %arg0, %c0_i32, %c0_i32_0, %c0_i32_1 : i32, i32, i32, i32
  }
}

</mosaic_0001>

<llo_original>
// kernel: resnet_block_forward.1
$region0: #{resnet_block_forward.1}
  #allocation0 [shape = 'u32[]', space=smem, size = 0x4, offset = 0x4, fixed_abs, tag = 'smem constant byte address 0x4 - core index']
  #allocation1 [shape = 'u32[144,128]{1,0:T(1,128)}', space=vmem, size = 0x12000, scoped, tag = 'internal scratch']
  #allocation2 [shape = 'bf16[2,18,16,384]{3,2,1,0:T(16,128)(2,1)}', space=vmem, size = 0x6c000, scoped, tag = 'scratch operand']
  #allocation3 [shape = 'bf16[2,18,16,384]{3,2,1,0:T(16,128)(2,1)}', space=vmem, size = 0x6c000, scoped, tag = 'scratch operand']
  #allocation4 [shape = 'f32[512,128]{1,0:T(8,128)}', space=vmem, size = 0x40000, scoped, tag = 'scratch operand']
  %s0 = inlined_call_operand.vmem [shape: f32[4,16,16,128], index: 0, kind: input, shape index: {}]
  %s1 = inlined_call_operand.vmem [shape: bf16[3,384,128], index: 1, kind: input, shape index: {}]
  %s2 = inlined_call_operand.vmem [shape: f32[1,128], index: 2, kind: input, shape index: {}]
  %s3 = inlined_call_operand.vmem [shape: bf16[3,384,128], index: 3, kind: input, shape index: {}]
  %s4 = inlined_call_operand.vmem [shape: f32[1,128], index: 4, kind: input, shape index: {}]
  %s5 = inlined_call_operand.hbm [shape: f32[4,16,16,128], index: 5, kind: output, shape index: {}]
  %s6 = sld [smem:[#allocation0]]
  $region53: #{resnet_block_forward.1} parent=0
    _
  %s8 = ssub.s32 1, %s6
  %s9 = scalar_select 0, %s8, %s6
  $region1: #{resnet_block_forward.1} parent=0
    #allocation5 [shape = 'u8[524288]{0}', space=vmem, size = 0x80000, scoped, tag = 'output window, operand 0']
    #allocation6 [shape = 's32[2]{0}', space=sflag, size = 0x8, scoped, tag = 'scoped memory for resnet_block_forward.1']
    %10 = vsyncpa [#allocation6], 0
    %s11 = scalar_lea.sflag [#allocation6], 1
    %12 = vsyncpa %s11, 0
    loop: start=0, step=1, limit=4
    $region2: #{resnet_block_forward.1} parent=1 // loop_pre_header
      _
    $region3: #{resnet_block_forward.1} parent=1 // loop_header
      %s14 = sphi 0, %s18
      %p15 = scmp.ge.s32.totalorder %s14, 4
      %s24 = sphi 0, %s26
      %s27 = sphi 0, %s24
      %s28 = sphi 0, %s27
      %s44 = sphi 0, %s28
      %s48 = sphi 0, %s48
      %s50 = sphi 0, %s48
      %s51 = sphi 0, %s50
      %s65 = sphi 0, %s51
      %s69 = sphi 0, %s69
      %s71 = sphi 0, %s69
      %s72 = sphi 0, %s71
      %s86 = sphi 0, %s72
      %s90 = sphi 0, %s90
      %s92 = sphi 0, %s90
      %s93 = sphi 0, %s92
      %s107 = sphi 0, %s93
      %s111 = sphi 0, %s111
      %s113 = sphi 0, %s111
      %s114 = sphi 0, %s113
      %s128 = sphi 0, %s114
      %s134 = sphi 0, %s136
      %s137 = sphi 0, %s134
      %s138 = sphi 0, %s137
      %s154 = sphi 0, %s138
    $region4: #{resnet_block_forward.1} parent=1 // loop_header_branch
      %17 = sbr.rel (%p15) target = $region8
    $region5: #{resnet_block_forward.1} parent=1 // loop_body
      %s19 = ssub.s32 %s14, 1
      %s20 = ssub.s32 %s14, 2
      %s21 = sadd.s32 %s14, 1
      %s22 = ssub.s32 %s14, %s21
      %p23 = scmp.eq.s32.totalorder %s22, 0
      %s25 = sadd.s32 %s24, 1
      %s26 = scalar_select %p23, %s24, %s25
      %p29 = pneg %p23
      %p30 = scmp.eq.s32.totalorder %s14, 1
      %p31 = por %p29, %p30
      %p32 = scmp.ne.s32.totalorder %s24, %s27
      %p33 = scmp.eq.s32.totalorder %s14, 0
      %p34 = por %p32, %p33
      %p35 = scmp.ne.s32.totalorder %s24, %s27
      %p36 = scmp.eq.s32.totalorder %s19, 1
      %p37 = por %p35, %p36
      %p38 = scmp.ne.s32.totalorder %s27, %s28
      %p39 = scmp.eq.s32.totalorder %s19, 0
      %p40 = por %p38, %p39
      %p41 = scmp.ne.s32.totalorder %s27, %s28
      %p42 = scmp.eq.s32.totalorder %s20, 1
      %p43 = por %p41, %p42
      %p45 = scmp.ne.s32.totalorder %s28, %s44
      %p46 = scmp.eq.s32.totalorder %s20, 0
      %p47 = por %p45, %p46
      %s49 = sadd.s32 %s48, 1
      %p52 = scmp.eq.s32.totalorder %s14, 1
      %p53 = scmp.ne.s32.totalorder %s48, %s50
      %p54 = scmp.eq.s32.totalorder %s14, 0
      %p55 = por %p53, %p54
      %p56 = scmp.ne.s32.totalorder %s48, %s50
      %p57 = scmp.eq.s32.totalorder %s19, 1
      %p58 = por %p56, %p57
      %p59 = scmp.ne.s32.totalorder %s50, %s51
      %p60 = scmp.eq.s32.totalorder %s19, 0
      %p61 = por %p59, %p60
      %p62 = scmp.ne.s32.totalorder %s50, %s51
      %p63 = scmp.eq.s32.totalorder %s20, 1
      %p64 = por %p62, %p63
      %p66 = scmp.ne.s32.totalorder %s51, %s65
      %p67 = scmp.eq.s32.totalorder %s20, 0
      %p68 = por %p66, %p67
      %s70 = sadd.s32 %s69, 1
      %p73 = scmp.eq.s32.totalorder %s14, 1
      %p74 = scmp.ne.s32.totalorder %s69, %s71
      %p75 = scmp.eq.s32.totalorder %s14, 0
      %p76 = por %p74, %p75
      %p77 = scmp.ne.s32.totalorder %s69, %s71
      %p78 = scmp.eq.s32.totalorder %s19, 1
      %p79 = por %p77, %p78
      %p80 = scmp.ne.s32.totalorder %s71, %s72
      %p81 = scmp.eq.s32.totalorder %s19, 0
      %p82 = por %p80, %p81
      %p83 = scmp.ne.s32.totalorder %s71, %s72
      %p84 = scmp.eq.s32.totalorder %s20, 1
      %p85 = por %p83, %p84
      %p87 = scmp.ne.s32.totalorder %s72, %s86
      %p88 = scmp.eq.s32.totalorder %s20, 0
      %p89 = por %p87, %p88
      %s91 = sadd.s32 %s90, 1
      %p94 = scmp.eq.s32.totalorder %s14, 1
      %p95 = scmp.ne.s32.totalorder %s90, %s92
      %p96 = scmp.eq.s32.totalorder %s14, 0
      %p97 = por %p95, %p96
      %p98 = scmp.ne.s32.totalorder %s90, %s92
      %p99 = scmp.eq.s32.totalorder %s19, 1
      %p100 = por %p98, %p99
      %p101 = scmp.ne.s32.totalorder %s92, %s93
      %p102 = scmp.eq.s32.totalorder %s19, 0
      %p103 = por %p101, %p102
      %p104 = scmp.ne.s32.totalorder %s92, %s93
      %p105 = scmp.eq.s32.totalorder %s20, 1
      %p106 = por %p104, %p105
      %p108 = scmp.ne.s32.totalorder %s93, %s107
      %p109 = scmp.eq.s32.totalorder %s20, 0
      %p110 = por %p108, %p109
      %s112 = sadd.s32 %s111, 1
      %p115 = scmp.eq.s32.totalorder %s14, 1
      %p116 = scmp.ne.s32.totalorder %s111, %s113
      %p117 = scmp.eq.s32.totalorder %s14, 0
      %p118 = por %p116, %p117
      %p119 = scmp.ne.s32.totalorder %s111, %s113
      %p120 = scmp.eq.s32.totalorder %s19, 1
      %p121 = por %p119, %p120
      %p122 = scmp.ne.s32.totalorder %s113, %s114
      %p123 = scmp.eq.s32.totalorder %s19, 0
      %p124 = por %p122, %p123
      %p125 = scmp.ne.s32.totalorder %s113, %s114
      %p126 = scmp.eq.s32.totalorder %s20, 1
      %p127 = por %p125, %p126
      %p129 = scmp.ne.s32.totalorder %s114, %s128
      %p130 = scmp.eq.s32.totalorder %s20, 0
      %p131 = por %p129, %p130
      %s132 = ssub.s32 %s14, %s21
      %p133 = scmp.eq.s32.totalorder %s132, 0
      %s135 = sadd.s32 %s134, 1
      %s136 = scalar_select %p133, %s134, %s135
      %p139 = pneg %p133
      %p140 = scmp.eq.s32.totalorder %s14, 1
      %p141 = por %p139, %p140
      %p142 = scmp.ne.s32.totalorder %s134, %s137
      %p143 = scmp.eq.s32.totalorder %s14, 0
      %p144 = por %p142, %p143
      %p145 = scmp.ne.s32.totalorder %s134, %s137
      %p146 = scmp.eq.s32.totalorder %s19, 1
      %p147 = por %p145, %p146
      %p148 = scmp.ne.s32.totalorder %s137, %s138
      %p149 = scmp.eq.s32.totalorder %s19, 0
      %p150 = por %p148, %p149
      %p151 = scmp.ne.s32.totalorder %s137, %s138
      %p152 = scmp.eq.s32.totalorder %s20, 1
      %p153 = por %p151, %p152
      %p155 = scmp.ne.s32.totalorder %s138, %s154
      %p156 = scmp.eq.s32.totalorder %s20, 0
      %p157 = por %p155, %p156
      %p158 = scmp.le.s32.totalorder 1, %s14
      %p159 = scmp.lt.s32.totalorder %s14, 3
      %p160 = pnand %p158, %p159
      %p161 = pneg %p160
      // Predicated region
      $region9: #{resnet_block_forward.1} parent=5 // pred_check
        _
      $region10: #{resnet_block_forward.1} parent=5 // pred_check_branch
        %163 = sbr.rel (%p160) target = $region12
      $region11: #{resnet_block_forward.1} parent=5 // pred_region
        %s164 = ssub.s32 %s14, 1
        // Predicated region
        $region13: #{resnet_block_forward.1} parent=11 // pred_check
          %p165 = pneg %p61
        $region14: #{resnet_block_forward.1} parent=11 // pred_check_branch
          %167 = sbr.rel (%p165) target = $region16
        $region15: #{resnet_block_forward.1} parent=11 // pred_region
          _
        $region16: #{resnet_block_forward.1} parent=11 // pred_fallthru
          _
        // Predicated region
        $region17: #{resnet_block_forward.1} parent=11 // pred_check
          %p168 = pneg %p82
        $region18: #{resnet_block_forward.1} parent=11 // pred_check_branch
          %170 = sbr.rel (%p168) target = $region20
        $region19: #{resnet_block_forward.1} parent=11 // pred_region
          _
        $region20: #{resnet_block_forward.1} parent=11 // pred_fallthru
          _
        // Predicated region
        $region21: #{resnet_block_forward.1} parent=11 // pred_check
          %p171 = pneg %p103
        $region22: #{resnet_block_forward.1} parent=11 // pred_check_branch
          %173 = sbr.rel (%p171) target = $region24
        $region23: #{resnet_block_forward.1} parent=11 // pred_region
          _
        $region24: #{resnet_block_forward.1} parent=11 // pred_fallthru
          _
        // Predicated region
        $region25: #{resnet_block_forward.1} parent=11 // pred_check
          %p174 = pneg %p124
        $region26: #{resnet_block_forward.1} parent=11 // pred_check_branch
          %176 = sbr.rel (%p174) target = $region28
        $region27: #{resnet_block_forward.1} parent=11 // pred_region
          _
        $region28: #{resnet_block_forward.1} parent=11 // pred_fallthru
          _
      $region12: #{resnet_block_forward.1} parent=5 // pred_fallthru
        _
      %p177 = scmp.lt.s32.totalorder %s14, 2
      // Predicated region
      $region29: #{resnet_block_forward.1} parent=5 // pred_check
        %p178 = pneg %p177
      $region30: #{resnet_block_forward.1} parent=5 // pred_check_branch
        %180 = sbr.rel (%p178) target = $region32
      $region31: #{resnet_block_forward.1} parent=5 // pred_region
        // Predicated region
        $region33: #{resnet_block_forward.1} parent=31 // pred_check
          %p181 = pneg %p34
        $region34: #{resnet_block_forward.1} parent=31 // pred_check_branch
          %183 = sbr.rel (%p181) target = $region36
        $region35: #{resnet_block_forward.1} parent=31 // pred_region
          %s184 = smul.u32 2, %s14
          %p185 = scmp.lt.s32.totalorder %s184, 3
          %s186 = scalar_select %p185, %s184, 3
          %s187 = smul.addr %s186, 32
          %s188 = smul.addr %s187, 8
          %s189 = scalar_lea.vmem %s0, %s188
          %s190 = smul.u32 2, %s14
        $region36: #{resnet_block_forward.1} parent=31 // pred_fallthru
          _
      $region32: #{resnet_block_forward.1} parent=5 // pred_fallthru
        _
      %p191 = scmp.le.s32.totalorder 1, %s14
      %p192 = scmp.lt.s32.totalorder %s14, 3
      %p193 = pnand %p191, %p192
      %p194 = pneg %p193
      // Predicated region
      $region37: #{resnet_block_forward.1} parent=5 // pred_check
        _
      $region38: #{resnet_block_forward.1} parent=5 // pred_check_branch
        %196 = sbr.rel (%p193) target = $region40
      $region39: #{resnet_block_forward.1} parent=5 // pred_region
        %s197 = ssub.s32 %s14, 1
        %s198 = smul.u32 2, %s19
        %p199 = scmp.lt.s32.totalorder %s198, 3
        %s200 = scalar_select %p199, %s198, 3
        %s201 = smul.addr %s200, 32
        %s202 = smul.addr %s201, 8
        %s203 = scalar_lea.vmem %s0, %s202
        %p204 = pneg %p40
        %p205 = pneg %p37
        %p206 = pneg %p61
        %p207 = pneg %p58
        %p208 = pneg %p82
        %p209 = pneg %p79
        %p210 = pneg %p103
        %p211 = pneg %p100
        %p212 = pneg %p124
        %p213 = pneg %p121
        %p214 = pneg %p150
        %p215 = pneg %p147
        %s216 = sand.u32 %s137, 1
        %s217 = scalar_lea.sflag [#allocation6], %s216
        %s218 = sand.u32 %s137, 1
        %s219 = smul.addr %s218, 512
        %s220 = scalar_lea.vmem [#allocation5], %s219
        %s221 = smul.u32 2, %s19
        %p222 = scmp.lt.s32.totalorder %s221, 3
        %s223 = scalar_select %p222, %s221, 3
        %s224 = smul.addr %s223, 32
        %s225 = smul.addr %s224, 8
        %s226 = scalar_lea.vmem %s0, %s225
        %s227 = smul.u32 2, %s19
        %s228 = smul.u32 2, %s19
        %v230 = vld [vmem:[%s226] sm:$0xff]
        %v231 = vld [vmem:[%s226 + $0x8] sm:$0xff]
        %v232 = vld [vmem:[%s226 + $0x10] sm:$0xff]
        %v233 = vld [vmem:[%s226 + $0x18] sm:$0xff]
        %v234 = vld [vmem:[%s226 + $0x20] sm:$0xff]
        %v235 = vld [vmem:[%s226 + $0x28] sm:$0xff]
        %v236 = vld [vmem:[%s226 + $0x30] sm:$0xff]
        %v237 = vld [vmem:[%s226 + $0x38] sm:$0xff]
        %v238 = vld [vmem:[%s226 + $0x40] sm:$0xff]
        %v239 = vld [vmem:[%s226 + $0x48] sm:$0xff]
        %v240 = vld [vmem:[%s226 + $0x50] sm:$0xff]
        %v241 = vld [vmem:[%s226 + $0x58] sm:$0xff]
        %v242 = vld [vmem:[%s226 + $0x60] sm:$0xff]
        %v243 = vld [vmem:[%s226 + $0x68] sm:$0xff]
        %v244 = vld [vmem:[%s226 + $0x70] sm:$0xff]
        %v245 = vld [vmem:[%s226 + $0x78] sm:$0xff]
        %v246 = vld [vmem:[%s226 + $0x80] sm:$0xff]
        %v247 = vld [vmem:[%s226 + $0x88] sm:$0xff]
        %v248 = vld [vmem:[%s226 + $0x90] sm:$0xff]
        %v249 = vld [vmem:[%s226 + $0x98] sm:$0xff]
        %v250 = vld [vmem:[%s226 + $0xa0] sm:$0xff]
        %v251 = vld [vmem:[%s226 + $0xa8] sm:$0xff]
        %v252 = vld [vmem:[%s226 + $0xb0] sm:$0xff]
        %v253 = vld [vmem:[%s226 + $0xb8] sm:$0xff]
        %v254 = vld [vmem:[%s226 + $0xc0] sm:$0xff]
        %v255 = vld [vmem:[%s226 + $0xc8] sm:$0xff]
        %v256 = vld [vmem:[%s226 + $0xd0] sm:$0xff]
        %v257 = vld [vmem:[%s226 + $0xd8] sm:$0xff]
        %v258 = vld [vmem:[%s226 + $0xe0] sm:$0xff]
        %v259 = vld [vmem:[%s226 + $0xe8] sm:$0xff]
        %v260 = vld [vmem:[%s226 + $0xf0] sm:$0xff]
        %v261 = vld [vmem:[%s226 + $0xf8] sm:$0xff]
        %v262 = vld [vmem:[%s226 + $0x100] sm:$0xff]
        %v263 = vld [vmem:[%s226 + $0x108] sm:$0xff]
        %v264 = vld [vmem:[%s226 + $0x110] sm:$0xff]
        %v265 = vld [vmem:[%s226 + $0x118] sm:$0xff]
        %v266 = vld [vmem:[%s226 + $0x120] sm:$0xff]
        %v267 = vld [vmem:[%s226 + $0x128] sm:$0xff]
        %v268 = vld [vmem:[%s226 + $0x130] sm:$0xff]
        %v269 = vld [vmem:[%s226 + $0x138] sm:$0xff]
        %v270 = vld [vmem:[%s226 + $0x140] sm:$0xff]
        %v271 = vld [vmem:[%s226 + $0x148] sm:$0xff]
        %v272 = vld [vmem:[%s226 + $0x150] sm:$0xff]
        %v273 = vld [vmem:[%s226 + $0x158] sm:$0xff]
        %v274 = vld [vmem:[%s226 + $0x160] sm:$0xff]
        %v275 = vld [vmem:[%s226 + $0x168] sm:$0xff]
        %v276 = vld [vmem:[%s226 + $0x170] sm:$0xff]
        %v277 = vld [vmem:[%s226 + $0x178] sm:$0xff]
        %v278 = vld [vmem:[%s226 + $0x180] sm:$0xff]
        %v279 = vld [vmem:[%s226 + $0x188] sm:$0xff]
        %v280 = vld [vmem:[%s226 + $0x190] sm:$0xff]
        %v281 = vld [vmem:[%s226 + $0x198] sm:$0xff]
        %v282 = vld [vmem:[%s226 + $0x1a0] sm:$0xff]
        %v283 = vld [vmem:[%s226 + $0x1a8] sm:$0xff]
        %v284 = vld [vmem:[%s226 + $0x1b0] sm:$0xff]
        %v285 = vld [vmem:[%s226 + $0x1b8] sm:$0xff]
        %v286 = vld [vmem:[%s226 + $0x1c0] sm:$0xff]
        %v287 = vld [vmem:[%s226 + $0x1c8] sm:$0xff]
        %v288 = vld [vmem:[%s226 + $0x1d0] sm:$0xff]
        %v289 = vld [vmem:[%s226 + $0x1d8] sm:$0xff]
        %v290 = vld [vmem:[%s226 + $0x1e0] sm:$0xff]
        %v291 = vld [vmem:[%s226 + $0x1e8] sm:$0xff]
        %v292 = vld [vmem:[%s226 + $0x1f0] sm:$0xff]
        %v293 = vld [vmem:[%s226 + $0x1f8] sm:$0xff]
        %v294 = vpack.c.bf16 %v231, %v230
        %v295 = vpack.c.bf16 %v233, %v232
        %v296 = vpack.c.bf16 %v235, %v234
        %v297 = vpack.c.bf16 %v237, %v236
        %v298 = vpack.c.bf16 %v239, %v238
        %v299 = vpack.c.bf16 %v241, %v240
        %v300 = vpack.c.bf16 %v243, %v242
        %v301 = vpack.c.bf16 %v245, %v244
        %v302 = vpack.c.bf16 %v247, %v246
        %v303 = vpack.c.bf16 %v249, %v248
        %v304 = vpack.c.bf16 %v251, %v250
        %v305 = vpack.c.bf16 %v253, %v252
        %v306 = vpack.c.bf16 %v255, %v254
        %v307 = vpack.c.bf16 %v257, %v256
        %v308 = vpack.c.bf16 %v259, %v258
        %v309 = vpack.c.bf16 %v261, %v260
        %v310 = vpack.c.bf16 %v263, %v262
        %v311 = vpack.c.bf16 %v265, %v264
        %v312 = vpack.c.bf16 %v267, %v266
        %v313 = vpack.c.bf16 %v269, %v268
        %v314 = vpack.c.bf16 %v271, %v270
        %v315 = vpack.c.bf16 %v273, %v272
        %v316 = vpack.c.bf16 %v275, %v274
        %v317 = vpack.c.bf16 %v277, %v276
        %v318 = vpack.c.bf16 %v279, %v278
        %v319 = vpack.c.bf16 %v281, %v280
        %v320 = vpack.c.bf16 %v283, %v282
        %v321 = vpack.c.bf16 %v285, %v284
        %v322 = vpack.c.bf16 %v287, %v286
        %v323 = vpack.c.bf16 %v289, %v288
        %v324 = vpack.c.bf16 %v291, %v290
        %v325 = vpack.c.bf16 %v293, %v292
        %326 = vst [vmem:[#allocation2] sm:$0xff] 0
        %327 = vst [vmem:[#allocation2 + $0x8] sm:$0xff] 0
        %328 = vst [vmem:[#allocation2 + $0x10] sm:$0xff] 0
        %329 = vst [vmem:[#allocation2 + $0x1b0] sm:$0xff] 0
        %330 = vst [vmem:[#allocation2 + $0x1b8] sm:$0xff] 0
        %331 = vst [vmem:[#allocation2 + $0x1c0] sm:$0xff] 0
        %s332 = scalar_lea.vmem [#allocation2], 408
        %333 = vst [vmem:[%s332] sm:$0xff] 0
        %334 = vst [vmem:[%s332 + $0x8] sm:$0xff] 0
        %335 = vst [vmem:[%s332 + $0x10] sm:$0xff] 0
        %336 = vst [vmem:[%s332 + $0x1b0] sm:$0xff] 0
        %337 = vst [vmem:[%s332 + $0x1b8] sm:$0xff] 0
        %338 = vst [vmem:[%s332 + $0x1c0] sm:$0xff] 0
        %v340 = vshrl.u32 %v294, 16
        %v342 = vrot.slane %v340, 7
        %v343 = vshll.u32 %v294, 16
        %v345 = vor.u32 %v342, %v343
        %v347 = vshrl.u32 %v295, 16
        %v349 = vrot.slane %v347, 7
        %v350 = vshll.u32 %v295, 16
        %v352 = vor.u32 %v349, %v350
        %v354 = vshrl.u32 %v296, 16
        %v356 = vrot.slane %v354, 7
        %v357 = vshll.u32 %v296, 16
        %v359 = vor.u32 %v356, %v357
        %v361 = vshrl.u32 %v297, 16
        %v363 = vrot.slane %v361, 7
        %v364 = vshll.u32 %v297, 16
        %v366 = vor.u32 %v363, %v364
        %v368 = vshrl.u32 %v298, 16
        %v370 = vrot.slane %v368, 7
        %v371 = vshll.u32 %v298, 16
        %v373 = vor.u32 %v370, %v371
        %v375 = vshrl.u32 %v299, 16
        %v377 = vrot.slane %v375, 7
        %v378 = vshll.u32 %v299, 16
        %v380 = vor.u32 %v377, %v378
        %v382 = vshrl.u32 %v300, 16
        %v384 = vrot.slane %v382, 7
        %v385 = vshll.u32 %v300, 16
        %v387 = vor.u32 %v384, %v385
        %v389 = vshrl.u32 %v301, 16
        %v391 = vrot.slane %v389, 7
        %v392 = vshll.u32 %v301, 16
        %v394 = vor.u32 %v391, %v392
        %v396 = vshrl.u32 %v302, 16
        %v398 = vrot.slane %v396, 7
        %v399 = vshll.u32 %v302, 16
        %v401 = vor.u32 %v398, %v399
        %v403 = vshrl.u32 %v303, 16
        %v405 = vrot.slane %v403, 7
        %v406 = vshll.u32 %v303, 16
        %v408 = vor.u32 %v405, %v406
        %v410 = vshrl.u32 %v304, 16
        %v412 = vrot.slane %v410, 7
        %v413 = vshll.u32 %v304, 16
        %v415 = vor.u32 %v412, %v413
        %v417 = vshrl.u32 %v305, 16
        %v419 = vrot.slane %v417, 7
        %v420 = vshll.u32 %v305, 16
        %v422 = vor.u32 %v419, %v420
        %v424 = vshrl.u32 %v306, 16
        %v426 = vrot.slane %v424, 7
        %v427 = vshll.u32 %v306, 16
        %v429 = vor.u32 %v426, %v427
        %v431 = vshrl.u32 %v307, 16
        %v433 = vrot.slane %v431, 7
        %v434 = vshll.u32 %v307, 16
        %v436 = vor.u32 %v433, %v434
        %v438 = vshrl.u32 %v308, 16
        %v440 = vrot.slane %v438, 7
        %v441 = vshll.u32 %v308, 16
        %v443 = vor.u32 %v440, %v441
        %v445 = vshrl.u32 %v309, 16
        %v447 = vrot.slane %v445, 7
        %v448 = vshll.u32 %v309, 16
        %v450 = vor.u32 %v447, %v448
        %v452 = vshrl.u32 %v310, 16
        %v454 = vrot.slane %v452, 7
        %v455 = vshll.u32 %v310, 16
        %v457 = vor.u32 %v454, %v455
        %v459 = vshrl.u32 %v311, 16
        %v461 = vrot.slane %v459, 7
        %v462 = vshll.u32 %v311, 16
        %v464 = vor.u32 %v461, %v462
        %v466 = vshrl.u32 %v312, 16
        %v468 = vrot.slane %v466, 7
        %v469 = vshll.u32 %v312, 16
        %v471 = vor.u32 %v468, %v469
        %v473 = vshrl.u32 %v313, 16
        %v475 = vrot.slane %v473, 7
        %v476 = vshll.u32 %v313, 16
        %v478 = vor.u32 %v475, %v476
        %v480 = vshrl.u32 %v314, 16
        %v482 = vrot.slane %v480, 7
        %v483 = vshll.u32 %v314, 16
        %v485 = vor.u32 %v482, %v483
        %v487 = vshrl.u32 %v315, 16
        %v489 = vrot.slane %v487, 7
        %v490 = vshll.u32 %v315, 16
        %v492 = vor.u32 %v489, %v490
        %v494 = vshrl.u32 %v316, 16
        %v496 = vrot.slane %v494, 7
        %v497 = vshll.u32 %v316, 16
        %v499 = vor.u32 %v496, %v497
        %v501 = vshrl.u32 %v317, 16
        %v503 = vrot.slane %v501, 7
        %v504 = vshll.u32 %v317, 16
        %v506 = vor.u32 %v503, %v504
        %v508 = vshrl.u32 %v318, 16
        %v510 = vrot.slane %v508, 7
        %v511 = vshll.u32 %v318, 16
        %v513 = vor.u32 %v510, %v511
        %v515 = vshrl.u32 %v319, 16
        %v517 = vrot.slane %v515, 7
        %v518 = vshll.u32 %v319, 16
        %v520 = vor.u32 %v517, %v518
        %v522 = vshrl.u32 %v320, 16
        %v524 = vrot.slane %v522, 7
        %v525 = vshll.u32 %v320, 16
        %v527 = vor.u32 %v524, %v525
        %v529 = vshrl.u32 %v321, 16
        %v531 = vrot.slane %v529, 7
        %v532 = vshll.u32 %v321, 16
        %v534 = vor.u32 %v531, %v532
        %v536 = vshrl.u32 %v322, 16
        %v538 = vrot.slane %v536, 7
        %v539 = vshll.u32 %v322, 16
        %v541 = vor.u32 %v538, %v539
        %v543 = vshrl.u32 %v323, 16
        %v545 = vrot.slane %v543, 7
        %v546 = vshll.u32 %v323, 16
        %v548 = vor.u32 %v545, %v546
        %v550 = vshrl.u32 %v324, 16
        %v552 = vrot.slane %v550, 7
        %v553 = vshll.u32 %v324, 16
        %v555 = vor.u32 %v552, %v553
        %v557 = vshrl.u32 %v325, 16
        %v559 = vrot.slane %v557, 7
        %v560 = vshll.u32 %v325, 16
        %v562 = vor.u32 %v559, %v560
        %vm595 = vcmask 1040384
        %vm596 = vsmask.f32 256
        %vm597 = vmand %vm595, %vm596
        %v598 = vsel %vm597, 0, %v345
        %v599 = vsel %vm597, 0, %v352
        %v600 = vsel %vm597, 0, %v359
        %v601 = vsel %vm597, 0, %v366
        %v602 = vsel %vm597, 0, %v373
        %v603 = vsel %vm597, 0, %v380
        %v604 = vsel %vm597, 0, %v387
        %v605 = vsel %vm597, 0, %v394
        %v606 = vsel %vm597, 0, %v401
        %v607 = vsel %vm597, 0, %v408
        %v608 = vsel %vm597, 0, %v415
        %v609 = vsel %vm597, 0, %v422
        %v610 = vsel %vm597, 0, %v429
        %v611 = vsel %vm597, 0, %v436
        %v612 = vsel %vm597, 0, %v443
        %v613 = vsel %vm597, 0, %v450
        %v614 = vsel %vm597, 0, %v457
        %v615 = vsel %vm597, 0, %v464
        %v616 = vsel %vm597, 0, %v471
        %v617 = vsel %vm597, 0, %v478
        %v618 = vsel %vm597, 0, %v485
        %v619 = vsel %vm597, 0, %v492
        %v620 = vsel %vm597, 0, %v499
        %v621 = vsel %vm597, 0, %v506
        %v622 = vsel %vm597, 0, %v513
        %v623 = vsel %vm597, 0, %v520
        %v624 = vsel %vm597, 0, %v527
        %v625 = vsel %vm597, 0, %v534
        %v626 = vsel %vm597, 0, %v541
        %v627 = vsel %vm597, 0, %v548
        %v628 = vsel %vm597, 0, %v555
        %v629 = vsel %vm597, 0, %v562
        %s630 = scalar_lea.vmem [#allocation2], 24
        %631 = vst [vmem:[%s630] sm:$0xff] %v598
        %632 = vst [vmem:[%s630 + $0x18] sm:$0xff] %v599
        %633 = vst [vmem:[%s630 + $0x30] sm:$0xff] %v600
        %634 = vst [vmem:[%s630 + $0x48] sm:$0xff] %v601
        %635 = vst [vmem:[%s630 + $0x60] sm:$0xff] %v602
        %636 = vst [vmem:[%s630 + $0x78] sm:$0xff] %v603
        %637 = vst [vmem:[%s630 + $0x90] sm:$0xff] %v604
        %638 = vst [vmem:[%s630 + $0xa8] sm:$0xff] %v605
        %639 = vst [vmem:[%s630 + $0xc0] sm:$0xff] %v606
        %640 = vst [vmem:[%s630 + $0xd8] sm:$0xff] %v607
        %641 = vst [vmem:[%s630 + $0xf0] sm:$0xff] %v608
        %642 = vst [vmem:[%s630 + $0x108] sm:$0xff] %v609
        %643 = vst [vmem:[%s630 + $0x120] sm:$0xff] %v610
        %644 = vst [vmem:[%s630 + $0x138] sm:$0xff] %v611
        %645 = vst [vmem:[%s630 + $0x150] sm:$0xff] %v612
        %646 = vst [vmem:[%s630 + $0x168] sm:$0xff] %v613
        %647 = vst [vmem:[%s630 + $0x1b0] sm:$0xff] %v614
        %648 = vst [vmem:[%s630 + $0x1c8] sm:$0xff] %v615
        %649 = vst [vmem:[%s630 + $0x1e0] sm:$0xff] %v616
        %650 = vst [vmem:[%s630 + $0x1f8] sm:$0xff] %v617
        %651 = vst [vmem:[%s630 + $0x210] sm:$0xff] %v618
        %652 = vst [vmem:[%s630 + $0x228] sm:$0xff] %v619
        %653 = vst [vmem:[%s630 + $0x240] sm:$0xff] %v620
        %654 = vst [vmem:[%s630 + $0x258] sm:$0xff] %v621
        %655 = vst [vmem:[%s630 + $0x270] sm:$0xff] %v622
        %656 = vst [vmem:[%s630 + $0x288] sm:$0xff] %v623
        %657 = vst [vmem:[%s630 + $0x2a0] sm:$0xff] %v624
        %658 = vst [vmem:[%s630 + $0x2b8] sm:$0xff] %v625
        %659 = vst [vmem:[%s630 + $0x2d0] sm:$0xff] %v626
        %660 = vst [vmem:[%s630 + $0x2e8] sm:$0xff] %v627
        %661 = vst [vmem:[%s630 + $0x300] sm:$0xff] %v628
        %662 = vst [vmem:[%s630 + $0x318] sm:$0xff] %v629
        %663 = vst [vmem:[%s630 + $0x8] sm:$0xff] %v294
        %664 = vst [vmem:[%s630 + $0x20] sm:$0xff] %v295
        %665 = vst [vmem:[%s630 + $0x38] sm:$0xff] %v296
        %666 = vst [vmem:[%s630 + $0x50] sm:$0xff] %v297
        %667 = vst [vmem:[%s630 + $0x68] sm:$0xff] %v298
        %668 = vst [vmem:[%s630 + $0x80] sm:$0xff] %v299
        %669 = vst [vmem:[%s630 + $0x98] sm:$0xff] %v300
        %670 = vst [vmem:[%s630 + $0xb0] sm:$0xff] %v301
        %671 = vst [vmem:[%s630 + $0xc8] sm:$0xff] %v302
        %672 = vst [vmem:[%s630 + $0xe0] sm:$0xff] %v303
        %673 = vst [vmem:[%s630 + $0xf8] sm:$0xff] %v304
        %674 = vst [vmem:[%s630 + $0x110] sm:$0xff] %v305
        %675 = vst [vmem:[%s630 + $0x128] sm:$0xff] %v306
        %676 = vst [vmem:[%s630 + $0x140] sm:$0xff] %v307
        %677 = vst [vmem:[%s630 + $0x158] sm:$0xff] %v308
        %678 = vst [vmem:[%s630 + $0x170] sm:$0xff] %v309
        %679 = vst [vmem:[%s630 + $0x1b8] sm:$0xff] %v310
        %680 = vst [vmem:[%s630 + $0x1d0] sm:$0xff] %v311
        %681 = vst [vmem:[%s630 + $0x1e8] sm:$0xff] %v312
        %682 = vst [vmem:[%s630 + $0x200] sm:$0xff] %v313
        %683 = vst [vmem:[%s630 + $0x218] sm:$0xff] %v314
        %684 = vst [vmem:[%s630 + $0x230] sm:$0xff] %v315
        %685 = vst [vmem:[%s630 + $0x248] sm:$0xff] %v316
        %686 = vst [vmem:[%s630 + $0x260] sm:$0xff] %v317
        %687 = vst [vmem:[%s630 + $0x278] sm:$0xff] %v318
        %688 = vst [vmem:[%s630 + $0x290] sm:$0xff] %v319
        %689 = vst [vmem:[%s630 + $0x2a8] sm:$0xff] %v320
        %690 = vst [vmem:[%s630 + $0x2c0] sm:$0xff] %v321
        %691 = vst [vmem:[%s630 + $0x2d8] sm:$0xff] %v322
        %692 = vst [vmem:[%s630 + $0x2f0] sm:$0xff] %v323
        %693 = vst [vmem:[%s630 + $0x308] sm:$0xff] %v324
        %694 = vst [vmem:[%s630 + $0x320] sm:$0xff] %v325
        %v695 = vrot.slane %v343, 1
        %v696 = vor.u32 %v340, %v695
        %v697 = vrot.slane %v350, 1
        %v698 = vor.u32 %v347, %v697
        %v699 = vrot.slane %v357, 1
        %v700 = vor.u32 %v354, %v699
        %v701 = vrot.slane %v364, 1
        %v702 = vor.u32 %v361, %v701
        %v703 = vrot.slane %v371, 1
        %v704 = vor.u32 %v368, %v703
        %v705 = vrot.slane %v378, 1
        %v706 = vor.u32 %v375, %v705
        %v707 = vrot.slane %v385, 1
        %v708 = vor.u32 %v382, %v707
        %v709 = vrot.slane %v392, 1
        %v710 = vor.u32 %v389, %v709
        %v711 = vrot.slane %v399, 1
        %v712 = vor.u32 %v396, %v711
        %v713 = vrot.slane %v406, 1
        %v714 = vor.u32 %v403, %v713
        %v715 = vrot.slane %v413, 1
        %v716 = vor.u32 %v410, %v715
        %v717 = vrot.slane %v420, 1
        %v718 = vor.u32 %v417, %v717
        %v719 = vrot.slane %v427, 1
        %v720 = vor.u32 %v424, %v719
        %v721 = vrot.slane %v434, 1
        %v722 = vor.u32 %v431, %v721
        %v723 = vrot.slane %v441, 1
        %v724 = vor.u32 %v438, %v723
        %v725 = vrot.slane %v448, 1
        %v726 = vor.u32 %v445, %v725
        %v727 = vrot.slane %v455, 1
        %v728 = vor.u32 %v452, %v727
        %v729 = vrot.slane %v462, 1
        %v730 = vor.u32 %v459, %v729
        %v731 = vrot.slane %v469, 1
        %v732 = vor.u32 %v466, %v731
        %v733 = vrot.slane %v476, 1
        %v734 = vor.u32 %v473, %v733
        %v735 = vrot.slane %v483, 1
        %v736 = vor.u32 %v480, %v735
        %v737 = vrot.slane %v490, 1
        %v738 = vor.u32 %v487, %v737
        %v739 = vrot.slane %v497, 1
        %v740 = vor.u32 %v494, %v739
        %v741 = vrot.slane %v504, 1
        %v742 = vor.u32 %v501, %v741
        %v743 = vrot.slane %v511, 1
        %v744 = vor.u32 %v508, %v743
        %v745 = vrot.slane %v518, 1
        %v746 = vor.u32 %v515, %v745
        %v747 = vrot.slane %v525, 1
        %v748 = vor.u32 %v522, %v747
        %v749 = vrot.slane %v532, 1
        %v750 = vor.u32 %v529, %v749
        %v751 = vrot.slane %v539, 1
        %v752 = vor.u32 %v536, %v751
        %v753 = vrot.slane %v546, 1
        %v754 = vor.u32 %v543, %v753
        %v755 = vrot.slane %v553, 1
        %v756 = vor.u32 %v550, %v755
        %v757 = vrot.slane %v560, 1
        %v758 = vor.u32 %v557, %v757
        %vm791 = vcmask 1047552
        %vm792 = vsmask.f32 7424
        %vm793 = vmand %vm791, %vm792
        %v794 = vsel %vm793, %v696, 0
        %v795 = vsel %vm793, %v698, 0
        %v796 = vsel %vm793, %v700, 0
        %v797 = vsel %vm793, %v702, 0
        %v798 = vsel %vm793, %v704, 0
        %v799 = vsel %vm793, %v706, 0
        %v800 = vsel %vm793, %v708, 0
        %v801 = vsel %vm793, %v710, 0
        %v802 = vsel %vm793, %v712, 0
        %v803 = vsel %vm793, %v714, 0
        %v804 = vsel %vm793, %v716, 0
        %v805 = vsel %vm793, %v718, 0
        %v806 = vsel %vm793, %v720, 0
        %v807 = vsel %vm793, %v722, 0
        %v808 = vsel %vm793, %v724, 0
        %v809 = vsel %vm793, %v726, 0
        %v810 = vsel %vm793, %v728, 0
        %v811 = vsel %vm793, %v730, 0
        %v812 = vsel %vm793, %v732, 0
        %v813 = vsel %vm793, %v734, 0
        %v814 = vsel %vm793, %v736, 0
        %v815 = vsel %vm793, %v738, 0
        %v816 = vsel %vm793, %v740, 0
        %v817 = vsel %vm793, %v742, 0
        %v818 = vsel %vm793, %v744, 0
        %v819 = vsel %vm793, %v746, 0
        %v820 = vsel %vm793, %v748, 0
        %v821 = vsel %vm793, %v750, 0
        %v822 = vsel %vm793, %v752, 0
        %v823 = vsel %vm793, %v754, 0
        %v824 = vsel %vm793, %v756, 0
        %v825 = vsel %vm793, %v758, 0
        %826 = vst [vmem:[%s630 + $0x10] sm:$0xff] %v794
        %827 = vst [vmem:[%s630 + $0x28] sm:$0xff] %v795
        %828 = vst [vmem:[%s630 + $0x40] sm:$0xff] %v796
        %829 = vst [vmem:[%s630 + $0x58] sm:$0xff] %v797
        %830 = vst [vmem:[%s630 + $0x70] sm:$0xff] %v798
        %831 = vst [vmem:[%s630 + $0x88] sm:$0xff] %v799
        %832 = vst [vmem:[%s630 + $0xa0] sm:$0xff] %v800
        %833 = vst [vmem:[%s630 + $0xb8] sm:$0xff] %v801
        %834 = vst [vmem:[%s630 + $0xd0] sm:$0xff] %v802
        %835 = vst [vmem:[%s630 + $0xe8] sm:$0xff] %v803
        %836 = vst [vmem:[%s630 + $0x100] sm:$0xff] %v804
        %837 = vst [vmem:[%s630 + $0x118] sm:$0xff] %v805
        %838 = vst [vmem:[%s630 + $0x130] sm:$0xff] %v806
        %839 = vst [vmem:[%s630 + $0x148] sm:$0xff] %v807
        %840 = vst [vmem:[%s630 + $0x160] sm:$0xff] %v808
        %841 = vst [vmem:[%s630 + $0x178] sm:$0xff] %v809
        %842 = vst [vmem:[%s630 + $0x1c0] sm:$0xff] %v810
        %843 = vst [vmem:[%s630 + $0x1d8] sm:$0xff] %v811
        %844 = vst [vmem:[%s630 + $0x1f0] sm:$0xff] %v812
        %845 = vst [vmem:[%s630 + $0x208] sm:$0xff] %v813
        %846 = vst [vmem:[%s630 + $0x220] sm:$0xff] %v814
        %847 = vst [vmem:[%s630 + $0x238] sm:$0xff] %v815
        %848 = vst [vmem:[%s630 + $0x250] sm:$0xff] %v816
        %849 = vst [vmem:[%s630 + $0x268] sm:$0xff] %v817
        %850 = vst [vmem:[%s630 + $0x280] sm:$0xff] %v818
        %851 = vst [vmem:[%s630 + $0x298] sm:$0xff] %v819
        %852 = vst [vmem:[%s630 + $0x2b0] sm:$0xff] %v820
        %853 = vst [vmem:[%s630 + $0x2c8] sm:$0xff] %v821
        %854 = vst [vmem:[%s630 + $0x2e0] sm:$0xff] %v822
        %855 = vst [vmem:[%s630 + $0x2f8] sm:$0xff] %v823
        %856 = vst [vmem:[%s630 + $0x310] sm:$0xff] %v824
        %857 = vst [vmem:[%s630 + $0x328] sm:$0xff] %v825
        %v858 = vld [vmem:[#allocation2] sm:$0xff]
        %v859 = vld [vmem:[#allocation2 + $0x8] sm:$0xff]
        %v860 = vld [vmem:[#allocation2 + $0x10] sm:$0xff]
        %v861 = vld [vmem:[#allocation2 + $0x18] sm:$0xff]
        %v862 = vld [vmem:[#allocation2 + $0x20] sm:$0xff]
        %v863 = vld [vmem:[#allocation2 + $0x28] sm:$0xff]
        %v864 = vld [vmem:[#allocation2 + $0x30] sm:$0xff]
        %v865 = vld [vmem:[#allocation2 + $0x38] sm:$0xff]
        %v866 = vld [vmem:[#allocation2 + $0x40] sm:$0xff]
        %v867 = vld [vmem:[#allocation2 + $0x48] sm:$0xff]
        %v868 = vld [vmem:[#allocation2 + $0x50] sm:$0xff]
        %v869 = vld [vmem:[#allocation2 + $0x58] sm:$0xff]
        %v870 = vld [vmem:[#allocation2 + $0x60] sm:$0xff]
        %v871 = vld [vmem:[#allocation2 + $0x68] sm:$0xff]
        %v872 = vld [vmem:[#allocation2 + $0x70] sm:$0xff]
        %v873 = vld [vmem:[#allocation2 + $0x78] sm:$0xff]
        %v874 = vld [vmem:[#allocation2 + $0x80] sm:$0xff]
        %v875 = vld [vmem:[#allocation2 + $0x88] sm:$0xff]
        %v876 = vld [vmem:[#allocation2 + $0x90] sm:$0xff]
        %v877 = vld [vmem:[#allocation2 + $0x98] sm:$0xff]
        %v878 = vld [vmem:[#allocation2 + $0xa0] sm:$0xff]
        %v879 = vld [vmem:[#allocation2 + $0xa8] sm:$0xff]
        %v880 = vld [vmem:[#allocation2 + $0xb0] sm:$0xff]
        %v881 = vld [vmem:[#allocation2 + $0xb8] sm:$0xff]
        %v882 = vld [vmem:[#allocation2 + $0xc0] sm:$0xff]
        %v883 = vld [vmem:[#allocation2 + $0xc8] sm:$0xff]
        %v884 = vld [vmem:[#allocation2 + $0xd0] sm:$0xff]
        %v885 = vld [vmem:[#allocation2 + $0xd8] sm:$0xff]
        %v886 = vld [vmem:[#allocation2 + $0xe0] sm:$0xff]
        %v887 = vld [vmem:[#allocation2 + $0xe8] sm:$0xff]
        %v888 = vld [vmem:[#allocation2 + $0xf0] sm:$0xff]
        %v889 = vld [vmem:[#allocation2 + $0xf8] sm:$0xff]
        %v890 = vld [vmem:[#allocation2 + $0x100] sm:$0xff]
        %v891 = vld [vmem:[#allocation2 + $0x108] sm:$0xff]
        %v892 = vld [vmem:[#allocation2 + $0x110] sm:$0xff]
        %v893 = vld [vmem:[#allocation2 + $0x118] sm:$0xff]
        %v894 = vld [vmem:[#allocation2 + $0x120] sm:$0xff]
        %v895 = vld [vmem:[#allocation2 + $0x128] sm:$0xff]
        %v896 = vld [vmem:[#allocation2 + $0x130] sm:$0xff]
        %v897 = vld [vmem:[#allocation2 + $0x138] sm:$0xff]
        %v898 = vld [vmem:[#allocation2 + $0x140] sm:$0xff]
        %v899 = vld [vmem:[#allocation2 + $0x148] sm:$0xff]
        %v900 = vld [vmem:[#allocation2 + $0x150] sm:$0xff]
        %v901 = vld [vmem:[#allocation2 + $0x158] sm:$0xff]
        %v902 = vld [vmem:[#allocation2 + $0x160] sm:$0xff]
        %v903 = vld [vmem:[#allocation2 + $0x168] sm:$0xff]
        %v904 = vld [vmem:[#allocation2 + $0x170] sm:$0xff]
        %v905 = vld [vmem:[#allocation2 + $0x178] sm:$0xff]
        %v906 = vld [vmem:[#allocation2 + $0x1b0] sm:$0xff]
        %v907 = vld [vmem:[#allocation2 + $0x1b8] sm:$0xff]
        %v908 = vld [vmem:[#allocation2 + $0x1c0] sm:$0xff]
        %v909 = vld [vmem:[#allocation2 + $0x1c8] sm:$0xff]
        %v910 = vld [vmem:[#allocation2 + $0x1d0] sm:$0xff]
        %v911 = vld [vmem:[#allocation2 + $0x1d8] sm:$0xff]
        %v912 = vld [vmem:[#allocation2 + $0x1e0] sm:$0xff]
        %v913 = vld [vmem:[#allocation2 + $0x1e8] sm:$0xff]
        %v914 = vld [vmem:[#allocation2 + $0x1f0] sm:$0xff]
        %v915 = vld [vmem:[#allocation2 + $0x1f8] sm:$0xff]
        %v916 = vld [vmem:[#allocation2 + $0x200] sm:$0xff]
        %v917 = vld [vmem:[#allocation2 + $0x208] sm:$0xff]
        %v918 = vld [vmem:[#allocation2 + $0x210] sm:$0xff]
        %v919 = vld [vmem:[#allocation2 + $0x218] sm:$0xff]
        %v920 = vld [vmem:[#allocation2 + $0x220] sm:$0xff]
        %v921 = vld [vmem:[#allocation2 + $0x228] sm:$0xff]
        %v922 = vld [vmem:[#allocation2 + $0x230] sm:$0xff]
        %v923 = vld [vmem:[#allocation2 + $0x238] sm:$0xff]
        %v924 = vld [vmem:[#allocation2 + $0x240] sm:$0xff]
        %v925 = vld [vmem:[#allocation2 + $0x248] sm:$0xff]
        %v926 = vld [vmem:[#allocation2 + $0x250] sm:$0xff]
        %v927 = vld [vmem:[#allocation2 + $0x258] sm:$0xff]
        %v928 = vld [vmem:[#allocation2 + $0x260] sm:$0xff]
        %v929 = vld [vmem:[#allocation2 + $0x268] sm:$0xff]
        %v930 = vld [vmem:[#allocation2 + $0x270] sm:$0xff]
        %v931 = vld [vmem:[#allocation2 + $0x278] sm:$0xff]
        %v932 = vld [vmem:[#allocation2 + $0x280] sm:$0xff]
        %v933 = vld [vmem:[#allocation2 + $0x288] sm:$0xff]
        %v934 = vld [vmem:[#allocation2 + $0x290] sm:$0xff]
        %v935 = vld [vmem:[#allocation2 + $0x298] sm:$0xff]
        %v936 = vld [vmem:[#allocation2 + $0x2a0] sm:$0xff]
        %v937 = vld [vmem:[#allocation2 + $0x2a8] sm:$0xff]
        %v938 = vld [vmem:[#allocation2 + $0x2b0] sm:$0xff]
        %v939 = vld [vmem:[#allocation2 + $0x2b8] sm:$0xff]
        %v940 = vld [vmem:[#allocation2 + $0x2c0] sm:$0xff]
        %v941 = vld [vmem:[#allocation2 + $0x2c8] sm:$0xff]
        %v942 = vld [vmem:[#allocation2 + $0x2d0] sm:$0xff]
        %v943 = vld [vmem:[#allocation2 + $0x2d8] sm:$0xff]
        %v944 = vld [vmem:[#allocation2 + $0x2e0] sm:$0xff]
        %v945 = vld [vmem:[#allocation2 + $0x2e8] sm:$0xff]
        %v946 = vld [vmem:[#allocation2 + $0x2f0] sm:$0xff]
        %v947 = vld [vmem:[#allocation2 + $0x2f8] sm:$0xff]
        %v948 = vld [vmem:[#allocation2 + $0x300] sm:$0xff]
        %v949 = vld [vmem:[#allocation2 + $0x308] sm:$0xff]
        %v950 = vld [vmem:[#allocation2 + $0x310] sm:$0xff]
        %v951 = vld [vmem:[#allocation2 + $0x318] sm:$0xff]
        %v952 = vld [vmem:[#allocation2 + $0x320] sm:$0xff]
        %v953 = vld [vmem:[#allocation2 + $0x328] sm:$0xff]
        %v954 = vld [vmem:[%s1] sm:$0xf]
        %v955 = vld [vmem:[%s1 + $0x4] sm:$0xf]
        %v956 = vld [vmem:[%s1 + $0x8] sm:$0xf]
        %v957 = vld [vmem:[%s1 + $0xc] sm:$0xf]
        %v958 = vld [vmem:[%s1 + $0x10] sm:$0xf]
        %v959 = vld [vmem:[%s1 + $0x14] sm:$0xf]
        %v960 = vld [vmem:[%s1 + $0x18] sm:$0xf]
        %v961 = vld [vmem:[%s1 + $0x1c] sm:$0xf]
        %v962 = vld [vmem:[%s1 + $0x20] sm:$0xf]
        %v963 = vld [vmem:[%s1 + $0x24] sm:$0xf]
        %v964 = vld [vmem:[%s1 + $0x28] sm:$0xf]
        %v965 = vld [vmem:[%s1 + $0x2c] sm:$0xf]
        %v966 = vld [vmem:[%s1 + $0x30] sm:$0xf]
        %v967 = vld [vmem:[%s1 + $0x34] sm:$0xf]
        %v968 = vld [vmem:[%s1 + $0x38] sm:$0xf]
        %v969 = vld [vmem:[%s1 + $0x3c] sm:$0xf]
        %v970 = vld [vmem:[%s1 + $0x40] sm:$0xf]
        %v971 = vld [vmem:[%s1 + $0x44] sm:$0xf]
        %v972 = vld [vmem:[%s1 + $0x48] sm:$0xf]
        %v973 = vld [vmem:[%s1 + $0x4c] sm:$0xf]
        %v974 = vld [vmem:[%s1 + $0x50] sm:$0xf]
        %v975 = vld [vmem:[%s1 + $0x54] sm:$0xf]
        %v976 = vld [vmem:[%s1 + $0x58] sm:$0xf]
        %v977 = vld [vmem:[%s1 + $0x5c] sm:$0xf]
        %v978 = vld [vmem:[%s1 + $0x60] sm:$0xf]
        %v979 = vld [vmem:[%s1 + $0x64] sm:$0xf]
        %v980 = vld [vmem:[%s1 + $0x68] sm:$0xf]
        %v981 = vld [vmem:[%s1 + $0x6c] sm:$0xf]
        %v982 = vld [vmem:[%s1 + $0x70] sm:$0xf]
        %v983 = vld [vmem:[%s1 + $0x74] sm:$0xf]
        %v984 = vld [vmem:[%s1 + $0x78] sm:$0xf]
        %v985 = vld [vmem:[%s1 + $0x7c] sm:$0xf]
        %v986 = vld [vmem:[%s1 + $0x80] sm:$0xf]
        %v987 = vld [vmem:[%s1 + $0x84] sm:$0xf]
        %v988 = vld [vmem:[%s1 + $0x88] sm:$0xf]
        %v989 = vld [vmem:[%s1 + $0x8c] sm:$0xf]
        %v990 = vld [vmem:[%s1 + $0x90] sm:$0xf]
        %v991 = vld [vmem:[%s1 + $0x94] sm:$0xf]
        %v992 = vld [vmem:[%s1 + $0x98] sm:$0xf]
        %v993 = vld [vmem:[%s1 + $0x9c] sm:$0xf]
        %v994 = vld [vmem:[%s1 + $0xa0] sm:$0xf]
        %v995 = vld [vmem:[%s1 + $0xa4] sm:$0xf]
        %v996 = vld [vmem:[%s1 + $0xa8] sm:$0xf]
        %v997 = vld [vmem:[%s1 + $0xac] sm:$0xf]
        %v998 = vld [vmem:[%s1 + $0xb0] sm:$0xf]
        %v999 = vld [vmem:[%s1 + $0xb4] sm:$0xf]
        %v1000 = vld [vmem:[%s1 + $0xb8] sm:$0xf]
        %v1001 = vld [vmem:[%s1 + $0xbc] sm:$0xf]
        %v1050 = vunpack.c.l.b16 %v954
        %v1051 = vunpack.c.l.b16 %v955
        %v1052 = vunpack.c.l.b16 %v956
        %v1053 = vunpack.c.l.b16 %v957
        %v1054 = vunpack.c.l.b16 %v958
        %v1055 = vunpack.c.l.b16 %v959
        %v1056 = vunpack.c.l.b16 %v960
        %v1057 = vunpack.c.l.b16 %v961
        %v1058 = vunpack.c.l.b16 %v962
        %v1059 = vunpack.c.l.b16 %v963
        %v1060 = vunpack.c.l.b16 %v964
        %v1061 = vunpack.c.l.b16 %v965
        %v1062 = vunpack.c.l.b16 %v966
        %v1063 = vunpack.c.l.b16 %v967
        %v1064 = vunpack.c.l.b16 %v968
        %v1065 = vunpack.c.l.b16 %v969
        %v1066 = vunpack.c.l.b16 %v970
        %v1067 = vunpack.c.l.b16 %v971
        %v1068 = vunpack.c.l.b16 %v972
        %v1069 = vunpack.c.l.b16 %v973
        %v1070 = vunpack.c.l.b16 %v974
        %v1071 = vunpack.c.l.b16 %v975
        %v1072 = vunpack.c.l.b16 %v976
        %v1073 = vunpack.c.l.b16 %v977
        %v1074 = vunpack.c.l.b16 %v978
        %v1075 = vunpack.c.l.b16 %v979
        %v1076 = vunpack.c.l.b16 %v980
        %v1077 = vunpack.c.l.b16 %v981
        %v1078 = vunpack.c.l.b16 %v982
        %v1079 = vunpack.c.l.b16 %v983
        %v1080 = vunpack.c.l.b16 %v984
        %v1081 = vunpack.c.l.b16 %v985
        %v1082 = vunpack.c.l.b16 %v986
        %v1083 = vunpack.c.l.b16 %v987
        %v1084 = vunpack.c.l.b16 %v988
        %v1085 = vunpack.c.l.b16 %v989
        %v1086 = vunpack.c.l.b16 %v990
        %v1087 = vunpack.c.l.b16 %v991
        %v1088 = vunpack.c.l.b16 %v992
        %v1089 = vunpack.c.l.b16 %v993
        %v1090 = vunpack.c.l.b16 %v994
        %v1091 = vunpack.c.l.b16 %v995
        %v1092 = vunpack.c.l.b16 %v996
        %v1093 = vunpack.c.l.b16 %v997
        %v1094 = vunpack.c.l.b16 %v998
        %v1095 = vunpack.c.l.b16 %v999
        %v1096 = vunpack.c.l.b16 %v1000
        %v1097 = vunpack.c.l.b16 %v1001
        %v1098 = vpack.c.b16 %v1051, %v1050
        %v1099 = vpack.c.b16 %v1053, %v1052
        %v1100 = vpack.c.b16 %v1055, %v1054
        %v1101 = vpack.c.b16 %v1057, %v1056
        %v1102 = vpack.c.b16 %v1059, %v1058
        %v1103 = vpack.c.b16 %v1061, %v1060
        %v1104 = vpack.c.b16 %v1063, %v1062
        %v1105 = vpack.c.b16 %v1065, %v1064
        %v1106 = vpack.c.b16 %v1067, %v1066
        %v1107 = vpack.c.b16 %v1069, %v1068
        %v1108 = vpack.c.b16 %v1071, %v1070
        %v1109 = vpack.c.b16 %v1073, %v1072
        %v1110 = vpack.c.b16 %v1075, %v1074
        %v1111 = vpack.c.b16 %v1077, %v1076
        %v1112 = vpack.c.b16 %v1079, %v1078
        %v1113 = vpack.c.b16 %v1081, %v1080
        %v1114 = vpack.c.b16 %v1083, %v1082
        %v1115 = vpack.c.b16 %v1085, %v1084
        %v1116 = vpack.c.b16 %v1087, %v1086
        %v1117 = vpack.c.b16 %v1089, %v1088
        %v1118 = vpack.c.b16 %v1091, %v1090
        %v1119 = vpack.c.b16 %v1093, %v1092
        %v1120 = vpack.c.b16 %v1095, %v1094
        %v1121 = vpack.c.b16 %v1097, %v1096
        %1146 = vmatprep.subr.bf16.mxu0 0
        %1147 = vmatpush1.bf16.msra.mxu0 %v1098
        %1148 = vmatprep.subr.bf16.mxu0 0
        %1149 = vmatpush1.bf16.msra.mxu0 %v1099
        %1150 = vmatprep.subr.bf16.mxu0 0
        %1151 = vmatpush1.bf16.msra.mxu0 %v1100
        %1152 = vmatprep.subr.bf16.mxu0 0
        %1153 = vmatpush1.bf16.msra.mxu0 %v1101
        %1154 = vmatprep.subr.bf16.mxu0 0
        %1155 = vmatpush1.bf16.msra.mxu0 %v1102
        %1156 = vmatprep.subr.bf16.mxu0 0
        %1157 = vmatpush1.bf16.msra.mxu0 %v1103
        %1158 = vmatprep.subr.bf16.mxu0 0
        %1159 = vmatpush1.bf16.msra.mxu0 %v1104
        %1160 = vmatprep.subr.bf16.mxu0 0
        %1161 = vmatpush1.bf16.msra.mxu0 %v1105
        %1162 = vmatprep.subr.bf16.mxu0 0
        %1163 = vmatpush1.bf16.msra.mxu0 %v1106
        %1164 = vmatprep.subr.bf16.mxu0 0
        %1165 = vmatpush1.bf16.msra.mxu0 %v1107
        %1166 = vmatprep.subr.bf16.mxu0 0
        %1167 = vmatpush1.bf16.msra.mxu0 %v1108
        %1168 = vmatprep.subr.bf16.mxu0 0
        %1169 = vmatpush1.bf16.msra.mxu0 %v1109
        %1170 = vmatprep.subr.bf16.mxu0 0
        %1171 = vmatpush1.bf16.msra.mxu0 %v1110
        %1172 = vmatprep.subr.bf16.mxu0 0
        %1173 = vmatpush1.bf16.msra.mxu0 %v1111
        %1174 = vmatprep.subr.bf16.mxu0 0
        %1175 = vmatpush1.bf16.msra.mxu0 %v1112
        %1176 = vmatprep.subr.bf16.mxu0 0
        %1177 = vmatpush1.bf16.msra.mxu0 %v1113
        %1178 = vmatprep.mubr.bf16.mxu0 %v859
        %1179 = vmatmul.mubr.bf16.gmra.mrb[0].mxu0 %v858
        %v1180 = vpop.f32.mrb[0].mxu0
        %v1181 = vadd.f32 0.0, %v1180
        %v1182 = vpop.f32.mrb[0].mxu0
        %v1183 = vpop.f32.mrb[0].mxu0
        %v1184 = vadd.f32 0.0, %v1183
        %v1185 = vpop.f32.mrb[0].mxu0
        %1186 = vmatprep.mubr.bf16.mxu0 %v862
        %1187 = vmatmul.mubr.bf16.gmra.mrb[0].mxu0 %v861
        %v1188 = vpop.f32.mrb[0].mxu0
        %v1189 = vadd.f32 0.0, %v1188
        %v1190 = vpop.f32.mrb[0].mxu0
        %v1191 = vpop.f32.mrb[0].mxu0
        %v1192 = vadd.f32 0.0, %v1191
        %v1193 = vpop.f32.mrb[0].mxu0
        %1194 = vmatprep.mubr.bf16.mxu0 %v865
        %1195 = vmatmul.mubr.bf16.gmra.mrb[0].mxu0 %v864
        %v1196 = vpop.f32.mrb[0].mxu0
        %v1197 = vadd.f32 0.0, %v1196
        %v1198 = vpop.f32.mrb[0].mxu0
        %v1199 = vpop.f32.mrb[0].mxu0
        %v1200 = vadd.f32 0.0, %v1199
        %v1201 = vpop.f32.mrb[0].mxu0
        %1202 = vmatprep.mubr.bf16.mxu0 %v868
        %1203 = vmatmul.mubr.bf16.gmra.mrb[0].mxu0 %v867
        %v1204 = vpop.f32.mrb[0].mxu0
        %v1205 = vadd.f32 0.0, %v1204
        %v1206 = vpop.f32.mrb[0].mxu0
        %v1207 = vpop.f32.mrb[0].mxu0
        %v1208 = vadd.f32 0.0, %v1207
        %v1209 = vpop.f32.mrb[0].mxu0
        %1210 = vmatprep.mubr.bf16.mxu0 %v871
        %1211 = vmatmul.mubr.bf16.gmra.mrb[0].mxu0 %v870
        %v1212 = vpop.f32.mrb[0].mxu0
        %v1213 = vadd.f32 0.0, %v1212
        %v1214 = vpop.f32.mrb[0].mxu0
        %v1215 = vpop.f32.mrb[0].mxu0
        %v1216 = vadd.f32 0.0, %v1215
        %v1217 = vpop.f32.mrb[0].mxu0
        %1218 = vmatprep.mubr.bf16.mxu0 %v874
        %1219 = vmatmul.mubr.bf16.gmra.mrb[0].mxu0 %v873
        %v1220 = vpop.f32.mrb[0].mxu0
        %v1221 = vadd.f32 0.0, %v1220
        %v1222 = vpop.f32.mrb[0].mxu0
        %v1223 = vpop.f32.mrb[0].mxu0
        %v1224 = vadd.f32 0.0, %v1223
        %v1225 = vpop.f32.mrb[0].mxu0
        %1226 = vmatprep.mubr.bf16.mxu0 %v877
        %1227 = vmatmul.mubr.bf16.gmra.mrb[0].mxu0 %v876
        %v1228 = vpop.f32.mrb[0].mxu0
        %v1229 = vadd.f32 0.0, %v1228
        %v1230 = vpop.f32.mrb[0].mxu0
        %v1231 = vpop.f32.mrb[0].mxu0
        %v1232 = vadd.f32 0.0, %v1231
        %v1233 = vpop.f32.mrb[0].mxu0
        %1234 = vmatprep.mubr.bf16.mxu0 %v880
        %1235 = vmatmul.mubr.bf16.gmra.mrb[0].mxu0 %v879
        %v1236 = vpop.f32.mrb[0].mxu0
        %v1237 = vadd.f32 0.0, %v1236
        %v1238 = vpop.f32.mrb[0].mxu0
        %v1239 = vpop.f32.mrb[0].mxu0
        %v1240 = vadd.f32 0.0, %v1239
        %v1241 = vpop.f32.mrb[0].mxu0
        %1242 = vmatprep.mubr.bf16.mxu0 %v883
        %1243 = vmatmul.mubr.bf16.gmra.mrb[0].mxu0 %v882
        %v1244 = vpop.f32.mrb[0].mxu0
        %v1245 = vadd.f32 0.0, %v1244
        %v1246 = vpop.f32.mrb[0].mxu0
        %v1247 = vpop.f32.mrb[0].mxu0
        %v1248 = vadd.f32 0.0, %v1247
        %v1249 = vpop.f32.mrb[0].mxu0
        %1250 = vmatprep.mubr.bf16.mxu0 %v886
        %1251 = vmatmul.mubr.bf16.gmra.mrb[0].mxu0 %v885
        %v1252 = vpop.f32.mrb[0].mxu0
        %v1253 = vadd.f32 0.0, %v1252
        %v1254 = vpop.f32.mrb[0].mxu0
        %v1255 = vpop.f32.mrb[0].mxu0
        %v1256 = vadd.f32 0.0, %v1255
        %v1257 = vpop.f32.mrb[0].mxu0
        %1258 = vmatprep.mubr.bf16.mxu0 %v889
        %1259 = vmatmul.mubr.bf16.gmra.mrb[0].mxu0 %v888
        %v1260 = vpop.f32.mrb[0].mxu0
        %v1261 = vadd.f32 0.0, %v1260
        %v1262 = vpop.f32.mrb[0].mxu0
        %v1263 = vpop.f32.mrb[0].mxu0
        %v1264 = vadd.f32 0.0, %v1263
        %v1265 = vpop.f32.mrb[0].mxu0
        %1266 = vmatprep.mubr.bf16.mxu0 %v892
        %1267 = vmatmul.mubr.bf16.gmra.mrb[0].mxu0 %v891
        %v1268 = vpop.f32.mrb[0].mxu0
        %v1269 = vadd.f32 0.0, %v1268
        %v1270 = vpop.f32.mrb[0].mxu0
        %v1271 = vpop.f32.mrb[0].mxu0
        %v1272 = vadd.f32 0.0, %v1271
        %v1273 = vpop.f32.mrb[0].mxu0
        %1274 = vmatprep.mubr.bf16.mxu0 %v895
        %1275 = vmatmul.mubr.bf16.gmra.mrb[0].mxu0 %v894
        %v1276 = vpop.f32.mrb[0].mxu0
        %v1277 = vadd.f32 0.0, %v1276
        %v1278 = vpop.f32.mrb[0].mxu0
        %v1279 = vpop.f32.mrb[0].mxu0
        %v1280 = vadd.f32 0.0, %v1279
        %v1281 = vpop.f32.mrb[0].mxu0
        %1282 = vmatprep.mubr.bf16.mxu0 %v898
        %1283 = vmatmul.mubr.bf16.gmra.mrb[0].mxu0 %v897
        %v1284 = vpop.f32.mrb[0].mxu0
        %v1285 = vadd.f32 0.0, %v1284
        %v1286 = vpop.f32.mrb[0].mxu0
        %v1287 = vpop.f32.mrb[0].mxu0
        %v1288 = vadd.f32 0.0, %v1287
        %v1289 = vpop.f32.mrb[0].mxu0
        %1290 = vmatprep.mubr.bf16.mxu0 %v901
        %1291 = vmatmul.mubr.bf16.gmra.mrb[0].mxu0 %v900
        %v1292 = vpop.f32.mrb[0].mxu0
        %v1293 = vadd.f32 0.0, %v1292
        %v1294 = vpop.f32.mrb[0].mxu0
        %v1295 = vpop.f32.mrb[0].mxu0
        %v1296 = vadd.f32 0.0, %v1295
        %v1297 = vpop.f32.mrb[0].mxu0
        %1298 = vmatprep.mubr.bf16.mxu0 %v904
        %1299 = vmatmul.mubr.bf16.gmra.mrb[0].mxu0 %v903
        %v1300 = vpop.f32.mrb[0].mxu0
        %v1301 = vadd.f32 0.0, %v1300
        %v1302 = vpop.f32.mrb[0].mxu0
        %v1303 = vpop.f32.mrb[0].mxu0
        %v1304 = vadd.f32 0.0, %v1303
        %v1305 = vpop.f32.mrb[0].mxu0
        %1306 = vmatprep.mubr.bf16.mxu0 %v907
        %1307 = vmatmul.mubr.bf16.gmra.mrb[0].mxu0 %v906
        %v1308 = vpop.f32.mrb[0].mxu0
        %v1309 = vadd.f32 0.0, %v1308
        %v1310 = vpop.f32.mrb[0].mxu0
        %v1311 = vpop.f32.mrb[0].mxu0
        %v1312 = vadd.f32 0.0, %v1311
        %v1313 = vpop.f32.mrb[0].mxu0
        %1314 = vmatprep.mubr.bf16.mxu0 %v910
        %1315 = vmatmul.mubr.bf16.gmra.mrb[0].mxu0 %v909
        %v1316 = vpop.f32.mrb[0].mxu0
        %v1317 = vadd.f32 0.0, %v1316
        %v1318 = vpop.f32.mrb[0].mxu0
        %v1319 = vpop.f32.mrb[0].mxu0
        %v1320 = vadd.f32 0.0, %v1319
        %v1321 = vpop.f32.mrb[0].mxu0
        %1322 = vmatprep.mubr.bf16.mxu0 %v913
        %1323 = vmatmul.mubr.bf16.gmra.mrb[0].mxu0 %v912
        %v1324 = vpop.f32.mrb[0].mxu0
        %v1325 = vadd.f32 0.0, %v1324
        %v1326 = vpop.f32.mrb[0].mxu0
        %v1327 = vpop.f32.mrb[0].mxu0
        %v1328 = vadd.f32 0.0, %v1327
        %v1329 = vpop.f32.mrb[0].mxu0
        %1330 = vmatprep.mubr.bf16.mxu0 %v916
        %1331 = vmatmul.mubr.bf16.gmra.mrb[0].mxu0 %v915
        %v1332 = vpop.f32.mrb[0].mxu0
        %v1333 = vadd.f32 0.0, %v1332
        %v1334 = vpop.f32.mrb[0].mxu0
        %v1335 = vpop.f32.mrb[0].mxu0
        %v1336 = vadd.f32 0.0, %v1335
        %v1337 = vpop.f32.mrb[0].mxu0
        %1338 = vmatprep.mubr.bf16.mxu0 %v919
        %1339 = vmatmul.mubr.bf16.gmra.mrb[0].mxu0 %v918
        %v1340 = vpop.f32.mrb[0].mxu0
        %v1341 = vadd.f32 0.0, %v1340
        %v1342 = vpop.f32.mrb[0].mxu0
        %v1343 = vpop.f32.mrb[0].mxu0
        %v1344 = vadd.f32 0.0, %v1343
        %v1345 = vpop.f32.mrb[0].mxu0
        %1346 = vmatprep.mubr.bf16.mxu0 %v922
        %1347 = vmatmul.mubr.bf16.gmra.mrb[0].mxu0 %v921
        %v1348 = vpop.f32.mrb[0].mxu0
        %v1349 = vadd.f32 0.0, %v1348
        %v1350 = vpop.f32.mrb[0].mxu0
        %v1351 = vpop.f32.mrb[0].mxu0
        %v1352 = vadd.f32 0.0, %v1351
        %v1353 = vpop.f32.mrb[0].mxu0
        %1354 = vmatprep.mubr.bf16.mxu0 %v925
        %1355 = vmatmul.mubr.bf16.gmra.mrb[0].mxu0 %v924
        %v1356 = vpop.f32.mrb[0].mxu0
        %v1357 = vadd.f32 0.0, %v1356
        %v1358 = vpop.f32.mrb[0].mxu0
        %v1359 = vpop.f32.mrb[0].mxu0
        %v1360 = vadd.f32 0.0, %v1359
        %v1361 = vpop.f32.mrb[0].mxu0
        %1362 = vmatprep.mubr.bf16.mxu0 %v928
        %1363 = vmatmul.mubr.bf16.gmra.mrb[0].mxu0 %v927
        %v1364 = vpop.f32.mrb[0].mxu0
        %v1365 = vadd.f32 0.0, %v1364
        %v1366 = vpop.f32.mrb[0].mxu0
        %v1367 = vpop.f32.mrb[0].mxu0
        %v1368 = vadd.f32 0.0, %v1367
        %v1369 = vpop.f32.mrb[0].mxu0
        %1370 = vmatprep.mubr.bf16.mxu0 %v931
        %1371 = vmatmul.mubr.bf16.gmra.mrb[0].mxu0 %v930
        %v1372 = vpop.f32.mrb[0].mxu0
        %v1373 = vadd.f32 0.0, %v1372
        %v1374 = vpop.f32.mrb[0].mxu0
        %v1375 = vpop.f32.mrb[0].mxu0
        %v1376 = vadd.f32 0.0, %v1375
        %v1377 = vpop.f32.mrb[0].mxu0
        %1378 = vmatprep.mubr.bf16.mxu0 %v934
        %1379 = vmatmul.mubr.bf16.gmra.mrb[0].mxu0 %v933
        %v1380 = vpop.f32.mrb[0].mxu0
        %v1381 = vadd.f32 0.0, %v1380
        %v1382 = vpop.f32.mrb[0].mxu0
        %v1383 = vpop.f32.mrb[0].mxu0
        %v1384 = vadd.f32 0.0, %v1383
        %v1385 = vpop.f32.mrb[0].mxu0
        %1386 = vmatprep.mubr.bf16.mxu0 %v937
        %1387 = vmatmul.mubr.bf16.gmra.mrb[0].mxu0 %v936
        %v1388 = vpop.f32.mrb[0].mxu0
        %v1389 = vadd.f32 0.0, %v1388
        %v1390 = vpop.f32.mrb[0].mxu0
        %v1391 = vpop.f32.mrb[0].mxu0
        %v1392 = vadd.f32 0.0, %v1391
        %v1393 = vpop.f32.mrb[0].mxu0
        %1394 = vmatprep.mubr.bf16.mxu0 %v940
        %1395 = vmatmul.mubr.bf16.gmra.mrb[0].mxu0 %v939
        %v1396 = vpop.f32.mrb[0].mxu0
        %v1397 = vadd.f32 0.0, %v1396
        %v1398 = vpop.f32.mrb[0].mxu0
        %v1399 = vpop.f32.mrb[0].mxu0
        %v1400 = vadd.f32 0.0, %v1399
        %v1401 = vpop.f32.mrb[0].mxu0
        %1402 = vmatprep.mubr.bf16.mxu0 %v943
        %1403 = vmatmul.mubr.bf16.gmra.mrb[0].mxu0 %v942
        %v1404 = vpop.f32.mrb[0].mxu0
        %v1405 = vadd.f32 0.0, %v1404
        %v1406 = vpop.f32.mrb[0].mxu0
        %v1407 = vpop.f32.mrb[0].mxu0
        %v1408 = vadd.f32 0.0, %v1407
        %v1409 = vpop.f32.mrb[0].mxu0
        %1410 = vmatprep.mubr.bf16.mxu0 %v946
        %1411 = vmatmul.mubr.bf16.gmra.mrb[0].mxu0 %v945
        %v1412 = vpop.f32.mrb[0].mxu0
        %v1413 = vadd.f32 0.0, %v1412
        %v1414 = vpop.f32.mrb[0].mxu0
        %v1415 = vpop.f32.mrb[0].mxu0
        %v1416 = vadd.f32 0.0, %v1415
        %v1417 = vpop.f32.mrb[0].mxu0
        %1418 = vmatprep.mubr.bf16.mxu0 %v949
        %1419 = vmatmul.mubr.bf16.gmra.mrb[0].mxu0 %v948
        %v1420 = vpop.f32.mrb[0].mxu0
        %v1421 = vadd.f32 0.0, %v1420
        %v1422 = vpop.f32.mrb[0].mxu0
        %v1423 = vpop.f32.mrb[0].mxu0
        %v1424 = vadd.f32 0.0, %v1423
        %v1425 = vpop.f32.mrb[0].mxu0
        %1426 = vmatprep.mubr.bf16.mxu0 %v952
        %1427 = vmatmul.mubr.bf16.gmra.mrb[0].mxu0 %v951
        %v1428 = vpop.f32.mrb[0].mxu0
        %v1429 = vadd.f32 0.0, %v1428
        %v1430 = vpop.f32.mrb[0].mxu0
        %v1431 = vpop.f32.mrb[0].mxu0
        %v1432 = vadd.f32 0.0, %v1431
        %v1433 = vpop.f32.mrb[0].mxu0
        %1434 = vdwg.mxu0
        %1435 = vmatprep.subr.bf16.mxu0 0
        %1436 = vmatpush1.bf16.msra.mxu0 %v1114
        %1437 = vmatprep.subr.bf16.mxu0 0
        %1438 = vmatpush1.bf16.msra.mxu0 %v1115
        %1439 = vmatprep.subr.bf16.mxu0 0
        %1440 = vmatpush1.bf16.msra.mxu0 %v1116
        %1441 = vmatprep.subr.bf16.mxu0 0
        %1442 = vmatpush1.bf16.msra.mxu0 %v1117
        %1443 = vmatprep.subr.bf16.mxu0 0
        %1444 = vmatpush1.bf16.msra.mxu0 %v1118
        %1445 = vmatprep.subr.bf16.mxu0 0
        %1446 = vmatpush1.bf16.msra.mxu0 %v1119
        %1447 = vmatprep.subr.bf16.mxu0 0
        %1448 = vmatpush1.bf16.msra.mxu0 %v1120
        %1449 = vmatprep.subr.bf16.mxu0 0
        %1450 = vmatpush1.bf16.msra.mxu0 %v1121
        %1451 = vmatprep.subr.bf16.mxu0 0
        %1452 = vmatpush1.bf16.msra.mxu0 0
        %1453 = vmatprep.subr.bf16.mxu0 0
        %1454 = vmatpush1.bf16.msra.mxu0 0
        %1455 = vmatprep.subr.bf16.mxu0 0
        %1456 = vmatpush1.bf16.msra.mxu0 0
        %1457 = vmatprep.subr.bf16.mxu0 0
        %1458 = vmatpush1.bf16.msra.mxu0 0
        %1459 = vmatprep.subr.bf16.mxu0 0
        %1460 = vmatpush1.bf16.msra.mxu0 0
        %1461 = vmatprep.subr.bf16.mxu0 0
        %1462 = vmatpush1.bf16.msra.mxu0 0
        %1463 = vmatprep.subr.bf16.mxu0 0
        %1464 = vmatpush1.bf16.msra.mxu0 0
        %1465 = vmatprep.subr.bf16.mxu0 0
        %1466 = vmatpush1.bf16.msra.mxu0 0
        %1467 = vmatprep.mubr.bf16.mxu0 0
        %1468 = vmatmul.mubr.bf16.gmra.mrb[0].mxu0 %v860
        %v1469 = vpop.f32.mrb[0].mxu0
        %v1470 = vadd.f32 %v1181, %v1469
        %v1471 = vpop.f32.mrb[0].mxu0
        %v1472 = vpop.f32.mrb[0].mxu0
        %v1473 = vadd.f32 %v1184, %v1472
        %v1474 = vpop.f32.mrb[0].mxu0
        %1475 = vmatprep.mubr.bf16.mxu0 0
        %1476 = vmatmul.mubr.bf16.gmra.mrb[0].mxu0 %v863
        %v1477 = vpop.f32.mrb[0].mxu0
        %v1478 = vadd.f32 %v1189, %v1477
        %v1479 = vpop.f32.mrb[0].mxu0
        %v1480 = vpop.f32.mrb[0].mxu0
        %v1481 = vadd.f32 %v1192, %v1480
        %v1482 = vpop.f32.mrb[0].mxu0
        %1483 = vmatprep.mubr.bf16.mxu0 0
        %1484 = vmatmul.mubr.bf16.gmra.mrb[0].mxu0 %v866
        %v1485 = vpop.f32.mrb[0].mxu0
        %v1486 = vadd.f32 %v1197, %v1485
        %v1487 = vpop.f32.mrb[0].mxu0
        %v1488 = vpop.f32.mrb[0].mxu0
        %v1489 = vadd.f32 %v1200, %v1488
        %v1490 = vpop.f32.mrb[0].mxu0
        %1491 = vmatprep.mubr.bf16.mxu0 0
        %1492 = vmatmul.mubr.bf16.gmra.mrb[0].mxu0 %v869
        %v1493 = vpop.f32.mrb[0].mxu0
        %v1494 = vadd.f32 %v1205, %v1493
        %v1495 = vpop.f32.mrb[0].mxu0
        %v1496 = vpop.f32.mrb[0].mxu0
        %v1497 = vadd.f32 %v1208, %v1496
        %v1498 = vpop.f32.mrb[0].mxu0
        %1499 = vmatprep.mubr.bf16.mxu0 0
        %1500 = vmatmul.mubr.bf16.gmra.mrb[0].mxu0 %v872
        %v1501 = vpop.f32.mrb[0].mxu0
        %v1502 = vadd.f32 %v1213, %v1501
        %v1503 = vpop.f32.mrb[0].mxu0
        %v1504 = vpop.f32.mrb[0].mxu0
        %v1505 = vadd.f32 %v1216, %v1504
        %v1506 = vpop.f32.mrb[0].mxu0
        %1507 = vmatprep.mubr.bf16.mxu0 0
        %1508 = vmatmul.mubr.bf16.gmra.mrb[0].mxu0 %v875
        %v1509 = vpop.f32.mrb[0].mxu0
        %v1510 = vadd.f32 %v1221, %v1509
        %v1511 = vpop.f32.mrb[0].mxu0
        %v1512 = vpop.f32.mrb[0].mxu0
        %v1513 = vadd.f32 %v1224, %v1512
        %v1514 = vpop.f32.mrb[0].mxu0
        %1515 = vmatprep.mubr.bf16.mxu0 0
        %1516 = vmatmul.mubr.bf16.gmra.mrb[0].mxu0 %v878
        %v1517 = vpop.f32.mrb[0].mxu0
        %v1518 = vadd.f32 %v1229, %v1517
        %v1519 = vpop.f32.mrb[0].mxu0
        %v1520 = vpop.f32.mrb[0].mxu0
        %v1521 = vadd.f32 %v1232, %v1520
        %v1522 = vpop.f32.mrb[0].mxu0
        %1523 = vmatprep.mubr.bf16.mxu0 0
        %1524 = vmatmul.mubr.bf16.gmra.mrb[0].mxu0 %v881
        %v1525 = vpop.f32.mrb[0].mxu0
        %v1526 = vadd.f32 %v1237, %v1525
        %v1527 = vpop.f32.mrb[0].mxu0
        %v1528 = vpop.f32.mrb[0].mxu0
        %v1529 = vadd.f32 %v1240, %v1528
        %v1530 = vpop.f32.mrb[0].mxu0
        %1531 = vmatprep.mubr.bf16.mxu0 0
        %1532 = vmatmul.mubr.bf16.gmra.mrb[0].mxu0 %v884
        %v1533 = vpop.f32.mrb[0].mxu0
        %v1534 = vadd.f32 %v1245, %v1533
        %v1535 = vpop.f32.mrb[0].mxu0
        %v1536 = vpop.f32.mrb[0].mxu0
        %v1537 = vadd.f32 %v1248, %v1536
        %v1538 = vpop.f32.mrb[0].mxu0
        %1539 = vmatprep.mubr.bf16.mxu0 0
        %1540 = vmatmul.mubr.bf16.gmra.mrb[0].mxu0 %v887
        %v1541 = vpop.f32.mrb[0].mxu0
        %v1542 = vadd.f32 %v1253, %v1541
        %v1543 = vpop.f32.mrb[0].mxu0
        %v1544 = vpop.f32.mrb[0].mxu0
        %v1545 = vadd.f32 %v1256, %v1544
        %v1546 = vpop.f32.mrb[0].mxu0
        %1547 = vmatprep.mubr.bf16.mxu0 0
        %1548 = vmatmul.mubr.bf16.gmra.mrb[0].mxu0 %v890
        %v1549 = vpop.f32.mrb[0].mxu0
        %v1550 = vadd.f32 %v1261, %v1549
        %v1551 = vpop.f32.mrb[0].mxu0
        %v1552 = vpop.f32.mrb[0].mxu0
        %v1553 = vadd.f32 %v1264, %v1552
        %v1554 = vpop.f32.mrb[0].mxu0
        %1555 = vmatprep.mubr.bf16.mxu0 0
        %1556 = vmatmul.mubr.bf16.gmra.mrb[0].mxu0 %v893
        %v1557 = vpop.f32.mrb[0].mxu0
        %v1558 = vadd.f32 %v1269, %v1557
        %v1559 = vpop.f32.mrb[0].mxu0
        %v1560 = vpop.f32.mrb[0].mxu0
        %v1561 = vadd.f32 %v1272, %v1560
        %v1562 = vpop.f32.mrb[0].mxu0
        %1563 = vmatprep.mubr.bf16.mxu0 0
        %1564 = vmatmul.mubr.bf16.gmra.mrb[0].mxu0 %v896
        %v1565 = vpop.f32.mrb[0].mxu0
        %v1566 = vadd.f32 %v1277, %v1565
        %v1567 = vpop.f32.mrb[0].mxu0
        %v1568 = vpop.f32.mrb[0].mxu0
        %v1569 = vadd.f32 %v1280, %v1568
        %v1570 = vpop.f32.mrb[0].mxu0
        %1571 = vmatprep.mubr.bf16.mxu0 0
        %1572 = vmatmul.mubr.bf16.gmra.mrb[0].mxu0 %v899
        %v1573 = vpop.f32.mrb[0].mxu0
        %v1574 = vadd.f32 %v1285, %v1573
        %v1575 = vpop.f32.mrb[0].mxu0
        %v1576 = vpop.f32.mrb[0].mxu0
        %v1577 = vadd.f32 %v1288, %v1576
        %v1578 = vpop.f32.mrb[0].mxu0
        %1579 = vmatprep.mubr.bf16.mxu0 0
        %1580 = vmatmul.mubr.bf16.gmra.mrb[0].mxu0 %v902
        %v1581 = vpop.f32.mrb[0].mxu0
        %v1582 = vadd.f32 %v1293, %v1581
        %v1583 = vpop.f32.mrb[0].mxu0
        %v1584 = vpop.f32.mrb[0].mxu0
        %v1585 = vadd.f32 %v1296, %v1584
        %v1586 = vpop.f32.mrb[0].mxu0
        %1587 = vmatprep.mubr.bf16.mxu0 0
        %1588 = vmatmul.mubr.bf16.gmra.mrb[0].mxu0 %v905
        %v1589 = vpop.f32.mrb[0].mxu0
        %v1590 = vadd.f32 %v1301, %v1589
        %v1591 = vpop.f32.mrb[0].mxu0
        %v1592 = vpop.f32.mrb[0].mxu0
        %v1593 = vadd.f32 %v1304, %v1592
        %v1594 = vpop.f32.mrb[0].mxu0
        %1595 = vmatprep.mubr.bf16.mxu0 0
        %1596 = vmatmul.mubr.bf16.gmra.mrb[0].mxu0 %v908
        %v1597 = vpop.f32.mrb[0].mxu0
        %v1598 = vadd.f32 %v1309, %v1597
        %v1599 = vpop.f32.mrb[0].mxu0
        %v1600 = vpop.f32.mrb[0].mxu0
        %v1601 = vadd.f32 %v1312, %v1600
        %v1602 = vpop.f32.mrb[0].mxu0
        %1603 = vmatprep.mubr.bf16.mxu0 0
        %1604 = vmatmul.mubr.bf16.gmra.mrb[0].mxu0 %v911
        %v1605 = vpop.f32.mrb[0].mxu0
        %v1606 = vadd.f32 %v1317, %v1605
        %v1607 = vpop.f32.mrb[0].mxu0
        %v1608 = vpop.f32.mrb[0].mxu0
        %v1609 = vadd.f32 %v1320, %v1608
        %v1610 = vpop.f32.mrb[0].mxu0
        %1611 = vmatprep.mubr.bf16.mxu0 0
        %1612 = vmatmul.mubr.bf16.gmra.mrb[0].mxu0 %v914
        %v1613 = vpop.f32.mrb[0].mxu0
        %v1614 = vadd.f32 %v1325, %v1613
        %v1615 = vpop.f32.mrb[0].mxu0
        %v1616 = vpop.f32.mrb[0].mxu0
        %v1617 = vadd.f32 %v1328, %v1616
        %v1618 = vpop.f32.mrb[0].mxu0
        %1619 = vmatprep.mubr.bf16.mxu0 0
        %1620 = vmatmul.mubr.bf16.gmra.mrb[0].mxu0 %v917
        %v1621 = vpop.f32.mrb[0].mxu0
        %v1622 = vadd.f32 %v1333, %v1621
        %v1623 = vpop.f32.mrb[0].mxu0
        %v1624 = vpop.f32.mrb[0].mxu0
        %v1625 = vadd.f32 %v1336, %v1624
        %v1626 = vpop.f32.mrb[0].mxu0
        %1627 = vmatprep.mubr.bf16.mxu0 0
        %1628 = vmatmul.mubr.bf16.gmra.mrb[0].mxu0 %v920
        %v1629 = vpop.f32.mrb[0].mxu0
        %v1630 = vadd.f32 %v1341, %v1629
        %v1631 = vpop.f32.mrb[0].mxu0
        %v1632 = vpop.f32.mrb[0].mxu0
        %v1633 = vadd.f32 %v1344, %v1632
        %v1634 = vpop.f32.mrb[0].mxu0
        %1635 = vmatprep.mubr.bf16.mxu0 0
        %1636 = vmatmul.mubr.bf16.gmra.mrb[0].mxu0 %v923
        %v1637 = vpop.f32.mrb[0].mxu0
        %v1638 = vadd.f32 %v1349, %v1637
        %v1639 = vpop.f32.mrb[0].mxu0
        %v1640 = vpop.f32.mrb[0].mxu0
        %v1641 = vadd.f32 %v1352, %v1640
        %v1642 = vpop.f32.mrb[0].mxu0
        %1643 = vmatprep.mubr.bf16.mxu0 0
        %1644 = vmatmul.mubr.bf16.gmra.mrb[0].mxu0 %v926
        %v1645 = vpop.f32.mrb[0].mxu0
        %v1646 = vadd.f32 %v1357, %v1645
        %v1647 = vpop.f32.mrb[0].mxu0
        %v1648 = vpop.f32.mrb[0].mxu0
        %v1649 = vadd.f32 %v1360, %v1648
        %v1650 = vpop.f32.mrb[0].mxu0
        %1651 = vmatprep.mubr.bf16.mxu0 0
        %1652 = vmatmul.mubr.bf16.gmra.mrb[0].mxu0 %v929
        %v1653 = vpop.f32.mrb[0].mxu0
        %v1654 = vadd.f32 %v1365, %v1653
        %v1655 = vpop.f32.mrb[0].mxu0
        %v1656 = vpop.f32.mrb[0].mxu0
        %v1657 = vadd.f32 %v1368, %v1656
        %v1658 = vpop.f32.mrb[0].mxu0
        %1659 = vmatprep.mubr.bf16.mxu0 0
        %1660 = vmatmul.mubr.bf16.gmra.mrb[0].mxu0 %v932
        %v1661 = vpop.f32.mrb[0].mxu0
        %v1662 = vadd.f32 %v1373, %v1661
        %v1663 = vpop.f32.mrb[0].mxu0
        %v1664 = vpop.f32.mrb[0].mxu0
        %v1665 = vadd.f32 %v1376, %v1664
        %v1666 = vpop.f32.mrb[0].mxu0
        %1667 = vmatprep.mubr.bf16.mxu0 0
        %1668 = vmatmul.mubr.bf16.gmra.mrb[0].mxu0 %v935
        %v1669 = vpop.f32.mrb[0].mxu0
        %v1670 = vadd.f32 %v1381, %v1669
        %v1671 = vpop.f32.mrb[0].mxu0
        %v1672 = vpop.f32.mrb[0].mxu0
        %v1673 = vadd.f32 %v1384, %v1672
        %v1674 = vpop.f32.mrb[0].mxu0
        %1675 = vmatprep.mubr.bf16.mxu0 0
        %1676 = vmatmul.mubr.bf16.gmra.mrb[0].mxu0 %v938
        %v1677 = vpop.f32.mrb[0].mxu0
        %v1678 = vadd.f32 %v1389, %v1677
        %v1679 = vpop.f32.mrb[0].mxu0
        %v1680 = vpop.f32.mrb[0].mxu0
        %v1681 = vadd.f32 %v1392, %v1680
        %v1682 = vpop.f32.mrb[0].mxu0
        %1683 = vmatprep.mubr.bf16.mxu0 0
        %1684 = vmatmul.mubr.bf16.gmra.mrb[0].mxu0 %v941
        %v1685 = vpop.f32.mrb[0].mxu0
        %v1686 = vadd.f32 %v1397, %v1685
        %v1687 = vpop.f32.mrb[0].mxu0
        %v1688 = vpop.f32.mrb[0].mxu0
        %v1689 = vadd.f32 %v1400, %v1688
        %v1690 = vpop.f32.mrb[0].mxu0
        %1691 = vmatprep.mubr.bf16.mxu0 0
        %1692 = vmatmul.mubr.bf16.gmra.mrb[0].mxu0 %v944
        %v1693 = vpop.f32.mrb[0].mxu0
        %v1694 = vadd.f32 %v1405, %v1693
        %v1695 = vpop.f32.mrb[0].mxu0
        %v1696 = vpop.f32.mrb[0].mxu0
        %v1697 = vadd.f32 %v1408, %v1696
        %v1698 = vpop.f32.mrb[0].mxu0
        %1699 = vmatprep.mubr.bf16.mxu0 0
        %1700 = vmatmul.mubr.bf16.gmra.mrb[0].mxu0 %v947
        %v1701 = vpop.f32.mrb[0].mxu0
        %v1702 = vadd.f32 %v1413, %v1701
        %v1703 = vpop.f32.mrb[0].mxu0
        %v1704 = vpop.f32.mrb[0].mxu0
        %v1705 = vadd.f32 %v1416, %v1704
        %v1706 = vpop.f32.mrb[0].mxu0
        %1707 = vmatprep.mubr.bf16.mxu0 0
        %1708 = vmatmul.mubr.bf16.gmra.mrb[0].mxu0 %v950
        %v1709 = vpop.f32.mrb[0].mxu0
        %v1710 = vadd.f32 %v1421, %v1709
        %v1711 = vpop.f32.mrb[0].mxu0
        %v1712 = vpop.f32.mrb[0].mxu0
        %v1713 = vadd.f32 %v1424, %v1712
        %v1714 = vpop.f32.mrb[0].mxu0
        %1715 = vmatprep.mubr.bf16.mxu0 0
        %1716 = vmatmul.mubr.bf16.gmra.mrb[0].mxu0 %v953
        %v1717 = vpop.f32.mrb[0].mxu0
        %v1718 = vadd.f32 %v1429, %v1717
        %v1719 = vpop.f32.mrb[0].mxu0
        %v1720 = vpop.f32.mrb[0].mxu0
        %v1721 = vadd.f32 %v1432, %v1720
        %v1722 = vpop.f32.mrb[0].mxu0
        %1723 = vdwg.mxu0
        %1724 = vst [vmem:[#allocation4] sm:$0xff] %v1470
        %1725 = vst [vmem:[#allocation4 + $0x8] sm:$0xff] %v1473
        %1726 = vst [vmem:[#allocation4 + $0x10] sm:$0xff] %v1478
        %1727 = vst [vmem:[#allocation4 + $0x18] sm:$0xff] %v1481
        %1728 = vst [vmem:[#allocation4 + $0x20] sm:$0xff] %v1486
        %1729 = vst [vmem:[#allocation4 + $0x28] sm:$0xff] %v1489
        %1730 = vst [vmem:[#allocation4 + $0x30] sm:$0xff] %v1494
        %1731 = vst [vmem:[#allocation4 + $0x38] sm:$0xff] %v1497
        %1732 = vst [vmem:[#allocation4 + $0x40] sm:$0xff] %v1502
        %1733 = vst [vmem:[#allocation4 + $0x48] sm:$0xff] %v1505
        %1734 = vst [vmem:[#allocation4 + $0x50] sm:$0xff] %v1510
        %1735 = vst [vmem:[#allocation4 + $0x58] sm:$0xff] %v1513
        %1736 = vst [vmem:[#allocation4 + $0x60] sm:$0xff] %v1518
        %1737 = vst [vmem:[#allocation4 + $0x68] sm:$0xff] %v1521
        %1738 = vst [vmem:[#allocation4 + $0x70] sm:$0xff] %v1526
        %1739 = vst [vmem:[#allocation4 + $0x78] sm:$0xff] %v1529
        %1740 = vst [vmem:[#allocation4 + $0x80] sm:$0xff] %v1534
        %1741 = vst [vmem:[#allocation4 + $0x88] sm:$0xff] %v1537
        %1742 = vst [vmem:[#allocation4 + $0x90] sm:$0xff] %v1542
        %1743 = vst [vmem:[#allocation4 + $0x98] sm:$0xff] %v1545
        %1744 = vst [vmem:[#allocation4 + $0xa0] sm:$0xff] %v1550
        %1745 = vst [vmem:[#allocation4 + $0xa8] sm:$0xff] %v1553
        %1746 = vst [vmem:[#allocation4 + $0xb0] sm:$0xff] %v1558
        %1747 = vst [vmem:[#allocation4 + $0xb8] sm:$0xff] %v1561
        %1748 = vst [vmem:[#allocation4 + $0xc0] sm:$0xff] %v1566
        %1749 = vst [vmem:[#allocation4 + $0xc8] sm:$0xff] %v1569
        %1750 = vst [vmem:[#allocation4 + $0xd0] sm:$0xff] %v1574
        %1751 = vst [vmem:[#allocation4 + $0xd8] sm:$0xff] %v1577
        %1752 = vst [vmem:[#allocation4 + $0xe0] sm:$0xff] %v1582
        %1753 = vst [vmem:[#allocation4 + $0xe8] sm:$0xff] %v1585
        %1754 = vst [vmem:[#allocation4 + $0xf0] sm:$0xff] %v1590
        %1755 = vst [vmem:[#allocation4 + $0xf8] sm:$0xff] %v1593
        %1756 = vst [vmem:[#allocation4 + $0x100] sm:$0xff] %v1598
        %1757 = vst [vmem:[#allocation4 + $0x108] sm:$0xff] %v1601
        %1758 = vst [vmem:[#allocation4 + $0x110] sm:$0xff] %v1606
        %1759 = vst [vmem:[#allocation4 + $0x118] sm:$0xff] %v1609
        %1760 = vst [vmem:[#allocation4 + $0x120] sm:$0xff] %v1614
        %1761 = vst [vmem:[#allocation4 + $0x128] sm:$0xff] %v1617
        %1762 = vst [vmem:[#allocation4 + $0x130] sm:$0xff] %v1622
        %1763 = vst [vmem:[#allocation4 + $0x138] sm:$0xff] %v1625
        %1764 = vst [vmem:[#allocation4 + $0x140] sm:$0xff] %v1630
        %1765 = vst [vmem:[#allocation4 + $0x148] sm:$0xff] %v1633
        %1766 = vst [vmem:[#allocation4 + $0x150] sm:$0xff] %v1638
        %1767 = vst [vmem:[#allocation4 + $0x158] sm:$0xff] %v1641
        %1768 = vst [vmem:[#allocation4 + $0x160] sm:$0xff] %v1646
        %1769 = vst [vmem:[#allocation4 + $0x168] sm:$0xff] %v1649
        %1770 = vst [vmem:[#allocation4 + $0x170] sm:$0xff] %v1654
        %1771 = vst [vmem:[#allocation4 + $0x178] sm:$0xff] %v1657
        %1772 = vst [vmem:[#allocation4 + $0x180] sm:$0xff] %v1662
        %1773 = vst [vmem:[#allocation4 + $0x188] sm:$0xff] %v1665
        %1774 = vst [vmem:[#allocation4 + $0x190] sm:$0xff] %v1670
        %1775 = vst [vmem:[#allocation4 + $0x198] sm:$0xff] %v1673
        %1776 = vst [vmem:[#allocation4 + $0x1a0] sm:$0xff] %v1678
        %1777 = vst [vmem:[#allocation4 + $0x1a8] sm:$0xff] %v1681
        %1778 = vst [vmem:[#allocation4 + $0x1b0] sm:$0xff] %v1686
        %1779 = vst [vmem:[#allocation4 + $0x1b8] sm:$0xff] %v1689
        %1780 = vst [vmem:[#allocation4 + $0x1c0] sm:$0xff] %v1694
        %1781 = vst [vmem:[#allocation4 + $0x1c8] sm:$0xff] %v1697
        %1782 = vst [vmem:[#allocation4 + $0x1d0] sm:$0xff] %v1702
        %1783 = vst [vmem:[#allocation4 + $0x1d8] sm:$0xff] %v1705
        %1784 = vst [vmem:[#allocation4 + $0x1e0] sm:$0xff] %v1710
        %1785 = vst [vmem:[#allocation4 + $0x1e8] sm:$0xff] %v1713
        %1786 = vst [vmem:[#allocation4 + $0x1f0] sm:$0xff] %v1718
        %1787 = vst [vmem:[#allocation4 + $0x1f8] sm:$0xff] %v1721
        %v1788 = vld [vmem:[%s630] sm:$0xff]
        %v1789 = vld [vmem:[%s630 + $0x8] sm:$0xff]
        %v1790 = vld [vmem:[%s630 + $0x10] sm:$0xff]
        %v1791 = vld [vmem:[%s630 + $0x18] sm:$0xff]
        %v1792 = vld [vmem:[%s630 + $0x20] sm:$0xff]
        %v1793 = vld [vmem:[%s630 + $0x28] sm:$0xff]
        %v1794 = vld [vmem:[%s630 + $0x30] sm:$0xff]
        %v1795 = vld [vmem:[%s630 + $0x38] sm:$0xff]
        %v1796 = vld [vmem:[%s630 + $0x40] sm:$0xff]
        %v1797 = vld [vmem:[%s630 + $0x48] sm:$0xff]
        %v1798 = vld [vmem:[%s630 + $0x50] sm:$0xff]
        %v1799 = vld [vmem:[%s630 + $0x58] sm:$0xff]
        %v1800 = vld [vmem:[%s630 + $0x60] sm:$0xff]
        %v1801 = vld [vmem:[%s630 + $0x68] sm:$0xff]
        %v1802 = vld [vmem:[%s630 + $0x70] sm:$0xff]
        %v1803 = vld [vmem:[%s630 + $0x78] sm:$0xff]
        %v1804 = vld [vmem:[%s630 + $0x80] sm:$0xff]
        %v1805 = vld [vmem:[%s630 + $0x88] sm:$0xff]
        %v1806 = vld [vmem:[%s630 + $0x90] sm:$0xff]
        %v1807 = vld [vmem:[%s630 + $0x98] sm:$0xff]
        %v1808 = vld [vmem:[%s630 + $0xa0] sm:$0xff]
        %v1809 = vld [vmem:[%s630 + $0xa8] sm:$0xff]
        %v1810 = vld [vmem:[%s630 + $0xb0] sm:$0xff]
        %v1811 = vld [vmem:[%s630 + $0xb8] sm:$0xff]
        %v1812 = vld [vmem:[%s630 + $0xc0] sm:$0xff]
        %v1813 = vld [vmem:[%s630 + $0xc8] sm:$0xff]
        %v1814 = vld [vmem:[%s630 + $0xd0] sm:$0xff]
        %v1815 = vld [vmem:[%s630 + $0xd8] sm:$0xff]
        %v1816 = vld [vmem:[%s630 + $0xe0] sm:$0xff]
        %v1817 = vld [vmem:[%s630 + $0xe8] sm:$0xff]
        %v1818 = vld [vmem:[%s630 + $0xf0] sm:$0xff]
        %v1819 = vld [vmem:[%s630 + $0xf8] sm:$0xff]
        %v1820 = vld [vmem:[%s630 + $0x100] sm:$0xff]
        %v1821 = vld [vmem:[%s630 + $0x108] sm:$0xff]
        %v1822 = vld [vmem:[%s630 + $0x110] sm:$0xff]
        %v1823 = vld [vmem:[%s630 + $0x118] sm:$0xff]
        %v1824 = vld [vmem:[%s630 + $0x120] sm:$0xff]
        %v1825 = vld [vmem:[%s630 + $0x128] sm:$0xff]
        %v1826 = vld [vmem:[%s630 + $0x130] sm:$0xff]
        %v1827 = vld [vmem:[%s630 + $0x138] sm:$0xff]
        %v1828 = vld [vmem:[%s630 + $0x140] sm:$0xff]
        %v1829 = vld [vmem:[%s630 + $0x148] sm:$0xff]
        %v1830 = vld [vmem:[%s630 + $0x150] sm:$0xff]
        %v1831 = vld [vmem:[%s630 + $0x158] sm:$0xff]
        %v1832 = vld [vmem:[%s630 + $0x160] sm:$0xff]
        %v1833 = vld [vmem:[%s630 + $0x168] sm:$0xff]
        %v1834 = vld [vmem:[%s630 + $0x170] sm:$0xff]
        %v1835 = vld [vmem:[%s630 + $0x178] sm:$0xff]
        %v1836 = vld [vmem:[%s630 + $0x1b0] sm:$0xff]
        %v1837 = vld [vmem:[%s630 + $0x1b8] sm:$0xff]
        %v1838 = vld [vmem:[%s630 + $0x1c0] sm:$0xff]
        %v1839 = vld [vmem:[%s630 + $0x1c8] sm:$0xff]
        %v1840 = vld [vmem:[%s630 + $0x1d0] sm:$0xff]
        %v1841 = vld [vmem:[%s630 + $0x1d8] sm:$0xff]
        %v1842 = vld [vmem:[%s630 + $0x1e0] sm:$0xff]
        %v1843 = vld [vmem:[%s630 + $0x1e8] sm:$0xff]
        %v1844 = vld [vmem:[%s630 + $0x1f0] sm:$0xff]
        %v1845 = vld [vmem:[%s630 + $0x1f8] sm:$0xff]
        %v1846 = vld [vmem:[%s630 + $0x200] sm:$0xff]
        %v1847 = vld [vmem:[%s630 + $0x208] sm:$0xff]
        %v1848 = vld [vmem:[%s630 + $0x210] sm:$0xff]
        %v1849 = vld [vmem:[%s630 + $0x218] sm:$0xff]
        %v1850 = vld [vmem:[%s630 + $0x220] sm:$0xff]
        %v1851 = vld [vmem:[%s630 + $0x228] sm:$0xff]
        %v1852 = vld [vmem:[%s630 + $0x230] sm:$0xff]
        %v1853 = vld [vmem:[%s630 + $0x238] sm:$0xff]
        %v1854 = vld [vmem:[%s630 + $0x240] sm:$0xff]
        %v1855 = vld [vmem:[%s630 + $0x248] sm:$0xff]
        %v1856 = vld [vmem:[%s630 + $0x250] sm:$0xff]
        %v1857 = vld [vmem:[%s630 + $0x258] sm:$0xff]
        %v1858 = vld [vmem:[%s630 + $0x260] sm:$0xff]
        %v1859 = vld [vmem:[%s630 + $0x268] sm:$0xff]
        %v1860 = vld [vmem:[%s630 + $0x270] sm:$0xff]
        %v1861 = vld [vmem:[%s630 + $0x278] sm:$0xff]
        %v1862 = vld [vmem:[%s630 + $0x280] sm:$0xff]
        %v1863 = vld [vmem:[%s630 + $0x288] sm:$0xff]
        %v1864 = vld [vmem:[%s630 + $0x290] sm:$0xff]
        %v1865 = vld [vmem:[%s630 + $0x298] sm:$0xff]
        %v1866 = vld [vmem:[%s630 + $0x2a0] sm:$0xff]
        %v1867 = vld [vmem:[%s630 + $0x2a8] sm:$0xff]
        %v1868 = vld [vmem:[%s630 + $0x2b0] sm:$0xff]
        %v1869 = vld [vmem:[%s630 + $0x2b8] sm:$0xff]
        %v1870 = vld [vmem:[%s630 + $0x2c0] sm:$0xff]
        %v1871 = vld [vmem:[%s630 + $0x2c8] sm:$0xff]
        %v1872 = vld [vmem:[%s630 + $0x2d0] sm:$0xff]
        %v1873 = vld [vmem:[%s630 + $0x2d8] sm:$0xff]
        %v1874 = vld [vmem:[%s630 + $0x2e0] sm:$0xff]
        %v1875 = vld [vmem:[%s630 + $0x2e8] sm:$0xff]
        %v1876 = vld [vmem:[%s630 + $0x2f0] sm:$0xff]
        %v1877 = vld [vmem:[%s630 + $0x2f8] sm:$0xff]
        %v1878 = vld [vmem:[%s630 + $0x300] sm:$0xff]
        %v1879 = vld [vmem:[%s630 + $0x308] sm:$0xff]
        %v1880 = vld [vmem:[%s630 + $0x310] sm:$0xff]
        %v1881 = vld [vmem:[%s630 + $0x318] sm:$0xff]
        %v1882 = vld [vmem:[%s630 + $0x320] sm:$0xff]
        %v1883 = vld [vmem:[%s630 + $0x328] sm:$0xff]
        %s1884 = scalar_lea.vmem %s1, 192
        %v1885 = vld [vmem:[%s1884] sm:$0xf]
        %v1886 = vld [vmem:[%s1884 + $0x4] sm:$0xf]
        %v1887 = vld [vmem:[%s1884 + $0x8] sm:$0xf]
        %v1888 = vld [vmem:[%s1884 + $0xc] sm:$0xf]
        %v1889 = vld [vmem:[%s1884 + $0x10] sm:$0xf]
        %v1890 = vld [vmem:[%s1884 + $0x14] sm:$0xf]
        %v1891 = vld [vmem:[%s1884 + $0x18] sm:$0xf]
        %v1892 = vld [vmem:[%s1884 + $0x1c] sm:$0xf]
        %v1893 = vld [vmem:[%s1884 + $0x20] sm:$0xf]
        %v1894 = vld [vmem:[%s1884 + $0x24] sm:$0xf]
        %v1895 = vld [vmem:[%s1884 + $0x28] sm:$0xf]
        %v1896 = vld [vmem:[%s1884 + $0x2c] sm:$0xf]
        %v1897 = vld [vmem:[%s1884 + $0x30] sm:$0xf]
        %v1898 = vld [vmem:[%s1884 + $0x34] sm:$0xf]
        %v1899 = vld [vmem:[%s1884 + $0x38] sm:$0xf]
        %v1900 = vld [vmem:[%s1884 + $0x3c] sm:$0xf]
        %v1901 = vld [vmem:[%s1884 + $0x40] sm:$0xf]
        %v1902 = vld [vmem:[%s1884 + $0x44] sm:$0xf]
        %v1903 = vld [vmem:[%s1884 + $0x48] sm:$0xf]
        %v1904 = vld [vmem:[%s1884 + $0x4c] sm:$0xf]
        %v1905 = vld [vmem:[%s1884 + $0x50] sm:$0xf]
        %v1906 = vld [vmem:[%s1884 + $0x54] sm:$0xf]
        %v1907 = vld [vmem:[%s1884 + $0x58] sm:$0xf]
        %v1908 = vld [vmem:[%s1884 + $0x5c] sm:$0xf]
        %v1909 = vld [vmem:[%s1884 + $0x60] sm:$0xf]
        %v1910 = vld [vmem:[%s1884 + $0x64] sm:$0xf]
        %v1911 = vld [vmem:[%s1884 + $0x68] sm:$0xf]
        %v1912 = vld [vmem:[%s1884 + $0x6c] sm:$0xf]
        %v1913 = vld [vmem:[%s1884 + $0x70] sm:$0xf]
        %v1914 = vld [vmem:[%s1884 + $0x74] sm:$0xf]
        %v1915 = vld [vmem:[%s1884 + $0x78] sm:$0xf]
        %v1916 = vld [vmem:[%s1884 + $0x7c] sm:$0xf]
        %v1917 = vld [vmem:[%s1884 + $0x80] sm:$0xf]
        %v1918 = vld [vmem:[%s1884 + $0x84] sm:$0xf]
        %v1919 = vld [vmem:[%s1884 + $0x88] sm:$0xf]
        %v1920 = vld [vmem:[%s1884 + $0x8c] sm:$0xf]
        %v1921 = vld [vmem:[%s1884 + $0x90] sm:$0xf]
        %v1922 = vld [vmem:[%s1884 + $0x94] sm:$0xf]
        %v1923 = vld [vmem:[%s1884 + $0x98] sm:$0xf]
        %v1924 = vld [vmem:[%s1884 + $0x9c] sm:$0xf]
        %v1925 = vld [vmem:[%s1884 + $0xa0] sm:$0xf]
        %v1926 = vld [vmem:[%s1884 + $0xa4] sm:$0xf]
        %v1927 = vld [vmem:[%s1884 + $0xa8] sm:$0xf]
        %v1928 = vld [vmem:[%s1884 + $0xac] sm:$0xf]
        %v1929 = vld [vmem:[%s1884 + $0xb0] sm:$0xf]
        %v1930 = vld [vmem:[%s1884 + $0xb4] sm:$0xf]
        %v1931 = vld [vmem:[%s1884 + $0xb8] sm:$0xf]
        %v1932 = vld [vmem:[%s1884 + $0xbc] sm:$0xf]
        %v1981 = vunpack.c.l.b16 %v1885
        %v1982 = vunpack.c.l.b16 %v1886
        %v1983 = vunpack.c.l.b16 %v1887
        %v1984 = vunpack.c.l.b16 %v1888
        %v1985 = vunpack.c.l.b16 %v1889
        %v1986 = vunpack.c.l.b16 %v1890
        %v1987 = vunpack.c.l.b16 %v1891
        %v1988 = vunpack.c.l.b16 %v1892
        %v1989 = vunpack.c.l.b16 %v1893
        %v1990 = vunpack.c.l.b16 %v1894
        %v1991 = vunpack.c.l.b16 %v1895
        %v1992 = vunpack.c.l.b16 %v1896
        %v1993 = vunpack.c.l.b16 %v1897
        %v1994 = vunpack.c.l.b16 %v1898
        %v1995 = vunpack.c.l.b16 %v1899
        %v1996 = vunpack.c.l.b16 %v1900
        %v1997 = vunpack.c.l.b16 %v1901
        %v1998 = vunpack.c.l.b16 %v1902
        %v1999 = vunpack.c.l.b16 %v1903
        %v2000 = vunpack.c.l.b16 %v1904
        %v2001 = vunpack.c.l.b16 %v1905
        %v2002 = vunpack.c.l.b16 %v1906
        %v2003 = vunpack.c.l.b16 %v1907
        %v2004 = vunpack.c.l.b16 %v1908
        %v2005 = vunpack.c.l.b16 %v1909
        %v2006 = vunpack.c.l.b16 %v1910
        %v2007 = vunpack.c.l.b16 %v1911
        %v2008 = vunpack.c.l.b16 %v1912
        %v2009 = vunpack.c.l.b16 %v1913
        %v2010 = vunpack.c.l.b16 %v1914
        %v2011 = vunpack.c.l.b16 %v1915
        %v2012 = vunpack.c.l.b16 %v1916
        %v2013 = vunpack.c.l.b16 %v1917
        %v2014 = vunpack.c.l.b16 %v1918
        %v2015 = vunpack.c.l.b16 %v1919
        %v2016 = vunpack.c.l.b16 %v1920
        %v2017 = vunpack.c.l.b16 %v1921
        %v2018 = vunpack.c.l.b16 %v1922
        %v2019 = vunpack.c.l.b16 %v1923
        %v2020 = vunpack.c.l.b16 %v1924
        %v2021 = vunpack.c.l.b16 %v1925
        %v2022 = vunpack.c.l.b16 %v1926
        %v2023 = vunpack.c.l.b16 %v1927
        %v2024 = vunpack.c.l.b16 %v1928
        %v2025 = vunpack.c.l.b16 %v1929
        %v2026 = vunpack.c.l.b16 %v1930
        %v2027 = vunpack.c.l.b16 %v1931
        %v2028 = vunpack.c.l.b16 %v1932
        %v2029 = vpack.c.b16 %v1982, %v1981
        %v2030 = vpack.c.b16 %v1984, %v1983
        %v2031 = vpack.c.b16 %v1986, %v1985
        %v2032 = vpack.c.b16 %v1988, %v1987
        %v2033 = vpack.c.b16 %v1990, %v1989
        %v2034 = vpack.c.b16 %v1992, %v1991
        %v2035 = vpack.c.b16 %v1994, %v1993
        %v2036 = vpack.c.b16 %v1996, %v1995
        %v2037 = vpack.c.b16 %v1998, %v1997
        %v2038 = vpack.c.b16 %v2000, %v1999
        %v2039 = vpack.c.b16 %v2002, %v2001
        %v2040 = vpack.c.b16 %v2004, %v2003
        %v2041 = vpack.c.b16 %v2006, %v2005
        %v2042 = vpack.c.b16 %v2008, %v2007
        %v2043 = vpack.c.b16 %v2010, %v2009
        %v2044 = vpack.c.b16 %v2012, %v2011
        %v2045 = vpack.c.b16 %v2014, %v2013
        %v2046 = vpack.c.b16 %v2016, %v2015
        %v2047 = vpack.c.b16 %v2018, %v2017
        %v2048 = vpack.c.b16 %v2020, %v2019
        %v2049 = vpack.c.b16 %v2022, %v2021
        %v2050 = vpack.c.b16 %v2024, %v2023
        %v2051 = vpack.c.b16 %v2026, %v2025
        %v2052 = vpack.c.b16 %v2028, %v2027
        %2077 = vmatprep.subr.bf16.mxu0 0
        %2078 = vmatpush1.bf16.msra.mxu0 %v2029
        %2079 = vmatprep.subr.bf16.mxu0 0
        %2080 = vmatpush1.bf16.msra.mxu0 %v2030
        %2081 = vmatprep.subr.bf16.mxu0 0
        %2082 = vmatpush1.bf16.msra.mxu0 %v2031
        %2083 = vmatprep.subr.bf16.mxu0 0
        %2084 = vmatpush1.bf16.msra.mxu0 %v2032
        %2085 = vmatprep.subr.bf16.mxu0 0
        %2086 = vmatpush1.bf16.msra.mxu0 %v2033
        %2087 = vmatprep.subr.bf16.mxu0 0
        %2088 = vmatpush1.bf16.msra.mxu0 %v2034
        %2089 = vmatprep.subr.bf16.mxu0 0
        %2090 = vmatpush1.bf16.msra.mxu0 %v2035
        %2091 = vmatprep.subr.bf16.mxu0 0
        %2092 = vmatpush1.bf16.msra.mxu0 %v2036
        %2093 = vmatprep.subr.bf16.mxu0 0
        %2094 = vmatpush1.bf16.msra.mxu0 %v2037
        %2095 = vmatprep.subr.bf16.mxu0 0
        %2096 = vmatpush1.bf16.msra.mxu0 %v2038
        %2097 = vmatprep.subr.bf16.mxu0 0
        %2098 = vmatpush1.bf16.msra.mxu0 %v2039
        %2099 = vmatprep.subr.bf16.mxu0 0
        %2100 = vmatpush1.bf16.msra.mxu0 %v2040
        %2101 = vmatprep.subr.bf16.mxu0 0
        %2102 = vmatpush1.bf16.msra.mxu0 %v2041
        %2103 = vmatprep.subr.bf16.mxu0 0
        %2104 = vmatpush1.bf16.msra.mxu0 %v2042
        %2105 = vmatprep.subr.bf16.mxu0 0
        %2106 = vmatpush1.bf16.msra.mxu0 %v2043
        %2107 = vmatprep.subr.bf16.mxu0 0
        %2108 = vmatpush1.bf16.msra.mxu0 %v2044
        %2109 = vmatprep.mubr.bf16.mxu0 %v1789
        %2110 = vmatmul.mubr.bf16.gmra.mrb[0].mxu0 %v1788
        %v2111 = vpop.f32.mrb[0].mxu0
        %v2112 = vadd.f32 0.0, %v2111
        %v2113 = vpop.f32.mrb[0].mxu0
        %v2114 = vpop.f32.mrb[0].mxu0
        %v2115 = vadd.f32 0.0, %v2114
        %v2116 = vpop.f32.mrb[0].mxu0
        %2117 = vmatprep.mubr.bf16.mxu0 %v1792
        %2118 = vmatmul.mubr.bf16.gmra.mrb[0].mxu0 %v1791
        %v2119 = vpop.f32.mrb[0].mxu0
        %v2120 = vadd.f32 0.0, %v2119
        %v2121 = vpop.f32.mrb[0].mxu0
        %v2122 = vpop.f32.mrb[0].mxu0
        %v2123 = vadd.f32 0.0, %v2122
        %v2124 = vpop.f32.mrb[0].mxu0
        %2125 = vmatprep.mubr.bf16.mxu0 %v1795
        %2126 = vmatmul.mubr.bf16.gmra.mrb[0].mxu0 %v1794
        %v2127 = vpop.f32.mrb[0].mxu0
        %v2128 = vadd.f32 0.0, %v2127
        %v2129 = vpop.f32.mrb[0].mxu0
        %v2130 = vpop.f32.mrb[0].mxu0
        %v2131 = vadd.f32 0.0, %v2130
        %v2132 = vpop.f32.mrb[0].mxu0
        %2133 = vmatprep.mubr.bf16.mxu0 %v1798
        %2134 = vmatmul.mubr.bf16.gmra.mrb[0].mxu0 %v1797
        %v2135 = vpop.f32.mrb[0].mxu0
        %v2136 = vadd.f32 0.0, %v2135
        %v2137 = vpop.f32.mrb[0].mxu0
        %v2138 = vpop.f32.mrb[0].mxu0
        %v2139 = vadd.f32 0.0, %v2138
        %v2140 = vpop.f32.mrb[0].mxu0
        %2141 = vmatprep.mubr.bf16.mxu0 %v1801
        %2142 = vmatmul.mubr.bf16.gmra.mrb[0].mxu0 %v1800
        %v2143 = vpop.f32.mrb[0].mxu0
        %v2144 = vadd.f32 0.0, %v2143
        %v2145 = vpop.f32.mrb[0].mxu0
        %v2146 = vpop.f32.mrb[0].mxu0
        %v2147 = vadd.f32 0.0, %v2146
        %v2148 = vpop.f32.mrb[0].mxu0
        %2149 = vmatprep.mubr.bf16.mxu0 %v1804
        %2150 = vmatmul.mubr.bf16.gmra.mrb[0].mxu0 %v1803
        %v2151 = vpop.f32.mrb[0].mxu0
        %v2152 = vadd.f32 0.0, %v2151
        %v2153 = vpop.f32.mrb[0].mxu0
        %v2154 = vpop.f32.mrb[0].mxu0
        %v2155 = vadd.f32 0.0, %v2154
        %v2156 = vpop.f32.mrb[0].mxu0
        %2157 = vmatprep.mubr.bf16.mxu0 %v1807
        %2158 = vmatmul.mubr.bf16.gmra.mrb[0].mxu0 %v1806
        %v2159 = vpop.f32.mrb[0].mxu0
        %v2160 = vadd.f32 0.0, %v2159
        %v2161 = vpop.f32.mrb[0].mxu0
        %v2162 = vpop.f32.mrb[0].mxu0
        %v2163 = vadd.f32 0.0, %v2162
        %v2164 = vpop.f32.mrb[0].mxu0
        %2165 = vmatprep.mubr.bf16.mxu0 %v1810
        %2166 = vmatmul.mubr.bf16.gmra.mrb[0].mxu0 %v1809
        %v2167 = vpop.f32.mrb[0].mxu0
        %v2168 = vadd.f32 0.0, %v2167
        %v2169 = vpop.f32.mrb[0].mxu0
        %v2170 = vpop.f32.mrb[0].mxu0
        %v2171 = vadd.f32 0.0, %v2170
        %v2172 = vpop.f32.mrb[0].mxu0
        %2173 = vmatprep.mubr.bf16.mxu0 %v1813
        %2174 = vmatmul.mubr.bf16.gmra.mrb[0].mxu0 %v1812
        %v2175 = vpop.f32.mrb[0].mxu0
        %v2176 = vadd.f32 0.0, %v2175
        %v2177 = vpop.f32.mrb[0].mxu0
        %v2178 = vpop.f32.mrb[0].mxu0
        %v2179 = vadd.f32 0.0, %v2178
        %v2180 = vpop.f32.mrb[0].mxu0
        %2181 = vmatprep.mubr.bf16.mxu0 %v1816
        %2182 = vmatmul.mubr.bf16.gmra.mrb[0].mxu0 %v1815
        %v2183 = vpop.f32.mrb[0].mxu0
        %v2184 = vadd.f32 0.0, %v2183
        %v2185 = vpop.f32.mrb[0].mxu0
        %v2186 = vpop.f32.mrb[0].mxu0
        %v2187 = vadd.f32 0.0, %v2186
        %v2188 = vpop.f32.mrb[0].mxu0
        %2189 = vmatprep.mubr.bf16.mxu0 %v1819
        %2190 = vmatmul.mubr.bf16.gmra.mrb[0].mxu0 %v1818
        %v2191 = vpop.f32.mrb[0].mxu0
        %v2192 = vadd.f32 0.0, %v2191
        %v2193 = vpop.f32.mrb[0].mxu0
        %v2194 = vpop.f32.mrb[0].mxu0
        %v2195 = vadd.f32 0.0, %v2194
        %v2196 = vpop.f32.mrb[0].mxu0
        %2197 = vmatprep.mubr.bf16.mxu0 %v1822
        %2198 = vmatmul.mubr.bf16.gmra.mrb[0].mxu0 %v1821
        %v2199 = vpop.f32.mrb[0].mxu0
        %v2200 = vadd.f32 0.0, %v2199
        %v2201 = vpop.f32.mrb[0].mxu0
        %v2202 = vpop.f32.mrb[0].mxu0
        %v2203 = vadd.f32 0.0, %v2202
        %v2204 = vpop.f32.mrb[0].mxu0
        %2205 = vmatprep.mubr.bf16.mxu0 %v1825
        %2206 = vmatmul.mubr.bf16.gmra.mrb[0].mxu0 %v1824
        %v2207 = vpop.f32.mrb[0].mxu0
        %v2208 = vadd.f32 0.0, %v2207
        %v2209 = vpop.f32.mrb[0].mxu0
        %v2210 = vpop.f32.mrb[0].mxu0
        %v2211 = vadd.f32 0.0, %v2210
        %v2212 = vpop.f32.mrb[0].mxu0
        %2213 = vmatprep.mubr.bf16.mxu0 %v1828
        %2214 = vmatmul.mubr.bf16.gmra.mrb[0].mxu0 %v1827
        %v2215 = vpop.f32.mrb[0].mxu0
        %v2216 = vadd.f32 0.0, %v2215
        %v2217 = vpop.f32.mrb[0].mxu0
        %v2218 = vpop.f32.mrb[0].mxu0
        %v2219 = vadd.f32 0.0, %v2218
        %v2220 = vpop.f32.mrb[0].mxu0
        %2221 = vmatprep.mubr.bf16.mxu0 %v1831
        %2222 = vmatmul.mubr.bf16.gmra.mrb[0].mxu0 %v1830
        %v2223 = vpop.f32.mrb[0].mxu0
        %v2224 = vadd.f32 0.0, %v2223
        %v2225 = vpop.f32.mrb[0].mxu0
        %v2226 = vpop.f32.mrb[0].mxu0
        %v2227 = vadd.f32 0.0, %v2226
        %v2228 = vpop.f32.mrb[0].mxu0
        %2229 = vmatprep.mubr.bf16.mxu0 %v1834
        %2230 = vmatmul.mubr.bf16.gmra.mrb[0].mxu0 %v1833
        %v2231 = vpop.f32.mrb[0].mxu0
        %v2232 = vadd.f32 0.0, %v2231
        %v2233 = vpop.f32.mrb[0].mxu0
        %v2234 = vpop.f32.mrb[0].mxu0
        %v2235 = vadd.f32 0.0, %v2234
        %v2236 = vpop.f32.mrb[0].mxu0
        %2237 = vmatprep.mubr.bf16.mxu0 %v1837
        %2238 = vmatmul.mubr.bf16.gmra.mrb[0].mxu0 %v1836
        %v2239 = vpop.f32.mrb[0].mxu0
        %v2240 = vadd.f32 0.0, %v2239
        %v2241 = vpop.f32.mrb[0].mxu0
        %v2242 = vpop.f32.mrb[0].mxu0
        %v2243 = vadd.f32 0.0, %v2242
        %v2244 = vpop.f32.mrb[0].mxu0
        %2245 = vmatprep.mubr.bf16.mxu0 %v1840
        %2246 = vmatmul.mubr.bf16.gmra.mrb[0].mxu0 %v1839
        %v2247 = vpop.f32.mrb[0].mxu0
        %v2248 = vadd.f32 0.0, %v2247
        %v2249 = vpop.f32.mrb[0].mxu0
        %v2250 = vpop.f32.mrb[0].mxu0
        %v2251 = vadd.f32 0.0, %v2250
        %v2252 = vpop.f32.mrb[0].mxu0
        %2253 = vmatprep.mubr.bf16.mxu0 %v1843
        %2254 = vmatmul.mubr.bf16.gmra.mrb[0].mxu0 %v1842
        %v2255 = vpop.f32.mrb[0].mxu0
        %v2256 = vadd.f32 0.0, %v2255
        %v2257 = vpop.f32.mrb[0].mxu0
        %v2258 = vpop.f32.mrb[0].mxu0
        %v2259 = vadd.f32 0.0, %v2258
        %v2260 = vpop.f32.mrb[0].mxu0
        %2261 = vmatprep.mubr.bf16.mxu0 %v1846
        %2262 = vmatmul.mubr.bf16.gmra.mrb[0].mxu0 %v1845
        %v2263 = vpop.f32.mrb[0].mxu0
        %v2264 = vadd.f32 0.0, %v2263
        %v2265 = vpop.f32.mrb[0].mxu0
        %v2266 = vpop.f32.mrb[0].mxu0
        %v2267 = vadd.f32 0.0, %v2266
        %v2268 = vpop.f32.mrb[0].mxu0
        %2269 = vmatprep.mubr.bf16.mxu0 %v1849
        %2270 = vmatmul.mubr.bf16.gmra.mrb[0].mxu0 %v1848
        %v2271 = vpop.f32.mrb[0].mxu0
        %v2272 = vadd.f32 0.0, %v2271
        %v2273 = vpop.f32.mrb[0].mxu0
        %v2274 = vpop.f32.mrb[0].mxu0
        %v2275 = vadd.f32 0.0, %v2274
        %v2276 = vpop.f32.mrb[0].mxu0
        %2277 = vmatprep.mubr.bf16.mxu0 %v1852
        %2278 = vmatmul.mubr.bf16.gmra.mrb[0].mxu0 %v1851
        %v2279 = vpop.f32.mrb[0].mxu0
        %v2280 = vadd.f32 0.0, %v2279
        %v2281 = vpop.f32.mrb[0].mxu0
        %v2282 = vpop.f32.mrb[0].mxu0
        %v2283 = vadd.f32 0.0, %v2282
        %v2284 = vpop.f32.mrb[0].mxu0
        %2285 = vmatprep.mubr.bf16.mxu0 %v1855
        %2286 = vmatmul.mubr.bf16.gmra.mrb[0].mxu0 %v1854
        %v2287 = vpop.f32.mrb[0].mxu0
        %v2288 = vadd.f32 0.0, %v2287
        %v2289 = vpop.f32.mrb[0].mxu0
        %v2290 = vpop.f32.mrb[0].mxu0
        %v2291 = vadd.f32 0.0, %v2290
        %v2292 = vpop.f32.mrb[0].mxu0
        %2293 = vmatprep.mubr.bf16.mxu0 %v1858
        %2294 = vmatmul.mubr.bf16.gmra.mrb[0].mxu0 %v1857
        %v2295 = vpop.f32.mrb[0].mxu0
        %v2296 = vadd.f32 0.0, %v2295
        %v2297 = vpop.f32.mrb[0].mxu0
        %v2298 = vpop.f32.mrb[0].mxu0
        %v2299 = vadd.f32 0.0, %v2298
        %v2300 = vpop.f32.mrb[0].mxu0
        %2301 = vmatprep.mubr.bf16.mxu0 %v1861
        %2302 = vmatmul.mubr.bf16.gmra.mrb[0].mxu0 %v1860
        %v2303 = vpop.f32.mrb[0].mxu0
        %v2304 = vadd.f32 0.0, %v2303
        %v2305 = vpop.f32.mrb[0].mxu0
        %v2306 = vpop.f32.mrb[0].mxu0
        %v2307 = vadd.f32 0.0, %v2306
        %v2308 = vpop.f32.mrb[0].mxu0
        %2309 = vmatprep.mubr.bf16.mxu0 %v1864
        %2310 = vmatmul.mubr.bf16.gmra.mrb[0].mxu0 %v1863
        %v2311 = vpop.f32.mrb[0].mxu0
        %v2312 = vadd.f32 0.0, %v2311
        %v2313 = vpop.f32.mrb[0].mxu0
        %v2314 = vpop.f32.mrb[0].mxu0
        %v2315 = vadd.f32 0.0, %v2314
        %v2316 = vpop.f32.mrb[0].mxu0
        %2317 = vmatprep.mubr.bf16.mxu0 %v1867
        %2318 = vmatmul.mubr.bf16.gmra.mrb[0].mxu0 %v1866
        %v2319 = vpop.f32.mrb[0].mxu0
        %v2320 = vadd.f32 0.0, %v2319
        %v2321 = vpop.f32.mrb[0].mxu0
        %v2322 = vpop.f32.mrb[0].mxu0
        %v2323 = vadd.f32 0.0, %v2322
        %v2324 = vpop.f32.mrb[0].mxu0
        %2325 = vmatprep.mubr.bf16.mxu0 %v1870
        %2326 = vmatmul.mubr.bf16.gmra.mrb[0].mxu0 %v1869
        %v2327 = vpop.f32.mrb[0].mxu0
        %v2328 = vadd.f32 0.0, %v2327
        %v2329 = vpop.f32.mrb[0].mxu0
        %v2330 = vpop.f32.mrb[0].mxu0
        %v2331 = vadd.f32 0.0, %v2330
        %v2332 = vpop.f32.mrb[0].mxu0
        %2333 = vmatprep.mubr.bf16.mxu0 %v1873
        %2334 = vmatmul.mubr.bf16.gmra.mrb[0].mxu0 %v1872
        %v2335 = vpop.f32.mrb[0].mxu0
        %v2336 = vadd.f32 0.0, %v2335
        %v2337 = vpop.f32.mrb[0].mxu0
        %v2338 = vpop.f32.mrb[0].mxu0
        %v2339 = vadd.f32 0.0, %v2338
        %v2340 = vpop.f32.mrb[0].mxu0
        %2341 = vmatprep.mubr.bf16.mxu0 %v1876
        %2342 = vmatmul.mubr.bf16.gmra.mrb[0].mxu0 %v1875
        %v2343 = vpop.f32.mrb[0].mxu0
        %v2344 = vadd.f32 0.0, %v2343
        %v2345 = vpop.f32.mrb[0].mxu0
        %v2346 = vpop.f32.mrb[0].mxu0
        %v2347 = vadd.f32 0.0, %v2346
        %v2348 = vpop.f32.mrb[0].mxu0
        %2349 = vmatprep.mubr.bf16.mxu0 %v1879
        %2350 = vmatmul.mubr.bf16.gmra.mrb[0].mxu0 %v1878
        %v2351 = vpop.f32.mrb[0].mxu0
        %v2352 = vadd.f32 0.0, %v2351
        %v2353 = vpop.f32.mrb[0].mxu0
        %v2354 = vpop.f32.mrb[0].mxu0
        %v2355 = vadd.f32 0.0, %v2354
        %v2356 = vpop.f32.mrb[0].mxu0
        %2357 = vmatprep.mubr.bf16.mxu0 %v1882
        %2358 = vmatmul.mubr.bf16.gmra.mrb[0].mxu0 %v1881
        %v2359 = vpop.f32.mrb[0].mxu0
        %v2360 = vadd.f32 0.0, %v2359
        %v2361 = vpop.f32.mrb[0].mxu0
        %v2362 = vpop.f32.mrb[0].mxu0
        %v2363 = vadd.f32 0.0, %v2362
        %v2364 = vpop.f32.mrb[0].mxu0
        %2365 = vdwg.mxu0
        %2366 = vmatprep.subr.bf16.mxu0 0
        %2367 = vmatpush1.bf16.msra.mxu0 %v2045
        %2368 = vmatprep.subr.bf16.mxu0 0
        %2369 = vmatpush1.bf16.msra.mxu0 %v2046
        %2370 = vmatprep.subr.bf16.mxu0 0
        %2371 = vmatpush1.bf16.msra.mxu0 %v2047
        %2372 = vmatprep.subr.bf16.mxu0 0
        %2373 = vmatpush1.bf16.msra.mxu0 %v2048
        %2374 = vmatprep.subr.bf16.mxu0 0
        %2375 = vmatpush1.bf16.msra.mxu0 %v2049
        %2376 = vmatprep.subr.bf16.mxu0 0
        %2377 = vmatpush1.bf16.msra.mxu0 %v2050
        %2378 = vmatprep.subr.bf16.mxu0 0
        %2379 = vmatpush1.bf16.msra.mxu0 %v2051
        %2380 = vmatprep.subr.bf16.mxu0 0
        %2381 = vmatpush1.bf16.msra.mxu0 %v2052
        %2382 = vmatprep.subr.bf16.mxu0 0
        %2383 = vmatpush1.bf16.msra.mxu0 0
        %2384 = vmatprep.subr.bf16.mxu0 0
        %2385 = vmatpush1.bf16.msra.mxu0 0
        %2386 = vmatprep.subr.bf16.mxu0 0
        %2387 = vmatpush1.bf16.msra.mxu0 0
        %2388 = vmatprep.subr.bf16.mxu0 0
        %2389 = vmatpush1.bf16.msra.mxu0 0
        %2390 = vmatprep.subr.bf16.mxu0 0
        %2391 = vmatpush1.bf16.msra.mxu0 0
        %2392 = vmatprep.subr.bf16.mxu0 0
        %2393 = vmatpush1.bf16.msra.mxu0 0
        %2394 = vmatprep.subr.bf16.mxu0 0
        %2395 = vmatpush1.bf16.msra.mxu0 0
        %2396 = vmatprep.subr.bf16.mxu0 0
        %2397 = vmatpush1.bf16.msra.mxu0 0
        %2398 = vmatprep.mubr.bf16.mxu0 0
        %2399 = vmatmul.mubr.bf16.gmra.mrb[0].mxu0 %v1790
        %v2400 = vpop.f32.mrb[0].mxu0
        %v2401 = vadd.f32 %v2112, %v2400
        %v2402 = vpop.f32.mrb[0].mxu0
        %v2403 = vpop.f32.mrb[0].mxu0
        %v2404 = vadd.f32 %v2115, %v2403
        %v2405 = vpop.f32.mrb[0].mxu0
        %2406 = vmatprep.mubr.bf16.mxu0 0
        %2407 = vmatmul.mubr.bf16.gmra.mrb[0].mxu0 %v1793
        %v2408 = vpop.f32.mrb[0].mxu0
        %v2409 = vadd.f32 %v2120, %v2408
        %v2410 = vpop.f32.mrb[0].mxu0
        %v2411 = vpop.f32.mrb[0].mxu0
        %v2412 = vadd.f32 %v2123, %v2411
        %v2413 = vpop.f32.mrb[0].mxu0
        %2414 = vmatprep.mubr.bf16.mxu0 0
        %2415 = vmatmul.mubr.bf16.gmra.mrb[0].mxu0 %v1796
        %v2416 = vpop.f32.mrb[0].mxu0
        %v2417 = vadd.f32 %v2128, %v2416
        %v2418 = vpop.f32.mrb[0].mxu0
        %v2419 = vpop.f32.mrb[0].mxu0
        %v2420 = vadd.f32 %v2131, %v2419
        %v2421 = vpop.f32.mrb[0].mxu0
        %2422 = vmatprep.mubr.bf16.mxu0 0
        %2423 = vmatmul.mubr.bf16.gmra.mrb[0].mxu0 %v1799
        %v2424 = vpop.f32.mrb[0].mxu0
        %v2425 = vadd.f32 %v2136, %v2424
        %v2426 = vpop.f32.mrb[0].mxu0
        %v2427 = vpop.f32.mrb[0].mxu0
        %v2428 = vadd.f32 %v2139, %v2427
        %v2429 = vpop.f32.mrb[0].mxu0
        %2430 = vmatprep.mubr.bf16.mxu0 0
        %2431 = vmatmul.mubr.bf16.gmra.mrb[0].mxu0 %v1802
        %v2432 = vpop.f32.mrb[0].mxu0
        %v2433 = vadd.f32 %v2144, %v2432
        %v2434 = vpop.f32.mrb[0].mxu0
        %v2435 = vpop.f32.mrb[0].mxu0
        %v2436 = vadd.f32 %v2147, %v2435
        %v2437 = vpop.f32.mrb[0].mxu0
        %2438 = vmatprep.mubr.bf16.mxu0 0
        %2439 = vmatmul.mubr.bf16.gmra.mrb[0].mxu0 %v1805
        %v2440 = vpop.f32.mrb[0].mxu0
        %v2441 = vadd.f32 %v2152, %v2440
        %v2442 = vpop.f32.mrb[0].mxu0
        %v2443 = vpop.f32.mrb[0].mxu0
        %v2444 = vadd.f32 %v2155, %v2443
        %v2445 = vpop.f32.mrb[0].mxu0
        %2446 = vmatprep.mubr.bf16.mxu0 0
        %2447 = vmatmul.mubr.bf16.gmra.mrb[0].mxu0 %v1808
        %v2448 = vpop.f32.mrb[0].mxu0
        %v2449 = vadd.f32 %v2160, %v2448
        %v2450 = vpop.f32.mrb[0].mxu0
        %v2451 = vpop.f32.mrb[0].mxu0
        %v2452 = vadd.f32 %v2163, %v2451
        %v2453 = vpop.f32.mrb[0].mxu0
        %2454 = vmatprep.mubr.bf16.mxu0 0
        %2455 = vmatmul.mubr.bf16.gmra.mrb[0].mxu0 %v1811
        %v2456 = vpop.f32.mrb[0].mxu0
        %v2457 = vadd.f32 %v2168, %v2456
        %v2458 = vpop.f32.mrb[0].mxu0
        %v2459 = vpop.f32.mrb[0].mxu0
        %v2460 = vadd.f32 %v2171, %v2459
        %v2461 = vpop.f32.mrb[0].mxu0
        %2462 = vmatprep.mubr.bf16.mxu0 0
        %2463 = vmatmul.mubr.bf16.gmra.mrb[0].mxu0 %v1814
        %v2464 = vpop.f32.mrb[0].mxu0
        %v2465 = vadd.f32 %v2176, %v2464
        %v2466 = vpop.f32.mrb[0].mxu0
        %v2467 = vpop.f32.mrb[0].mxu0
        %v2468 = vadd.f32 %v2179, %v2467
        %v2469 = vpop.f32.mrb[0].mxu0
        %2470 = vmatprep.mubr.bf16.mxu0 0
        %2471 = vmatmul.mubr.bf16.gmra.mrb[0].mxu0 %v1817
        %v2472 = vpop.f32.mrb[0].mxu0
        %v2473 = vadd.f32 %v2184, %v2472
        %v2474 = vpop.f32.mrb[0].mxu0
        %v2475 = vpop.f32.mrb[0].mxu0
        %v2476 = vadd.f32 %v2187, %v2475
        %v2477 = vpop.f32.mrb[0].mxu0
        %2478 = vmatprep.mubr.bf16.mxu0 0
        %2479 = vmatmul.mubr.bf16.gmra.mrb[0].mxu0 %v1820
        %v2480 = vpop.f32.mrb[0].mxu0
        %v2481 = vadd.f32 %v2192, %v2480
        %v2482 = vpop.f32.mrb[0].mxu0
        %v2483 = vpop.f32.mrb[0].mxu0
        %v2484 = vadd.f32 %v2195, %v2483
        %v2485 = vpop.f32.mrb[0].mxu0
        %2486 = vmatprep.mubr.bf16.mxu0 0
        %2487 = vmatmul.mubr.bf16.gmra.mrb[0].mxu0 %v1823
        %v2488 = vpop.f32.mrb[0].mxu0
        %v2489 = vadd.f32 %v2200, %v2488
        %v2490 = vpop.f32.mrb[0].mxu0
        %v2491 = vpop.f32.mrb[0].mxu0
        %v2492 = vadd.f32 %v2203, %v2491
        %v2493 = vpop.f32.mrb[0].mxu0
        %2494 = vmatprep.mubr.bf16.mxu0 0
        %2495 = vmatmul.mubr.bf16.gmra.mrb[0].mxu0 %v1826
        %v2496 = vpop.f32.mrb[0].mxu0
        %v2497 = vadd.f32 %v2208, %v2496
        %v2498 = vpop.f32.mrb[0].mxu0
        %v2499 = vpop.f32.mrb[0].mxu0
        %v2500 = vadd.f32 %v2211, %v2499
        %v2501 = vpop.f32.mrb[0].mxu0
        %2502 = vmatprep.mubr.bf16.mxu0 0
        %2503 = vmatmul.mubr.bf16.gmra.mrb[0].mxu0 %v1829
        %v2504 = vpop.f32.mrb[0].mxu0
        %v2505 = vadd.f32 %v2216, %v2504
        %v2506 = vpop.f32.mrb[0].mxu0
        %v2507 = vpop.f32.mrb[0].mxu0
        %v2508 = vadd.f32 %v2219, %v2507
        %v2509 = vpop.f32.mrb[0].mxu0
        %2510 = vmatprep.mubr.bf16.mxu0 0
        %2511 = vmatmul.mubr.bf16.gmra.mrb[0].mxu0 %v1832
        %v2512 = vpop.f32.mrb[0].mxu0
        %v2513 = vadd.f32 %v2224, %v2512
        %v2514 = vpop.f32.mrb[0].mxu0
        %v2515 = vpop.f32.mrb[0].mxu0
        %v2516 = vadd.f32 %v2227, %v2515
        %v2517 = vpop.f32.mrb[0].mxu0
        %2518 = vmatprep.mubr.bf16.mxu0 0
        %2519 = vmatmul.mubr.bf16.gmra.mrb[0].mxu0 %v1835
        %v2520 = vpop.f32.mrb[0].mxu0
        %v2521 = vadd.f32 %v2232, %v2520
        %v2522 = vpop.f32.mrb[0].mxu0
        %v2523 = vpop.f32.mrb[0].mxu0
        %v2524 = vadd.f32 %v2235, %v2523
        %v2525 = vpop.f32.mrb[0].mxu0
        %2526 = vmatprep.mubr.bf16.mxu0 0
        %2527 = vmatmul.mubr.bf16.gmra.mrb[0].mxu0 %v1838
        %v2528 = vpop.f32.mrb[0].mxu0
        %v2529 = vadd.f32 %v2240, %v2528
        %v2530 = vpop.f32.mrb[0].mxu0
        %v2531 = vpop.f32.mrb[0].mxu0
        %v2532 = vadd.f32 %v2243, %v2531
        %v2533 = vpop.f32.mrb[0].mxu0
        %2534 = vmatprep.mubr.bf16.mxu0 0
        %2535 = vmatmul.mubr.bf16.gmra.mrb[0].mxu0 %v1841
        %v2536 = vpop.f32.mrb[0].mxu0
        %v2537 = vadd.f32 %v2248, %v2536
        %v2538 = vpop.f32.mrb[0].mxu0
        %v2539 = vpop.f32.mrb[0].mxu0
        %v2540 = vadd.f32 %v2251, %v2539
        %v2541 = vpop.f32.mrb[0].mxu0
        %2542 = vmatprep.mubr.bf16.mxu0 0
        %2543 = vmatmul.mubr.bf16.gmra.mrb[0].mxu0 %v1844
        %v2544 = vpop.f32.mrb[0].mxu0
        %v2545 = vadd.f32 %v2256, %v2544
        %v2546 = vpop.f32.mrb[0].mxu0
        %v2547 = vpop.f32.mrb[0].mxu0
        %v2548 = vadd.f32 %v2259, %v2547
        %v2549 = vpop.f32.mrb[0].mxu0
        %2550 = vmatprep.mubr.bf16.mxu0 0
        %2551 = vmatmul.mubr.bf16.gmra.mrb[0].mxu0 %v1847
        %v2552 = vpop.f32.mrb[0].mxu0
        %v2553 = vadd.f32 %v2264, %v2552
        %v2554 = vpop.f32.mrb[0].mxu0
        %v2555 = vpop.f32.mrb[0].mxu0
        %v2556 = vadd.f32 %v2267, %v2555
        %v2557 = vpop.f32.mrb[0].mxu0
        %2558 = vmatprep.mubr.bf16.mxu0 0
        %2559 = vmatmul.mubr.bf16.gmra.mrb[0].mxu0 %v1850
        %v2560 = vpop.f32.mrb[0].mxu0
        %v2561 = vadd.f32 %v2272, %v2560
        %v2562 = vpop.f32.mrb[0].mxu0
        %v2563 = vpop.f32.mrb[0].mxu0
        %v2564 = vadd.f32 %v2275, %v2563
        %v2565 = vpop.f32.mrb[0].mxu0
        %2566 = vmatprep.mubr.bf16.mxu0 0
        %2567 = vmatmul.mubr.bf16.gmra.mrb[0].mxu0 %v1853
        %v2568 = vpop.f32.mrb[0].mxu0
        %v2569 = vadd.f32 %v2280, %v2568
        %v2570 = vpop.f32.mrb[0].mxu0
        %v2571 = vpop.f32.mrb[0].mxu0
        %v2572 = vadd.f32 %v2283, %v2571
        %v2573 = vpop.f32.mrb[0].mxu0
        %2574 = vmatprep.mubr.bf16.mxu0 0
        %2575 = vmatmul.mubr.bf16.gmra.mrb[0].mxu0 %v1856
        %v2576 = vpop.f32.mrb[0].mxu0
        %v2577 = vadd.f32 %v2288, %v2576
        %v2578 = vpop.f32.mrb[0].mxu0
        %v2579 = vpop.f32.mrb[0].mxu0
        %v2580 = vadd.f32 %v2291, %v2579
        %v2581 = vpop.f32.mrb[0].mxu0
        %2582 = vmatprep.mubr.bf16.mxu0 0
        %2583 = vmatmul.mubr.bf16.gmra.mrb[0].mxu0 %v1859
        %v2584 = vpop.f32.mrb[0].mxu0
        %v2585 = vadd.f32 %v2296, %v2584
        %v2586 = vpop.f32.mrb[0].mxu0
        %v2587 = vpop.f32.mrb[0].mxu0
        %v2588 = vadd.f32 %v2299, %v2587
        %v2589 = vpop.f32.mrb[0].mxu0
        %2590 = vmatprep.mubr.bf16.mxu0 0
        %2591 = vmatmul.mubr.bf16.gmra.mrb[0].mxu0 %v1862
        %v2592 = vpop.f32.mrb[0].mxu0
        %v2593 = vadd.f32 %v2304, %v2592
        %v2594 = vpop.f32.mrb[0].mxu0
        %v2595 = vpop.f32.mrb[0].mxu0
        %v2596 = vadd.f32 %v2307, %v2595
        %v2597 = vpop.f32.mrb[0].mxu0
        %2598 = vmatprep.mubr.bf16.mxu0 0
        %2599 = vmatmul.mubr.bf16.gmra.mrb[0].mxu0 %v1865
        %v2600 = vpop.f32.mrb[0].mxu0
        %v2601 = vadd.f32 %v2312, %v2600
        %v2602 = vpop.f32.mrb[0].mxu0
        %v2603 = vpop.f32.mrb[0].mxu0
        %v2604 = vadd.f32 %v2315, %v2603
        %v2605 = vpop.f32.mrb[0].mxu0
        %2606 = vmatprep.mubr.bf16.mxu0 0
        %2607 = vmatmul.mubr.bf16.gmra.mrb[0].mxu0 %v1868
        %v2608 = vpop.f32.mrb[0].mxu0
        %v2609 = vadd.f32 %v2320, %v2608
        %v2610 = vpop.f32.mrb[0].mxu0
        %v2611 = vpop.f32.mrb[0].mxu0
        %v2612 = vadd.f32 %v2323, %v2611
        %v2613 = vpop.f32.mrb[0].mxu0
        %2614 = vmatprep.mubr.bf16.mxu0 0
        %2615 = vmatmul.mubr.bf16.gmra.mrb[0].mxu0 %v1871
        %v2616 = vpop.f32.mrb[0].mxu0
        %v2617 = vadd.f32 %v2328, %v2616
        %v2618 = vpop.f32.mrb[0].mxu0
        %v2619 = vpop.f32.mrb[0].mxu0
        %v2620 = vadd.f32 %v2331, %v2619
        %v2621 = vpop.f32.mrb[0].mxu0
        %2622 = vmatprep.mubr.bf16.mxu0 0
        %2623 = vmatmul.mubr.bf16.gmra.mrb[0].mxu0 %v1874
        %v2624 = vpop.f32.mrb[0].mxu0
        %v2625 = vadd.f32 %v2336, %v2624
        %v2626 = vpop.f32.mrb[0].mxu0
        %v2627 = vpop.f32.mrb[0].mxu0
        %v2628 = vadd.f32 %v2339, %v2627
        %v2629 = vpop.f32.mrb[0].mxu0
        %2630 = vmatprep.mubr.bf16.mxu0 0
        %2631 = vmatmul.mubr.bf16.gmra.mrb[0].mxu0 %v1877
        %v2632 = vpop.f32.mrb[0].mxu0
        %v2633 = vadd.f32 %v2344, %v2632
        %v2634 = vpop.f32.mrb[0].mxu0
        %v2635 = vpop.f32.mrb[0].mxu0
        %v2636 = vadd.f32 %v2347, %v2635
        %v2637 = vpop.f32.mrb[0].mxu0
        %2638 = vmatprep.mubr.bf16.mxu0 0
        %2639 = vmatmul.mubr.bf16.gmra.mrb[0].mxu0 %v1880
        %v2640 = vpop.f32.mrb[0].mxu0
        %v2641 = vadd.f32 %v2352, %v2640
        %v2642 = vpop.f32.mrb[0].mxu0
        %v2643 = vpop.f32.mrb[0].mxu0
        %v2644 = vadd.f32 %v2355, %v2643
        %v2645 = vpop.f32.mrb[0].mxu0
        %2646 = vmatprep.mubr.bf16.mxu0 0
        %2647 = vmatmul.mubr.bf16.gmra.mrb[0].mxu0 %v1883
        %v2648 = vpop.f32.mrb[0].mxu0
        %v2649 = vadd.f32 %v2360, %v2648
        %v2650 = vpop.f32.mrb[0].mxu0
        %v2651 = vpop.f32.mrb[0].mxu0
        %v2652 = vadd.f32 %v2363, %v2651
        %v2653 = vpop.f32.mrb[0].mxu0
        %2654 = vdwg.mxu0
        %v2655 = vld [vmem:[#allocation4] sm:$0xff]
        %v2656 = vld [vmem:[#allocation4 + $0x8] sm:$0xff]
        %v2657 = vld [vmem:[#allocation4 + $0x10] sm:$0xff]
        %v2658 = vld [vmem:[#allocation4 + $0x18] sm:$0xff]
        %v2659 = vld [vmem:[#allocation4 + $0x20] sm:$0xff]
        %v2660 = vld [vmem:[#allocation4 + $0x28] sm:$0xff]
        %v2661 = vld [vmem:[#allocation4 + $0x30] sm:$0xff]
        %v2662 = vld [vmem:[#allocation4 + $0x38] sm:$0xff]
        %v2663 = vld [vmem:[#allocation4 + $0x40] sm:$0xff]
        %v2664 = vld [vmem:[#allocation4 + $0x48] sm:$0xff]
        %v2665 = vld [vmem:[#allocation4 + $0x50] sm:$0xff]
        %v2666 = vld [vmem:[#allocation4 + $0x58] sm:$0xff]
        %v2667 = vld [vmem:[#allocation4 + $0x60] sm:$0xff]
        %v2668 = vld [vmem:[#allocation4 + $0x68] sm:$0xff]
        %v2669 = vld [vmem:[#allocation4 + $0x70] sm:$0xff]
        %v2670 = vld [vmem:[#allocation4 + $0x78] sm:$0xff]
        %v2671 = vld [vmem:[#allocation4 + $0x80] sm:$0xff]
        %v2672 = vld [vmem:[#allocation4 + $0x88] sm:$0xff]
        %v2673 = vld [vmem:[#allocation4 + $0x90] sm:$0xff]
        %v2674 = vld [vmem:[#allocation4 + $0x98] sm:$0xff]
        %v2675 = vld [vmem:[#allocation4 + $0xa0] sm:$0xff]
        %v2676 = vld [vmem:[#allocation4 + $0xa8] sm:$0xff]
        %v2677 = vld [vmem:[#allocation4 + $0xb0] sm:$0xff]
        %v2678 = vld [vmem:[#allocation4 + $0xb8] sm:$0xff]
        %v2679 = vld [vmem:[#allocation4 + $0xc0] sm:$0xff]
        %v2680 = vld [vmem:[#allocation4 + $0xc8] sm:$0xff]
        %v2681 = vld [vmem:[#allocation4 + $0xd0] sm:$0xff]
        %v2682 = vld [vmem:[#allocation4 + $0xd8] sm:$0xff]
        %v2683 = vld [vmem:[#allocation4 + $0xe0] sm:$0xff]
        %v2684 = vld [vmem:[#allocation4 + $0xe8] sm:$0xff]
        %v2685 = vld [vmem:[#allocation4 + $0xf0] sm:$0xff]
        %v2686 = vld [vmem:[#allocation4 + $0xf8] sm:$0xff]
        %v2687 = vld [vmem:[#allocation4 + $0x100] sm:$0xff]
        %v2688 = vld [vmem:[#allocation4 + $0x108] sm:$0xff]
        %v2689 = vld [vmem:[#allocation4 + $0x110] sm:$0xff]
        %v2690 = vld [vmem:[#allocation4 + $0x118] sm:$0xff]
        %v2691 = vld [vmem:[#allocation4 + $0x120] sm:$0xff]
        %v2692 = vld [vmem:[#allocation4 + $0x128] sm:$0xff]
        %v2693 = vld [vmem:[#allocation4 + $0x130] sm:$0xff]
        %v2694 = vld [vmem:[#allocation4 + $0x138] sm:$0xff]
        %v2695 = vld [vmem:[#allocation4 + $0x140] sm:$0xff]
        %v2696 = vld [vmem:[#allocation4 + $0x148] sm:$0xff]
        %v2697 = vld [vmem:[#allocation4 + $0x150] sm:$0xff]
        %v2698 = vld [vmem:[#allocation4 + $0x158] sm:$0xff]
        %v2699 = vld [vmem:[#allocation4 + $0x160] sm:$0xff]
        %v2700 = vld [vmem:[#allocation4 + $0x168] sm:$0xff]
        %v2701 = vld [vmem:[#allocation4 + $0x170] sm:$0xff]
        %v2702 = vld [vmem:[#allocation4 + $0x178] sm:$0xff]
        %v2703 = vld [vmem:[#allocation4 + $0x180] sm:$0xff]
        %v2704 = vld [vmem:[#allocation4 + $0x188] sm:$0xff]
        %v2705 = vld [vmem:[#allocation4 + $0x190] sm:$0xff]
        %v2706 = vld [vmem:[#allocation4 + $0x198] sm:$0xff]
        %v2707 = vld [vmem:[#allocation4 + $0x1a0] sm:$0xff]
        %v2708 = vld [vmem:[#allocation4 + $0x1a8] sm:$0xff]
        %v2709 = vld [vmem:[#allocation4 + $0x1b0] sm:$0xff]
        %v2710 = vld [vmem:[#allocation4 + $0x1b8] sm:$0xff]
        %v2711 = vld [vmem:[#allocation4 + $0x1c0] sm:$0xff]
        %v2712 = vld [vmem:[#allocation4 + $0x1c8] sm:$0xff]
        %v2713 = vld [vmem:[#allocation4 + $0x1d0] sm:$0xff]
        %v2714 = vld [vmem:[#allocation4 + $0x1d8] sm:$0xff]
        %v2715 = vld [vmem:[#allocation4 + $0x1e0] sm:$0xff]
        %v2716 = vld [vmem:[#allocation4 + $0x1e8] sm:$0xff]
        %v2717 = vld [vmem:[#allocation4 + $0x1f0] sm:$0xff]
        %v2718 = vld [vmem:[#allocation4 + $0x1f8] sm:$0xff]
        %v2719 = vadd.f32 %v2655, %v2401
        %v2720 = vadd.f32 %v2656, %v2404
        %v2721 = vadd.f32 %v2657, %v2409
        %v2722 = vadd.f32 %v2658, %v2412
        %v2723 = vadd.f32 %v2659, %v2417
        %v2724 = vadd.f32 %v2660, %v2420
        %v2725 = vadd.f32 %v2661, %v2425
        %v2726 = vadd.f32 %v2662, %v2428
        %v2727 = vadd.f32 %v2663, %v2433
        %v2728 = vadd.f32 %v2664, %v2436
        %v2729 = vadd.f32 %v2665, %v2441
        %v2730 = vadd.f32 %v2666, %v2444
        %v2731 = vadd.f32 %v2667, %v2449
        %v2732 = vadd.f32 %v2668, %v2452
        %v2733 = vadd.f32 %v2669, %v2457
        %v2734 = vadd.f32 %v2670, %v2460
        %v2735 = vadd.f32 %v2671, %v2465
        %v2736 = vadd.f32 %v2672, %v2468
        %v2737 = vadd.f32 %v2673, %v2473
        %v2738 = vadd.f32 %v2674, %v2476
        %v2739 = vadd.f32 %v2675, %v2481
        %v2740 = vadd.f32 %v2676, %v2484
        %v2741 = vadd.f32 %v2677, %v2489
        %v2742 = vadd.f32 %v2678, %v2492
        %v2743 = vadd.f32 %v2679, %v2497
        %v2744 = vadd.f32 %v2680, %v2500
        %v2745 = vadd.f32 %v2681, %v2505
        %v2746 = vadd.f32 %v2682, %v2508
        %v2747 = vadd.f32 %v2683, %v2513
        %v2748 = vadd.f32 %v2684, %v2516
        %v2749 = vadd.f32 %v2685, %v2521
        %v2750 = vadd.f32 %v2686, %v2524
        %v2751 = vadd.f32 %v2687, %v2529
        %v2752 = vadd.f32 %v2688, %v2532
        %v2753 = vadd.f32 %v2689, %v2537
        %v2754 = vadd.f32 %v2690, %v2540
        %v2755 = vadd.f32 %v2691, %v2545
        %v2756 = vadd.f32 %v2692, %v2548
        %v2757 = vadd.f32 %v2693, %v2553
        %v2758 = vadd.f32 %v2694, %v2556
        %v2759 = vadd.f32 %v2695, %v2561
        %v2760 = vadd.f32 %v2696, %v2564
        %v2761 = vadd.f32 %v2697, %v2569
        %v2762 = vadd.f32 %v2698, %v2572
        %v2763 = vadd.f32 %v2699, %v2577
        %v2764 = vadd.f32 %v2700, %v2580
        %v2765 = vadd.f32 %v2701, %v2585
        %v2766 = vadd.f32 %v2702, %v2588
        %v2767 = vadd.f32 %v2703, %v2593
        %v2768 = vadd.f32 %v2704, %v2596
        %v2769 = vadd.f32 %v2705, %v2601
        %v2770 = vadd.f32 %v2706, %v2604
        %v2771 = vadd.f32 %v2707, %v2609
        %v2772 = vadd.f32 %v2708, %v2612
        %v2773 = vadd.f32 %v2709, %v2617
        %v2774 = vadd.f32 %v2710, %v2620
        %v2775 = vadd.f32 %v2711, %v2625
        %v2776 = vadd.f32 %v2712, %v2628
        %v2777 = vadd.f32 %v2713, %v2633
        %v2778 = vadd.f32 %v2714, %v2636
        %v2779 = vadd.f32 %v2715, %v2641
        %v2780 = vadd.f32 %v2716, %v2644
        %v2781 = vadd.f32 %v2717, %v2649
        %v2782 = vadd.f32 %v2718, %v2652
        %2783 = vst [vmem:[#allocation4] sm:$0xff] %v2719
        %2784 = vst [vmem:[#allocation4 + $0x8] sm:$0xff] %v2720
        %2785 = vst [vmem:[#allocation4 + $0x10] sm:$0xff] %v2721
        %2786 = vst [vmem:[#allocation4 + $0x18] sm:$0xff] %v2722
        %2787 = vst [vmem:[#allocation4 + $0x20] sm:$0xff] %v2723
        %2788 = vst [vmem:[#allocation4 + $0x28] sm:$0xff] %v2724
        %2789 = vst [vmem:[#allocation4 + $0x30] sm:$0xff] %v2725
        %2790 = vst [vmem:[#allocation4 + $0x38] sm:$0xff] %v2726
        %2791 = vst [vmem:[#allocation4 + $0x40] sm:$0xff] %v2727
        %2792 = vst [vmem:[#allocation4 + $0x48] sm:$0xff] %v2728
        %2793 = vst [vmem:[#allocation4 + $0x50] sm:$0xff] %v2729
        %2794 = vst [vmem:[#allocation4 + $0x58] sm:$0xff] %v2730
        %2795 = vst [vmem:[#allocation4 + $0x60] sm:$0xff] %v2731
        %2796 = vst [vmem:[#allocation4 + $0x68] sm:$0xff] %v2732
        %2797 = vst [vmem:[#allocation4 + $0x70] sm:$0xff] %v2733
        %2798 = vst [vmem:[#allocation4 + $0x78] sm:$0xff] %v2734
        %2799 = vst [vmem:[#allocation4 + $0x80] sm:$0xff] %v2735
        %2800 = vst [vmem:[#allocation4 + $0x88] sm:$0xff] %v2736
        %2801 = vst [vmem:[#allocation4 + $0x90] sm:$0xff] %v2737
        %2802 = vst [vmem:[#allocation4 + $0x98] sm:$0xff] %v2738
        %2803 = vst [vmem:[#allocation4 + $0xa0] sm:$0xff] %v2739
        %2804 = vst [vmem:[#allocation4 + $0xa8] sm:$0xff] %v2740
        %2805 = vst [vmem:[#allocation4 + $0xb0] sm:$0xff] %v2741
        %2806 = vst [vmem:[#allocation4 + $0xb8] sm:$0xff] %v2742
        %2807 = vst [vmem:[#allocation4 + $0xc0] sm:$0xff] %v2743
        %2808 = vst [vmem:[#allocation4 + $0xc8] sm:$0xff] %v2744
        %2809 = vst [vmem:[#allocation4 + $0xd0] sm:$0xff] %v2745
        %2810 = vst [vmem:[#allocation4 + $0xd8] sm:$0xff] %v2746
        %2811 = vst [vmem:[#allocation4 + $0xe0] sm:$0xff] %v2747
        %2812 = vst [vmem:[#allocation4 + $0xe8] sm:$0xff] %v2748
        %2813 = vst [vmem:[#allocation4 + $0xf0] sm:$0xff] %v2749
        %2814 = vst [vmem:[#allocation4 + $0xf8] sm:$0xff] %v2750
        %2815 = vst [vmem:[#allocation4 + $0x100] sm:$0xff] %v2751
        %2816 = vst [vmem:[#allocation4 + $0x108] sm:$0xff] %v2752
        %2817 = vst [vmem:[#allocation4 + $0x110] sm:$0xff] %v2753
        %2818 = vst [vmem:[#allocation4 + $0x118] sm:$0xff] %v2754
        %2819 = vst [vmem:[#allocation4 + $0x120] sm:$0xff] %v2755
        %2820 = vst [vmem:[#allocation4 + $0x128] sm:$0xff] %v2756
        %2821 = vst [vmem:[#allocation4 + $0x130] sm:$0xff] %v2757
        %2822 = vst [vmem:[#allocation4 + $0x138] sm:$0xff] %v2758
        %2823 = vst [vmem:[#allocation4 + $0x140] sm:$0xff] %v2759
        %2824 = vst [vmem:[#allocation4 + $0x148] sm:$0xff] %v2760
        %2825 = vst [vmem:[#allocation4 + $0x150] sm:$0xff] %v2761
        %2826 = vst [vmem:[#allocation4 + $0x158] sm:$0xff] %v2762
        %2827 = vst [vmem:[#allocation4 + $0x160] sm:$0xff] %v2763
        %2828 = vst [vmem:[#allocation4 + $0x168] sm:$0xff] %v2764
        %2829 = vst [vmem:[#allocation4 + $0x170] sm:$0xff] %v2765
        %2830 = vst [vmem:[#allocation4 + $0x178] sm:$0xff] %v2766
        %2831 = vst [vmem:[#allocation4 + $0x180] sm:$0xff] %v2767
        %2832 = vst [vmem:[#allocation4 + $0x188] sm:$0xff] %v2768
        %2833 = vst [vmem:[#allocation4 + $0x190] sm:$0xff] %v2769
        %2834 = vst [vmem:[#allocation4 + $0x198] sm:$0xff] %v2770
        %2835 = vst [vmem:[#allocation4 + $0x1a0] sm:$0xff] %v2771
        %2836 = vst [vmem:[#allocation4 + $0x1a8] sm:$0xff] %v2772
        %2837 = vst [vmem:[#allocation4 + $0x1b0] sm:$0xff] %v2773
        %2838 = vst [vmem:[#allocation4 + $0x1b8] sm:$0xff] %v2774
        %2839 = vst [vmem:[#allocation4 + $0x1c0] sm:$0xff] %v2775
        %2840 = vst [vmem:[#allocation4 + $0x1c8] sm:$0xff] %v2776
        %2841 = vst [vmem:[#allocation4 + $0x1d0] sm:$0xff] %v2777
        %2842 = vst [vmem:[#allocation4 + $0x1d8] sm:$0xff] %v2778
        %2843 = vst [vmem:[#allocation4 + $0x1e0] sm:$0xff] %v2779
        %2844 = vst [vmem:[#allocation4 + $0x1e8] sm:$0xff] %v2780
        %2845 = vst [vmem:[#allocation4 + $0x1f0] sm:$0xff] %v2781
        %2846 = vst [vmem:[#allocation4 + $0x1f8] sm:$0xff] %v2782
        %s2847 = scalar_lea.vmem [#allocation2], 48
        %v2848 = vld [vmem:[%s2847] sm:$0xff]
        %v2849 = vld [vmem:[%s2847 + $0x8] sm:$0xff]
        %v2850 = vld [vmem:[%s2847 + $0x10] sm:$0xff]
        %v2851 = vld [vmem:[%s2847 + $0x18] sm:$0xff]
        %v2852 = vld [vmem:[%s2847 + $0x20] sm:$0xff]
        %v2853 = vld [vmem:[%s2847 + $0x28] sm:$0xff]
        %v2854 = vld [vmem:[%s2847 + $0x30] sm:$0xff]
        %v2855 = vld [vmem:[%s2847 + $0x38] sm:$0xff]
        %v2856 = vld [vmem:[%s2847 + $0x40] sm:$0xff]
        %v2857 = vld [vmem:[%s2847 + $0x48] sm:$0xff]
        %v2858 = vld [vmem:[%s2847 + $0x50] sm:$0xff]
        %v2859 = vld [vmem:[%s2847 + $0x58] sm:$0xff]
        %v2860 = vld [vmem:[%s2847 + $0x60] sm:$0xff]
        %v2861 = vld [vmem:[%s2847 + $0x68] sm:$0xff]
        %v2862 = vld [vmem:[%s2847 + $0x70] sm:$0xff]
        %v2863 = vld [vmem:[%s2847 + $0x78] sm:$0xff]
        %v2864 = vld [vmem:[%s2847 + $0x80] sm:$0xff]
        %v2865 = vld [vmem:[%s2847 + $0x88] sm:$0xff]
        %v2866 = vld [vmem:[%s2847 + $0x90] sm:$0xff]
        %v2867 = vld [vmem:[%s2847 + $0x98] sm:$0xff]
        %v2868 = vld [vmem:[%s2847 + $0xa0] sm:$0xff]
        %v2869 = vld [vmem:[%s2847 + $0xa8] sm:$0xff]
        %v2870 = vld [vmem:[%s2847 + $0xb0] sm:$0xff]
        %v2871 = vld [vmem:[%s2847 + $0xb8] sm:$0xff]
        %v2872 = vld [vmem:[%s2847 + $0xc0] sm:$0xff]
        %v2873 = vld [vmem:[%s2847 + $0xc8] sm:$0xff]
        %v2874 = vld [vmem:[%s2847 + $0xd0] sm:$0xff]
        %v2875 = vld [vmem:[%s2847 + $0xd8] sm:$0xff]
        %v2876 = vld [vmem:[%s2847 + $0xe0] sm:$0xff]
        %v2877 = vld [vmem:[%s2847 + $0xe8] sm:$0xff]
        %v2878 = vld [vmem:[%s2847 + $0xf0] sm:$0xff]
        %v2879 = vld [vmem:[%s2847 + $0xf8] sm:$0xff]
        %v2880 = vld [vmem:[%s2847 + $0x100] sm:$0xff]
        %v2881 = vld [vmem:[%s2847 + $0x108] sm:$0xff]
        %v2882 = vld [vmem:[%s2847 + $0x110] sm:$0xff]
        %v2883 = vld [vmem:[%s2847 + $0x118] sm:$0xff]
        %v2884 = vld [vmem:[%s2847 + $0x120] sm:$0xff]
        %v2885 = vld [vmem:[%s2847 + $0x128] sm:$0xff]
        %v2886 = vld [vmem:[%s2847 + $0x130] sm:$0xff]
        %v2887 = vld [vmem:[%s2847 + $0x138] sm:$0xff]
        %v2888 = vld [vmem:[%s2847 + $0x140] sm:$0xff]
        %v2889 = vld [vmem:[%s2847 + $0x148] sm:$0xff]
        %v2890 = vld [vmem:[%s2847 + $0x150] sm:$0xff]
        %v2891 = vld [vmem:[%s2847 + $0x158] sm:$0xff]
        %v2892 = vld [vmem:[%s2847 + $0x160] sm:$0xff]
        %v2893 = vld [vmem:[%s2847 + $0x168] sm:$0xff]
        %v2894 = vld [vmem:[%s2847 + $0x170] sm:$0xff]
        %v2895 = vld [vmem:[%s2847 + $0x178] sm:$0xff]
        %v2896 = vld [vmem:[%s2847 + $0x1b0] sm:$0xff]
        %v2897 = vld [vmem:[%s2847 + $0x1b8] sm:$0xff]
        %v2898 = vld [vmem:[%s2847 + $0x1c0] sm:$0xff]
        %v2899 = vld [vmem:[%s2847 + $0x1c8] sm:$0xff]
        %v2900 = vld [vmem:[%s2847 + $0x1d0] sm:$0xff]
        %v2901 = vld [vmem:[%s2847 + $0x1d8] sm:$0xff]
        %v2902 = vld [vmem:[%s2847 + $0x1e0] sm:$0xff]
        %v2903 = vld [vmem:[%s2847 + $0x1e8] sm:$0xff]
        %v2904 = vld [vmem:[%s2847 + $0x1f0] sm:$0xff]
        %v2905 = vld [vmem:[%s2847 + $0x1f8] sm:$0xff]
        %v2906 = vld [vmem:[%s2847 + $0x200] sm:$0xff]
        %v2907 = vld [vmem:[%s2847 + $0x208] sm:$0xff]
        %v2908 = vld [vmem:[%s2847 + $0x210] sm:$0xff]
        %v2909 = vld [vmem:[%s2847 + $0x218] sm:$0xff]
        %v2910 = vld [vmem:[%s2847 + $0x220] sm:$0xff]
        %v2911 = vld [vmem:[%s2847 + $0x228] sm:$0xff]
        %v2912 = vld [vmem:[%s2847 + $0x230] sm:$0xff]
        %v2913 = vld [vmem:[%s2847 + $0x238] sm:$0xff]
        %v2914 = vld [vmem:[%s2847 + $0x240] sm:$0xff]
        %v2915 = vld [vmem:[%s2847 + $0x248] sm:$0xff]
        %v2916 = vld [vmem:[%s2847 + $0x250] sm:$0xff]
        %v2917 = vld [vmem:[%s2847 + $0x258] sm:$0xff]
        %v2918 = vld [vmem:[%s2847 + $0x260] sm:$0xff]
        %v2919 = vld [vmem:[%s2847 + $0x268] sm:$0xff]
        %v2920 = vld [vmem:[%s2847 + $0x270] sm:$0xff]
        %v2921 = vld [vmem:[%s2847 + $0x278] sm:$0xff]
        %v2922 = vld [vmem:[%s2847 + $0x280] sm:$0xff]
        %v2923 = vld [vmem:[%s2847 + $0x288] sm:$0xff]
        %v2924 = vld [vmem:[%s2847 + $0x290] sm:$0xff]
        %v2925 = vld [vmem:[%s2847 + $0x298] sm:$0xff]
        %v2926 = vld [vmem:[%s2847 + $0x2a0] sm:$0xff]
        %v2927 = vld [vmem:[%s2847 + $0x2a8] sm:$0xff]
        %v2928 = vld [vmem:[%s2847 + $0x2b0] sm:$0xff]
        %v2929 = vld [vmem:[%s2847 + $0x2b8] sm:$0xff]
        %v2930 = vld [vmem:[%s2847 + $0x2c0] sm:$0xff]
        %v2931 = vld [vmem:[%s2847 + $0x2c8] sm:$0xff]
        %v2932 = vld [vmem:[%s2847 + $0x2d0] sm:$0xff]
        %v2933 = vld [vmem:[%s2847 + $0x2d8] sm:$0xff]
        %v2934 = vld [vmem:[%s2847 + $0x2e0] sm:$0xff]
        %v2935 = vld [vmem:[%s2847 + $0x2e8] sm:$0xff]
        %v2936 = vld [vmem:[%s2847 + $0x2f0] sm:$0xff]
        %v2937 = vld [vmem:[%s2847 + $0x2f8] sm:$0xff]
        %v2938 = vld [vmem:[%s2847 + $0x300] sm:$0xff]
        %v2939 = vld [vmem:[%s2847 + $0x308] sm:$0xff]
        %v2940 = vld [vmem:[%s2847 + $0x310] sm:$0xff]
        %v2941 = vld [vmem:[%s2847 + $0x318] sm:$0xff]
        %v2942 = vld [vmem:[%s2847 + $0x320] sm:$0xff]
        %v2943 = vld [vmem:[%s2847 + $0x328] sm:$0xff]
        %s2944 = scalar_lea.vmem %s1, 384
        %v2945 = vld [vmem:[%s2944] sm:$0xf]
        %v2946 = vld [vmem:[%s2944 + $0x4] sm:$0xf]
        %v2947 = vld [vmem:[%s2944 + $0x8] sm:$0xf]
        %v2948 = vld [vmem:[%s2944 + $0xc] sm:$0xf]
        %v2949 = vld [vmem:[%s2944 + $0x10] sm:$0xf]
        %v2950 = vld [vmem:[%s2944 + $0x14] sm:$0xf]
        %v2951 = vld [vmem:[%s2944 + $0x18] sm:$0xf]
        %v2952 = vld [vmem:[%s2944 + $0x1c] sm:$0xf]
        %v2953 = vld [vmem:[%s2944 + $0x20] sm:$0xf]
        %v2954 = vld [vmem:[%s2944 + $0x24] sm:$0xf]
        %v2955 = vld [vmem:[%s2944 + $0x28] sm:$0xf]
        %v2956 = vld [vmem:[%s2944 + $0x2c] sm:$0xf]
        %v2957 = vld [vmem:[%s2944 + $0x30] sm:$0xf]
        %v2958 = vld [vmem:[%s2944 + $0x34] sm:$0xf]
        %v2959 = vld [vmem:[%s2944 + $0x38] sm:$0xf]
        %v2960 = vld [vmem:[%s2944 + $0x3c] sm:$0xf]
        %v2961 = vld [vmem:[%s2944 + $0x40] sm:$0xf]
        %v2962 = vld [vmem:[%s2944 + $0x44] sm:$0xf]
        %v2963 = vld [vmem:[%s2944 + $0x48] sm:$0xf]
        %v2964 = vld [vmem:[%s2944 + $0x4c] sm:$0xf]
        %v2965 = vld [vmem:[%s2944 + $0x50] sm:$0xf]
        %v2966 = vld [vmem:[%s2944 + $0x54] sm:$0xf]
        %v2967 = vld [vmem:[%s2944 + $0x58] sm:$0xf]
        %v2968 = vld [vmem:[%s2944 + $0x5c] sm:$0xf]
        %v2969 = vld [vmem:[%s2944 + $0x60] sm:$0xf]
        %v2970 = vld [vmem:[%s2944 + $0x64] sm:$0xf]
        %v2971 = vld [vmem:[%s2944 + $0x68] sm:$0xf]
        %v2972 = vld [vmem:[%s2944 + $0x6c] sm:$0xf]
        %v2973 = vld [vmem:[%s2944 + $0x70] sm:$0xf]
        %v2974 = vld [vmem:[%s2944 + $0x74] sm:$0xf]
        %v2975 = vld [vmem:[%s2944 + $0x78] sm:$0xf]
        %v2976 = vld [vmem:[%s2944 + $0x7c] sm:$0xf]
        %v2977 = vld [vmem:[%s2944 + $0x80] sm:$0xf]
        %v2978 = vld [vmem:[%s2944 + $0x84] sm:$0xf]
        %v2979 = vld [vmem:[%s2944 + $0x88] sm:$0xf]
        %v2980 = vld [vmem:[%s2944 + $0x8c] sm:$0xf]
        %v2981 = vld [vmem:[%s2944 + $0x90] sm:$0xf]
        %v2982 = vld [vmem:[%s2944 + $0x94] sm:$0xf]
        %v2983 = vld [vmem:[%s2944 + $0x98] sm:$0xf]
        %v2984 = vld [vmem:[%s2944 + $0x9c] sm:$0xf]
        %v2985 = vld [vmem:[%s2944 + $0xa0] sm:$0xf]
        %v2986 = vld [vmem:[%s2944 + $0xa4] sm:$0xf]
        %v2987 = vld [vmem:[%s2944 + $0xa8] sm:$0xf]
        %v2988 = vld [vmem:[%s2944 + $0xac] sm:$0xf]
        %v2989 = vld [vmem:[%s2944 + $0xb0] sm:$0xf]
        %v2990 = vld [vmem:[%s2944 + $0xb4] sm:$0xf]
        %v2991 = vld [vmem:[%s2944 + $0xb8] sm:$0xf]
        %v2992 = vld [vmem:[%s2944 + $0xbc] sm:$0xf]
        %v3041 = vunpack.c.l.b16 %v2945
        %v3042 = vunpack.c.l.b16 %v2946
        %v3043 = vunpack.c.l.b16 %v2947
        %v3044 = vunpack.c.l.b16 %v2948
        %v3045 = vunpack.c.l.b16 %v2949
        %v3046 = vunpack.c.l.b16 %v2950
        %v3047 = vunpack.c.l.b16 %v2951
        %v3048 = vunpack.c.l.b16 %v2952
        %v3049 = vunpack.c.l.b16 %v2953
        %v3050 = vunpack.c.l.b16 %v2954
        %v3051 = vunpack.c.l.b16 %v2955
        %v3052 = vunpack.c.l.b16 %v2956
        %v3053 = vunpack.c.l.b16 %v2957
        %v3054 = vunpack.c.l.b16 %v2958
        %v3055 = vunpack.c.l.b16 %v2959
        %v3056 = vunpack.c.l.b16 %v2960
        %v3057 = vunpack.c.l.b16 %v2961
        %v3058 = vunpack.c.l.b16 %v2962
        %v3059 = vunpack.c.l.b16 %v2963
        %v3060 = vunpack.c.l.b16 %v2964
        %v3061 = vunpack.c.l.b16 %v2965
        %v3062 = vunpack.c.l.b16 %v2966
        %v3063 = vunpack.c.l.b16 %v2967
        %v3064 = vunpack.c.l.b16 %v2968
        %v3065 = vunpack.c.l.b16 %v2969
        %v3066 = vunpack.c.l.b16 %v2970
        %v3067 = vunpack.c.l.b16 %v2971
        %v3068 = vunpack.c.l.b16 %v2972
        %v3069 = vunpack.c.l.b16 %v2973
        %v3070 = vunpack.c.l.b16 %v2974
        %v3071 = vunpack.c.l.b16 %v2975
        %v3072 = vunpack.c.l.b16 %v2976
        %v3073 = vunpack.c.l.b16 %v2977
        %v3074 = vunpack.c.l.b16 %v2978
        %v3075 = vunpack.c.l.b16 %v2979
        %v3076 = vunpack.c.l.b16 %v2980
        %v3077 = vunpack.c.l.b16 %v2981
        %v3078 = vunpack.c.l.b16 %v2982
        %v3079 = vunpack.c.l.b16 %v2983
        %v3080 = vunpack.c.l.b16 %v2984
        %v3081 = vunpack.c.l.b16 %v2985
        %v3082 = vunpack.c.l.b16 %v2986
        %v3083 = vunpack.c.l.b16 %v2987
        %v3084 = vunpack.c.l.b16 %v2988
        %v3085 = vunpack.c.l.b16 %v2989
        %v3086 = vunpack.c.l.b16 %v2990
        %v3087 = vunpack.c.l.b16 %v2991
        %v3088 = vunpack.c.l.b16 %v2992
        %v3089 = vpack.c.b16 %v3042, %v3041
        %v3090 = vpack.c.b16 %v3044, %v3043
        %v3091 = vpack.c.b16 %v3046, %v3045
        %v3092 = vpack.c.b16 %v3048, %v3047
        %v3093 = vpack.c.b16 %v3050, %v3049
        %v3094 = vpack.c.b16 %v3052, %v3051
        %v3095 = vpack.c.b16 %v3054, %v3053
        %v3096 = vpack.c.b16 %v3056, %v3055
        %v3097 = vpack.c.b16 %v3058, %v3057
        %v3098 = vpack.c.b16 %v3060, %v3059
        %v3099 = vpack.c.b16 %v3062, %v3061
        %v3100 = vpack.c.b16 %v3064, %v3063
        %v3101 = vpack.c.b16 %v3066, %v3065
        %v3102 = vpack.c.b16 %v3068, %v3067
        %v3103 = vpack.c.b16 %v3070, %v3069
        %v3104 = vpack.c.b16 %v3072, %v3071
        %v3105 = vpack.c.b16 %v3074, %v3073
        %v3106 = vpack.c.b16 %v3076, %v3075
        %v3107 = vpack.c.b16 %v3078, %v3077
        %v3108 = vpack.c.b16 %v3080, %v3079
        %v3109 = vpack.c.b16 %v3082, %v3081
        %v3110 = vpack.c.b16 %v3084, %v3083
        %v3111 = vpack.c.b16 %v3086, %v3085
        %v3112 = vpack.c.b16 %v3088, %v3087
        %3137 = vmatprep.subr.bf16.mxu0 0
        %3138 = vmatpush1.bf16.msra.mxu0 %v3089
        %3139 = vmatprep.subr.bf16.mxu0 0
        %3140 = vmatpush1.bf16.msra.mxu0 %v3090
        %3141 = vmatprep.subr.bf16.mxu0 0
        %3142 = vmatpush1.bf16.msra.mxu0 %v3091
        %3143 = vmatprep.subr.bf16.mxu0 0
        %3144 = vmatpush1.bf16.msra.mxu0 %v3092
        %3145 = vmatprep.subr.bf16.mxu0 0
        %3146 = vmatpush1.bf16.msra.mxu0 %v3093
        %3147 = vmatprep.subr.bf16.mxu0 0
        %3148 = vmatpush1.bf16.msra.mxu0 %v3094
        %3149 = vmatprep.subr.bf16.mxu0 0
        %3150 = vmatpush1.bf16.msra.mxu0 %v3095
        %3151 = vmatprep.subr.bf16.mxu0 0
        %3152 = vmatpush1.bf16.msra.mxu0 %v3096
        %3153 = vmatprep.subr.bf16.mxu0 0
        %3154 = vmatpush1.bf16.msra.mxu0 %v3097
        %3155 = vmatprep.subr.bf16.mxu0 0
        %3156 = vmatpush1.bf16.msra.mxu0 %v3098
        %3157 = vmatprep.subr.bf16.mxu0 0
        %3158 = vmatpush1.bf16.msra.mxu0 %v3099
        %3159 = vmatprep.subr.bf16.mxu0 0
        %3160 = vmatpush1.bf16.msra.mxu0 %v3100
        %3161 = vmatprep.subr.bf16.mxu0 0
        %3162 = vmatpush1.bf16.msra.mxu0 %v3101
        %3163 = vmatprep.subr.bf16.mxu0 0
        %3164 = vmatpush1.bf16.msra.mxu0 %v3102
        %3165 = vmatprep.subr.bf16.mxu0 0
        %3166 = vmatpush1.bf16.msra.mxu0 %v3103
        %3167 = vmatprep.subr.bf16.mxu0 0
        %3168 = vmatpush1.bf16.msra.mxu0 %v3104
        %3169 = vmatprep.mubr.bf16.mxu0 %v2849
        %3170 = vmatmul.mubr.bf16.gmra.mrb[0].mxu0 %v2848
        %v3171 = vpop.f32.mrb[0].mxu0
        %v3172 = vadd.f32 0.0, %v3171
        %v3173 = vpop.f32.mrb[0].mxu0
        %v3174 = vpop.f32.mrb[0].mxu0
        %v3175 = vadd.f32 0.0, %v3174
        %v3176 = vpop.f32.mrb[0].mxu0
        %3177 = vmatprep.mubr.bf16.mxu0 %v2852
        %3178 = vmatmul.mubr.bf16.gmra.mrb[0].mxu0 %v2851
        %v3179 = vpop.f32.mrb[0].mxu0
        %v3180 = vadd.f32 0.0, %v3179
        %v3181 = vpop.f32.mrb[0].mxu0
        %v3182 = vpop.f32.mrb[0].mxu0
        %v3183 = vadd.f32 0.0, %v3182
        %v3184 = vpop.f32.mrb[0].mxu0
        %3185 = vmatprep.mubr.bf16.mxu0 %v2855
        %3186 = vmatmul.mubr.bf16.gmra.mrb[0].mxu0 %v2854
        %v3187 = vpop.f32.mrb[0].mxu0
        %v3188 = vadd.f32 0.0, %v3187
        %v3189 = vpop.f32.mrb[0].mxu0
        %v3190 = vpop.f32.mrb[0].mxu0
        %v3191 = vadd.f32 0.0, %v3190
        %v3192 = vpop.f32.mrb[0].mxu0
        %3193 = vmatprep.mubr.bf16.mxu0 %v2858
        %3194 = vmatmul.mubr.bf16.gmra.mrb[0].mxu0 %v2857
        %v3195 = vpop.f32.mrb[0].mxu0
        %v3196 = vadd.f32 0.0, %v3195
        %v3197 = vpop.f32.mrb[0].mxu0
        %v3198 = vpop.f32.mrb[0].mxu0
        %v3199 = vadd.f32 0.0, %v3198
        %v3200 = vpop.f32.mrb[0].mxu0
        %3201 = vmatprep.mubr.bf16.mxu0 %v2861
        %3202 = vmatmul.mubr.bf16.gmra.mrb[0].mxu0 %v2860
        %v3203 = vpop.f32.mrb[0].mxu0
        %v3204 = vadd.f32 0.0, %v3203
        %v3205 = vpop.f32.mrb[0].mxu0
        %v3206 = vpop.f32.mrb[0].mxu0
        %v3207 = vadd.f32 0.0, %v3206
        %v3208 = vpop.f32.mrb[0].mxu0
        %3209 = vmatprep.mubr.bf16.mxu0 %v2864
        %3210 = vmatmul.mubr.bf16.gmra.mrb[0].mxu0 %v2863
        %v3211 = vpop.f32.mrb[0].mxu0
        %v3212 = vadd.f32 0.0, %v3211
        %v3213 = vpop.f32.mrb[0].mxu0
        %v3214 = vpop.f32.mrb[0].mxu0
        %v3215 = vadd.f32 0.0, %v3214
        %v3216 = vpop.f32.mrb[0].mxu0
        %3217 = vmatprep.mubr.bf16.mxu0 %v2867
        %3218 = vmatmul.mubr.bf16.gmra.mrb[0].mxu0 %v2866
        %v3219 = vpop.f32.mrb[0].mxu0
        %v3220 = vadd.f32 0.0, %v3219
        %v3221 = vpop.f32.mrb[0].mxu0
        %v3222 = vpop.f32.mrb[0].mxu0
        %v3223 = vadd.f32 0.0, %v3222
        %v3224 = vpop.f32.mrb[0].mxu0
        %3225 = vmatprep.mubr.bf16.mxu0 %v2870
        %3226 = vmatmul.mubr.bf16.gmra.mrb[0].mxu0 %v2869
        %v3227 = vpop.f32.mrb[0].mxu0
        %v3228 = vadd.f32 0.0, %v3227
        %v3229 = vpop.f32.mrb[0].mxu0
        %v3230 = vpop.f32.mrb[0].mxu0
        %v3231 = vadd.f32 0.0, %v3230
        %v3232 = vpop.f32.mrb[0].mxu0
        %3233 = vmatprep.mubr.bf16.mxu0 %v2873
        %3234 = vmatmul.mubr.bf16.gmra.mrb[0].mxu0 %v2872
        %v3235 = vpop.f32.mrb[0].mxu0
        %v3236 = vadd.f32 0.0, %v3235
        %v3237 = vpop.f32.mrb[0].mxu0
        %v3238 = vpop.f32.mrb[0].mxu0
        %v3239 = vadd.f32 0.0, %v3238
        %v3240 = vpop.f32.mrb[0].mxu0
        %3241 = vmatprep.mubr.bf16.mxu0 %v2876
        %3242 = vmatmul.mubr.bf16.gmra.mrb[0].mxu0 %v2875
        %v3243 = vpop.f32.mrb[0].mxu0
        %v3244 = vadd.f32 0.0, %v3243
        %v3245 = vpop.f32.mrb[0].mxu0
        %v3246 = vpop.f32.mrb[0].mxu0
        %v3247 = vadd.f32 0.0, %v3246
        %v3248 = vpop.f32.mrb[0].mxu0
        %3249 = vmatprep.mubr.bf16.mxu0 %v2879
        %3250 = vmatmul.mubr.bf16.gmra.mrb[0].mxu0 %v2878
        %v3251 = vpop.f32.mrb[0].mxu0
        %v3252 = vadd.f32 0.0, %v3251
        %v3253 = vpop.f32.mrb[0].mxu0
        %v3254 = vpop.f32.mrb[0].mxu0
        %v3255 = vadd.f32 0.0, %v3254
        %v3256 = vpop.f32.mrb[0].mxu0
        %3257 = vmatprep.mubr.bf16.mxu0 %v2882
        %3258 = vmatmul.mubr.bf16.gmra.mrb[0].mxu0 %v2881
        %v3259 = vpop.f32.mrb[0].mxu0
        %v3260 = vadd.f32 0.0, %v3259
        %v3261 = vpop.f32.mrb[0].mxu0
        %v3262 = vpop.f32.mrb[0].mxu0
        %v3263 = vadd.f32 0.0, %v3262
        %v3264 = vpop.f32.mrb[0].mxu0
        %3265 = vmatprep.mubr.bf16.mxu0 %v2885
        %3266 = vmatmul.mubr.bf16.gmra.mrb[0].mxu0 %v2884
        %v3267 = vpop.f32.mrb[0].mxu0
        %v3268 = vadd.f32 0.0, %v3267
        %v3269 = vpop.f32.mrb[0].mxu0
        %v3270 = vpop.f32.mrb[0].mxu0
        %v3271 = vadd.f32 0.0, %v3270
        %v3272 = vpop.f32.mrb[0].mxu0
        %3273 = vmatprep.mubr.bf16.mxu0 %v2888
        %3274 = vmatmul.mubr.bf16.gmra.mrb[0].mxu0 %v2887
        %v3275 = vpop.f32.mrb[0].mxu0
        %v3276 = vadd.f32 0.0, %v3275
        %v3277 = vpop.f32.mrb[0].mxu0
        %v3278 = vpop.f32.mrb[0].mxu0
        %v3279 = vadd.f32 0.0, %v3278
        %v3280 = vpop.f32.mrb[0].mxu0
        %3281 = vmatprep.mubr.bf16.mxu0 %v2891
        %3282 = vmatmul.mubr.bf16.gmra.mrb[0].mxu0 %v2890
        %v3283 = vpop.f32.mrb[0].mxu0
        %v3284 = vadd.f32 0.0, %v3283
        %v3285 = vpop.f32.mrb[0].mxu0
        %v3286 = vpop.f32.mrb[0].mxu0
        %v3287 = vadd.f32 0.0, %v3286
        %v3288 = vpop.f32.mrb[0].mxu0
        %3289 = vmatprep.mubr.bf16.mxu0 %v2894
        %3290 = vmatmul.mubr.bf16.gmra.mrb[0].mxu0 %v2893
        %v3291 = vpop.f32.mrb[0].mxu0
        %v3292 = vadd.f32 0.0, %v3291
        %v3293 = vpop.f32.mrb[0].mxu0
        %v3294 = vpop.f32.mrb[0].mxu0
        %v3295 = vadd.f32 0.0, %v3294
        %v3296 = vpop.f32.mrb[0].mxu0
        %3297 = vmatprep.mubr.bf16.mxu0 %v2897
        %3298 = vmatmul.mubr.bf16.gmra.mrb[0].mxu0 %v2896
        %v3299 = vpop.f32.mrb[0].mxu0
        %v3300 = vadd.f32 0.0, %v3299
        %v3301 = vpop.f32.mrb[0].mxu0
        %v3302 = vpop.f32.mrb[0].mxu0
        %v3303 = vadd.f32 0.0, %v3302
        %v3304 = vpop.f32.mrb[0].mxu0
        %3305 = vmatprep.mubr.bf16.mxu0 %v2900
        %3306 = vmatmul.mubr.bf16.gmra.mrb[0].mxu0 %v2899
        %v3307 = vpop.f32.mrb[0].mxu0
        %v3308 = vadd.f32 0.0, %v3307
        %v3309 = vpop.f32.mrb[0].mxu0
        %v3310 = vpop.f32.mrb[0].mxu0
        %v3311 = vadd.f32 0.0, %v3310
        %v3312 = vpop.f32.mrb[0].mxu0
        %3313 = vmatprep.mubr.bf16.mxu0 %v2903
        %3314 = vmatmul.mubr.bf16.gmra.mrb[0].mxu0 %v2902
        %v3315 = vpop.f32.mrb[0].mxu0
        %v3316 = vadd.f32 0.0, %v3315
        %v3317 = vpop.f32.mrb[0].mxu0
        %v3318 = vpop.f32.mrb[0].mxu0
        %v3319 = vadd.f32 0.0, %v3318
        %v3320 = vpop.f32.mrb[0].mxu0
        %3321 = vmatprep.mubr.bf16.mxu0 %v2906
        %3322 = vmatmul.mubr.bf16.gmra.mrb[0].mxu0 %v2905
        %v3323 = vpop.f32.mrb[0].mxu0
        %v3324 = vadd.f32 0.0, %v3323
        %v3325 = vpop.f32.mrb[0].mxu0
        %v3326 = vpop.f32.mrb[0].mxu0
        %v3327 = vadd.f32 0.0, %v3326
        %v3328 = vpop.f32.mrb[0].mxu0
        %3329 = vmatprep.mubr.bf16.mxu0 %v2909
        %3330 = vmatmul.mubr.bf16.gmra.mrb[0].mxu0 %v2908
        %v3331 = vpop.f32.mrb[0].mxu0
        %v3332 = vadd.f32 0.0, %v3331
        %v3333 = vpop.f32.mrb[0].mxu0
        %v3334 = vpop.f32.mrb[0].mxu0
        %v3335 = vadd.f32 0.0, %v3334
        %v3336 = vpop.f32.mrb[0].mxu0
        %3337 = vmatprep.mubr.bf16.mxu0 %v2912
        %3338 = vmatmul.mubr.bf16.gmra.mrb[0].mxu0 %v2911
        %v3339 = vpop.f32.mrb[0].mxu0
        %v3340 = vadd.f32 0.0, %v3339
        %v3341 = vpop.f32.mrb[0].mxu0
        %v3342 = vpop.f32.mrb[0].mxu0
        %v3343 = vadd.f32 0.0, %v3342
        %v3344 = vpop.f32.mrb[0].mxu0
        %3345 = vmatprep.mubr.bf16.mxu0 %v2915
        %3346 = vmatmul.mubr.bf16.gmra.mrb[0].mxu0 %v2914
        %v3347 = vpop.f32.mrb[0].mxu0
        %v3348 = vadd.f32 0.0, %v3347
        %v3349 = vpop.f32.mrb[0].mxu0
        %v3350 = vpop.f32.mrb[0].mxu0
        %v3351 = vadd.f32 0.0, %v3350
        %v3352 = vpop.f32.mrb[0].mxu0
        %3353 = vmatprep.mubr.bf16.mxu0 %v2918
        %3354 = vmatmul.mubr.bf16.gmra.mrb[0].mxu0 %v2917
        %v3355 = vpop.f32.mrb[0].mxu0
        %v3356 = vadd.f32 0.0, %v3355
        %v3357 = vpop.f32.mrb[0].mxu0
        %v3358 = vpop.f32.mrb[0].mxu0
        %v3359 = vadd.f32 0.0, %v3358
        %v3360 = vpop.f32.mrb[0].mxu0
        %3361 = vmatprep.mubr.bf16.mxu0 %v2921
        %3362 = vmatmul.mubr.bf16.gmra.mrb[0].mxu0 %v2920
        %v3363 = vpop.f32.mrb[0].mxu0
        %v3364 = vadd.f32 0.0, %v3363
        %v3365 = vpop.f32.mrb[0].mxu0
        %v3366 = vpop.f32.mrb[0].mxu0
        %v3367 = vadd.f32 0.0, %v3366
        %v3368 = vpop.f32.mrb[0].mxu0
        %3369 = vmatprep.mubr.bf16.mxu0 %v2924
        %3370 = vmatmul.mubr.bf16.gmra.mrb[0].mxu0 %v2923
        %v3371 = vpop.f32.mrb[0].mxu0
        %v3372 = vadd.f32 0.0, %v3371
        %v3373 = vpop.f32.mrb[0].mxu0
        %v3374 = vpop.f32.mrb[0].mxu0
        %v3375 = vadd.f32 0.0, %v3374
        %v3376 = vpop.f32.mrb[0].mxu0
        %3377 = vmatprep.mubr.bf16.mxu0 %v2927
        %3378 = vmatmul.mubr.bf16.gmra.mrb[0].mxu0 %v2926
        %v3379 = vpop.f32.mrb[0].mxu0
        %v3380 = vadd.f32 0.0, %v3379
        %v3381 = vpop.f32.mrb[0].mxu0
        %v3382 = vpop.f32.mrb[0].mxu0
        %v3383 = vadd.f32 0.0, %v3382
        %v3384 = vpop.f32.mrb[0].mxu0
        %3385 = vmatprep.mubr.bf16.mxu0 %v2930
        %3386 = vmatmul.mubr.bf16.gmra.mrb[0].mxu0 %v2929
        %v3387 = vpop.f32.mrb[0].mxu0
        %v3388 = vadd.f32 0.0, %v3387
        %v3389 = vpop.f32.mrb[0].mxu0
        %v3390 = vpop.f32.mrb[0].mxu0
        %v3391 = vadd.f32 0.0, %v3390
        %v3392 = vpop.f32.mrb[0].mxu0
        %3393 = vmatprep.mubr.bf16.mxu0 %v2933
        %3394 = vmatmul.mubr.bf16.gmra.mrb[0].mxu0 %v2932
        %v3395 = vpop.f32.mrb[0].mxu0
        %v3396 = vadd.f32 0.0, %v3395
        %v3397 = vpop.f32.mrb[0].mxu0
        %v3398 = vpop.f32.mrb[0].mxu0
        %v3399 = vadd.f32 0.0, %v3398
        %v3400 = vpop.f32.mrb[0].mxu0
        %3401 = vmatprep.mubr.bf16.mxu0 %v2936
        %3402 = vmatmul.mubr.bf16.gmra.mrb[0].mxu0 %v2935
        %v3403 = vpop.f32.mrb[0].mxu0
        %v3404 = vadd.f32 0.0, %v3403
        %v3405 = vpop.f32.mrb[0].mxu0
        %v3406 = vpop.f32.mrb[0].mxu0
        %v3407 = vadd.f32 0.0, %v3406
        %v3408 = vpop.f32.mrb[0].mxu0
        %3409 = vmatprep.mubr.bf16.mxu0 %v2939
        %3410 = vmatmul.mubr.bf16.gmra.mrb[0].mxu0 %v2938
        %v3411 = vpop.f32.mrb[0].mxu0
        %v3412 = vadd.f32 0.0, %v3411
        %v3413 = vpop.f32.mrb[0].mxu0
        %v3414 = vpop.f32.mrb[0].mxu0
        %v3415 = vadd.f32 0.0, %v3414
        %v3416 = vpop.f32.mrb[0].mxu0
        %3417 = vmatprep.mubr.bf16.mxu0 %v2942
        %3418 = vmatmul.mubr.bf16.gmra.mrb[0].mxu0 %v2941
        %v3419 = vpop.f32.mrb[0].mxu0
        %v3420 = vadd.f32 0.0, %v3419
        %v3421 = vpop.f32.mrb[0].mxu0
        %v3422 = vpop.f32.mrb[0].mxu0
        %v3423 = vadd.f32 0.0, %v3422
        %v3424 = vpop.f32.mrb[0].mxu0
        %3425 = vdwg.mxu0
        %3426 = vmatprep.subr.bf16.mxu0 0
        %3427 = vmatpush1.bf16.msra.mxu0 %v3105
        %3428 = vmatprep.subr.bf16.mxu0 0
        %3429 = vmatpush1.bf16.msra.mxu0 %v3106
        %3430 = vmatprep.subr.bf16.mxu0 0
        %3431 = vmatpush1.bf16.msra.mxu0 %v3107
        %3432 = vmatprep.subr.bf16.mxu0 0
        %3433 = vmatpush1.bf16.msra.mxu0 %v3108
        %3434 = vmatprep.subr.bf16.mxu0 0
        %3435 = vmatpush1.bf16.msra.mxu0 %v3109
        %3436 = vmatprep.subr.bf16.mxu0 0
        %3437 = vmatpush1.bf16.msra.mxu0 %v3110
        %3438 = vmatprep.subr.bf16.mxu0 0
        %3439 = vmatpush1.bf16.msra.mxu0 %v3111
        %3440 = vmatprep.subr.bf16.mxu0 0
        %3441 = vmatpush1.bf16.msra.mxu0 %v3112
        %3442 = vmatprep.subr.bf16.mxu0 0
        %3443 = vmatpush1.bf16.msra.mxu0 0
        %3444 = vmatprep.subr.bf16.mxu0 0
        %3445 = vmatpush1.bf16.msra.mxu0 0
        %3446 = vmatprep.subr.bf16.mxu0 0
        %3447 = vmatpush1.bf16.msra.mxu0 0
        %3448 = vmatprep.subr.bf16.mxu0 0
        %3449 = vmatpush1.bf16.msra.mxu0 0
        %3450 = vmatprep.subr.bf16.mxu0 0
        %3451 = vmatpush1.bf16.msra.mxu0 0
        %3452 = vmatprep.subr.bf16.mxu0 0
        %3453 = vmatpush1.bf16.msra.mxu0 0
        %3454 = vmatprep.subr.bf16.mxu0 0
        %3455 = vmatpush1.bf16.msra.mxu0 0
        %3456 = vmatprep.subr.bf16.mxu0 0
        %3457 = vmatpush1.bf16.msra.mxu0 0
        %3458 = vmatprep.mubr.bf16.mxu0 0
        %3459 = vmatmul.mubr.bf16.gmra.mrb[0].mxu0 %v2850
        %v3460 = vpop.f32.mrb[0].mxu0
        %v3461 = vadd.f32 %v3172, %v3460
        %v3462 = vpop.f32.mrb[0].mxu0
        %v3463 = vpop.f32.mrb[0].mxu0
        %v3464 = vadd.f32 %v3175, %v3463
        %v3465 = vpop.f32.mrb[0].mxu0
        %3466 = vmatprep.mubr.bf16.mxu0 0
        %3467 = vmatmul.mubr.bf16.gmra.mrb[0].mxu0 %v2853
        %v3468 = vpop.f32.mrb[0].mxu0
        %v3469 = vadd.f32 %v3180, %v3468
        %v3470 = vpop.f32.mrb[0].mxu0
        %v3471 = vpop.f32.mrb[0].mxu0
        %v3472 = vadd.f32 %v3183, %v3471
        %v3473 = vpop.f32.mrb[0].mxu0
        %3474 = vmatprep.mubr.bf16.mxu0 0
        %3475 = vmatmul.mubr.bf16.gmra.mrb[0].mxu0 %v2856
        %v3476 = vpop.f32.mrb[0].mxu0
        %v3477 = vadd.f32 %v3188, %v3476
        %v3478 = vpop.f32.mrb[0].mxu0
        %v3479 = vpop.f32.mrb[0].mxu0
        %v3480 = vadd.f32 %v3191, %v3479
        %v3481 = vpop.f32.mrb[0].mxu0
        %3482 = vmatprep.mubr.bf16.mxu0 0
        %3483 = vmatmul.mubr.bf16.gmra.mrb[0].mxu0 %v2859
        %v3484 = vpop.f32.mrb[0].mxu0
        %v3485 = vadd.f32 %v3196, %v3484
        %v3486 = vpop.f32.mrb[0].mxu0
        %v3487 = vpop.f32.mrb[0].mxu0
        %v3488 = vadd.f32 %v3199, %v3487
        %v3489 = vpop.f32.mrb[0].mxu0
        %3490 = vmatprep.mubr.bf16.mxu0 0
        %3491 = vmatmul.mubr.bf16.gmra.mrb[0].mxu0 %v2862
        %v3492 = vpop.f32.mrb[0].mxu0
        %v3493 = vadd.f32 %v3204, %v3492
        %v3494 = vpop.f32.mrb[0].mxu0
        %v3495 = vpop.f32.mrb[0].mxu0
        %v3496 = vadd.f32 %v3207, %v3495
        %v3497 = vpop.f32.mrb[0].mxu0
        %3498 = vmatprep.mubr.bf16.mxu0 0
        %3499 = vmatmul.mubr.bf16.gmra.mrb[0].mxu0 %v2865
        %v3500 = vpop.f32.mrb[0].mxu0
        %v3501 = vadd.f32 %v3212, %v3500
        %v3502 = vpop.f32.mrb[0].mxu0
        %v3503 = vpop.f32.mrb[0].mxu0
        %v3504 = vadd.f32 %v3215, %v3503
        %v3505 = vpop.f32.mrb[0].mxu0
        %3506 = vmatprep.mubr.bf16.mxu0 0
        %3507 = vmatmul.mubr.bf16.gmra.mrb[0].mxu0 %v2868
        %v3508 = vpop.f32.mrb[0].mxu0
        %v3509 = vadd.f32 %v3220, %v3508
        %v3510 = vpop.f32.mrb[0].mxu0
        %v3511 = vpop.f32.mrb[0].mxu0
        %v3512 = vadd.f32 %v3223, %v3511
        %v3513 = vpop.f32.mrb[0].mxu0
        %3514 = vmatprep.mubr.bf16.mxu0 0
        %3515 = vmatmul.mubr.bf16.gmra.mrb[0].mxu0 %v2871
        %v3516 = vpop.f32.mrb[0].mxu0
        %v3517 = vadd.f32 %v3228, %v3516
        %v3518 = vpop.f32.mrb[0].mxu0
        %v3519 = vpop.f32.mrb[0].mxu0
        %v3520 = vadd.f32 %v3231, %v3519
        %v3521 = vpop.f32.mrb[0].mxu0
        %3522 = vmatprep.mubr.bf16.mxu0 0
        %3523 = vmatmul.mubr.bf16.gmra.mrb[0].mxu0 %v2874
        %v3524 = vpop.f32.mrb[0].mxu0
        %v3525 = vadd.f32 %v3236, %v3524
        %v3526 = vpop.f32.mrb[0].mxu0
        %v3527 = vpop.f32.mrb[0].mxu0
        %v3528 = vadd.f32 %v3239, %v3527
        %v3529 = vpop.f32.mrb[0].mxu0
        %3530 = vmatprep.mubr.bf16.mxu0 0
        %3531 = vmatmul.mubr.bf16.gmra.mrb[0].mxu0 %v2877
        %v3532 = vpop.f32.mrb[0].mxu0
        %v3533 = vadd.f32 %v3244, %v3532
        %v3534 = vpop.f32.mrb[0].mxu0
        %v3535 = vpop.f32.mrb[0].mxu0
        %v3536 = vadd.f32 %v3247, %v3535
        %v3537 = vpop.f32.mrb[0].mxu0
        %3538 = vmatprep.mubr.bf16.mxu0 0
        %3539 = vmatmul.mubr.bf16.gmra.mrb[0].mxu0 %v2880
        %v3540 = vpop.f32.mrb[0].mxu0
        %v3541 = vadd.f32 %v3252, %v3540
        %v3542 = vpop.f32.mrb[0].mxu0
        %v3543 = vpop.f32.mrb[0].mxu0
        %v3544 = vadd.f32 %v3255, %v3543
        %v3545 = vpop.f32.mrb[0].mxu0
        %3546 = vmatprep.mubr.bf16.mxu0 0
        %3547 = vmatmul.mubr.bf16.gmra.mrb[0].mxu0 %v2883
        %v3548 = vpop.f32.mrb[0].mxu0
        %v3549 = vadd.f32 %v3260, %v3548
        %v3550 = vpop.f32.mrb[0].mxu0
        %v3551 = vpop.f32.mrb[0].mxu0
        %v3552 = vadd.f32 %v3263, %v3551
        %v3553 = vpop.f32.mrb[0].mxu0
        %3554 = vmatprep.mubr.bf16.mxu0 0
        %3555 = vmatmul.mubr.bf16.gmra.mrb[0].mxu0 %v2886
        %v3556 = vpop.f32.mrb[0].mxu0
        %v3557 = vadd.f32 %v3268, %v3556
        %v3558 = vpop.f32.mrb[0].mxu0
        %v3559 = vpop.f32.mrb[0].mxu0
        %v3560 = vadd.f32 %v3271, %v3559
        %v3561 = vpop.f32.mrb[0].mxu0
        %3562 = vmatprep.mubr.bf16.mxu0 0
        %3563 = vmatmul.mubr.bf16.gmra.mrb[0].mxu0 %v2889
        %v3564 = vpop.f32.mrb[0].mxu0
        %v3565 = vadd.f32 %v3276, %v3564
        %v3566 = vpop.f32.mrb[0].mxu0
        %v3567 = vpop.f32.mrb[0].mxu0
        %v3568 = vadd.f32 %v3279, %v3567
        %v3569 = vpop.f32.mrb[0].mxu0
        %3570 = vmatprep.mubr.bf16.mxu0 0
        %3571 = vmatmul.mubr.bf16.gmra.mrb[0].mxu0 %v2892
        %v3572 = vpop.f32.mrb[0].mxu0
        %v3573 = vadd.f32 %v3284, %v3572
        %v3574 = vpop.f32.mrb[0].mxu0
        %v3575 = vpop.f32.mrb[0].mxu0
        %v3576 = vadd.f32 %v3287, %v3575
        %v3577 = vpop.f32.mrb[0].mxu0
        %3578 = vmatprep.mubr.bf16.mxu0 0
        %3579 = vmatmul.mubr.bf16.gmra.mrb[0].mxu0 %v2895
        %v3580 = vpop.f32.mrb[0].mxu0
        %v3581 = vadd.f32 %v3292, %v3580
        %v3582 = vpop.f32.mrb[0].mxu0
        %v3583 = vpop.f32.mrb[0].mxu0
        %v3584 = vadd.f32 %v3295, %v3583
        %v3585 = vpop.f32.mrb[0].mxu0
        %3586 = vmatprep.mubr.bf16.mxu0 0
        %3587 = vmatmul.mubr.bf16.gmra.mrb[0].mxu0 %v2898
        %v3588 = vpop.f32.mrb[0].mxu0
        %v3589 = vadd.f32 %v3300, %v3588
        %v3590 = vpop.f32.mrb[0].mxu0
        %v3591 = vpop.f32.mrb[0].mxu0
        %v3592 = vadd.f32 %v3303, %v3591
        %v3593 = vpop.f32.mrb[0].mxu0
        %3594 = vmatprep.mubr.bf16.mxu0 0
        %3595 = vmatmul.mubr.bf16.gmra.mrb[0].mxu0 %v2901
        %v3596 = vpop.f32.mrb[0].mxu0
        %v3597 = vadd.f32 %v3308, %v3596
        %v3598 = vpop.f32.mrb[0].mxu0
        %v3599 = vpop.f32.mrb[0].mxu0
        %v3600 = vadd.f32 %v3311, %v3599
        %v3601 = vpop.f32.mrb[0].mxu0
        %3602 = vmatprep.mubr.bf16.mxu0 0
        %3603 = vmatmul.mubr.bf16.gmra.mrb[0].mxu0 %v2904
        %v3604 = vpop.f32.mrb[0].mxu0
        %v3605 = vadd.f32 %v3316, %v3604
        %v3606 = vpop.f32.mrb[0].mxu0
        %v3607 = vpop.f32.mrb[0].mxu0
        %v3608 = vadd.f32 %v3319, %v3607
        %v3609 = vpop.f32.mrb[0].mxu0
        %3610 = vmatprep.mubr.bf16.mxu0 0
        %3611 = vmatmul.mubr.bf16.gmra.mrb[0].mxu0 %v2907
        %v3612 = vpop.f32.mrb[0].mxu0
        %v3613 = vadd.f32 %v3324, %v3612
        %v3614 = vpop.f32.mrb[0].mxu0
        %v3615 = vpop.f32.mrb[0].mxu0
        %v3616 = vadd.f32 %v3327, %v3615
        %v3617 = vpop.f32.mrb[0].mxu0
        %3618 = vmatprep.mubr.bf16.mxu0 0
        %3619 = vmatmul.mubr.bf16.gmra.mrb[0].mxu0 %v2910
        %v3620 = vpop.f32.mrb[0].mxu0
        %v3621 = vadd.f32 %v3332, %v3620
        %v3622 = vpop.f32.mrb[0].mxu0
        %v3623 = vpop.f32.mrb[0].mxu0
        %v3624 = vadd.f32 %v3335, %v3623
        %v3625 = vpop.f32.mrb[0].mxu0
        %3626 = vmatprep.mubr.bf16.mxu0 0
        %3627 = vmatmul.mubr.bf16.gmra.mrb[0].mxu0 %v2913
        %v3628 = vpop.f32.mrb[0].mxu0
        %v3629 = vadd.f32 %v3340, %v3628
        %v3630 = vpop.f32.mrb[0].mxu0
        %v3631 = vpop.f32.mrb[0].mxu0
        %v3632 = vadd.f32 %v3343, %v3631
        %v3633 = vpop.f32.mrb[0].mxu0
        %3634 = vmatprep.mubr.bf16.mxu0 0
        %3635 = vmatmul.mubr.bf16.gmra.mrb[0].mxu0 %v2916
        %v3636 = vpop.f32.mrb[0].mxu0
        %v3637 = vadd.f32 %v3348, %v3636
        %v3638 = vpop.f32.mrb[0].mxu0
        %v3639 = vpop.f32.mrb[0].mxu0
        %v3640 = vadd.f32 %v3351, %v3639
        %v3641 = vpop.f32.mrb[0].mxu0
        %3642 = vmatprep.mubr.bf16.mxu0 0
        %3643 = vmatmul.mubr.bf16.gmra.mrb[0].mxu0 %v2919
        %v3644 = vpop.f32.mrb[0].mxu0
        %v3645 = vadd.f32 %v3356, %v3644
        %v3646 = vpop.f32.mrb[0].mxu0
        %v3647 = vpop.f32.mrb[0].mxu0
        %v3648 = vadd.f32 %v3359, %v3647
        %v3649 = vpop.f32.mrb[0].mxu0
        %3650 = vmatprep.mubr.bf16.mxu0 0
        %3651 = vmatmul.mubr.bf16.gmra.mrb[0].mxu0 %v2922
        %v3652 = vpop.f32.mrb[0].mxu0
        %v3653 = vadd.f32 %v3364, %v3652
        %v3654 = vpop.f32.mrb[0].mxu0
        %v3655 = vpop.f32.mrb[0].mxu0
        %v3656 = vadd.f32 %v3367, %v3655
        %v3657 = vpop.f32.mrb[0].mxu0
        %3658 = vmatprep.mubr.bf16.mxu0 0
        %3659 = vmatmul.mubr.bf16.gmra.mrb[0].mxu0 %v2925
        %v3660 = vpop.f32.mrb[0].mxu0
        %v3661 = vadd.f32 %v3372, %v3660
        %v3662 = vpop.f32.mrb[0].mxu0
        %v3663 = vpop.f32.mrb[0].mxu0
        %v3664 = vadd.f32 %v3375, %v3663
        %v3665 = vpop.f32.mrb[0].mxu0
        %3666 = vmatprep.mubr.bf16.mxu0 0
        %3667 = vmatmul.mubr.bf16.gmra.mrb[0].mxu0 %v2928
        %v3668 = vpop.f32.mrb[0].mxu0
        %v3669 = vadd.f32 %v3380, %v3668
        %v3670 = vpop.f32.mrb[0].mxu0
        %v3671 = vpop.f32.mrb[0].mxu0
        %v3672 = vadd.f32 %v3383, %v3671
        %v3673 = vpop.f32.mrb[0].mxu0
        %3674 = vmatprep.mubr.bf16.mxu0 0
        %3675 = vmatmul.mubr.bf16.gmra.mrb[0].mxu0 %v2931
        %v3676 = vpop.f32.mrb[0].mxu0
        %v3677 = vadd.f32 %v3388, %v3676
        %v3678 = vpop.f32.mrb[0].mxu0
        %v3679 = vpop.f32.mrb[0].mxu0
        %v3680 = vadd.f32 %v3391, %v3679
        %v3681 = vpop.f32.mrb[0].mxu0
        %3682 = vmatprep.mubr.bf16.mxu0 0
        %3683 = vmatmul.mubr.bf16.gmra.mrb[0].mxu0 %v2934
        %v3684 = vpop.f32.mrb[0].mxu0
        %v3685 = vadd.f32 %v3396, %v3684
        %v3686 = vpop.f32.mrb[0].mxu0
        %v3687 = vpop.f32.mrb[0].mxu0
        %v3688 = vadd.f32 %v3399, %v3687
        %v3689 = vpop.f32.mrb[0].mxu0
        %3690 = vmatprep.mubr.bf16.mxu0 0
        %3691 = vmatmul.mubr.bf16.gmra.mrb[0].mxu0 %v2937
        %v3692 = vpop.f32.mrb[0].mxu0
        %v3693 = vadd.f32 %v3404, %v3692
        %v3694 = vpop.f32.mrb[0].mxu0
        %v3695 = vpop.f32.mrb[0].mxu0
        %v3696 = vadd.f32 %v3407, %v3695
        %v3697 = vpop.f32.mrb[0].mxu0
        %3698 = vmatprep.mubr.bf16.mxu0 0
        %3699 = vmatmul.mubr.bf16.gmra.mrb[0].mxu0 %v2940
        %v3700 = vpop.f32.mrb[0].mxu0
        %v3701 = vadd.f32 %v3412, %v3700
        %v3702 = vpop.f32.mrb[0].mxu0
        %v3703 = vpop.f32.mrb[0].mxu0
        %v3704 = vadd.f32 %v3415, %v3703
        %v3705 = vpop.f32.mrb[0].mxu0
        %3706 = vmatprep.mubr.bf16.mxu0 0
        %3707 = vmatmul.mubr.bf16.gmra.mrb[0].mxu0 %v2943
        %v3708 = vpop.f32.mrb[0].mxu0
        %v3709 = vadd.f32 %v3420, %v3708
        %v3710 = vpop.f32.mrb[0].mxu0
        %v3711 = vpop.f32.mrb[0].mxu0
        %v3712 = vadd.f32 %v3423, %v3711
        %v3713 = vpop.f32.mrb[0].mxu0
        %3714 = vdwg.mxu0
        %v3715 = vld [vmem:[#allocation4] sm:$0xff]
        %v3716 = vld [vmem:[#allocation4 + $0x8] sm:$0xff]
        %v3717 = vld [vmem:[#allocation4 + $0x10] sm:$0xff]
        %v3718 = vld [vmem:[#allocation4 + $0x18] sm:$0xff]
        %v3719 = vld [vmem:[#allocation4 + $0x20] sm:$0xff]
        %v3720 = vld [vmem:[#allocation4 + $0x28] sm:$0xff]
        %v3721 = vld [vmem:[#allocation4 + $0x30] sm:$0xff]
        %v3722 = vld [vmem:[#allocation4 + $0x38] sm:$0xff]
        %v3723 = vld [vmem:[#allocation4 + $0x40] sm:$0xff]
        %v3724 = vld [vmem:[#allocation4 + $0x48] sm:$0xff]
        %v3725 = vld [vmem:[#allocation4 + $0x50] sm:$0xff]
        %v3726 = vld [vmem:[#allocation4 + $0x58] sm:$0xff]
        %v3727 = vld [vmem:[#allocation4 + $0x60] sm:$0xff]
        %v3728 = vld [vmem:[#allocation4 + $0x68] sm:$0xff]
        %v3729 = vld [vmem:[#allocation4 + $0x70] sm:$0xff]
        %v3730 = vld [vmem:[#allocation4 + $0x78] sm:$0xff]
        %v3731 = vld [vmem:[#allocation4 + $0x80] sm:$0xff]
        %v3732 = vld [vmem:[#allocation4 + $0x88] sm:$0xff]
        %v3733 = vld [vmem:[#allocation4 + $0x90] sm:$0xff]
        %v3734 = vld [vmem:[#allocation4 + $0x98] sm:$0xff]
        %v3735 = vld [vmem:[#allocation4 + $0xa0] sm:$0xff]
        %v3736 = vld [vmem:[#allocation4 + $0xa8] sm:$0xff]
        %v3737 = vld [vmem:[#allocation4 + $0xb0] sm:$0xff]
        %v3738 = vld [vmem:[#allocation4 + $0xb8] sm:$0xff]
        %v3739 = vld [vmem:[#allocation4 + $0xc0] sm:$0xff]
        %v3740 = vld [vmem:[#allocation4 + $0xc8] sm:$0xff]
        %v3741 = vld [vmem:[#allocation4 + $0xd0] sm:$0xff]
        %v3742 = vld [vmem:[#allocation4 + $0xd8] sm:$0xff]
        %v3743 = vld [vmem:[#allocation4 + $0xe0] sm:$0xff]
        %v3744 = vld [vmem:[#allocation4 + $0xe8] sm:$0xff]
        %v3745 = vld [vmem:[#allocation4 + $0xf0] sm:$0xff]
        %v3746 = vld [vmem:[#allocation4 + $0xf8] sm:$0xff]
        %v3747 = vld [vmem:[#allocation4 + $0x100] sm:$0xff]
        %v3748 = vld [vmem:[#allocation4 + $0x108] sm:$0xff]
        %v3749 = vld [vmem:[#allocation4 + $0x110] sm:$0xff]
        %v3750 = vld [vmem:[#allocation4 + $0x118] sm:$0xff]
        %v3751 = vld [vmem:[#allocation4 + $0x120] sm:$0xff]
        %v3752 = vld [vmem:[#allocation4 + $0x128] sm:$0xff]
        %v3753 = vld [vmem:[#allocation4 + $0x130] sm:$0xff]
        %v3754 = vld [vmem:[#allocation4 + $0x138] sm:$0xff]
        %v3755 = vld [vmem:[#allocation4 + $0x140] sm:$0xff]
        %v3756 = vld [vmem:[#allocation4 + $0x148] sm:$0xff]
        %v3757 = vld [vmem:[#allocation4 + $0x150] sm:$0xff]
        %v3758 = vld [vmem:[#allocation4 + $0x158] sm:$0xff]
        %v3759 = vld [vmem:[#allocation4 + $0x160] sm:$0xff]
        %v3760 = vld [vmem:[#allocation4 + $0x168] sm:$0xff]
        %v3761 = vld [vmem:[#allocation4 + $0x170] sm:$0xff]
        %v3762 = vld [vmem:[#allocation4 + $0x178] sm:$0xff]
        %v3763 = vld [vmem:[#allocation4 + $0x180] sm:$0xff]
        %v3764 = vld [vmem:[#allocation4 + $0x188] sm:$0xff]
        %v3765 = vld [vmem:[#allocation4 + $0x190] sm:$0xff]
        %v3766 = vld [vmem:[#allocation4 + $0x198] sm:$0xff]
        %v3767 = vld [vmem:[#allocation4 + $0x1a0] sm:$0xff]
        %v3768 = vld [vmem:[#allocation4 + $0x1a8] sm:$0xff]
        %v3769 = vld [vmem:[#allocation4 + $0x1b0] sm:$0xff]
        %v3770 = vld [vmem:[#allocation4 + $0x1b8] sm:$0xff]
        %v3771 = vld [vmem:[#allocation4 + $0x1c0] sm:$0xff]
        %v3772 = vld [vmem:[#allocation4 + $0x1c8] sm:$0xff]
        %v3773 = vld [vmem:[#allocation4 + $0x1d0] sm:$0xff]
        %v3774 = vld [vmem:[#allocation4 + $0x1d8] sm:$0xff]
        %v3775 = vld [vmem:[#allocation4 + $0x1e0] sm:$0xff]
        %v3776 = vld [vmem:[#allocation4 + $0x1e8] sm:$0xff]
        %v3777 = vld [vmem:[#allocation4 + $0x1f0] sm:$0xff]
        %v3778 = vld [vmem:[#allocation4 + $0x1f8] sm:$0xff]
        %v3779 = vadd.f32 %v3715, %v3461
        %v3780 = vadd.f32 %v3716, %v3464
        %v3781 = vadd.f32 %v3717, %v3469
        %v3782 = vadd.f32 %v3718, %v3472
        %v3783 = vadd.f32 %v3719, %v3477
        %v3784 = vadd.f32 %v3720, %v3480
        %v3785 = vadd.f32 %v3721, %v3485
        %v3786 = vadd.f32 %v3722, %v3488
        %v3787 = vadd.f32 %v3723, %v3493
        %v3788 = vadd.f32 %v3724, %v3496
        %v3789 = vadd.f32 %v3725, %v3501
        %v3790 = vadd.f32 %v3726, %v3504
        %v3791 = vadd.f32 %v3727, %v3509
        %v3792 = vadd.f32 %v3728, %v3512
        %v3793 = vadd.f32 %v3729, %v3517
        %v3794 = vadd.f32 %v3730, %v3520
        %v3795 = vadd.f32 %v3731, %v3525
        %v3796 = vadd.f32 %v3732, %v3528
        %v3797 = vadd.f32 %v3733, %v3533
        %v3798 = vadd.f32 %v3734, %v3536
        %v3799 = vadd.f32 %v3735, %v3541
        %v3800 = vadd.f32 %v3736, %v3544
        %v3801 = vadd.f32 %v3737, %v3549
        %v3802 = vadd.f32 %v3738, %v3552
        %v3803 = vadd.f32 %v3739, %v3557
        %v3804 = vadd.f32 %v3740, %v3560
        %v3805 = vadd.f32 %v3741, %v3565
        %v3806 = vadd.f32 %v3742, %v3568
        %v3807 = vadd.f32 %v3743, %v3573
        %v3808 = vadd.f32 %v3744, %v3576
        %v3809 = vadd.f32 %v3745, %v3581
        %v3810 = vadd.f32 %v3746, %v3584
        %v3811 = vadd.f32 %v3747, %v3589
        %v3812 = vadd.f32 %v3748, %v3592
        %v3813 = vadd.f32 %v3749, %v3597
        %v3814 = vadd.f32 %v3750, %v3600
        %v3815 = vadd.f32 %v3751, %v3605
        %v3816 = vadd.f32 %v3752, %v3608
        %v3817 = vadd.f32 %v3753, %v3613
        %v3818 = vadd.f32 %v3754, %v3616
        %v3819 = vadd.f32 %v3755, %v3621
        %v3820 = vadd.f32 %v3756, %v3624
        %v3821 = vadd.f32 %v3757, %v3629
        %v3822 = vadd.f32 %v3758, %v3632
        %v3823 = vadd.f32 %v3759, %v3637
        %v3824 = vadd.f32 %v3760, %v3640
        %v3825 = vadd.f32 %v3761, %v3645
        %v3826 = vadd.f32 %v3762, %v3648
        %v3827 = vadd.f32 %v3763, %v3653
        %v3828 = vadd.f32 %v3764, %v3656
        %v3829 = vadd.f32 %v3765, %v3661
        %v3830 = vadd.f32 %v3766, %v3664
        %v3831 = vadd.f32 %v3767, %v3669
        %v3832 = vadd.f32 %v3768, %v3672
        %v3833 = vadd.f32 %v3769, %v3677
        %v3834 = vadd.f32 %v3770, %v3680
        %v3835 = vadd.f32 %v3771, %v3685
        %v3836 = vadd.f32 %v3772, %v3688
        %v3837 = vadd.f32 %v3773, %v3693
        %v3838 = vadd.f32 %v3774, %v3696
        %v3839 = vadd.f32 %v3775, %v3701
        %v3840 = vadd.f32 %v3776, %v3704
        %v3841 = vadd.f32 %v3777, %v3709
        %v3842 = vadd.f32 %v3778, %v3712
        %3843 = vst [vmem:[#allocation4] sm:$0xff] %v3779
        %3844 = vst [vmem:[#allocation4 + $0x8] sm:$0xff] %v3780
        %3845 = vst [vmem:[#allocation4 + $0x10] sm:$0xff] %v3781
        %3846 = vst [vmem:[#allocation4 + $0x18] sm:$0xff] %v3782
        %3847 = vst [vmem:[#allocation4 + $0x20] sm:$0xff] %v3783
        %3848 = vst [vmem:[#allocation4 + $0x28] sm:$0xff] %v3784
        %3849 = vst [vmem:[#allocation4 + $0x30] sm:$0xff] %v3785
        %3850 = vst [vmem:[#allocation4 + $0x38] sm:$0xff] %v3786
        %3851 = vst [vmem:[#allocation4 + $0x40] sm:$0xff] %v3787
        %3852 = vst [vmem:[#allocation4 + $0x48] sm:$0xff] %v3788
        %3853 = vst [vmem:[#allocation4 + $0x50] sm:$0xff] %v3789
        %3854 = vst [vmem:[#allocation4 + $0x58] sm:$0xff] %v3790
        %3855 = vst [vmem:[#allocation4 + $0x60] sm:$0xff] %v3791
        %3856 = vst [vmem:[#allocation4 + $0x68] sm:$0xff] %v3792
        %3857 = vst [vmem:[#allocation4 + $0x70] sm:$0xff] %v3793
        %3858 = vst [vmem:[#allocation4 + $0x78] sm:$0xff] %v3794
        %3859 = vst [vmem:[#allocation4 + $0x80] sm:$0xff] %v3795
        %3860 = vst [vmem:[#allocation4 + $0x88] sm:$0xff] %v3796
        %3861 = vst [vmem:[#allocation4 + $0x90] sm:$0xff] %v3797
        %3862 = vst [vmem:[#allocation4 + $0x98] sm:$0xff] %v3798
        %3863 = vst [vmem:[#allocation4 + $0xa0] sm:$0xff] %v3799
        %3864 = vst [vmem:[#allocation4 + $0xa8] sm:$0xff] %v3800
        %3865 = vst [vmem:[#allocation4 + $0xb0] sm:$0xff] %v3801
        %3866 = vst [vmem:[#allocation4 + $0xb8] sm:$0xff] %v3802
        %3867 = vst [vmem:[#allocation4 + $0xc0] sm:$0xff] %v3803
        %3868 = vst [vmem:[#allocation4 + $0xc8] sm:$0xff] %v3804
        %3869 = vst [vmem:[#allocation4 + $0xd0] sm:$0xff] %v3805
        %3870 = vst [vmem:[#allocation4 + $0xd8] sm:$0xff] %v3806
        %3871 = vst [vmem:[#allocation4 + $0xe0] sm:$0xff] %v3807
        %3872 = vst [vmem:[#allocation4 + $0xe8] sm:$0xff] %v3808
        %3873 = vst [vmem:[#allocation4 + $0xf0] sm:$0xff] %v3809
        %3874 = vst [vmem:[#allocation4 + $0xf8] sm:$0xff] %v3810
        %3875 = vst [vmem:[#allocation4 + $0x100] sm:$0xff] %v3811
        %3876 = vst [vmem:[#allocation4 + $0x108] sm:$0xff] %v3812
        %3877 = vst [vmem:[#allocation4 + $0x110] sm:$0xff] %v3813
        %3878 = vst [vmem:[#allocation4 + $0x118] sm:$0xff] %v3814
        %3879 = vst [vmem:[#allocation4 + $0x120] sm:$0xff] %v3815
        %3880 = vst [vmem:[#allocation4 + $0x128] sm:$0xff] %v3816
        %3881 = vst [vmem:[#allocation4 + $0x130] sm:$0xff] %v3817
        %3882 = vst [vmem:[#allocation4 + $0x138] sm:$0xff] %v3818
        %3883 = vst [vmem:[#allocation4 + $0x140] sm:$0xff] %v3819
        %3884 = vst [vmem:[#allocation4 + $0x148] sm:$0xff] %v3820
        %3885 = vst [vmem:[#allocation4 + $0x150] sm:$0xff] %v3821
        %3886 = vst [vmem:[#allocation4 + $0x158] sm:$0xff] %v3822
        %3887 = vst [vmem:[#allocation4 + $0x160] sm:$0xff] %v3823
        %3888 = vst [vmem:[#allocation4 + $0x168] sm:$0xff] %v3824
        %3889 = vst [vmem:[#allocation4 + $0x170] sm:$0xff] %v3825
        %3890 = vst [vmem:[#allocation4 + $0x178] sm:$0xff] %v3826
        %3891 = vst [vmem:[#allocation4 + $0x180] sm:$0xff] %v3827
        %3892 = vst [vmem:[#allocation4 + $0x188] sm:$0xff] %v3828
        %3893 = vst [vmem:[#allocation4 + $0x190] sm:$0xff] %v3829
        %3894 = vst [vmem:[#allocation4 + $0x198] sm:$0xff] %v3830
        %3895 = vst [vmem:[#allocation4 + $0x1a0] sm:$0xff] %v3831
        %3896 = vst [vmem:[#allocation4 + $0x1a8] sm:$0xff] %v3832
        %3897 = vst [vmem:[#allocation4 + $0x1b0] sm:$0xff] %v3833
        %3898 = vst [vmem:[#allocation4 + $0x1b8] sm:$0xff] %v3834
        %3899 = vst [vmem:[#allocation4 + $0x1c0] sm:$0xff] %v3835
        %3900 = vst [vmem:[#allocation4 + $0x1c8] sm:$0xff] %v3836
        %3901 = vst [vmem:[#allocation4 + $0x1d0] sm:$0xff] %v3837
        %3902 = vst [vmem:[#allocation4 + $0x1d8] sm:$0xff] %v3838
        %3903 = vst [vmem:[#allocation4 + $0x1e0] sm:$0xff] %v3839
        %3904 = vst [vmem:[#allocation4 + $0x1e8] sm:$0xff] %v3840
        %3905 = vst [vmem:[#allocation4 + $0x1f0] sm:$0xff] %v3841
        %3906 = vst [vmem:[#allocation4 + $0x1f8] sm:$0xff] %v3842
        %v3907 = vld [vmem:[#allocation4] sm:$0xff]
        %v3908 = vld [vmem:[#allocation4 + $0x8] sm:$0xff]
        %v3909 = vld [vmem:[#allocation4 + $0x10] sm:$0xff]
        %v3910 = vld [vmem:[#allocation4 + $0x18] sm:$0xff]
        %v3911 = vld [vmem:[#allocation4 + $0x20] sm:$0xff]
        %v3912 = vld [vmem:[#allocation4 + $0x28] sm:$0xff]
        %v3913 = vld [vmem:[#allocation4 + $0x30] sm:$0xff]
        %v3914 = vld [vmem:[#allocation4 + $0x38] sm:$0xff]
        %v3915 = vld [vmem:[#allocation4 + $0x40] sm:$0xff]
        %v3916 = vld [vmem:[#allocation4 + $0x48] sm:$0xff]
        %v3917 = vld [vmem:[#allocation4 + $0x50] sm:$0xff]
        %v3918 = vld [vmem:[#allocation4 + $0x58] sm:$0xff]
        %v3919 = vld [vmem:[#allocation4 + $0x60] sm:$0xff]
        %v3920 = vld [vmem:[#allocation4 + $0x68] sm:$0xff]
        %v3921 = vld [vmem:[#allocation4 + $0x70] sm:$0xff]
        %v3922 = vld [vmem:[#allocation4 + $0x78] sm:$0xff]
        %v3923 = vld [vmem:[#allocation4 + $0x80] sm:$0xff]
        %v3924 = vld [vmem:[#allocation4 + $0x88] sm:$0xff]
        %v3925 = vld [vmem:[#allocation4 + $0x90] sm:$0xff]
        %v3926 = vld [vmem:[#allocation4 + $0x98] sm:$0xff]
        %v3927 = vld [vmem:[#allocation4 + $0xa0] sm:$0xff]
        %v3928 = vld [vmem:[#allocation4 + $0xa8] sm:$0xff]
        %v3929 = vld [vmem:[#allocation4 + $0xb0] sm:$0xff]
        %v3930 = vld [vmem:[#allocation4 + $0xb8] sm:$0xff]
        %v3931 = vld [vmem:[#allocation4 + $0xc0] sm:$0xff]
        %v3932 = vld [vmem:[#allocation4 + $0xc8] sm:$0xff]
        %v3933 = vld [vmem:[#allocation4 + $0xd0] sm:$0xff]
        %v3934 = vld [vmem:[#allocation4 + $0xd8] sm:$0xff]
        %v3935 = vld [vmem:[#allocation4 + $0xe0] sm:$0xff]
        %v3936 = vld [vmem:[#allocation4 + $0xe8] sm:$0xff]
        %v3937 = vld [vmem:[#allocation4 + $0xf0] sm:$0xff]
        %v3938 = vld [vmem:[#allocation4 + $0xf8] sm:$0xff]
        %v3939 = vld [vmem:[#allocation4 + $0x100] sm:$0xff]
        %v3940 = vld [vmem:[#allocation4 + $0x108] sm:$0xff]
        %v3941 = vld [vmem:[#allocation4 + $0x110] sm:$0xff]
        %v3942 = vld [vmem:[#allocation4 + $0x118] sm:$0xff]
        %v3943 = vld [vmem:[#allocation4 + $0x120] sm:$0xff]
        %v3944 = vld [vmem:[#allocation4 + $0x128] sm:$0xff]
        %v3945 = vld [vmem:[#allocation4 + $0x130] sm:$0xff]
        %v3946 = vld [vmem:[#allocation4 + $0x138] sm:$0xff]
        %v3947 = vld [vmem:[#allocation4 + $0x140] sm:$0xff]
        %v3948 = vld [vmem:[#allocation4 + $0x148] sm:$0xff]
        %v3949 = vld [vmem:[#allocation4 + $0x150] sm:$0xff]
        %v3950 = vld [vmem:[#allocation4 + $0x158] sm:$0xff]
        %v3951 = vld [vmem:[#allocation4 + $0x160] sm:$0xff]
        %v3952 = vld [vmem:[#allocation4 + $0x168] sm:$0xff]
        %v3953 = vld [vmem:[#allocation4 + $0x170] sm:$0xff]
        %v3954 = vld [vmem:[#allocation4 + $0x178] sm:$0xff]
        %v3955 = vld [vmem:[#allocation4 + $0x180] sm:$0xff]
        %v3956 = vld [vmem:[#allocation4 + $0x188] sm:$0xff]
        %v3957 = vld [vmem:[#allocation4 + $0x190] sm:$0xff]
        %v3958 = vld [vmem:[#allocation4 + $0x198] sm:$0xff]
        %v3959 = vld [vmem:[#allocation4 + $0x1a0] sm:$0xff]
        %v3960 = vld [vmem:[#allocation4 + $0x1a8] sm:$0xff]
        %v3961 = vld [vmem:[#allocation4 + $0x1b0] sm:$0xff]
        %v3962 = vld [vmem:[#allocation4 + $0x1b8] sm:$0xff]
        %v3963 = vld [vmem:[#allocation4 + $0x1c0] sm:$0xff]
        %v3964 = vld [vmem:[#allocation4 + $0x1c8] sm:$0xff]
        %v3965 = vld [vmem:[#allocation4 + $0x1d0] sm:$0xff]
        %v3966 = vld [vmem:[#allocation4 + $0x1d8] sm:$0xff]
        %v3967 = vld [vmem:[#allocation4 + $0x1e0] sm:$0xff]
        %v3968 = vld [vmem:[#allocation4 + $0x1e8] sm:$0xff]
        %v3969 = vld [vmem:[#allocation4 + $0x1f0] sm:$0xff]
        %v3970 = vld [vmem:[#allocation4 + $0x1f8] sm:$0xff]
        %v3971 = vld [vmem:[%s2] sm:$0x1]
        %v3973 = vlaneseq
        %v3974 = vshrl.u32 %v3973, 7
        %v3975 = vsub.s32 0, %v3974
        %v3976 = vrot.slane %v3971, %v3975
        %v3978 = vadd.f32 %v3907, %v3976
        %v3979 = vadd.f32 %v3908, %v3976
        %v3980 = vadd.f32 %v3909, %v3976
        %v3981 = vadd.f32 %v3910, %v3976
        %v3982 = vadd.f32 %v3911, %v3976
        %v3983 = vadd.f32 %v3912, %v3976
        %v3984 = vadd.f32 %v3913, %v3976
        %v3985 = vadd.f32 %v3914, %v3976
        %v3986 = vadd.f32 %v3915, %v3976
        %v3987 = vadd.f32 %v3916, %v3976
        %v3988 = vadd.f32 %v3917, %v3976
        %v3989 = vadd.f32 %v3918, %v3976
        %v3990 = vadd.f32 %v3919, %v3976
        %v3991 = vadd.f32 %v3920, %v3976
        %v3992 = vadd.f32 %v3921, %v3976
        %v3993 = vadd.f32 %v3922, %v3976
        %v3994 = vadd.f32 %v3923, %v3976
        %v3995 = vadd.f32 %v3924, %v3976
        %v3996 = vadd.f32 %v3925, %v3976
        %v3997 = vadd.f32 %v3926, %v3976
        %v3998 = vadd.f32 %v3927, %v3976
        %v3999 = vadd.f32 %v3928, %v3976
        %v4000 = vadd.f32 %v3929, %v3976
        %v4001 = vadd.f32 %v3930, %v3976
        %v4002 = vadd.f32 %v3931, %v3976
        %v4003 = vadd.f32 %v3932, %v3976
        %v4004 = vadd.f32 %v3933, %v3976
        %v4005 = vadd.f32 %v3934, %v3976
        %v4006 = vadd.f32 %v3935, %v3976
        %v4007 = vadd.f32 %v3936, %v3976
        %v4008 = vadd.f32 %v3937, %v3976
        %v4009 = vadd.f32 %v3938, %v3976
        %v4010 = vadd.f32 %v3939, %v3976
        %v4011 = vadd.f32 %v3940, %v3976
        %v4012 = vadd.f32 %v3941, %v3976
        %v4013 = vadd.f32 %v3942, %v3976
        %v4014 = vadd.f32 %v3943, %v3976
        %v4015 = vadd.f32 %v3944, %v3976
        %v4016 = vadd.f32 %v3945, %v3976
        %v4017 = vadd.f32 %v3946, %v3976
        %v4018 = vadd.f32 %v3947, %v3976
        %v4019 = vadd.f32 %v3948, %v3976
        %v4020 = vadd.f32 %v3949, %v3976
        %v4021 = vadd.f32 %v3950, %v3976
        %v4022 = vadd.f32 %v3951, %v3976
        %v4023 = vadd.f32 %v3952, %v3976
        %v4024 = vadd.f32 %v3953, %v3976
        %v4025 = vadd.f32 %v3954, %v3976
        %v4026 = vadd.f32 %v3955, %v3976
        %v4027 = vadd.f32 %v3956, %v3976
        %v4028 = vadd.f32 %v3957, %v3976
        %v4029 = vadd.f32 %v3958, %v3976
        %v4030 = vadd.f32 %v3959, %v3976
        %v4031 = vadd.f32 %v3960, %v3976
        %v4032 = vadd.f32 %v3961, %v3976
        %v4033 = vadd.f32 %v3962, %v3976
        %v4034 = vadd.f32 %v3963, %v3976
        %v4035 = vadd.f32 %v3964, %v3976
        %v4036 = vadd.f32 %v3965, %v3976
        %v4037 = vadd.f32 %v3966, %v3976
        %v4038 = vadd.f32 %v3967, %v3976
        %v4039 = vadd.f32 %v3968, %v3976
        %v4040 = vadd.f32 %v3969, %v3976
        %v4041 = vadd.f32 %v3970, %v3976
        %v4042 = vmax.f32 %v3978, 0.0
        %v4043 = vmax.f32 %v3979, 0.0
        %v4044 = vmax.f32 %v3980, 0.0
        %v4045 = vmax.f32 %v3981, 0.0
        %v4046 = vmax.f32 %v3982, 0.0
        %v4047 = vmax.f32 %v3983, 0.0
        %v4048 = vmax.f32 %v3984, 0.0
        %v4049 = vmax.f32 %v3985, 0.0
        %v4050 = vmax.f32 %v3986, 0.0
        %v4051 = vmax.f32 %v3987, 0.0
        %v4052 = vmax.f32 %v3988, 0.0
        %v4053 = vmax.f32 %v3989, 0.0
        %v4054 = vmax.f32 %v3990, 0.0
        %v4055 = vmax.f32 %v3991, 0.0
        %v4056 = vmax.f32 %v3992, 0.0
        %v4057 = vmax.f32 %v3993, 0.0
        %v4058 = vmax.f32 %v3994, 0.0
        %v4059 = vmax.f32 %v3995, 0.0
        %v4060 = vmax.f32 %v3996, 0.0
        %v4061 = vmax.f32 %v3997, 0.0
        %v4062 = vmax.f32 %v3998, 0.0
        %v4063 = vmax.f32 %v3999, 0.0
        %v4064 = vmax.f32 %v4000, 0.0
        %v4065 = vmax.f32 %v4001, 0.0
        %v4066 = vmax.f32 %v4002, 0.0
        %v4067 = vmax.f32 %v4003, 0.0
        %v4068 = vmax.f32 %v4004, 0.0
        %v4069 = vmax.f32 %v4005, 0.0
        %v4070 = vmax.f32 %v4006, 0.0
        %v4071 = vmax.f32 %v4007, 0.0
        %v4072 = vmax.f32 %v4008, 0.0
        %v4073 = vmax.f32 %v4009, 0.0
        %v4074 = vmax.f32 %v4010, 0.0
        %v4075 = vmax.f32 %v4011, 0.0
        %v4076 = vmax.f32 %v4012, 0.0
        %v4077 = vmax.f32 %v4013, 0.0
        %v4078 = vmax.f32 %v4014, 0.0
        %v4079 = vmax.f32 %v4015, 0.0
        %v4080 = vmax.f32 %v4016, 0.0
        %v4081 = vmax.f32 %v4017, 0.0
        %v4082 = vmax.f32 %v4018, 0.0
        %v4083 = vmax.f32 %v4019, 0.0
        %v4084 = vmax.f32 %v4020, 0.0
        %v4085 = vmax.f32 %v4021, 0.0
        %v4086 = vmax.f32 %v4022, 0.0
        %v4087 = vmax.f32 %v4023, 0.0
        %v4088 = vmax.f32 %v4024, 0.0
        %v4089 = vmax.f32 %v4025, 0.0
        %v4090 = vmax.f32 %v4026, 0.0
        %v4091 = vmax.f32 %v4027, 0.0
        %v4092 = vmax.f32 %v4028, 0.0
        %v4093 = vmax.f32 %v4029, 0.0
        %v4094 = vmax.f32 %v4030, 0.0
        %v4095 = vmax.f32 %v4031, 0.0
        %v4096 = vmax.f32 %v4032, 0.0
        %v4097 = vmax.f32 %v4033, 0.0
        %v4098 = vmax.f32 %v4034, 0.0
        %v4099 = vmax.f32 %v4035, 0.0
        %v4100 = vmax.f32 %v4036, 0.0
        %v4101 = vmax.f32 %v4037, 0.0
        %v4102 = vmax.f32 %v4038, 0.0
        %v4103 = vmax.f32 %v4039, 0.0
        %v4104 = vmax.f32 %v4040, 0.0
        %v4105 = vmax.f32 %v4041, 0.0
        %v4106 = vpack.c.bf16 %v4043, %v4042
        %v4107 = vpack.c.bf16 %v4045, %v4044
        %v4108 = vpack.c.bf16 %v4047, %v4046
        %v4109 = vpack.c.bf16 %v4049, %v4048
        %v4110 = vpack.c.bf16 %v4051, %v4050
        %v4111 = vpack.c.bf16 %v4053, %v4052
        %v4112 = vpack.c.bf16 %v4055, %v4054
        %v4113 = vpack.c.bf16 %v4057, %v4056
        %v4114 = vpack.c.bf16 %v4059, %v4058
        %v4115 = vpack.c.bf16 %v4061, %v4060
        %v4116 = vpack.c.bf16 %v4063, %v4062
        %v4117 = vpack.c.bf16 %v4065, %v4064
        %v4118 = vpack.c.bf16 %v4067, %v4066
        %v4119 = vpack.c.bf16 %v4069, %v4068
        %v4120 = vpack.c.bf16 %v4071, %v4070
        %v4121 = vpack.c.bf16 %v4073, %v4072
        %v4122 = vpack.c.bf16 %v4075, %v4074
        %v4123 = vpack.c.bf16 %v4077, %v4076
        %v4124 = vpack.c.bf16 %v4079, %v4078
        %v4125 = vpack.c.bf16 %v4081, %v4080
        %v4126 = vpack.c.bf16 %v4083, %v4082
        %v4127 = vpack.c.bf16 %v4085, %v4084
        %v4128 = vpack.c.bf16 %v4087, %v4086
        %v4129 = vpack.c.bf16 %v4089, %v4088
        %v4130 = vpack.c.bf16 %v4091, %v4090
        %v4131 = vpack.c.bf16 %v4093, %v4092
        %v4132 = vpack.c.bf16 %v4095, %v4094
        %v4133 = vpack.c.bf16 %v4097, %v4096
        %v4134 = vpack.c.bf16 %v4099, %v4098
        %v4135 = vpack.c.bf16 %v4101, %v4100
        %v4136 = vpack.c.bf16 %v4103, %v4102
        %v4137 = vpack.c.bf16 %v4105, %v4104
        %4138 = vst [vmem:[#allocation3] sm:$0xff] 0
        %4139 = vst [vmem:[#allocation3 + $0x8] sm:$0xff] 0
        %4140 = vst [vmem:[#allocation3 + $0x10] sm:$0xff] 0
        %4141 = vst [vmem:[#allocation3 + $0x1b0] sm:$0xff] 0
        %4142 = vst [vmem:[#allocation3 + $0x1b8] sm:$0xff] 0
        %4143 = vst [vmem:[#allocation3 + $0x1c0] sm:$0xff] 0
        %s4144 = scalar_lea.vmem [#allocation3], 408
        %4145 = vst [vmem:[%s4144] sm:$0xff] 0
        %4146 = vst [vmem:[%s4144 + $0x8] sm:$0xff] 0
        %4147 = vst [vmem:[%s4144 + $0x10] sm:$0xff] 0
        %4148 = vst [vmem:[%s4144 + $0x1b0] sm:$0xff] 0
        %4149 = vst [vmem:[%s4144 + $0x1b8] sm:$0xff] 0
        %4150 = vst [vmem:[%s4144 + $0x1c0] sm:$0xff] 0
        %v4152 = vshrl.u32 %v4106, 16
        %v4154 = vrot.slane %v4152, 7
        %v4155 = vshll.u32 %v4106, 16
        %v4157 = vor.u32 %v4154, %v4155
        %v4159 = vshrl.u32 %v4107, 16
        %v4161 = vrot.slane %v4159, 7
        %v4162 = vshll.u32 %v4107, 16
        %v4164 = vor.u32 %v4161, %v4162
        %v4166 = vshrl.u32 %v4108, 16
        %v4168 = vrot.slane %v4166, 7
        %v4169 = vshll.u32 %v4108, 16
        %v4171 = vor.u32 %v4168, %v4169
        %v4173 = vshrl.u32 %v4109, 16
        %v4175 = vrot.slane %v4173, 7
        %v4176 = vshll.u32 %v4109, 16
        %v4178 = vor.u32 %v4175, %v4176
        %v4180 = vshrl.u32 %v4110, 16
        %v4182 = vrot.slane %v4180, 7
        %v4183 = vshll.u32 %v4110, 16
        %v4185 = vor.u32 %v4182, %v4183
        %v4187 = vshrl.u32 %v4111, 16
        %v4189 = vrot.slane %v4187, 7
        %v4190 = vshll.u32 %v4111, 16
        %v4192 = vor.u32 %v4189, %v4190
        %v4194 = vshrl.u32 %v4112, 16
        %v4196 = vrot.slane %v4194, 7
        %v4197 = vshll.u32 %v4112, 16
        %v4199 = vor.u32 %v4196, %v4197
        %v4201 = vshrl.u32 %v4113, 16
        %v4203 = vrot.slane %v4201, 7
        %v4204 = vshll.u32 %v4113, 16
        %v4206 = vor.u32 %v4203, %v4204
        %v4208 = vshrl.u32 %v4114, 16
        %v4210 = vrot.slane %v4208, 7
        %v4211 = vshll.u32 %v4114, 16
        %v4213 = vor.u32 %v4210, %v4211
        %v4215 = vshrl.u32 %v4115, 16
        %v4217 = vrot.slane %v4215, 7
        %v4218 = vshll.u32 %v4115, 16
        %v4220 = vor.u32 %v4217, %v4218
        %v4222 = vshrl.u32 %v4116, 16
        %v4224 = vrot.slane %v4222, 7
        %v4225 = vshll.u32 %v4116, 16
        %v4227 = vor.u32 %v4224, %v4225
        %v4229 = vshrl.u32 %v4117, 16
        %v4231 = vrot.slane %v4229, 7
        %v4232 = vshll.u32 %v4117, 16
        %v4234 = vor.u32 %v4231, %v4232
        %v4236 = vshrl.u32 %v4118, 16
        %v4238 = vrot.slane %v4236, 7
        %v4239 = vshll.u32 %v4118, 16
        %v4241 = vor.u32 %v4238, %v4239
        %v4243 = vshrl.u32 %v4119, 16
        %v4245 = vrot.slane %v4243, 7
        %v4246 = vshll.u32 %v4119, 16
        %v4248 = vor.u32 %v4245, %v4246
        %v4250 = vshrl.u32 %v4120, 16
        %v4252 = vrot.slane %v4250, 7
        %v4253 = vshll.u32 %v4120, 16
        %v4255 = vor.u32 %v4252, %v4253
        %v4257 = vshrl.u32 %v4121, 16
        %v4259 = vrot.slane %v4257, 7
        %v4260 = vshll.u32 %v4121, 16
        %v4262 = vor.u32 %v4259, %v4260
        %v4264 = vshrl.u32 %v4122, 16
        %v4266 = vrot.slane %v4264, 7
        %v4267 = vshll.u32 %v4122, 16
        %v4269 = vor.u32 %v4266, %v4267
        %v4271 = vshrl.u32 %v4123, 16
        %v4273 = vrot.slane %v4271, 7
        %v4274 = vshll.u32 %v4123, 16
        %v4276 = vor.u32 %v4273, %v4274
        %v4278 = vshrl.u32 %v4124, 16
        %v4280 = vrot.slane %v4278, 7
        %v4281 = vshll.u32 %v4124, 16
        %v4283 = vor.u32 %v4280, %v4281
        %v4285 = vshrl.u32 %v4125, 16
        %v4287 = vrot.slane %v4285, 7
        %v4288 = vshll.u32 %v4125, 16
        %v4290 = vor.u32 %v4287, %v4288
        %v4292 = vshrl.u32 %v4126, 16
        %v4294 = vrot.slane %v4292, 7
        %v4295 = vshll.u32 %v4126, 16
        %v4297 = vor.u32 %v4294, %v4295
        %v4299 = vshrl.u32 %v4127, 16
        %v4301 = vrot.slane %v4299, 7
        %v4302 = vshll.u32 %v4127, 16
        %v4304 = vor.u32 %v4301, %v4302
        %v4306 = vshrl.u32 %v4128, 16
        %v4308 = vrot.slane %v4306, 7
        %v4309 = vshll.u32 %v4128, 16
        %v4311 = vor.u32 %v4308, %v4309
        %v4313 = vshrl.u32 %v4129, 16
        %v4315 = vrot.slane %v4313, 7
        %v4316 = vshll.u32 %v4129, 16
        %v4318 = vor.u32 %v4315, %v4316
        %v4320 = vshrl.u32 %v4130, 16
        %v4322 = vrot.slane %v4320, 7
        %v4323 = vshll.u32 %v4130, 16
        %v4325 = vor.u32 %v4322, %v4323
        %v4327 = vshrl.u32 %v4131, 16
        %v4329 = vrot.slane %v4327, 7
        %v4330 = vshll.u32 %v4131, 16
        %v4332 = vor.u32 %v4329, %v4330
        %v4334 = vshrl.u32 %v4132, 16
        %v4336 = vrot.slane %v4334, 7
        %v4337 = vshll.u32 %v4132, 16
        %v4339 = vor.u32 %v4336, %v4337
        %v4341 = vshrl.u32 %v4133, 16
        %v4343 = vrot.slane %v4341, 7
        %v4344 = vshll.u32 %v4133, 16
        %v4346 = vor.u32 %v4343, %v4344
        %v4348 = vshrl.u32 %v4134, 16
        %v4350 = vrot.slane %v4348, 7
        %v4351 = vshll.u32 %v4134, 16
        %v4353 = vor.u32 %v4350, %v4351
        %v4355 = vshrl.u32 %v4135, 16
        %v4357 = vrot.slane %v4355, 7
        %v4358 = vshll.u32 %v4135, 16
        %v4360 = vor.u32 %v4357, %v4358
        %v4362 = vshrl.u32 %v4136, 16
        %v4364 = vrot.slane %v4362, 7
        %v4365 = vshll.u32 %v4136, 16
        %v4367 = vor.u32 %v4364, %v4365
        %v4369 = vshrl.u32 %v4137, 16
        %v4371 = vrot.slane %v4369, 7
        %v4372 = vshll.u32 %v4137, 16
        %v4374 = vor.u32 %v4371, %v4372
        %v4407 = vsel %vm597, 0, %v4157
        %v4408 = vsel %vm597, 0, %v4164
        %v4409 = vsel %vm597, 0, %v4171
        %v4410 = vsel %vm597, 0, %v4178
        %v4411 = vsel %vm597, 0, %v4185
        %v4412 = vsel %vm597, 0, %v4192
        %v4413 = vsel %vm597, 0, %v4199
        %v4414 = vsel %vm597, 0, %v4206
        %v4415 = vsel %vm597, 0, %v4213
        %v4416 = vsel %vm597, 0, %v4220
        %v4417 = vsel %vm597, 0, %v4227
        %v4418 = vsel %vm597, 0, %v4234
        %v4419 = vsel %vm597, 0, %v4241
        %v4420 = vsel %vm597, 0, %v4248
        %v4421 = vsel %vm597, 0, %v4255
        %v4422 = vsel %vm597, 0, %v4262
        %v4423 = vsel %vm597, 0, %v4269
        %v4424 = vsel %vm597, 0, %v4276
        %v4425 = vsel %vm597, 0, %v4283
        %v4426 = vsel %vm597, 0, %v4290
        %v4427 = vsel %vm597, 0, %v4297
        %v4428 = vsel %vm597, 0, %v4304
        %v4429 = vsel %vm597, 0, %v4311
        %v4430 = vsel %vm597, 0, %v4318
        %v4431 = vsel %vm597, 0, %v4325
        %v4432 = vsel %vm597, 0, %v4332
        %v4433 = vsel %vm597, 0, %v4339
        %v4434 = vsel %vm597, 0, %v4346
        %v4435 = vsel %vm597, 0, %v4353
        %v4436 = vsel %vm597, 0, %v4360
        %v4437 = vsel %vm597, 0, %v4367
        %v4438 = vsel %vm597, 0, %v4374
        %s4439 = scalar_lea.vmem [#allocation3], 24
        %4440 = vst [vmem:[%s4439] sm:$0xff] %v4407
        %4441 = vst [vmem:[%s4439 + $0x18] sm:$0xff] %v4408
        %4442 = vst [vmem:[%s4439 + $0x30] sm:$0xff] %v4409
        %4443 = vst [vmem:[%s4439 + $0x48] sm:$0xff] %v4410
        %4444 = vst [vmem:[%s4439 + $0x60] sm:$0xff] %v4411
        %4445 = vst [vmem:[%s4439 + $0x78] sm:$0xff] %v4412
        %4446 = vst [vmem:[%s4439 + $0x90] sm:$0xff] %v4413
        %4447 = vst [vmem:[%s4439 + $0xa8] sm:$0xff] %v4414
        %4448 = vst [vmem:[%s4439 + $0xc0] sm:$0xff] %v4415
        %4449 = vst [vmem:[%s4439 + $0xd8] sm:$0xff] %v4416
        %4450 = vst [vmem:[%s4439 + $0xf0] sm:$0xff] %v4417
        %4451 = vst [vmem:[%s4439 + $0x108] sm:$0xff] %v4418
        %4452 = vst [vmem:[%s4439 + $0x120] sm:$0xff] %v4419
        %4453 = vst [vmem:[%s4439 + $0x138] sm:$0xff] %v4420
        %4454 = vst [vmem:[%s4439 + $0x150] sm:$0xff] %v4421
        %4455 = vst [vmem:[%s4439 + $0x168] sm:$0xff] %v4422
        %4456 = vst [vmem:[%s4439 + $0x1b0] sm:$0xff] %v4423
        %4457 = vst [vmem:[%s4439 + $0x1c8] sm:$0xff] %v4424
        %4458 = vst [vmem:[%s4439 + $0x1e0] sm:$0xff] %v4425
        %4459 = vst [vmem:[%s4439 + $0x1f8] sm:$0xff] %v4426
        %4460 = vst [vmem:[%s4439 + $0x210] sm:$0xff] %v4427
        %4461 = vst [vmem:[%s4439 + $0x228] sm:$0xff] %v4428
        %4462 = vst [vmem:[%s4439 + $0x240] sm:$0xff] %v4429
        %4463 = vst [vmem:[%s4439 + $0x258] sm:$0xff] %v4430
        %4464 = vst [vmem:[%s4439 + $0x270] sm:$0xff] %v4431
        %4465 = vst [vmem:[%s4439 + $0x288] sm:$0xff] %v4432
        %4466 = vst [vmem:[%s4439 + $0x2a0] sm:$0xff] %v4433
        %4467 = vst [vmem:[%s4439 + $0x2b8] sm:$0xff] %v4434
        %4468 = vst [vmem:[%s4439 + $0x2d0] sm:$0xff] %v4435
        %4469 = vst [vmem:[%s4439 + $0x2e8] sm:$0xff] %v4436
        %4470 = vst [vmem:[%s4439 + $0x300] sm:$0xff] %v4437
        %4471 = vst [vmem:[%s4439 + $0x318] sm:$0xff] %v4438
        %4472 = vst [vmem:[%s4439 + $0x8] sm:$0xff] %v4106
        %4473 = vst [vmem:[%s4439 + $0x20] sm:$0xff] %v4107
        %4474 = vst [vmem:[%s4439 + $0x38] sm:$0xff] %v4108
        %4475 = vst [vmem:[%s4439 + $0x50] sm:$0xff] %v4109
        %4476 = vst [vmem:[%s4439 + $0x68] sm:$0xff] %v4110
        %4477 = vst [vmem:[%s4439 + $0x80] sm:$0xff] %v4111
        %4478 = vst [vmem:[%s4439 + $0x98] sm:$0xff] %v4112
        %4479 = vst [vmem:[%s4439 + $0xb0] sm:$0xff] %v4113
        %4480 = vst [vmem:[%s4439 + $0xc8] sm:$0xff] %v4114
        %4481 = vst [vmem:[%s4439 + $0xe0] sm:$0xff] %v4115
        %4482 = vst [vmem:[%s4439 + $0xf8] sm:$0xff] %v4116
        %4483 = vst [vmem:[%s4439 + $0x110] sm:$0xff] %v4117
        %4484 = vst [vmem:[%s4439 + $0x128] sm:$0xff] %v4118
        %4485 = vst [vmem:[%s4439 + $0x140] sm:$0xff] %v4119
        %4486 = vst [vmem:[%s4439 + $0x158] sm:$0xff] %v4120
        %4487 = vst [vmem:[%s4439 + $0x170] sm:$0xff] %v4121
        %4488 = vst [vmem:[%s4439 + $0x1b8] sm:$0xff] %v4122
        %4489 = vst [vmem:[%s4439 + $0x1d0] sm:$0xff] %v4123
        %4490 = vst [vmem:[%s4439 + $0x1e8] sm:$0xff] %v4124
        %4491 = vst [vmem:[%s4439 + $0x200] sm:$0xff] %v4125
        %4492 = vst [vmem:[%s4439 + $0x218] sm:$0xff] %v4126
        %4493 = vst [vmem:[%s4439 + $0x230] sm:$0xff] %v4127
        %4494 = vst [vmem:[%s4439 + $0x248] sm:$0xff] %v4128
        %4495 = vst [vmem:[%s4439 + $0x260] sm:$0xff] %v4129
        %4496 = vst [vmem:[%s4439 + $0x278] sm:$0xff] %v4130
        %4497 = vst [vmem:[%s4439 + $0x290] sm:$0xff] %v4131
        %4498 = vst [vmem:[%s4439 + $0x2a8] sm:$0xff] %v4132
        %4499 = vst [vmem:[%s4439 + $0x2c0] sm:$0xff] %v4133
        %4500 = vst [vmem:[%s4439 + $0x2d8] sm:$0xff] %v4134
        %4501 = vst [vmem:[%s4439 + $0x2f0] sm:$0xff] %v4135
        %4502 = vst [vmem:[%s4439 + $0x308] sm:$0xff] %v4136
        %4503 = vst [vmem:[%s4439 + $0x320] sm:$0xff] %v4137
        %v4504 = vrot.slane %v4155, 1
        %v4505 = vor.u32 %v4152, %v4504
        %v4506 = vrot.slane %v4162, 1
        %v4507 = vor.u32 %v4159, %v4506
        %v4508 = vrot.slane %v4169, 1
        %v4509 = vor.u32 %v4166, %v4508
        %v4510 = vrot.slane %v4176, 1
        %v4511 = vor.u32 %v4173, %v4510
        %v4512 = vrot.slane %v4183, 1
        %v4513 = vor.u32 %v4180, %v4512
        %v4514 = vrot.slane %v4190, 1
        %v4515 = vor.u32 %v4187, %v4514
        %v4516 = vrot.slane %v4197, 1
        %v4517 = vor.u32 %v4194, %v4516
        %v4518 = vrot.slane %v4204, 1
        %v4519 = vor.u32 %v4201, %v4518
        %v4520 = vrot.slane %v4211, 1
        %v4521 = vor.u32 %v4208, %v4520
        %v4522 = vrot.slane %v4218, 1
        %v4523 = vor.u32 %v4215, %v4522
        %v4524 = vrot.slane %v4225, 1
        %v4525 = vor.u32 %v4222, %v4524
        %v4526 = vrot.slane %v4232, 1
        %v4527 = vor.u32 %v4229, %v4526
        %v4528 = vrot.slane %v4239, 1
        %v4529 = vor.u32 %v4236, %v4528
        %v4530 = vrot.slane %v4246, 1
        %v4531 = vor.u32 %v4243, %v4530
        %v4532 = vrot.slane %v4253, 1
        %v4533 = vor.u32 %v4250, %v4532
        %v4534 = vrot.slane %v4260, 1
        %v4535 = vor.u32 %v4257, %v4534
        %v4536 = vrot.slane %v4267, 1
        %v4537 = vor.u32 %v4264, %v4536
        %v4538 = vrot.slane %v4274, 1
        %v4539 = vor.u32 %v4271, %v4538
        %v4540 = vrot.slane %v4281, 1
        %v4541 = vor.u32 %v4278, %v4540
        %v4542 = vrot.slane %v4288, 1
        %v4543 = vor.u32 %v4285, %v4542
        %v4544 = vrot.slane %v4295, 1
        %v4545 = vor.u32 %v4292, %v4544
        %v4546 = vrot.slane %v4302, 1
        %v4547 = vor.u32 %v4299, %v4546
        %v4548 = vrot.slane %v4309, 1
        %v4549 = vor.u32 %v4306, %v4548
        %v4550 = vrot.slane %v4316, 1
        %v4551 = vor.u32 %v4313, %v4550
        %v4552 = vrot.slane %v4323, 1
        %v4553 = vor.u32 %v4320, %v4552
        %v4554 = vrot.slane %v4330, 1
        %v4555 = vor.u32 %v4327, %v4554
        %v4556 = vrot.slane %v4337, 1
        %v4557 = vor.u32 %v4334, %v4556
        %v4558 = vrot.slane %v4344, 1
        %v4559 = vor.u32 %v4341, %v4558
        %v4560 = vrot.slane %v4351, 1
        %v4561 = vor.u32 %v4348, %v4560
        %v4562 = vrot.slane %v4358, 1
        %v4563 = vor.u32 %v4355, %v4562
        %v4564 = vrot.slane %v4365, 1
        %v4565 = vor.u32 %v4362, %v4564
        %v4566 = vrot.slane %v4372, 1
        %v4567 = vor.u32 %v4369, %v4566
        %v4600 = vsel %vm793, %v4505, 0
        %v4601 = vsel %vm793, %v4507, 0
        %v4602 = vsel %vm793, %v4509, 0
        %v4603 = vsel %vm793, %v4511, 0
        %v4604 = vsel %vm793, %v4513, 0
        %v4605 = vsel %vm793, %v4515, 0
        %v4606 = vsel %vm793, %v4517, 0
        %v4607 = vsel %vm793, %v4519, 0
        %v4608 = vsel %vm793, %v4521, 0
        %v4609 = vsel %vm793, %v4523, 0
        %v4610 = vsel %vm793, %v4525, 0
        %v4611 = vsel %vm793, %v4527, 0
        %v4612 = vsel %vm793, %v4529, 0
        %v4613 = vsel %vm793, %v4531, 0
        %v4614 = vsel %vm793, %v4533, 0
        %v4615 = vsel %vm793, %v4535, 0
        %v4616 = vsel %vm793, %v4537, 0
        %v4617 = vsel %vm793, %v4539, 0
        %v4618 = vsel %vm793, %v4541, 0
        %v4619 = vsel %vm793, %v4543, 0
        %v4620 = vsel %vm793, %v4545, 0
        %v4621 = vsel %vm793, %v4547, 0
        %v4622 = vsel %vm793, %v4549, 0
        %v4623 = vsel %vm793, %v4551, 0
        %v4624 = vsel %vm793, %v4553, 0
        %v4625 = vsel %vm793, %v4555, 0
        %v4626 = vsel %vm793, %v4557, 0
        %v4627 = vsel %vm793, %v4559, 0
        %v4628 = vsel %vm793, %v4561, 0
        %v4629 = vsel %vm793, %v4563, 0
        %v4630 = vsel %vm793, %v4565, 0
        %v4631 = vsel %vm793, %v4567, 0
        %4632 = vst [vmem:[%s4439 + $0x10] sm:$0xff] %v4600
        %4633 = vst [vmem:[%s4439 + $0x28] sm:$0xff] %v4601
        %4634 = vst [vmem:[%s4439 + $0x40] sm:$0xff] %v4602
        %4635 = vst [vmem:[%s4439 + $0x58] sm:$0xff] %v4603
        %4636 = vst [vmem:[%s4439 + $0x70] sm:$0xff] %v4604
        %4637 = vst [vmem:[%s4439 + $0x88] sm:$0xff] %v4605
        %4638 = vst [vmem:[%s4439 + $0xa0] sm:$0xff] %v4606
        %4639 = vst [vmem:[%s4439 + $0xb8] sm:$0xff] %v4607
        %4640 = vst [vmem:[%s4439 + $0xd0] sm:$0xff] %v4608
        %4641 = vst [vmem:[%s4439 + $0xe8] sm:$0xff] %v4609
        %4642 = vst [vmem:[%s4439 + $0x100] sm:$0xff] %v4610
        %4643 = vst [vmem:[%s4439 + $0x118] sm:$0xff] %v4611
        %4644 = vst [vmem:[%s4439 + $0x130] sm:$0xff] %v4612
        %4645 = vst [vmem:[%s4439 + $0x148] sm:$0xff] %v4613
        %4646 = vst [vmem:[%s4439 + $0x160] sm:$0xff] %v4614
        %4647 = vst [vmem:[%s4439 + $0x178] sm:$0xff] %v4615
        %4648 = vst [vmem:[%s4439 + $0x1c0] sm:$0xff] %v4616
        %4649 = vst [vmem:[%s4439 + $0x1d8] sm:$0xff] %v4617
        %4650 = vst [vmem:[%s4439 + $0x1f0] sm:$0xff] %v4618
        %4651 = vst [vmem:[%s4439 + $0x208] sm:$0xff] %v4619
        %4652 = vst [vmem:[%s4439 + $0x220] sm:$0xff] %v4620
        %4653 = vst [vmem:[%s4439 + $0x238] sm:$0xff] %v4621
        %4654 = vst [vmem:[%s4439 + $0x250] sm:$0xff] %v4622
        %4655 = vst [vmem:[%s4439 + $0x268] sm:$0xff] %v4623
        %4656 = vst [vmem:[%s4439 + $0x280] sm:$0xff] %v4624
        %4657 = vst [vmem:[%s4439 + $0x298] sm:$0xff] %v4625
        %4658 = vst [vmem:[%s4439 + $0x2b0] sm:$0xff] %v4626
        %4659 = vst [vmem:[%s4439 + $0x2c8] sm:$0xff] %v4627
        %4660 = vst [vmem:[%s4439 + $0x2e0] sm:$0xff] %v4628
        %4661 = vst [vmem:[%s4439 + $0x2f8] sm:$0xff] %v4629
        %4662 = vst [vmem:[%s4439 + $0x310] sm:$0xff] %v4630
        %4663 = vst [vmem:[%s4439 + $0x328] sm:$0xff] %v4631
        %v4664 = vld [vmem:[#allocation3] sm:$0xff]
        %v4665 = vld [vmem:[#allocation3 + $0x8] sm:$0xff]
        %v4666 = vld [vmem:[#allocation3 + $0x10] sm:$0xff]
        %v4667 = vld [vmem:[#allocation3 + $0x18] sm:$0xff]
        %v4668 = vld [vmem:[#allocation3 + $0x20] sm:$0xff]
        %v4669 = vld [vmem:[#allocation3 + $0x28] sm:$0xff]
        %v4670 = vld [vmem:[#allocation3 + $0x30] sm:$0xff]
        %v4671 = vld [vmem:[#allocation3 + $0x38] sm:$0xff]
        %v4672 = vld [vmem:[#allocation3 + $0x40] sm:$0xff]
        %v4673 = vld [vmem:[#allocation3 + $0x48] sm:$0xff]
        %v4674 = vld [vmem:[#allocation3 + $0x50] sm:$0xff]
        %v4675 = vld [vmem:[#allocation3 + $0x58] sm:$0xff]
        %v4676 = vld [vmem:[#allocation3 + $0x60] sm:$0xff]
        %v4677 = vld [vmem:[#allocation3 + $0x68] sm:$0xff]
        %v4678 = vld [vmem:[#allocation3 + $0x70] sm:$0xff]
        %v4679 = vld [vmem:[#allocation3 + $0x78] sm:$0xff]
        %v4680 = vld [vmem:[#allocation3 + $0x80] sm:$0xff]
        %v4681 = vld [vmem:[#allocation3 + $0x88] sm:$0xff]
        %v4682 = vld [vmem:[#allocation3 + $0x90] sm:$0xff]
        %v4683 = vld [vmem:[#allocation3 + $0x98] sm:$0xff]
        %v4684 = vld [vmem:[#allocation3 + $0xa0] sm:$0xff]
        %v4685 = vld [vmem:[#allocation3 + $0xa8] sm:$0xff]
        %v4686 = vld [vmem:[#allocation3 + $0xb0] sm:$0xff]
        %v4687 = vld [vmem:[#allocation3 + $0xb8] sm:$0xff]
        %v4688 = vld [vmem:[#allocation3 + $0xc0] sm:$0xff]
        %v4689 = vld [vmem:[#allocation3 + $0xc8] sm:$0xff]
        %v4690 = vld [vmem:[#allocation3 + $0xd0] sm:$0xff]
        %v4691 = vld [vmem:[#allocation3 + $0xd8] sm:$0xff]
        %v4692 = vld [vmem:[#allocation3 + $0xe0] sm:$0xff]
        %v4693 = vld [vmem:[#allocation3 + $0xe8] sm:$0xff]
        %v4694 = vld [vmem:[#allocation3 + $0xf0] sm:$0xff]
        %v4695 = vld [vmem:[#allocation3 + $0xf8] sm:$0xff]
        %v4696 = vld [vmem:[#allocation3 + $0x100] sm:$0xff]
        %v4697 = vld [vmem:[#allocation3 + $0x108] sm:$0xff]
        %v4698 = vld [vmem:[#allocation3 + $0x110] sm:$0xff]
        %v4699 = vld [vmem:[#allocation3 + $0x118] sm:$0xff]
        %v4700 = vld [vmem:[#allocation3 + $0x120] sm:$0xff]
        %v4701 = vld [vmem:[#allocation3 + $0x128] sm:$0xff]
        %v4702 = vld [vmem:[#allocation3 + $0x130] sm:$0xff]
        %v4703 = vld [vmem:[#allocation3 + $0x138] sm:$0xff]
        %v4704 = vld [vmem:[#allocation3 + $0x140] sm:$0xff]
        %v4705 = vld [vmem:[#allocation3 + $0x148] sm:$0xff]
        %v4706 = vld [vmem:[#allocation3 + $0x150] sm:$0xff]
        %v4707 = vld [vmem:[#allocation3 + $0x158] sm:$0xff]
        %v4708 = vld [vmem:[#allocation3 + $0x160] sm:$0xff]
        %v4709 = vld [vmem:[#allocation3 + $0x168] sm:$0xff]
        %v4710 = vld [vmem:[#allocation3 + $0x170] sm:$0xff]
        %v4711 = vld [vmem:[#allocation3 + $0x178] sm:$0xff]
        %v4712 = vld [vmem:[#allocation3 + $0x1b0] sm:$0xff]
        %v4713 = vld [vmem:[#allocation3 + $0x1b8] sm:$0xff]
        %v4714 = vld [vmem:[#allocation3 + $0x1c0] sm:$0xff]
        %v4715 = vld [vmem:[#allocation3 + $0x1c8] sm:$0xff]
        %v4716 = vld [vmem:[#allocation3 + $0x1d0] sm:$0xff]
        %v4717 = vld [vmem:[#allocation3 + $0x1d8] sm:$0xff]
        %v4718 = vld [vmem:[#allocation3 + $0x1e0] sm:$0xff]
        %v4719 = vld [vmem:[#allocation3 + $0x1e8] sm:$0xff]
        %v4720 = vld [vmem:[#allocation3 + $0x1f0] sm:$0xff]
        %v4721 = vld [vmem:[#allocation3 + $0x1f8] sm:$0xff]
        %v4722 = vld [vmem:[#allocation3 + $0x200] sm:$0xff]
        %v4723 = vld [vmem:[#allocation3 + $0x208] sm:$0xff]
        %v4724 = vld [vmem:[#allocation3 + $0x210] sm:$0xff]
        %v4725 = vld [vmem:[#allocation3 + $0x218] sm:$0xff]
        %v4726 = vld [vmem:[#allocation3 + $0x220] sm:$0xff]
        %v4727 = vld [vmem:[#allocation3 + $0x228] sm:$0xff]
        %v4728 = vld [vmem:[#allocation3 + $0x230] sm:$0xff]
        %v4729 = vld [vmem:[#allocation3 + $0x238] sm:$0xff]
        %v4730 = vld [vmem:[#allocation3 + $0x240] sm:$0xff]
        %v4731 = vld [vmem:[#allocation3 + $0x248] sm:$0xff]
        %v4732 = vld [vmem:[#allocation3 + $0x250] sm:$0xff]
        %v4733 = vld [vmem:[#allocation3 + $0x258] sm:$0xff]
        %v4734 = vld [vmem:[#allocation3 + $0x260] sm:$0xff]
        %v4735 = vld [vmem:[#allocation3 + $0x268] sm:$0xff]
        %v4736 = vld [vmem:[#allocation3 + $0x270] sm:$0xff]
        %v4737 = vld [vmem:[#allocation3 + $0x278] sm:$0xff]
        %v4738 = vld [vmem:[#allocation3 + $0x280] sm:$0xff]
        %v4739 = vld [vmem:[#allocation3 + $0x288] sm:$0xff]
        %v4740 = vld [vmem:[#allocation3 + $0x290] sm:$0xff]
        %v4741 = vld [vmem:[#allocation3 + $0x298] sm:$0xff]
        %v4742 = vld [vmem:[#allocation3 + $0x2a0] sm:$0xff]
        %v4743 = vld [vmem:[#allocation3 + $0x2a8] sm:$0xff]
        %v4744 = vld [vmem:[#allocation3 + $0x2b0] sm:$0xff]
        %v4745 = vld [vmem:[#allocation3 + $0x2b8] sm:$0xff]
        %v4746 = vld [vmem:[#allocation3 + $0x2c0] sm:$0xff]
        %v4747 = vld [vmem:[#allocation3 + $0x2c8] sm:$0xff]
        %v4748 = vld [vmem:[#allocation3 + $0x2d0] sm:$0xff]
        %v4749 = vld [vmem:[#allocation3 + $0x2d8] sm:$0xff]
        %v4750 = vld [vmem:[#allocation3 + $0x2e0] sm:$0xff]
        %v4751 = vld [vmem:[#allocation3 + $0x2e8] sm:$0xff]
        %v4752 = vld [vmem:[#allocation3 + $0x2f0] sm:$0xff]
        %v4753 = vld [vmem:[#allocation3 + $0x2f8] sm:$0xff]
        %v4754 = vld [vmem:[#allocation3 + $0x300] sm:$0xff]
        %v4755 = vld [vmem:[#allocation3 + $0x308] sm:$0xff]
        %v4756 = vld [vmem:[#allocation3 + $0x310] sm:$0xff]
        %v4757 = vld [vmem:[#allocation3 + $0x318] sm:$0xff]
        %v4758 = vld [vmem:[#allocation3 + $0x320] sm:$0xff]
        %v4759 = vld [vmem:[#allocation3 + $0x328] sm:$0xff]
        %v4760 = vld [vmem:[%s3] sm:$0xf]
        %v4761 = vld [vmem:[%s3 + $0x4] sm:$0xf]
        %v4762 = vld [vmem:[%s3 + $0x8] sm:$0xf]
        %v4763 = vld [vmem:[%s3 + $0xc] sm:$0xf]
        %v4764 = vld [vmem:[%s3 + $0x10] sm:$0xf]
        %v4765 = vld [vmem:[%s3 + $0x14] sm:$0xf]
        %v4766 = vld [vmem:[%s3 + $0x18] sm:$0xf]
        %v4767 = vld [vmem:[%s3 + $0x1c] sm:$0xf]
        %v4768 = vld [vmem:[%s3 + $0x20] sm:$0xf]
        %v4769 = vld [vmem:[%s3 + $0x24] sm:$0xf]
        %v4770 = vld [vmem:[%s3 + $0x28] sm:$0xf]
        %v4771 = vld [vmem:[%s3 + $0x2c] sm:$0xf]
        %v4772 = vld [vmem:[%s3 + $0x30] sm:$0xf]
        %v4773 = vld [vmem:[%s3 + $0x34] sm:$0xf]
        %v4774 = vld [vmem:[%s3 + $0x38] sm:$0xf]
        %v4775 = vld [vmem:[%s3 + $0x3c] sm:$0xf]
        %v4776 = vld [vmem:[%s3 + $0x40] sm:$0xf]
        %v4777 = vld [vmem:[%s3 + $0x44] sm:$0xf]
        %v4778 = vld [vmem:[%s3 + $0x48] sm:$0xf]
        %v4779 = vld [vmem:[%s3 + $0x4c] sm:$0xf]
        %v4780 = vld [vmem:[%s3 + $0x50] sm:$0xf]
        %v4781 = vld [vmem:[%s3 + $0x54] sm:$0xf]
        %v4782 = vld [vmem:[%s3 + $0x58] sm:$0xf]
        %v4783 = vld [vmem:[%s3 + $0x5c] sm:$0xf]
        %v4784 = vld [vmem:[%s3 + $0x60] sm:$0xf]
        %v4785 = vld [vmem:[%s3 + $0x64] sm:$0xf]
        %v4786 = vld [vmem:[%s3 + $0x68] sm:$0xf]
        %v4787 = vld [vmem:[%s3 + $0x6c] sm:$0xf]
        %v4788 = vld [vmem:[%s3 + $0x70] sm:$0xf]
        %v4789 = vld [vmem:[%s3 + $0x74] sm:$0xf]
        %v4790 = vld [vmem:[%s3 + $0x78] sm:$0xf]
        %v4791 = vld [vmem:[%s3 + $0x7c] sm:$0xf]
        %v4792 = vld [vmem:[%s3 + $0x80] sm:$0xf]
        %v4793 = vld [vmem:[%s3 + $0x84] sm:$0xf]
        %v4794 = vld [vmem:[%s3 + $0x88] sm:$0xf]
        %v4795 = vld [vmem:[%s3 + $0x8c] sm:$0xf]
        %v4796 = vld [vmem:[%s3 + $0x90] sm:$0xf]
        %v4797 = vld [vmem:[%s3 + $0x94] sm:$0xf]
        %v4798 = vld [vmem:[%s3 + $0x98] sm:$0xf]
        %v4799 = vld [vmem:[%s3 + $0x9c] sm:$0xf]
        %v4800 = vld [vmem:[%s3 + $0xa0] sm:$0xf]
        %v4801 = vld [vmem:[%s3 + $0xa4] sm:$0xf]
        %v4802 = vld [vmem:[%s3 + $0xa8] sm:$0xf]
        %v4803 = vld [vmem:[%s3 + $0xac] sm:$0xf]
        %v4804 = vld [vmem:[%s3 + $0xb0] sm:$0xf]
        %v4805 = vld [vmem:[%s3 + $0xb4] sm:$0xf]
        %v4806 = vld [vmem:[%s3 + $0xb8] sm:$0xf]
        %v4807 = vld [vmem:[%s3 + $0xbc] sm:$0xf]
        %v4856 = vunpack.c.l.b16 %v4760
        %v4857 = vunpack.c.l.b16 %v4761
        %v4858 = vunpack.c.l.b16 %v4762
        %v4859 = vunpack.c.l.b16 %v4763
        %v4860 = vunpack.c.l.b16 %v4764
        %v4861 = vunpack.c.l.b16 %v4765
        %v4862 = vunpack.c.l.b16 %v4766
        %v4863 = vunpack.c.l.b16 %v4767
        %v4864 = vunpack.c.l.b16 %v4768
        %v4865 = vunpack.c.l.b16 %v4769
        %v4866 = vunpack.c.l.b16 %v4770
        %v4867 = vunpack.c.l.b16 %v4771
        %v4868 = vunpack.c.l.b16 %v4772
        %v4869 = vunpack.c.l.b16 %v4773
        %v4870 = vunpack.c.l.b16 %v4774
        %v4871 = vunpack.c.l.b16 %v4775
        %v4872 = vunpack.c.l.b16 %v4776
        %v4873 = vunpack.c.l.b16 %v4777
        %v4874 = vunpack.c.l.b16 %v4778
        %v4875 = vunpack.c.l.b16 %v4779
        %v4876 = vunpack.c.l.b16 %v4780
        %v4877 = vunpack.c.l.b16 %v4781
        %v4878 = vunpack.c.l.b16 %v4782
        %v4879 = vunpack.c.l.b16 %v4783
        %v4880 = vunpack.c.l.b16 %v4784
        %v4881 = vunpack.c.l.b16 %v4785
        %v4882 = vunpack.c.l.b16 %v4786
        %v4883 = vunpack.c.l.b16 %v4787
        %v4884 = vunpack.c.l.b16 %v4788
        %v4885 = vunpack.c.l.b16 %v4789
        %v4886 = vunpack.c.l.b16 %v4790
        %v4887 = vunpack.c.l.b16 %v4791
        %v4888 = vunpack.c.l.b16 %v4792
        %v4889 = vunpack.c.l.b16 %v4793
        %v4890 = vunpack.c.l.b16 %v4794
        %v4891 = vunpack.c.l.b16 %v4795
        %v4892 = vunpack.c.l.b16 %v4796
        %v4893 = vunpack.c.l.b16 %v4797
        %v4894 = vunpack.c.l.b16 %v4798
        %v4895 = vunpack.c.l.b16 %v4799
        %v4896 = vunpack.c.l.b16 %v4800
        %v4897 = vunpack.c.l.b16 %v4801
        %v4898 = vunpack.c.l.b16 %v4802
        %v4899 = vunpack.c.l.b16 %v4803
        %v4900 = vunpack.c.l.b16 %v4804
        %v4901 = vunpack.c.l.b16 %v4805
        %v4902 = vunpack.c.l.b16 %v4806
        %v4903 = vunpack.c.l.b16 %v4807
        %v4904 = vpack.c.b16 %v4857, %v4856
        %v4905 = vpack.c.b16 %v4859, %v4858
        %v4906 = vpack.c.b16 %v4861, %v4860
        %v4907 = vpack.c.b16 %v4863, %v4862
        %v4908 = vpack.c.b16 %v4865, %v4864
        %v4909 = vpack.c.b16 %v4867, %v4866
        %v4910 = vpack.c.b16 %v4869, %v4868
        %v4911 = vpack.c.b16 %v4871, %v4870
        %v4912 = vpack.c.b16 %v4873, %v4872
        %v4913 = vpack.c.b16 %v4875, %v4874
        %v4914 = vpack.c.b16 %v4877, %v4876
        %v4915 = vpack.c.b16 %v4879, %v4878
        %v4916 = vpack.c.b16 %v4881, %v4880
        %v4917 = vpack.c.b16 %v4883, %v4882
        %v4918 = vpack.c.b16 %v4885, %v4884
        %v4919 = vpack.c.b16 %v4887, %v4886
        %v4920 = vpack.c.b16 %v4889, %v4888
        %v4921 = vpack.c.b16 %v4891, %v4890
        %v4922 = vpack.c.b16 %v4893, %v4892
        %v4923 = vpack.c.b16 %v4895, %v4894
        %v4924 = vpack.c.b16 %v4897, %v4896
        %v4925 = vpack.c.b16 %v4899, %v4898
        %v4926 = vpack.c.b16 %v4901, %v4900
        %v4927 = vpack.c.b16 %v4903, %v4902
        %4952 = vmatprep.subr.bf16.mxu0 0
        %4953 = vmatpush1.bf16.msra.mxu0 %v4904
        %4954 = vmatprep.subr.bf16.mxu0 0
        %4955 = vmatpush1.bf16.msra.mxu0 %v4905
        %4956 = vmatprep.subr.bf16.mxu0 0
        %4957 = vmatpush1.bf16.msra.mxu0 %v4906
        %4958 = vmatprep.subr.bf16.mxu0 0
        %4959 = vmatpush1.bf16.msra.mxu0 %v4907
        %4960 = vmatprep.subr.bf16.mxu0 0
        %4961 = vmatpush1.bf16.msra.mxu0 %v4908
        %4962 = vmatprep.subr.bf16.mxu0 0
        %4963 = vmatpush1.bf16.msra.mxu0 %v4909
        %4964 = vmatprep.subr.bf16.mxu0 0
        %4965 = vmatpush1.bf16.msra.mxu0 %v4910
        %4966 = vmatprep.subr.bf16.mxu0 0
        %4967 = vmatpush1.bf16.msra.mxu0 %v4911
        %4968 = vmatprep.subr.bf16.mxu0 0
        %4969 = vmatpush1.bf16.msra.mxu0 %v4912
        %4970 = vmatprep.subr.bf16.mxu0 0
        %4971 = vmatpush1.bf16.msra.mxu0 %v4913
        %4972 = vmatprep.subr.bf16.mxu0 0
        %4973 = vmatpush1.bf16.msra.mxu0 %v4914
        %4974 = vmatprep.subr.bf16.mxu0 0
        %4975 = vmatpush1.bf16.msra.mxu0 %v4915
        %4976 = vmatprep.subr.bf16.mxu0 0
        %4977 = vmatpush1.bf16.msra.mxu0 %v4916
        %4978 = vmatprep.subr.bf16.mxu0 0
        %4979 = vmatpush1.bf16.msra.mxu0 %v4917
        %4980 = vmatprep.subr.bf16.mxu0 0
        %4981 = vmatpush1.bf16.msra.mxu0 %v4918
        %4982 = vmatprep.subr.bf16.mxu0 0
        %4983 = vmatpush1.bf16.msra.mxu0 %v4919
        %4984 = vmatprep.mubr.bf16.mxu0 %v4665
        %4985 = vmatmul.mubr.bf16.gmra.mrb[0].mxu0 %v4664
        %v4986 = vpop.f32.mrb[0].mxu0
        %v4987 = vadd.f32 0.0, %v4986
        %v4988 = vpop.f32.mrb[0].mxu0
        %v4989 = vpop.f32.mrb[0].mxu0
        %v4990 = vadd.f32 0.0, %v4989
        %v4991 = vpop.f32.mrb[0].mxu0
        %4992 = vmatprep.mubr.bf16.mxu0 %v4668
        %4993 = vmatmul.mubr.bf16.gmra.mrb[0].mxu0 %v4667
        %v4994 = vpop.f32.mrb[0].mxu0
        %v4995 = vadd.f32 0.0, %v4994
        %v4996 = vpop.f32.mrb[0].mxu0
        %v4997 = vpop.f32.mrb[0].mxu0
        %v4998 = vadd.f32 0.0, %v4997
        %v4999 = vpop.f32.mrb[0].mxu0
        %5000 = vmatprep.mubr.bf16.mxu0 %v4671
        %5001 = vmatmul.mubr.bf16.gmra.mrb[0].mxu0 %v4670
        %v5002 = vpop.f32.mrb[0].mxu0
        %v5003 = vadd.f32 0.0, %v5002
        %v5004 = vpop.f32.mrb[0].mxu0
        %v5005 = vpop.f32.mrb[0].mxu0
        %v5006 = vadd.f32 0.0, %v5005
        %v5007 = vpop.f32.mrb[0].mxu0
        %5008 = vmatprep.mubr.bf16.mxu0 %v4674
        %5009 = vmatmul.mubr.bf16.gmra.mrb[0].mxu0 %v4673
        %v5010 = vpop.f32.mrb[0].mxu0
        %v5011 = vadd.f32 0.0, %v5010
        %v5012 = vpop.f32.mrb[0].mxu0
        %v5013 = vpop.f32.mrb[0].mxu0
        %v5014 = vadd.f32 0.0, %v5013
        %v5015 = vpop.f32.mrb[0].mxu0
        %5016 = vmatprep.mubr.bf16.mxu0 %v4677
        %5017 = vmatmul.mubr.bf16.gmra.mrb[0].mxu0 %v4676
        %v5018 = vpop.f32.mrb[0].mxu0
        %v5019 = vadd.f32 0.0, %v5018
        %v5020 = vpop.f32.mrb[0].mxu0
        %v5021 = vpop.f32.mrb[0].mxu0
        %v5022 = vadd.f32 0.0, %v5021
        %v5023 = vpop.f32.mrb[0].mxu0
        %5024 = vmatprep.mubr.bf16.mxu0 %v4680
        %5025 = vmatmul.mubr.bf16.gmra.mrb[0].mxu0 %v4679
        %v5026 = vpop.f32.mrb[0].mxu0
        %v5027 = vadd.f32 0.0, %v5026
        %v5028 = vpop.f32.mrb[0].mxu0
        %v5029 = vpop.f32.mrb[0].mxu0
        %v5030 = vadd.f32 0.0, %v5029
        %v5031 = vpop.f32.mrb[0].mxu0
        %5032 = vmatprep.mubr.bf16.mxu0 %v4683
        %5033 = vmatmul.mubr.bf16.gmra.mrb[0].mxu0 %v4682
        %v5034 = vpop.f32.mrb[0].mxu0
        %v5035 = vadd.f32 0.0, %v5034
        %v5036 = vpop.f32.mrb[0].mxu0
        %v5037 = vpop.f32.mrb[0].mxu0
        %v5038 = vadd.f32 0.0, %v5037
        %v5039 = vpop.f32.mrb[0].mxu0
        %5040 = vmatprep.mubr.bf16.mxu0 %v4686
        %5041 = vmatmul.mubr.bf16.gmra.mrb[0].mxu0 %v4685
        %v5042 = vpop.f32.mrb[0].mxu0
        %v5043 = vadd.f32 0.0, %v5042
        %v5044 = vpop.f32.mrb[0].mxu0
        %v5045 = vpop.f32.mrb[0].mxu0
        %v5046 = vadd.f32 0.0, %v5045
        %v5047 = vpop.f32.mrb[0].mxu0
        %5048 = vmatprep.mubr.bf16.mxu0 %v4689
        %5049 = vmatmul.mubr.bf16.gmra.mrb[0].mxu0 %v4688
        %v5050 = vpop.f32.mrb[0].mxu0
        %v5051 = vadd.f32 0.0, %v5050
        %v5052 = vpop.f32.mrb[0].mxu0
        %v5053 = vpop.f32.mrb[0].mxu0
        %v5054 = vadd.f32 0.0, %v5053
        %v5055 = vpop.f32.mrb[0].mxu0
        %5056 = vmatprep.mubr.bf16.mxu0 %v4692
        %5057 = vmatmul.mubr.bf16.gmra.mrb[0].mxu0 %v4691
        %v5058 = vpop.f32.mrb[0].mxu0
        %v5059 = vadd.f32 0.0, %v5058
        %v5060 = vpop.f32.mrb[0].mxu0
        %v5061 = vpop.f32.mrb[0].mxu0
        %v5062 = vadd.f32 0.0, %v5061
        %v5063 = vpop.f32.mrb[0].mxu0
        %5064 = vmatprep.mubr.bf16.mxu0 %v4695
        %5065 = vmatmul.mubr.bf16.gmra.mrb[0].mxu0 %v4694
        %v5066 = vpop.f32.mrb[0].mxu0
        %v5067 = vadd.f32 0.0, %v5066
        %v5068 = vpop.f32.mrb[0].mxu0
        %v5069 = vpop.f32.mrb[0].mxu0
        %v5070 = vadd.f32 0.0, %v5069
        %v5071 = vpop.f32.mrb[0].mxu0
        %5072 = vmatprep.mubr.bf16.mxu0 %v4698
        %5073 = vmatmul.mubr.bf16.gmra.mrb[0].mxu0 %v4697
        %v5074 = vpop.f32.mrb[0].mxu0
        %v5075 = vadd.f32 0.0, %v5074
        %v5076 = vpop.f32.mrb[0].mxu0
        %v5077 = vpop.f32.mrb[0].mxu0
        %v5078 = vadd.f32 0.0, %v5077
        %v5079 = vpop.f32.mrb[0].mxu0
        %5080 = vmatprep.mubr.bf16.mxu0 %v4701
        %5081 = vmatmul.mubr.bf16.gmra.mrb[0].mxu0 %v4700
        %v5082 = vpop.f32.mrb[0].mxu0
        %v5083 = vadd.f32 0.0, %v5082
        %v5084 = vpop.f32.mrb[0].mxu0
        %v5085 = vpop.f32.mrb[0].mxu0
        %v5086 = vadd.f32 0.0, %v5085
        %v5087 = vpop.f32.mrb[0].mxu0
        %5088 = vmatprep.mubr.bf16.mxu0 %v4704
        %5089 = vmatmul.mubr.bf16.gmra.mrb[0].mxu0 %v4703
        %v5090 = vpop.f32.mrb[0].mxu0
        %v5091 = vadd.f32 0.0, %v5090
        %v5092 = vpop.f32.mrb[0].mxu0
        %v5093 = vpop.f32.mrb[0].mxu0
        %v5094 = vadd.f32 0.0, %v5093
        %v5095 = vpop.f32.mrb[0].mxu0
        %5096 = vmatprep.mubr.bf16.mxu0 %v4707
        %5097 = vmatmul.mubr.bf16.gmra.mrb[0].mxu0 %v4706
        %v5098 = vpop.f32.mrb[0].mxu0
        %v5099 = vadd.f32 0.0, %v5098
        %v5100 = vpop.f32.mrb[0].mxu0
        %v5101 = vpop.f32.mrb[0].mxu0
        %v5102 = vadd.f32 0.0, %v5101
        %v5103 = vpop.f32.mrb[0].mxu0
        %5104 = vmatprep.mubr.bf16.mxu0 %v4710
        %5105 = vmatmul.mubr.bf16.gmra.mrb[0].mxu0 %v4709
        %v5106 = vpop.f32.mrb[0].mxu0
        %v5107 = vadd.f32 0.0, %v5106
        %v5108 = vpop.f32.mrb[0].mxu0
        %v5109 = vpop.f32.mrb[0].mxu0
        %v5110 = vadd.f32 0.0, %v5109
        %v5111 = vpop.f32.mrb[0].mxu0
        %5112 = vmatprep.mubr.bf16.mxu0 %v4713
        %5113 = vmatmul.mubr.bf16.gmra.mrb[0].mxu0 %v4712
        %v5114 = vpop.f32.mrb[0].mxu0
        %v5115 = vadd.f32 0.0, %v5114
        %v5116 = vpop.f32.mrb[0].mxu0
        %v5117 = vpop.f32.mrb[0].mxu0
        %v5118 = vadd.f32 0.0, %v5117
        %v5119 = vpop.f32.mrb[0].mxu0
        %5120 = vmatprep.mubr.bf16.mxu0 %v4716
        %5121 = vmatmul.mubr.bf16.gmra.mrb[0].mxu0 %v4715
        %v5122 = vpop.f32.mrb[0].mxu0
        %v5123 = vadd.f32 0.0, %v5122
        %v5124 = vpop.f32.mrb[0].mxu0
        %v5125 = vpop.f32.mrb[0].mxu0
        %v5126 = vadd.f32 0.0, %v5125
        %v5127 = vpop.f32.mrb[0].mxu0
        %5128 = vmatprep.mubr.bf16.mxu0 %v4719
        %5129 = vmatmul.mubr.bf16.gmra.mrb[0].mxu0 %v4718
        %v5130 = vpop.f32.mrb[0].mxu0
        %v5131 = vadd.f32 0.0, %v5130
        %v5132 = vpop.f32.mrb[0].mxu0
        %v5133 = vpop.f32.mrb[0].mxu0
        %v5134 = vadd.f32 0.0, %v5133
        %v5135 = vpop.f32.mrb[0].mxu0
        %5136 = vmatprep.mubr.bf16.mxu0 %v4722
        %5137 = vmatmul.mubr.bf16.gmra.mrb[0].mxu0 %v4721
        %v5138 = vpop.f32.mrb[0].mxu0
        %v5139 = vadd.f32 0.0, %v5138
        %v5140 = vpop.f32.mrb[0].mxu0
        %v5141 = vpop.f32.mrb[0].mxu0
        %v5142 = vadd.f32 0.0, %v5141
        %v5143 = vpop.f32.mrb[0].mxu0
        %5144 = vmatprep.mubr.bf16.mxu0 %v4725
        %5145 = vmatmul.mubr.bf16.gmra.mrb[0].mxu0 %v4724
        %v5146 = vpop.f32.mrb[0].mxu0
        %v5147 = vadd.f32 0.0, %v5146
        %v5148 = vpop.f32.mrb[0].mxu0
        %v5149 = vpop.f32.mrb[0].mxu0
        %v5150 = vadd.f32 0.0, %v5149
        %v5151 = vpop.f32.mrb[0].mxu0
        %5152 = vmatprep.mubr.bf16.mxu0 %v4728
        %5153 = vmatmul.mubr.bf16.gmra.mrb[0].mxu0 %v4727
        %v5154 = vpop.f32.mrb[0].mxu0
        %v5155 = vadd.f32 0.0, %v5154
        %v5156 = vpop.f32.mrb[0].mxu0
        %v5157 = vpop.f32.mrb[0].mxu0
        %v5158 = vadd.f32 0.0, %v5157
        %v5159 = vpop.f32.mrb[0].mxu0
        %5160 = vmatprep.mubr.bf16.mxu0 %v4731
        %5161 = vmatmul.mubr.bf16.gmra.mrb[0].mxu0 %v4730
        %v5162 = vpop.f32.mrb[0].mxu0
        %v5163 = vadd.f32 0.0, %v5162
        %v5164 = vpop.f32.mrb[0].mxu0
        %v5165 = vpop.f32.mrb[0].mxu0
        %v5166 = vadd.f32 0.0, %v5165
        %v5167 = vpop.f32.mrb[0].mxu0
        %5168 = vmatprep.mubr.bf16.mxu0 %v4734
        %5169 = vmatmul.mubr.bf16.gmra.mrb[0].mxu0 %v4733
        %v5170 = vpop.f32.mrb[0].mxu0
        %v5171 = vadd.f32 0.0, %v5170
        %v5172 = vpop.f32.mrb[0].mxu0
        %v5173 = vpop.f32.mrb[0].mxu0
        %v5174 = vadd.f32 0.0, %v5173
        %v5175 = vpop.f32.mrb[0].mxu0
        %5176 = vmatprep.mubr.bf16.mxu0 %v4737
        %5177 = vmatmul.mubr.bf16.gmra.mrb[0].mxu0 %v4736
        %v5178 = vpop.f32.mrb[0].mxu0
        %v5179 = vadd.f32 0.0, %v5178
        %v5180 = vpop.f32.mrb[0].mxu0
        %v5181 = vpop.f32.mrb[0].mxu0
        %v5182 = vadd.f32 0.0, %v5181
        %v5183 = vpop.f32.mrb[0].mxu0
        %5184 = vmatprep.mubr.bf16.mxu0 %v4740
        %5185 = vmatmul.mubr.bf16.gmra.mrb[0].mxu0 %v4739
        %v5186 = vpop.f32.mrb[0].mxu0
        %v5187 = vadd.f32 0.0, %v5186
        %v5188 = vpop.f32.mrb[0].mxu0
        %v5189 = vpop.f32.mrb[0].mxu0
        %v5190 = vadd.f32 0.0, %v5189
        %v5191 = vpop.f32.mrb[0].mxu0
        %5192 = vmatprep.mubr.bf16.mxu0 %v4743
        %5193 = vmatmul.mubr.bf16.gmra.mrb[0].mxu0 %v4742
        %v5194 = vpop.f32.mrb[0].mxu0
        %v5195 = vadd.f32 0.0, %v5194
        %v5196 = vpop.f32.mrb[0].mxu0
        %v5197 = vpop.f32.mrb[0].mxu0
        %v5198 = vadd.f32 0.0, %v5197
        %v5199 = vpop.f32.mrb[0].mxu0
        %5200 = vmatprep.mubr.bf16.mxu0 %v4746
        %5201 = vmatmul.mubr.bf16.gmra.mrb[0].mxu0 %v4745
        %v5202 = vpop.f32.mrb[0].mxu0
        %v5203 = vadd.f32 0.0, %v5202
        %v5204 = vpop.f32.mrb[0].mxu0
        %v5205 = vpop.f32.mrb[0].mxu0
        %v5206 = vadd.f32 0.0, %v5205
        %v5207 = vpop.f32.mrb[0].mxu0
        %5208 = vmatprep.mubr.bf16.mxu0 %v4749
        %5209 = vmatmul.mubr.bf16.gmra.mrb[0].mxu0 %v4748
        %v5210 = vpop.f32.mrb[0].mxu0
        %v5211 = vadd.f32 0.0, %v5210
        %v5212 = vpop.f32.mrb[0].mxu0
        %v5213 = vpop.f32.mrb[0].mxu0
        %v5214 = vadd.f32 0.0, %v5213
        %v5215 = vpop.f32.mrb[0].mxu0
        %5216 = vmatprep.mubr.bf16.mxu0 %v4752
        %5217 = vmatmul.mubr.bf16.gmra.mrb[0].mxu0 %v4751
        %v5218 = vpop.f32.mrb[0].mxu0
        %v5219 = vadd.f32 0.0, %v5218
        %v5220 = vpop.f32.mrb[0].mxu0
        %v5221 = vpop.f32.mrb[0].mxu0
        %v5222 = vadd.f32 0.0, %v5221
        %v5223 = vpop.f32.mrb[0].mxu0
        %5224 = vmatprep.mubr.bf16.mxu0 %v4755
        %5225 = vmatmul.mubr.bf16.gmra.mrb[0].mxu0 %v4754
        %v5226 = vpop.f32.mrb[0].mxu0
        %v5227 = vadd.f32 0.0, %v5226
        %v5228 = vpop.f32.mrb[0].mxu0
        %v5229 = vpop.f32.mrb[0].mxu0
        %v5230 = vadd.f32 0.0, %v5229
        %v5231 = vpop.f32.mrb[0].mxu0
        %5232 = vmatprep.mubr.bf16.mxu0 %v4758
        %5233 = vmatmul.mubr.bf16.gmra.mrb[0].mxu0 %v4757
        %v5234 = vpop.f32.mrb[0].mxu0
        %v5235 = vadd.f32 0.0, %v5234
        %v5236 = vpop.f32.mrb[0].mxu0
        %v5237 = vpop.f32.mrb[0].mxu0
        %v5238 = vadd.f32 0.0, %v5237
        %v5239 = vpop.f32.mrb[0].mxu0
        %5240 = vdwg.mxu0
        %5241 = vmatprep.subr.bf16.mxu0 0
        %5242 = vmatpush1.bf16.msra.mxu0 %v4920
        %5243 = vmatprep.subr.bf16.mxu0 0
        %5244 = vmatpush1.bf16.msra.mxu0 %v4921
        %5245 = vmatprep.subr.bf16.mxu0 0
        %5246 = vmatpush1.bf16.msra.mxu0 %v4922
        %5247 = vmatprep.subr.bf16.mxu0 0
        %5248 = vmatpush1.bf16.msra.mxu0 %v4923
        %5249 = vmatprep.subr.bf16.mxu0 0
        %5250 = vmatpush1.bf16.msra.mxu0 %v4924
        %5251 = vmatprep.subr.bf16.mxu0 0
        %5252 = vmatpush1.bf16.msra.mxu0 %v4925
        %5253 = vmatprep.subr.bf16.mxu0 0
        %5254 = vmatpush1.bf16.msra.mxu0 %v4926
        %5255 = vmatprep.subr.bf16.mxu0 0
        %5256 = vmatpush1.bf16.msra.mxu0 %v4927
        %5257 = vmatprep.subr.bf16.mxu0 0
        %5258 = vmatpush1.bf16.msra.mxu0 0
        %5259 = vmatprep.subr.bf16.mxu0 0
        %5260 = vmatpush1.bf16.msra.mxu0 0
        %5261 = vmatprep.subr.bf16.mxu0 0
        %5262 = vmatpush1.bf16.msra.mxu0 0
        %5263 = vmatprep.subr.bf16.mxu0 0
        %5264 = vmatpush1.bf16.msra.mxu0 0
        %5265 = vmatprep.subr.bf16.mxu0 0
        %5266 = vmatpush1.bf16.msra.mxu0 0
        %5267 = vmatprep.subr.bf16.mxu0 0
        %5268 = vmatpush1.bf16.msra.mxu0 0
        %5269 = vmatprep.subr.bf16.mxu0 0
        %5270 = vmatpush1.bf16.msra.mxu0 0
        %5271 = vmatprep.subr.bf16.mxu0 0
        %5272 = vmatpush1.bf16.msra.mxu0 0
        %5273 = vmatprep.mubr.bf16.mxu0 0
        %5274 = vmatmul.mubr.bf16.gmra.mrb[0].mxu0 %v4666
        %v5275 = vpop.f32.mrb[0].mxu0
        %v5276 = vadd.f32 %v4987, %v5275
        %v5277 = vpop.f32.mrb[0].mxu0
        %v5278 = vpop.f32.mrb[0].mxu0
        %v5279 = vadd.f32 %v4990, %v5278
        %v5280 = vpop.f32.mrb[0].mxu0
        %5281 = vmatprep.mubr.bf16.mxu0 0
        %5282 = vmatmul.mubr.bf16.gmra.mrb[0].mxu0 %v4669
        %v5283 = vpop.f32.mrb[0].mxu0
        %v5284 = vadd.f32 %v4995, %v5283
        %v5285 = vpop.f32.mrb[0].mxu0
        %v5286 = vpop.f32.mrb[0].mxu0
        %v5287 = vadd.f32 %v4998, %v5286
        %v5288 = vpop.f32.mrb[0].mxu0
        %5289 = vmatprep.mubr.bf16.mxu0 0
        %5290 = vmatmul.mubr.bf16.gmra.mrb[0].mxu0 %v4672
        %v5291 = vpop.f32.mrb[0].mxu0
        %v5292 = vadd.f32 %v5003, %v5291
        %v5293 = vpop.f32.mrb[0].mxu0
        %v5294 = vpop.f32.mrb[0].mxu0
        %v5295 = vadd.f32 %v5006, %v5294
        %v5296 = vpop.f32.mrb[0].mxu0
        %5297 = vmatprep.mubr.bf16.mxu0 0
        %5298 = vmatmul.mubr.bf16.gmra.mrb[0].mxu0 %v4675
        %v5299 = vpop.f32.mrb[0].mxu0
        %v5300 = vadd.f32 %v5011, %v5299
        %v5301 = vpop.f32.mrb[0].mxu0
        %v5302 = vpop.f32.mrb[0].mxu0
        %v5303 = vadd.f32 %v5014, %v5302
        %v5304 = vpop.f32.mrb[0].mxu0
        %5305 = vmatprep.mubr.bf16.mxu0 0
        %5306 = vmatmul.mubr.bf16.gmra.mrb[0].mxu0 %v4678
        %v5307 = vpop.f32.mrb[0].mxu0
        %v5308 = vadd.f32 %v5019, %v5307
        %v5309 = vpop.f32.mrb[0].mxu0
        %v5310 = vpop.f32.mrb[0].mxu0
        %v5311 = vadd.f32 %v5022, %v5310
        %v5312 = vpop.f32.mrb[0].mxu0
        %5313 = vmatprep.mubr.bf16.mxu0 0
        %5314 = vmatmul.mubr.bf16.gmra.mrb[0].mxu0 %v4681
        %v5315 = vpop.f32.mrb[0].mxu0
        %v5316 = vadd.f32 %v5027, %v5315
        %v5317 = vpop.f32.mrb[0].mxu0
        %v5318 = vpop.f32.mrb[0].mxu0
        %v5319 = vadd.f32 %v5030, %v5318
        %v5320 = vpop.f32.mrb[0].mxu0
        %5321 = vmatprep.mubr.bf16.mxu0 0
        %5322 = vmatmul.mubr.bf16.gmra.mrb[0].mxu0 %v4684
        %v5323 = vpop.f32.mrb[0].mxu0
        %v5324 = vadd.f32 %v5035, %v5323
        %v5325 = vpop.f32.mrb[0].mxu0
        %v5326 = vpop.f32.mrb[0].mxu0
        %v5327 = vadd.f32 %v5038, %v5326
        %v5328 = vpop.f32.mrb[0].mxu0
        %5329 = vmatprep.mubr.bf16.mxu0 0
        %5330 = vmatmul.mubr.bf16.gmra.mrb[0].mxu0 %v4687
        %v5331 = vpop.f32.mrb[0].mxu0
        %v5332 = vadd.f32 %v5043, %v5331
        %v5333 = vpop.f32.mrb[0].mxu0
        %v5334 = vpop.f32.mrb[0].mxu0
        %v5335 = vadd.f32 %v5046, %v5334
        %v5336 = vpop.f32.mrb[0].mxu0
        %5337 = vmatprep.mubr.bf16.mxu0 0
        %5338 = vmatmul.mubr.bf16.gmra.mrb[0].mxu0 %v4690
        %v5339 = vpop.f32.mrb[0].mxu0
        %v5340 = vadd.f32 %v5051, %v5339
        %v5341 = vpop.f32.mrb[0].mxu0
        %v5342 = vpop.f32.mrb[0].mxu0
        %v5343 = vadd.f32 %v5054, %v5342
        %v5344 = vpop.f32.mrb[0].mxu0
        %5345 = vmatprep.mubr.bf16.mxu0 0
        %5346 = vmatmul.mubr.bf16.gmra.mrb[0].mxu0 %v4693
        %v5347 = vpop.f32.mrb[0].mxu0
        %v5348 = vadd.f32 %v5059, %v5347
        %v5349 = vpop.f32.mrb[0].mxu0
        %v5350 = vpop.f32.mrb[0].mxu0
        %v5351 = vadd.f32 %v5062, %v5350
        %v5352 = vpop.f32.mrb[0].mxu0
        %5353 = vmatprep.mubr.bf16.mxu0 0
        %5354 = vmatmul.mubr.bf16.gmra.mrb[0].mxu0 %v4696
        %v5355 = vpop.f32.mrb[0].mxu0
        %v5356 = vadd.f32 %v5067, %v5355
        %v5357 = vpop.f32.mrb[0].mxu0
        %v5358 = vpop.f32.mrb[0].mxu0
        %v5359 = vadd.f32 %v5070, %v5358
        %v5360 = vpop.f32.mrb[0].mxu0
        %5361 = vmatprep.mubr.bf16.mxu0 0
        %5362 = vmatmul.mubr.bf16.gmra.mrb[0].mxu0 %v4699
        %v5363 = vpop.f32.mrb[0].mxu0
        %v5364 = vadd.f32 %v5075, %v5363
        %v5365 = vpop.f32.mrb[0].mxu0
        %v5366 = vpop.f32.mrb[0].mxu0
        %v5367 = vadd.f32 %v5078, %v5366
        %v5368 = vpop.f32.mrb[0].mxu0
        %5369 = vmatprep.mubr.bf16.mxu0 0
        %5370 = vmatmul.mubr.bf16.gmra.mrb[0].mxu0 %v4702
        %v5371 = vpop.f32.mrb[0].mxu0
        %v5372 = vadd.f32 %v5083, %v5371
        %v5373 = vpop.f32.mrb[0].mxu0
        %v5374 = vpop.f32.mrb[0].mxu0
        %v5375 = vadd.f32 %v5086, %v5374
        %v5376 = vpop.f32.mrb[0].mxu0
        %5377 = vmatprep.mubr.bf16.mxu0 0
        %5378 = vmatmul.mubr.bf16.gmra.mrb[0].mxu0 %v4705
        %v5379 = vpop.f32.mrb[0].mxu0
        %v5380 = vadd.f32 %v5091, %v5379
        %v5381 = vpop.f32.mrb[0].mxu0
        %v5382 = vpop.f32.mrb[0].mxu0
        %v5383 = vadd.f32 %v5094, %v5382
        %v5384 = vpop.f32.mrb[0].mxu0
        %5385 = vmatprep.mubr.bf16.mxu0 0
        %5386 = vmatmul.mubr.bf16.gmra.mrb[0].mxu0 %v4708
        %v5387 = vpop.f32.mrb[0].mxu0
        %v5388 = vadd.f32 %v5099, %v5387
        %v5389 = vpop.f32.mrb[0].mxu0
        %v5390 = vpop.f32.mrb[0].mxu0
        %v5391 = vadd.f32 %v5102, %v5390
        %v5392 = vpop.f32.mrb[0].mxu0
        %5393 = vmatprep.mubr.bf16.mxu0 0
        %5394 = vmatmul.mubr.bf16.gmra.mrb[0].mxu0 %v4711
        %v5395 = vpop.f32.mrb[0].mxu0
        %v5396 = vadd.f32 %v5107, %v5395
        %v5397 = vpop.f32.mrb[0].mxu0
        %v5398 = vpop.f32.mrb[0].mxu0
        %v5399 = vadd.f32 %v5110, %v5398
        %v5400 = vpop.f32.mrb[0].mxu0
        %5401 = vmatprep.mubr.bf16.mxu0 0
        %5402 = vmatmul.mubr.bf16.gmra.mrb[0].mxu0 %v4714
        %v5403 = vpop.f32.mrb[0].mxu0
        %v5404 = vadd.f32 %v5115, %v5403
        %v5405 = vpop.f32.mrb[0].mxu0
        %v5406 = vpop.f32.mrb[0].mxu0
        %v5407 = vadd.f32 %v5118, %v5406
        %v5408 = vpop.f32.mrb[0].mxu0
        %5409 = vmatprep.mubr.bf16.mxu0 0
        %5410 = vmatmul.mubr.bf16.gmra.mrb[0].mxu0 %v4717
        %v5411 = vpop.f32.mrb[0].mxu0
        %v5412 = vadd.f32 %v5123, %v5411
        %v5413 = vpop.f32.mrb[0].mxu0
        %v5414 = vpop.f32.mrb[0].mxu0
        %v5415 = vadd.f32 %v5126, %v5414
        %v5416 = vpop.f32.mrb[0].mxu0
        %5417 = vmatprep.mubr.bf16.mxu0 0
        %5418 = vmatmul.mubr.bf16.gmra.mrb[0].mxu0 %v4720
        %v5419 = vpop.f32.mrb[0].mxu0
        %v5420 = vadd.f32 %v5131, %v5419
        %v5421 = vpop.f32.mrb[0].mxu0
        %v5422 = vpop.f32.mrb[0].mxu0
        %v5423 = vadd.f32 %v5134, %v5422
        %v5424 = vpop.f32.mrb[0].mxu0
        %5425 = vmatprep.mubr.bf16.mxu0 0
        %5426 = vmatmul.mubr.bf16.gmra.mrb[0].mxu0 %v4723
        %v5427 = vpop.f32.mrb[0].mxu0
        %v5428 = vadd.f32 %v5139, %v5427
        %v5429 = vpop.f32.mrb[0].mxu0
        %v5430 = vpop.f32.mrb[0].mxu0
        %v5431 = vadd.f32 %v5142, %v5430
        %v5432 = vpop.f32.mrb[0].mxu0
        %5433 = vmatprep.mubr.bf16.mxu0 0
        %5434 = vmatmul.mubr.bf16.gmra.mrb[0].mxu0 %v4726
        %v5435 = vpop.f32.mrb[0].mxu0
        %v5436 = vadd.f32 %v5147, %v5435
        %v5437 = vpop.f32.mrb[0].mxu0
        %v5438 = vpop.f32.mrb[0].mxu0
        %v5439 = vadd.f32 %v5150, %v5438
        %v5440 = vpop.f32.mrb[0].mxu0
        %5441 = vmatprep.mubr.bf16.mxu0 0
        %5442 = vmatmul.mubr.bf16.gmra.mrb[0].mxu0 %v4729
        %v5443 = vpop.f32.mrb[0].mxu0
        %v5444 = vadd.f32 %v5155, %v5443
        %v5445 = vpop.f32.mrb[0].mxu0
        %v5446 = vpop.f32.mrb[0].mxu0
        %v5447 = vadd.f32 %v5158, %v5446
        %v5448 = vpop.f32.mrb[0].mxu0
        %5449 = vmatprep.mubr.bf16.mxu0 0
        %5450 = vmatmul.mubr.bf16.gmra.mrb[0].mxu0 %v4732
        %v5451 = vpop.f32.mrb[0].mxu0
        %v5452 = vadd.f32 %v5163, %v5451
        %v5453 = vpop.f32.mrb[0].mxu0
        %v5454 = vpop.f32.mrb[0].mxu0
        %v5455 = vadd.f32 %v5166, %v5454
        %v5456 = vpop.f32.mrb[0].mxu0
        %5457 = vmatprep.mubr.bf16.mxu0 0
        %5458 = vmatmul.mubr.bf16.gmra.mrb[0].mxu0 %v4735
        %v5459 = vpop.f32.mrb[0].mxu0
        %v5460 = vadd.f32 %v5171, %v5459
        %v5461 = vpop.f32.mrb[0].mxu0
        %v5462 = vpop.f32.mrb[0].mxu0
        %v5463 = vadd.f32 %v5174, %v5462
        %v5464 = vpop.f32.mrb[0].mxu0
        %5465 = vmatprep.mubr.bf16.mxu0 0
        %5466 = vmatmul.mubr.bf16.gmra.mrb[0].mxu0 %v4738
        %v5467 = vpop.f32.mrb[0].mxu0
        %v5468 = vadd.f32 %v5179, %v5467
        %v5469 = vpop.f32.mrb[0].mxu0
        %v5470 = vpop.f32.mrb[0].mxu0
        %v5471 = vadd.f32 %v5182, %v5470
        %v5472 = vpop.f32.mrb[0].mxu0
        %5473 = vmatprep.mubr.bf16.mxu0 0
        %5474 = vmatmul.mubr.bf16.gmra.mrb[0].mxu0 %v4741
        %v5475 = vpop.f32.mrb[0].mxu0
        %v5476 = vadd.f32 %v5187, %v5475
        %v5477 = vpop.f32.mrb[0].mxu0
        %v5478 = vpop.f32.mrb[0].mxu0
        %v5479 = vadd.f32 %v5190, %v5478
        %v5480 = vpop.f32.mrb[0].mxu0
        %5481 = vmatprep.mubr.bf16.mxu0 0
        %5482 = vmatmul.mubr.bf16.gmra.mrb[0].mxu0 %v4744
        %v5483 = vpop.f32.mrb[0].mxu0
        %v5484 = vadd.f32 %v5195, %v5483
        %v5485 = vpop.f32.mrb[0].mxu0
        %v5486 = vpop.f32.mrb[0].mxu0
        %v5487 = vadd.f32 %v5198, %v5486
        %v5488 = vpop.f32.mrb[0].mxu0
        %5489 = vmatprep.mubr.bf16.mxu0 0
        %5490 = vmatmul.mubr.bf16.gmra.mrb[0].mxu0 %v4747
        %v5491 = vpop.f32.mrb[0].mxu0
        %v5492 = vadd.f32 %v5203, %v5491
        %v5493 = vpop.f32.mrb[0].mxu0
        %v5494 = vpop.f32.mrb[0].mxu0
        %v5495 = vadd.f32 %v5206, %v5494
        %v5496 = vpop.f32.mrb[0].mxu0
        %5497 = vmatprep.mubr.bf16.mxu0 0
        %5498 = vmatmul.mubr.bf16.gmra.mrb[0].mxu0 %v4750
        %v5499 = vpop.f32.mrb[0].mxu0
        %v5500 = vadd.f32 %v5211, %v5499
        %v5501 = vpop.f32.mrb[0].mxu0
        %v5502 = vpop.f32.mrb[0].mxu0
        %v5503 = vadd.f32 %v5214, %v5502
        %v5504 = vpop.f32.mrb[0].mxu0
        %5505 = vmatprep.mubr.bf16.mxu0 0
        %5506 = vmatmul.mubr.bf16.gmra.mrb[0].mxu0 %v4753
        %v5507 = vpop.f32.mrb[0].mxu0
        %v5508 = vadd.f32 %v5219, %v5507
        %v5509 = vpop.f32.mrb[0].mxu0
        %v5510 = vpop.f32.mrb[0].mxu0
        %v5511 = vadd.f32 %v5222, %v5510
        %v5512 = vpop.f32.mrb[0].mxu0
        %5513 = vmatprep.mubr.bf16.mxu0 0
        %5514 = vmatmul.mubr.bf16.gmra.mrb[0].mxu0 %v4756
        %v5515 = vpop.f32.mrb[0].mxu0
        %v5516 = vadd.f32 %v5227, %v5515
        %v5517 = vpop.f32.mrb[0].mxu0
        %v5518 = vpop.f32.mrb[0].mxu0
        %v5519 = vadd.f32 %v5230, %v5518
        %v5520 = vpop.f32.mrb[0].mxu0
        %5521 = vmatprep.mubr.bf16.mxu0 0
        %5522 = vmatmul.mubr.bf16.gmra.mrb[0].mxu0 %v4759
        %v5523 = vpop.f32.mrb[0].mxu0
        %v5524 = vadd.f32 %v5235, %v5523
        %v5525 = vpop.f32.mrb[0].mxu0
        %v5526 = vpop.f32.mrb[0].mxu0
        %v5527 = vadd.f32 %v5238, %v5526
        %v5528 = vpop.f32.mrb[0].mxu0
        %5529 = vdwg.mxu0
        %5530 = vst [vmem:[#allocation4] sm:$0xff] %v5276
        %5531 = vst [vmem:[#allocation4 + $0x8] sm:$0xff] %v5279
        %5532 = vst [vmem:[#allocation4 + $0x10] sm:$0xff] %v5284
        %5533 = vst [vmem:[#allocation4 + $0x18] sm:$0xff] %v5287
        %5534 = vst [vmem:[#allocation4 + $0x20] sm:$0xff] %v5292
        %5535 = vst [vmem:[#allocation4 + $0x28] sm:$0xff] %v5295
        %5536 = vst [vmem:[#allocation4 + $0x30] sm:$0xff] %v5300
        %5537 = vst [vmem:[#allocation4 + $0x38] sm:$0xff] %v5303
        %5538 = vst [vmem:[#allocation4 + $0x40] sm:$0xff] %v5308
        %5539 = vst [vmem:[#allocation4 + $0x48] sm:$0xff] %v5311
        %5540 = vst [vmem:[#allocation4 + $0x50] sm:$0xff] %v5316
        %5541 = vst [vmem:[#allocation4 + $0x58] sm:$0xff] %v5319
        %5542 = vst [vmem:[#allocation4 + $0x60] sm:$0xff] %v5324
        %5543 = vst [vmem:[#allocation4 + $0x68] sm:$0xff] %v5327
        %5544 = vst [vmem:[#allocation4 + $0x70] sm:$0xff] %v5332
        %5545 = vst [vmem:[#allocation4 + $0x78] sm:$0xff] %v5335
        %5546 = vst [vmem:[#allocation4 + $0x80] sm:$0xff] %v5340
        %5547 = vst [vmem:[#allocation4 + $0x88] sm:$0xff] %v5343
        %5548 = vst [vmem:[#allocation4 + $0x90] sm:$0xff] %v5348
        %5549 = vst [vmem:[#allocation4 + $0x98] sm:$0xff] %v5351
        %5550 = vst [vmem:[#allocation4 + $0xa0] sm:$0xff] %v5356
        %5551 = vst [vmem:[#allocation4 + $0xa8] sm:$0xff] %v5359
        %5552 = vst [vmem:[#allocation4 + $0xb0] sm:$0xff] %v5364
        %5553 = vst [vmem:[#allocation4 + $0xb8] sm:$0xff] %v5367
        %5554 = vst [vmem:[#allocation4 + $0xc0] sm:$0xff] %v5372
        %5555 = vst [vmem:[#allocation4 + $0xc8] sm:$0xff] %v5375
        %5556 = vst [vmem:[#allocation4 + $0xd0] sm:$0xff] %v5380
        %5557 = vst [vmem:[#allocation4 + $0xd8] sm:$0xff] %v5383
        %5558 = vst [vmem:[#allocation4 + $0xe0] sm:$0xff] %v5388
        %5559 = vst [vmem:[#allocation4 + $0xe8] sm:$0xff] %v5391
        %5560 = vst [vmem:[#allocation4 + $0xf0] sm:$0xff] %v5396
        %5561 = vst [vmem:[#allocation4 + $0xf8] sm:$0xff] %v5399
        %5562 = vst [vmem:[#allocation4 + $0x100] sm:$0xff] %v5404
        %5563 = vst [vmem:[#allocation4 + $0x108] sm:$0xff] %v5407
        %5564 = vst [vmem:[#allocation4 + $0x110] sm:$0xff] %v5412
        %5565 = vst [vmem:[#allocation4 + $0x118] sm:$0xff] %v5415
        %5566 = vst [vmem:[#allocation4 + $0x120] sm:$0xff] %v5420
        %5567 = vst [vmem:[#allocation4 + $0x128] sm:$0xff] %v5423
        %5568 = vst [vmem:[#allocation4 + $0x130] sm:$0xff] %v5428
        %5569 = vst [vmem:[#allocation4 + $0x138] sm:$0xff] %v5431
        %5570 = vst [vmem:[#allocation4 + $0x140] sm:$0xff] %v5436
        %5571 = vst [vmem:[#allocation4 + $0x148] sm:$0xff] %v5439
        %5572 = vst [vmem:[#allocation4 + $0x150] sm:$0xff] %v5444
        %5573 = vst [vmem:[#allocation4 + $0x158] sm:$0xff] %v5447
        %5574 = vst [vmem:[#allocation4 + $0x160] sm:$0xff] %v5452
        %5575 = vst [vmem:[#allocation4 + $0x168] sm:$0xff] %v5455
        %5576 = vst [vmem:[#allocation4 + $0x170] sm:$0xff] %v5460
        %5577 = vst [vmem:[#allocation4 + $0x178] sm:$0xff] %v5463
        %5578 = vst [vmem:[#allocation4 + $0x180] sm:$0xff] %v5468
        %5579 = vst [vmem:[#allocation4 + $0x188] sm:$0xff] %v5471
        %5580 = vst [vmem:[#allocation4 + $0x190] sm:$0xff] %v5476
        %5581 = vst [vmem:[#allocation4 + $0x198] sm:$0xff] %v5479
        %5582 = vst [vmem:[#allocation4 + $0x1a0] sm:$0xff] %v5484
        %5583 = vst [vmem:[#allocation4 + $0x1a8] sm:$0xff] %v5487
        %5584 = vst [vmem:[#allocation4 + $0x1b0] sm:$0xff] %v5492
        %5585 = vst [vmem:[#allocation4 + $0x1b8] sm:$0xff] %v5495
        %5586 = vst [vmem:[#allocation4 + $0x1c0] sm:$0xff] %v5500
        %5587 = vst [vmem:[#allocation4 + $0x1c8] sm:$0xff] %v5503
        %5588 = vst [vmem:[#allocation4 + $0x1d0] sm:$0xff] %v5508
        %5589 = vst [vmem:[#allocation4 + $0x1d8] sm:$0xff] %v5511
        %5590 = vst [vmem:[#allocation4 + $0x1e0] sm:$0xff] %v5516
        %5591 = vst [vmem:[#allocation4 + $0x1e8] sm:$0xff] %v5519
        %5592 = vst [vmem:[#allocation4 + $0x1f0] sm:$0xff] %v5524
        %5593 = vst [vmem:[#allocation4 + $0x1f8] sm:$0xff] %v5527
        %v5594 = vld [vmem:[%s4439] sm:$0xff]
        %v5595 = vld [vmem:[%s4439 + $0x8] sm:$0xff]
        %v5596 = vld [vmem:[%s4439 + $0x10] sm:$0xff]
        %v5597 = vld [vmem:[%s4439 + $0x18] sm:$0xff]
        %v5598 = vld [vmem:[%s4439 + $0x20] sm:$0xff]
        %v5599 = vld [vmem:[%s4439 + $0x28] sm:$0xff]
        %v5600 = vld [vmem:[%s4439 + $0x30] sm:$0xff]
        %v5601 = vld [vmem:[%s4439 + $0x38] sm:$0xff]
        %v5602 = vld [vmem:[%s4439 + $0x40] sm:$0xff]
        %v5603 = vld [vmem:[%s4439 + $0x48] sm:$0xff]
        %v5604 = vld [vmem:[%s4439 + $0x50] sm:$0xff]
        %v5605 = vld [vmem:[%s4439 + $0x58] sm:$0xff]
        %v5606 = vld [vmem:[%s4439 + $0x60] sm:$0xff]
        %v5607 = vld [vmem:[%s4439 + $0x68] sm:$0xff]
        %v5608 = vld [vmem:[%s4439 + $0x70] sm:$0xff]
        %v5609 = vld [vmem:[%s4439 + $0x78] sm:$0xff]
        %v5610 = vld [vmem:[%s4439 + $0x80] sm:$0xff]
        %v5611 = vld [vmem:[%s4439 + $0x88] sm:$0xff]
        %v5612 = vld [vmem:[%s4439 + $0x90] sm:$0xff]
        %v5613 = vld [vmem:[%s4439 + $0x98] sm:$0xff]
        %v5614 = vld [vmem:[%s4439 + $0xa0] sm:$0xff]
        %v5615 = vld [vmem:[%s4439 + $0xa8] sm:$0xff]
        %v5616 = vld [vmem:[%s4439 + $0xb0] sm:$0xff]
        %v5617 = vld [vmem:[%s4439 + $0xb8] sm:$0xff]
        %v5618 = vld [vmem:[%s4439 + $0xc0] sm:$0xff]
        %v5619 = vld [vmem:[%s4439 + $0xc8] sm:$0xff]
        %v5620 = vld [vmem:[%s4439 + $0xd0] sm:$0xff]
        %v5621 = vld [vmem:[%s4439 + $0xd8] sm:$0xff]
        %v5622 = vld [vmem:[%s4439 + $0xe0] sm:$0xff]
        %v5623 = vld [vmem:[%s4439 + $0xe8] sm:$0xff]
        %v5624 = vld [vmem:[%s4439 + $0xf0] sm:$0xff]
        %v5625 = vld [vmem:[%s4439 + $0xf8] sm:$0xff]
        %v5626 = vld [vmem:[%s4439 + $0x100] sm:$0xff]
        %v5627 = vld [vmem:[%s4439 + $0x108] sm:$0xff]
        %v5628 = vld [vmem:[%s4439 + $0x110] sm:$0xff]
        %v5629 = vld [vmem:[%s4439 + $0x118] sm:$0xff]
        %v5630 = vld [vmem:[%s4439 + $0x120] sm:$0xff]
        %v5631 = vld [vmem:[%s4439 + $0x128] sm:$0xff]
        %v5632 = vld [vmem:[%s4439 + $0x130] sm:$0xff]
        %v5633 = vld [vmem:[%s4439 + $0x138] sm:$0xff]
        %v5634 = vld [vmem:[%s4439 + $0x140] sm:$0xff]
        %v5635 = vld [vmem:[%s4439 + $0x148] sm:$0xff]
        %v5636 = vld [vmem:[%s4439 + $0x150] sm:$0xff]
        %v5637 = vld [vmem:[%s4439 + $0x158] sm:$0xff]
        %v5638 = vld [vmem:[%s4439 + $0x160] sm:$0xff]
        %v5639 = vld [vmem:[%s4439 + $0x168] sm:$0xff]
        %v5640 = vld [vmem:[%s4439 + $0x170] sm:$0xff]
        %v5641 = vld [vmem:[%s4439 + $0x178] sm:$0xff]
        %v5642 = vld [vmem:[%s4439 + $0x1b0] sm:$0xff]
        %v5643 = vld [vmem:[%s4439 + $0x1b8] sm:$0xff]
        %v5644 = vld [vmem:[%s4439 + $0x1c0] sm:$0xff]
        %v5645 = vld [vmem:[%s4439 + $0x1c8] sm:$0xff]
        %v5646 = vld [vmem:[%s4439 + $0x1d0] sm:$0xff]
        %v5647 = vld [vmem:[%s4439 + $0x1d8] sm:$0xff]
        %v5648 = vld [vmem:[%s4439 + $0x1e0] sm:$0xff]
        %v5649 = vld [vmem:[%s4439 + $0x1e8] sm:$0xff]
        %v5650 = vld [vmem:[%s4439 + $0x1f0] sm:$0xff]
        %v5651 = vld [vmem:[%s4439 + $0x1f8] sm:$0xff]
        %v5652 = vld [vmem:[%s4439 + $0x200] sm:$0xff]
        %v5653 = vld [vmem:[%s4439 + $0x208] sm:$0xff]
        %v5654 = vld [vmem:[%s4439 + $0x210] sm:$0xff]
        %v5655 = vld [vmem:[%s4439 + $0x218] sm:$0xff]
        %v5656 = vld [vmem:[%s4439 + $0x220] sm:$0xff]
        %v5657 = vld [vmem:[%s4439 + $0x228] sm:$0xff]
        %v5658 = vld [vmem:[%s4439 + $0x230] sm:$0xff]
        %v5659 = vld [vmem:[%s4439 + $0x238] sm:$0xff]
        %v5660 = vld [vmem:[%s4439 + $0x240] sm:$0xff]
        %v5661 = vld [vmem:[%s4439 + $0x248] sm:$0xff]
        %v5662 = vld [vmem:[%s4439 + $0x250] sm:$0xff]
        %v5663 = vld [vmem:[%s4439 + $0x258] sm:$0xff]
        %v5664 = vld [vmem:[%s4439 + $0x260] sm:$0xff]
        %v5665 = vld [vmem:[%s4439 + $0x268] sm:$0xff]
        %v5666 = vld [vmem:[%s4439 + $0x270] sm:$0xff]
        %v5667 = vld [vmem:[%s4439 + $0x278] sm:$0xff]
        %v5668 = vld [vmem:[%s4439 + $0x280] sm:$0xff]
        %v5669 = vld [vmem:[%s4439 + $0x288] sm:$0xff]
        %v5670 = vld [vmem:[%s4439 + $0x290] sm:$0xff]
        %v5671 = vld [vmem:[%s4439 + $0x298] sm:$0xff]
        %v5672 = vld [vmem:[%s4439 + $0x2a0] sm:$0xff]
        %v5673 = vld [vmem:[%s4439 + $0x2a8] sm:$0xff]
        %v5674 = vld [vmem:[%s4439 + $0x2b0] sm:$0xff]
        %v5675 = vld [vmem:[%s4439 + $0x2b8] sm:$0xff]
        %v5676 = vld [vmem:[%s4439 + $0x2c0] sm:$0xff]
        %v5677 = vld [vmem:[%s4439 + $0x2c8] sm:$0xff]
        %v5678 = vld [vmem:[%s4439 + $0x2d0] sm:$0xff]
        %v5679 = vld [vmem:[%s4439 + $0x2d8] sm:$0xff]
        %v5680 = vld [vmem:[%s4439 + $0x2e0] sm:$0xff]
        %v5681 = vld [vmem:[%s4439 + $0x2e8] sm:$0xff]
        %v5682 = vld [vmem:[%s4439 + $0x2f0] sm:$0xff]
        %v5683 = vld [vmem:[%s4439 + $0x2f8] sm:$0xff]
        %v5684 = vld [vmem:[%s4439 + $0x300] sm:$0xff]
        %v5685 = vld [vmem:[%s4439 + $0x308] sm:$0xff]
        %v5686 = vld [vmem:[%s4439 + $0x310] sm:$0xff]
        %v5687 = vld [vmem:[%s4439 + $0x318] sm:$0xff]
        %v5688 = vld [vmem:[%s4439 + $0x320] sm:$0xff]
        %v5689 = vld [vmem:[%s4439 + $0x328] sm:$0xff]
        %s5690 = scalar_lea.vmem %s3, 192
        %v5691 = vld [vmem:[%s5690] sm:$0xf]
        %v5692 = vld [vmem:[%s5690 + $0x4] sm:$0xf]
        %v5693 = vld [vmem:[%s5690 + $0x8] sm:$0xf]
        %v5694 = vld [vmem:[%s5690 + $0xc] sm:$0xf]
        %v5695 = vld [vmem:[%s5690 + $0x10] sm:$0xf]
        %v5696 = vld [vmem:[%s5690 + $0x14] sm:$0xf]
        %v5697 = vld [vmem:[%s5690 + $0x18] sm:$0xf]
        %v5698 = vld [vmem:[%s5690 + $0x1c] sm:$0xf]
        %v5699 = vld [vmem:[%s5690 + $0x20] sm:$0xf]
        %v5700 = vld [vmem:[%s5690 + $0x24] sm:$0xf]
        %v5701 = vld [vmem:[%s5690 + $0x28] sm:$0xf]
        %v5702 = vld [vmem:[%s5690 + $0x2c] sm:$0xf]
        %v5703 = vld [vmem:[%s5690 + $0x30] sm:$0xf]
        %v5704 = vld [vmem:[%s5690 + $0x34] sm:$0xf]
        %v5705 = vld [vmem:[%s5690 + $0x38] sm:$0xf]
        %v5706 = vld [vmem:[%s5690 + $0x3c] sm:$0xf]
        %v5707 = vld [vmem:[%s5690 + $0x40] sm:$0xf]
        %v5708 = vld [vmem:[%s5690 + $0x44] sm:$0xf]
        %v5709 = vld [vmem:[%s5690 + $0x48] sm:$0xf]
        %v5710 = vld [vmem:[%s5690 + $0x4c] sm:$0xf]
        %v5711 = vld [vmem:[%s5690 + $0x50] sm:$0xf]
        %v5712 = vld [vmem:[%s5690 + $0x54] sm:$0xf]
        %v5713 = vld [vmem:[%s5690 + $0x58] sm:$0xf]
        %v5714 = vld [vmem:[%s5690 + $0x5c] sm:$0xf]
        %v5715 = vld [vmem:[%s5690 + $0x60] sm:$0xf]
        %v5716 = vld [vmem:[%s5690 + $0x64] sm:$0xf]
        %v5717 = vld [vmem:[%s5690 + $0x68] sm:$0xf]
        %v5718 = vld [vmem:[%s5690 + $0x6c] sm:$0xf]
        %v5719 = vld [vmem:[%s5690 + $0x70] sm:$0xf]
        %v5720 = vld [vmem:[%s5690 + $0x74] sm:$0xf]
        %v5721 = vld [vmem:[%s5690 + $0x78] sm:$0xf]
        %v5722 = vld [vmem:[%s5690 + $0x7c] sm:$0xf]
        %v5723 = vld [vmem:[%s5690 + $0x80] sm:$0xf]
        %v5724 = vld [vmem:[%s5690 + $0x84] sm:$0xf]
        %v5725 = vld [vmem:[%s5690 + $0x88] sm:$0xf]
        %v5726 = vld [vmem:[%s5690 + $0x8c] sm:$0xf]
        %v5727 = vld [vmem:[%s5690 + $0x90] sm:$0xf]
        %v5728 = vld [vmem:[%s5690 + $0x94] sm:$0xf]
        %v5729 = vld [vmem:[%s5690 + $0x98] sm:$0xf]
        %v5730 = vld [vmem:[%s5690 + $0x9c] sm:$0xf]
        %v5731 = vld [vmem:[%s5690 + $0xa0] sm:$0xf]
        %v5732 = vld [vmem:[%s5690 + $0xa4] sm:$0xf]
        %v5733 = vld [vmem:[%s5690 + $0xa8] sm:$0xf]
        %v5734 = vld [vmem:[%s5690 + $0xac] sm:$0xf]
        %v5735 = vld [vmem:[%s5690 + $0xb0] sm:$0xf]
        %v5736 = vld [vmem:[%s5690 + $0xb4] sm:$0xf]
        %v5737 = vld [vmem:[%s5690 + $0xb8] sm:$0xf]
        %v5738 = vld [vmem:[%s5690 + $0xbc] sm:$0xf]
        %v5787 = vunpack.c.l.b16 %v5691
        %v5788 = vunpack.c.l.b16 %v5692
        %v5789 = vunpack.c.l.b16 %v5693
        %v5790 = vunpack.c.l.b16 %v5694
        %v5791 = vunpack.c.l.b16 %v5695
        %v5792 = vunpack.c.l.b16 %v5696
        %v5793 = vunpack.c.l.b16 %v5697
        %v5794 = vunpack.c.l.b16 %v5698
        %v5795 = vunpack.c.l.b16 %v5699
        %v5796 = vunpack.c.l.b16 %v5700
        %v5797 = vunpack.c.l.b16 %v5701
        %v5798 = vunpack.c.l.b16 %v5702
        %v5799 = vunpack.c.l.b16 %v5703
        %v5800 = vunpack.c.l.b16 %v5704
        %v5801 = vunpack.c.l.b16 %v5705
        %v5802 = vunpack.c.l.b16 %v5706
        %v5803 = vunpack.c.l.b16 %v5707
        %v5804 = vunpack.c.l.b16 %v5708
        %v5805 = vunpack.c.l.b16 %v5709
        %v5806 = vunpack.c.l.b16 %v5710
        %v5807 = vunpack.c.l.b16 %v5711
        %v5808 = vunpack.c.l.b16 %v5712
        %v5809 = vunpack.c.l.b16 %v5713
        %v5810 = vunpack.c.l.b16 %v5714
        %v5811 = vunpack.c.l.b16 %v5715
        %v5812 = vunpack.c.l.b16 %v5716
        %v5813 = vunpack.c.l.b16 %v5717
        %v5814 = vunpack.c.l.b16 %v5718
        %v5815 = vunpack.c.l.b16 %v5719
        %v5816 = vunpack.c.l.b16 %v5720
        %v5817 = vunpack.c.l.b16 %v5721
        %v5818 = vunpack.c.l.b16 %v5722
        %v5819 = vunpack.c.l.b16 %v5723
        %v5820 = vunpack.c.l.b16 %v5724
        %v5821 = vunpack.c.l.b16 %v5725
        %v5822 = vunpack.c.l.b16 %v5726
        %v5823 = vunpack.c.l.b16 %v5727
        %v5824 = vunpack.c.l.b16 %v5728
        %v5825 = vunpack.c.l.b16 %v5729
        %v5826 = vunpack.c.l.b16 %v5730
        %v5827 = vunpack.c.l.b16 %v5731
        %v5828 = vunpack.c.l.b16 %v5732
        %v5829 = vunpack.c.l.b16 %v5733
        %v5830 = vunpack.c.l.b16 %v5734
        %v5831 = vunpack.c.l.b16 %v5735
        %v5832 = vunpack.c.l.b16 %v5736
        %v5833 = vunpack.c.l.b16 %v5737
        %v5834 = vunpack.c.l.b16 %v5738
        %v5835 = vpack.c.b16 %v5788, %v5787
        %v5836 = vpack.c.b16 %v5790, %v5789
        %v5837 = vpack.c.b16 %v5792, %v5791
        %v5838 = vpack.c.b16 %v5794, %v5793
        %v5839 = vpack.c.b16 %v5796, %v5795
        %v5840 = vpack.c.b16 %v5798, %v5797
        %v5841 = vpack.c.b16 %v5800, %v5799
        %v5842 = vpack.c.b16 %v5802, %v5801
        %v5843 = vpack.c.b16 %v5804, %v5803
        %v5844 = vpack.c.b16 %v5806, %v5805
        %v5845 = vpack.c.b16 %v5808, %v5807
        %v5846 = vpack.c.b16 %v5810, %v5809
        %v5847 = vpack.c.b16 %v5812, %v5811
        %v5848 = vpack.c.b16 %v5814, %v5813
        %v5849 = vpack.c.b16 %v5816, %v5815
        %v5850 = vpack.c.b16 %v5818, %v5817
        %v5851 = vpack.c.b16 %v5820, %v5819
        %v5852 = vpack.c.b16 %v5822, %v5821
        %v5853 = vpack.c.b16 %v5824, %v5823
        %v5854 = vpack.c.b16 %v5826, %v5825
        %v5855 = vpack.c.b16 %v5828, %v5827
        %v5856 = vpack.c.b16 %v5830, %v5829
        %v5857 = vpack.c.b16 %v5832, %v5831
        %v5858 = vpack.c.b16 %v5834, %v5833
        %5883 = vmatprep.subr.bf16.mxu0 0
        %5884 = vmatpush1.bf16.msra.mxu0 %v5835
        %5885 = vmatprep.subr.bf16.mxu0 0
        %5886 = vmatpush1.bf16.msra.mxu0 %v5836
        %5887 = vmatprep.subr.bf16.mxu0 0
        %5888 = vmatpush1.bf16.msra.mxu0 %v5837
        %5889 = vmatprep.subr.bf16.mxu0 0
        %5890 = vmatpush1.bf16.msra.mxu0 %v5838
        %5891 = vmatprep.subr.bf16.mxu0 0
        %5892 = vmatpush1.bf16.msra.mxu0 %v5839
        %5893 = vmatprep.subr.bf16.mxu0 0
        %5894 = vmatpush1.bf16.msra.mxu0 %v5840
        %5895 = vmatprep.subr.bf16.mxu0 0
        %5896 = vmatpush1.bf16.msra.mxu0 %v5841
        %5897 = vmatprep.subr.bf16.mxu0 0
        %5898 = vmatpush1.bf16.msra.mxu0 %v5842
        %5899 = vmatprep.subr.bf16.mxu0 0
        %5900 = vmatpush1.bf16.msra.mxu0 %v5843
        %5901 = vmatprep.subr.bf16.mxu0 0
        %5902 = vmatpush1.bf16.msra.mxu0 %v5844
        %5903 = vmatprep.subr.bf16.mxu0 0
        %5904 = vmatpush1.bf16.msra.mxu0 %v5845
        %5905 = vmatprep.subr.bf16.mxu0 0
        %5906 = vmatpush1.bf16.msra.mxu0 %v5846
        %5907 = vmatprep.subr.bf16.mxu0 0
        %5908 = vmatpush1.bf16.msra.mxu0 %v5847
        %5909 = vmatprep.subr.bf16.mxu0 0
        %5910 = vmatpush1.bf16.msra.mxu0 %v5848
        %5911 = vmatprep.subr.bf16.mxu0 0
        %5912 = vmatpush1.bf16.msra.mxu0 %v5849
        %5913 = vmatprep.subr.bf16.mxu0 0
        %5914 = vmatpush1.bf16.msra.mxu0 %v5850
        %5915 = vmatprep.mubr.bf16.mxu0 %v5595
        %5916 = vmatmul.mubr.bf16.gmra.mrb[0].mxu0 %v5594
        %v5917 = vpop.f32.mrb[0].mxu0
        %v5918 = vadd.f32 0.0, %v5917
        %v5919 = vpop.f32.mrb[0].mxu0
        %v5920 = vpop.f32.mrb[0].mxu0
        %v5921 = vadd.f32 0.0, %v5920
        %v5922 = vpop.f32.mrb[0].mxu0
        %5923 = vmatprep.mubr.bf16.mxu0 %v5598
        %5924 = vmatmul.mubr.bf16.gmra.mrb[0].mxu0 %v5597
        %v5925 = vpop.f32.mrb[0].mxu0
        %v5926 = vadd.f32 0.0, %v5925
        %v5927 = vpop.f32.mrb[0].mxu0
        %v5928 = vpop.f32.mrb[0].mxu0
        %v5929 = vadd.f32 0.0, %v5928
        %v5930 = vpop.f32.mrb[0].mxu0
        %5931 = vmatprep.mubr.bf16.mxu0 %v5601
        %5932 = vmatmul.mubr.bf16.gmra.mrb[0].mxu0 %v5600
        %v5933 = vpop.f32.mrb[0].mxu0
        %v5934 = vadd.f32 0.0, %v5933
        %v5935 = vpop.f32.mrb[0].mxu0
        %v5936 = vpop.f32.mrb[0].mxu0
        %v5937 = vadd.f32 0.0, %v5936
        %v5938 = vpop.f32.mrb[0].mxu0
        %5939 = vmatprep.mubr.bf16.mxu0 %v5604
        %5940 = vmatmul.mubr.bf16.gmra.mrb[0].mxu0 %v5603
        %v5941 = vpop.f32.mrb[0].mxu0
        %v5942 = vadd.f32 0.0, %v5941
        %v5943 = vpop.f32.mrb[0].mxu0
        %v5944 = vpop.f32.mrb[0].mxu0
        %v5945 = vadd.f32 0.0, %v5944
        %v5946 = vpop.f32.mrb[0].mxu0
        %5947 = vmatprep.mubr.bf16.mxu0 %v5607
        %5948 = vmatmul.mubr.bf16.gmra.mrb[0].mxu0 %v5606
        %v5949 = vpop.f32.mrb[0].mxu0
        %v5950 = vadd.f32 0.0, %v5949
        %v5951 = vpop.f32.mrb[0].mxu0
        %v5952 = vpop.f32.mrb[0].mxu0
        %v5953 = vadd.f32 0.0, %v5952
        %v5954 = vpop.f32.mrb[0].mxu0
        %5955 = vmatprep.mubr.bf16.mxu0 %v5610
        %5956 = vmatmul.mubr.bf16.gmra.mrb[0].mxu0 %v5609
        %v5957 = vpop.f32.mrb[0].mxu0
        %v5958 = vadd.f32 0.0, %v5957
        %v5959 = vpop.f32.mrb[0].mxu0
        %v5960 = vpop.f32.mrb[0].mxu0
        %v5961 = vadd.f32 0.0, %v5960
        %v5962 = vpop.f32.mrb[0].mxu0
        %5963 = vmatprep.mubr.bf16.mxu0 %v5613
        %5964 = vmatmul.mubr.bf16.gmra.mrb[0].mxu0 %v5612
        %v5965 = vpop.f32.mrb[0].mxu0
        %v5966 = vadd.f32 0.0, %v5965
        %v5967 = vpop.f32.mrb[0].mxu0
        %v5968 = vpop.f32.mrb[0].mxu0
        %v5969 = vadd.f32 0.0, %v5968
        %v5970 = vpop.f32.mrb[0].mxu0
        %5971 = vmatprep.mubr.bf16.mxu0 %v5616
        %5972 = vmatmul.mubr.bf16.gmra.mrb[0].mxu0 %v5615
        %v5973 = vpop.f32.mrb[0].mxu0
        %v5974 = vadd.f32 0.0, %v5973
        %v5975 = vpop.f32.mrb[0].mxu0
        %v5976 = vpop.f32.mrb[0].mxu0
        %v5977 = vadd.f32 0.0, %v5976
        %v5978 = vpop.f32.mrb[0].mxu0
        %5979 = vmatprep.mubr.bf16.mxu0 %v5619
        %5980 = vmatmul.mubr.bf16.gmra.mrb[0].mxu0 %v5618
        %v5981 = vpop.f32.mrb[0].mxu0
        %v5982 = vadd.f32 0.0, %v5981
        %v5983 = vpop.f32.mrb[0].mxu0
        %v5984 = vpop.f32.mrb[0].mxu0
        %v5985 = vadd.f32 0.0, %v5984
        %v5986 = vpop.f32.mrb[0].mxu0
        %5987 = vmatprep.mubr.bf16.mxu0 %v5622
        %5988 = vmatmul.mubr.bf16.gmra.mrb[0].mxu0 %v5621
        %v5989 = vpop.f32.mrb[0].mxu0
        %v5990 = vadd.f32 0.0, %v5989
        %v5991 = vpop.f32.mrb[0].mxu0
        %v5992 = vpop.f32.mrb[0].mxu0
        %v5993 = vadd.f32 0.0, %v5992
        %v5994 = vpop.f32.mrb[0].mxu0
        %5995 = vmatprep.mubr.bf16.mxu0 %v5625
        %5996 = vmatmul.mubr.bf16.gmra.mrb[0].mxu0 %v5624
        %v5997 = vpop.f32.mrb[0].mxu0
        %v5998 = vadd.f32 0.0, %v5997
        %v5999 = vpop.f32.mrb[0].mxu0
        %v6000 = vpop.f32.mrb[0].mxu0
        %v6001 = vadd.f32 0.0, %v6000
        %v6002 = vpop.f32.mrb[0].mxu0
        %6003 = vmatprep.mubr.bf16.mxu0 %v5628
        %6004 = vmatmul.mubr.bf16.gmra.mrb[0].mxu0 %v5627
        %v6005 = vpop.f32.mrb[0].mxu0
        %v6006 = vadd.f32 0.0, %v6005
        %v6007 = vpop.f32.mrb[0].mxu0
        %v6008 = vpop.f32.mrb[0].mxu0
        %v6009 = vadd.f32 0.0, %v6008
        %v6010 = vpop.f32.mrb[0].mxu0
        %6011 = vmatprep.mubr.bf16.mxu0 %v5631
        %6012 = vmatmul.mubr.bf16.gmra.mrb[0].mxu0 %v5630
        %v6013 = vpop.f32.mrb[0].mxu0
        %v6014 = vadd.f32 0.0, %v6013
        %v6015 = vpop.f32.mrb[0].mxu0
        %v6016 = vpop.f32.mrb[0].mxu0
        %v6017 = vadd.f32 0.0, %v6016
        %v6018 = vpop.f32.mrb[0].mxu0
        %6019 = vmatprep.mubr.bf16.mxu0 %v5634
        %6020 = vmatmul.mubr.bf16.gmra.mrb[0].mxu0 %v5633
        %v6021 = vpop.f32.mrb[0].mxu0
        %v6022 = vadd.f32 0.0, %v6021
        %v6023 = vpop.f32.mrb[0].mxu0
        %v6024 = vpop.f32.mrb[0].mxu0
        %v6025 = vadd.f32 0.0, %v6024
        %v6026 = vpop.f32.mrb[0].mxu0
        %6027 = vmatprep.mubr.bf16.mxu0 %v5637
        %6028 = vmatmul.mubr.bf16.gmra.mrb[0].mxu0 %v5636
        %v6029 = vpop.f32.mrb[0].mxu0
        %v6030 = vadd.f32 0.0, %v6029
        %v6031 = vpop.f32.mrb[0].mxu0
        %v6032 = vpop.f32.mrb[0].mxu0
        %v6033 = vadd.f32 0.0, %v6032
        %v6034 = vpop.f32.mrb[0].mxu0
        %6035 = vmatprep.mubr.bf16.mxu0 %v5640
        %6036 = vmatmul.mubr.bf16.gmra.mrb[0].mxu0 %v5639
        %v6037 = vpop.f32.mrb[0].mxu0
        %v6038 = vadd.f32 0.0, %v6037
        %v6039 = vpop.f32.mrb[0].mxu0
        %v6040 = vpop.f32.mrb[0].mxu0
        %v6041 = vadd.f32 0.0, %v6040
        %v6042 = vpop.f32.mrb[0].mxu0
        %6043 = vmatprep.mubr.bf16.mxu0 %v5643
        %6044 = vmatmul.mubr.bf16.gmra.mrb[0].mxu0 %v5642
        %v6045 = vpop.f32.mrb[0].mxu0
        %v6046 = vadd.f32 0.0, %v6045
        %v6047 = vpop.f32.mrb[0].mxu0
        %v6048 = vpop.f32.mrb[0].mxu0
        %v6049 = vadd.f32 0.0, %v6048
        %v6050 = vpop.f32.mrb[0].mxu0
        %6051 = vmatprep.mubr.bf16.mxu0 %v5646
        %6052 = vmatmul.mubr.bf16.gmra.mrb[0].mxu0 %v5645
        %v6053 = vpop.f32.mrb[0].mxu0
        %v6054 = vadd.f32 0.0, %v6053
        %v6055 = vpop.f32.mrb[0].mxu0
        %v6056 = vpop.f32.mrb[0].mxu0
        %v6057 = vadd.f32 0.0, %v6056
        %v6058 = vpop.f32.mrb[0].mxu0
        %6059 = vmatprep.mubr.bf16.mxu0 %v5649
        %6060 = vmatmul.mubr.bf16.gmra.mrb[0].mxu0 %v5648
        %v6061 = vpop.f32.mrb[0].mxu0
        %v6062 = vadd.f32 0.0, %v6061
        %v6063 = vpop.f32.mrb[0].mxu0
        %v6064 = vpop.f32.mrb[0].mxu0
        %v6065 = vadd.f32 0.0, %v6064
        %v6066 = vpop.f32.mrb[0].mxu0
        %6067 = vmatprep.mubr.bf16.mxu0 %v5652
        %6068 = vmatmul.mubr.bf16.gmra.mrb[0].mxu0 %v5651
        %v6069 = vpop.f32.mrb[0].mxu0
        %v6070 = vadd.f32 0.0, %v6069
        %v6071 = vpop.f32.mrb[0].mxu0
        %v6072 = vpop.f32.mrb[0].mxu0
        %v6073 = vadd.f32 0.0, %v6072
        %v6074 = vpop.f32.mrb[0].mxu0
        %6075 = vmatprep.mubr.bf16.mxu0 %v5655
        %6076 = vmatmul.mubr.bf16.gmra.mrb[0].mxu0 %v5654
        %v6077 = vpop.f32.mrb[0].mxu0
        %v6078 = vadd.f32 0.0, %v6077
        %v6079 = vpop.f32.mrb[0].mxu0
        %v6080 = vpop.f32.mrb[0].mxu0
        %v6081 = vadd.f32 0.0, %v6080
        %v6082 = vpop.f32.mrb[0].mxu0
        %6083 = vmatprep.mubr.bf16.mxu0 %v5658
        %6084 = vmatmul.mubr.bf16.gmra.mrb[0].mxu0 %v5657
        %v6085 = vpop.f32.mrb[0].mxu0
        %v6086 = vadd.f32 0.0, %v6085
        %v6087 = vpop.f32.mrb[0].mxu0
        %v6088 = vpop.f32.mrb[0].mxu0
        %v6089 = vadd.f32 0.0, %v6088
        %v6090 = vpop.f32.mrb[0].mxu0
        %6091 = vmatprep.mubr.bf16.mxu0 %v5661
        %6092 = vmatmul.mubr.bf16.gmra.mrb[0].mxu0 %v5660
        %v6093 = vpop.f32.mrb[0].mxu0
        %v6094 = vadd.f32 0.0, %v6093
        %v6095 = vpop.f32.mrb[0].mxu0
        %v6096 = vpop.f32.mrb[0].mxu0
        %v6097 = vadd.f32 0.0, %v6096
        %v6098 = vpop.f32.mrb[0].mxu0
        %6099 = vmatprep.mubr.bf16.mxu0 %v5664
        %6100 = vmatmul.mubr.bf16.gmra.mrb[0].mxu0 %v5663
        %v6101 = vpop.f32.mrb[0].mxu0
        %v6102 = vadd.f32 0.0, %v6101
        %v6103 = vpop.f32.mrb[0].mxu0
        %v6104 = vpop.f32.mrb[0].mxu0
        %v6105 = vadd.f32 0.0, %v6104
        %v6106 = vpop.f32.mrb[0].mxu0
        %6107 = vmatprep.mubr.bf16.mxu0 %v5667
        %6108 = vmatmul.mubr.bf16.gmra.mrb[0].mxu0 %v5666
        %v6109 = vpop.f32.mrb[0].mxu0
        %v6110 = vadd.f32 0.0, %v6109
        %v6111 = vpop.f32.mrb[0].mxu0
        %v6112 = vpop.f32.mrb[0].mxu0
        %v6113 = vadd.f32 0.0, %v6112
        %v6114 = vpop.f32.mrb[0].mxu0
        %6115 = vmatprep.mubr.bf16.mxu0 %v5670
        %6116 = vmatmul.mubr.bf16.gmra.mrb[0].mxu0 %v5669
        %v6117 = vpop.f32.mrb[0].mxu0
        %v6118 = vadd.f32 0.0, %v6117
        %v6119 = vpop.f32.mrb[0].mxu0
        %v6120 = vpop.f32.mrb[0].mxu0
        %v6121 = vadd.f32 0.0, %v6120
        %v6122 = vpop.f32.mrb[0].mxu0
        %6123 = vmatprep.mubr.bf16.mxu0 %v5673
        %6124 = vmatmul.mubr.bf16.gmra.mrb[0].mxu0 %v5672
        %v6125 = vpop.f32.mrb[0].mxu0
        %v6126 = vadd.f32 0.0, %v6125
        %v6127 = vpop.f32.mrb[0].mxu0
        %v6128 = vpop.f32.mrb[0].mxu0
        %v6129 = vadd.f32 0.0, %v6128
        %v6130 = vpop.f32.mrb[0].mxu0
        %6131 = vmatprep.mubr.bf16.mxu0 %v5676
        %6132 = vmatmul.mubr.bf16.gmra.mrb[0].mxu0 %v5675
        %v6133 = vpop.f32.mrb[0].mxu0
        %v6134 = vadd.f32 0.0, %v6133
        %v6135 = vpop.f32.mrb[0].mxu0
        %v6136 = vpop.f32.mrb[0].mxu0
        %v6137 = vadd.f32 0.0, %v6136
        %v6138 = vpop.f32.mrb[0].mxu0
        %6139 = vmatprep.mubr.bf16.mxu0 %v5679
        %6140 = vmatmul.mubr.bf16.gmra.mrb[0].mxu0 %v5678
        %v6141 = vpop.f32.mrb[0].mxu0
        %v6142 = vadd.f32 0.0, %v6141
        %v6143 = vpop.f32.mrb[0].mxu0
        %v6144 = vpop.f32.mrb[0].mxu0
        %v6145 = vadd.f32 0.0, %v6144
        %v6146 = vpop.f32.mrb[0].mxu0
        %6147 = vmatprep.mubr.bf16.mxu0 %v5682
        %6148 = vmatmul.mubr.bf16.gmra.mrb[0].mxu0 %v5681
        %v6149 = vpop.f32.mrb[0].mxu0
        %v6150 = vadd.f32 0.0, %v6149
        %v6151 = vpop.f32.mrb[0].mxu0
        %v6152 = vpop.f32.mrb[0].mxu0
        %v6153 = vadd.f32 0.0, %v6152
        %v6154 = vpop.f32.mrb[0].mxu0
        %6155 = vmatprep.mubr.bf16.mxu0 %v5685
        %6156 = vmatmul.mubr.bf16.gmra.mrb[0].mxu0 %v5684
        %v6157 = vpop.f32.mrb[0].mxu0
        %v6158 = vadd.f32 0.0, %v6157
        %v6159 = vpop.f32.mrb[0].mxu0
        %v6160 = vpop.f32.mrb[0].mxu0
        %v6161 = vadd.f32 0.0, %v6160
        %v6162 = vpop.f32.mrb[0].mxu0
        %6163 = vmatprep.mubr.bf16.mxu0 %v5688
        %6164 = vmatmul.mubr.bf16.gmra.mrb[0].mxu0 %v5687
        %v6165 = vpop.f32.mrb[0].mxu0
        %v6166 = vadd.f32 0.0, %v6165
        %v6167 = vpop.f32.mrb[0].mxu0
        %v6168 = vpop.f32.mrb[0].mxu0
        %v6169 = vadd.f32 0.0, %v6168
        %v6170 = vpop.f32.mrb[0].mxu0
        %6171 = vdwg.mxu0
        %6172 = vmatprep.subr.bf16.mxu0 0
        %6173 = vmatpush1.bf16.msra.mxu0 %v5851
        %6174 = vmatprep.subr.bf16.mxu0 0
        %6175 = vmatpush1.bf16.msra.mxu0 %v5852
        %6176 = vmatprep.subr.bf16.mxu0 0
        %6177 = vmatpush1.bf16.msra.mxu0 %v5853
        %6178 = vmatprep.subr.bf16.mxu0 0
        %6179 = vmatpush1.bf16.msra.mxu0 %v5854
        %6180 = vmatprep.subr.bf16.mxu0 0
        %6181 = vmatpush1.bf16.msra.mxu0 %v5855
        %6182 = vmatprep.subr.bf16.mxu0 0
        %6183 = vmatpush1.bf16.msra.mxu0 %v5856
        %6184 = vmatprep.subr.bf16.mxu0 0
        %6185 = vmatpush1.bf16.msra.mxu0 %v5857
        %6186 = vmatprep.subr.bf16.mxu0 0
        %6187 = vmatpush1.bf16.msra.mxu0 %v5858
        %6188 = vmatprep.subr.bf16.mxu0 0
        %6189 = vmatpush1.bf16.msra.mxu0 0
        %6190 = vmatprep.subr.bf16.mxu0 0
        %6191 = vmatpush1.bf16.msra.mxu0 0
        %6192 = vmatprep.subr.bf16.mxu0 0
        %6193 = vmatpush1.bf16.msra.mxu0 0
        %6194 = vmatprep.subr.bf16.mxu0 0
        %6195 = vmatpush1.bf16.msra.mxu0 0
        %6196 = vmatprep.subr.bf16.mxu0 0
        %6197 = vmatpush1.bf16.msra.mxu0 0
        %6198 = vmatprep.subr.bf16.mxu0 0
        %6199 = vmatpush1.bf16.msra.mxu0 0
        %6200 = vmatprep.subr.bf16.mxu0 0
        %6201 = vmatpush1.bf16.msra.mxu0 0
        %6202 = vmatprep.subr.bf16.mxu0 0
        %6203 = vmatpush1.bf16.msra.mxu0 0
        %6204 = vmatprep.mubr.bf16.mxu0 0
        %6205 = vmatmul.mubr.bf16.gmra.mrb[0].mxu0 %v5596
        %v6206 = vpop.f32.mrb[0].mxu0
        %v6207 = vadd.f32 %v5918, %v6206
        %v6208 = vpop.f32.mrb[0].mxu0
        %v6209 = vpop.f32.mrb[0].mxu0
        %v6210 = vadd.f32 %v5921, %v6209
        %v6211 = vpop.f32.mrb[0].mxu0
        %6212 = vmatprep.mubr.bf16.mxu0 0
        %6213 = vmatmul.mubr.bf16.gmra.mrb[0].mxu0 %v5599
        %v6214 = vpop.f32.mrb[0].mxu0
        %v6215 = vadd.f32 %v5926, %v6214
        %v6216 = vpop.f32.mrb[0].mxu0
        %v6217 = vpop.f32.mrb[0].mxu0
        %v6218 = vadd.f32 %v5929, %v6217
        %v6219 = vpop.f32.mrb[0].mxu0
        %6220 = vmatprep.mubr.bf16.mxu0 0
        %6221 = vmatmul.mubr.bf16.gmra.mrb[0].mxu0 %v5602
        %v6222 = vpop.f32.mrb[0].mxu0
        %v6223 = vadd.f32 %v5934, %v6222
        %v6224 = vpop.f32.mrb[0].mxu0
        %v6225 = vpop.f32.mrb[0].mxu0
        %v6226 = vadd.f32 %v5937, %v6225
        %v6227 = vpop.f32.mrb[0].mxu0
        %6228 = vmatprep.mubr.bf16.mxu0 0
        %6229 = vmatmul.mubr.bf16.gmra.mrb[0].mxu0 %v5605
        %v6230 = vpop.f32.mrb[0].mxu0
        %v6231 = vadd.f32 %v5942, %v6230
        %v6232 = vpop.f32.mrb[0].mxu0
        %v6233 = vpop.f32.mrb[0].mxu0
        %v6234 = vadd.f32 %v5945, %v6233
        %v6235 = vpop.f32.mrb[0].mxu0
        %6236 = vmatprep.mubr.bf16.mxu0 0
        %6237 = vmatmul.mubr.bf16.gmra.mrb[0].mxu0 %v5608
        %v6238 = vpop.f32.mrb[0].mxu0
        %v6239 = vadd.f32 %v5950, %v6238
        %v6240 = vpop.f32.mrb[0].mxu0
        %v6241 = vpop.f32.mrb[0].mxu0
        %v6242 = vadd.f32 %v5953, %v6241
        %v6243 = vpop.f32.mrb[0].mxu0
        %6244 = vmatprep.mubr.bf16.mxu0 0
        %6245 = vmatmul.mubr.bf16.gmra.mrb[0].mxu0 %v5611
        %v6246 = vpop.f32.mrb[0].mxu0
        %v6247 = vadd.f32 %v5958, %v6246
        %v6248 = vpop.f32.mrb[0].mxu0
        %v6249 = vpop.f32.mrb[0].mxu0
        %v6250 = vadd.f32 %v5961, %v6249
        %v6251 = vpop.f32.mrb[0].mxu0
        %6252 = vmatprep.mubr.bf16.mxu0 0
        %6253 = vmatmul.mubr.bf16.gmra.mrb[0].mxu0 %v5614
        %v6254 = vpop.f32.mrb[0].mxu0
        %v6255 = vadd.f32 %v5966, %v6254
        %v6256 = vpop.f32.mrb[0].mxu0
        %v6257 = vpop.f32.mrb[0].mxu0
        %v6258 = vadd.f32 %v5969, %v6257
        %v6259 = vpop.f32.mrb[0].mxu0
        %6260 = vmatprep.mubr.bf16.mxu0 0
        %6261 = vmatmul.mubr.bf16.gmra.mrb[0].mxu0 %v5617
        %v6262 = vpop.f32.mrb[0].mxu0
        %v6263 = vadd.f32 %v5974, %v6262
        %v6264 = vpop.f32.mrb[0].mxu0
        %v6265 = vpop.f32.mrb[0].mxu0
        %v6266 = vadd.f32 %v5977, %v6265
        %v6267 = vpop.f32.mrb[0].mxu0
        %6268 = vmatprep.mubr.bf16.mxu0 0
        %6269 = vmatmul.mubr.bf16.gmra.mrb[0].mxu0 %v5620
        %v6270 = vpop.f32.mrb[0].mxu0
        %v6271 = vadd.f32 %v5982, %v6270
        %v6272 = vpop.f32.mrb[0].mxu0
        %v6273 = vpop.f32.mrb[0].mxu0
        %v6274 = vadd.f32 %v5985, %v6273
        %v6275 = vpop.f32.mrb[0].mxu0
        %6276 = vmatprep.mubr.bf16.mxu0 0
        %6277 = vmatmul.mubr.bf16.gmra.mrb[0].mxu0 %v5623
        %v6278 = vpop.f32.mrb[0].mxu0
        %v6279 = vadd.f32 %v5990, %v6278
        %v6280 = vpop.f32.mrb[0].mxu0
        %v6281 = vpop.f32.mrb[0].mxu0
        %v6282 = vadd.f32 %v5993, %v6281
        %v6283 = vpop.f32.mrb[0].mxu0
        %6284 = vmatprep.mubr.bf16.mxu0 0
        %6285 = vmatmul.mubr.bf16.gmra.mrb[0].mxu0 %v5626
        %v6286 = vpop.f32.mrb[0].mxu0
        %v6287 = vadd.f32 %v5998, %v6286
        %v6288 = vpop.f32.mrb[0].mxu0
        %v6289 = vpop.f32.mrb[0].mxu0
        %v6290 = vadd.f32 %v6001, %v6289
        %v6291 = vpop.f32.mrb[0].mxu0
        %6292 = vmatprep.mubr.bf16.mxu0 0
        %6293 = vmatmul.mubr.bf16.gmra.mrb[0].mxu0 %v5629
        %v6294 = vpop.f32.mrb[0].mxu0
        %v6295 = vadd.f32 %v6006, %v6294
        %v6296 = vpop.f32.mrb[0].mxu0
        %v6297 = vpop.f32.mrb[0].mxu0
        %v6298 = vadd.f32 %v6009, %v6297
        %v6299 = vpop.f32.mrb[0].mxu0
        %6300 = vmatprep.mubr.bf16.mxu0 0
        %6301 = vmatmul.mubr.bf16.gmra.mrb[0].mxu0 %v5632
        %v6302 = vpop.f32.mrb[0].mxu0
        %v6303 = vadd.f32 %v6014, %v6302
        %v6304 = vpop.f32.mrb[0].mxu0
        %v6305 = vpop.f32.mrb[0].mxu0
        %v6306 = vadd.f32 %v6017, %v6305
        %v6307 = vpop.f32.mrb[0].mxu0
        %6308 = vmatprep.mubr.bf16.mxu0 0
        %6309 = vmatmul.mubr.bf16.gmra.mrb[0].mxu0 %v5635
        %v6310 = vpop.f32.mrb[0].mxu0
        %v6311 = vadd.f32 %v6022, %v6310
        %v6312 = vpop.f32.mrb[0].mxu0
        %v6313 = vpop.f32.mrb[0].mxu0
        %v6314 = vadd.f32 %v6025, %v6313
        %v6315 = vpop.f32.mrb[0].mxu0
        %6316 = vmatprep.mubr.bf16.mxu0 0
        %6317 = vmatmul.mubr.bf16.gmra.mrb[0].mxu0 %v5638
        %v6318 = vpop.f32.mrb[0].mxu0
        %v6319 = vadd.f32 %v6030, %v6318
        %v6320 = vpop.f32.mrb[0].mxu0
        %v6321 = vpop.f32.mrb[0].mxu0
        %v6322 = vadd.f32 %v6033, %v6321
        %v6323 = vpop.f32.mrb[0].mxu0
        %6324 = vmatprep.mubr.bf16.mxu0 0
        %6325 = vmatmul.mubr.bf16.gmra.mrb[0].mxu0 %v5641
        %v6326 = vpop.f32.mrb[0].mxu0
        %v6327 = vadd.f32 %v6038, %v6326
        %v6328 = vpop.f32.mrb[0].mxu0
        %v6329 = vpop.f32.mrb[0].mxu0
        %v6330 = vadd.f32 %v6041, %v6329
        %v6331 = vpop.f32.mrb[0].mxu0
        %6332 = vmatprep.mubr.bf16.mxu0 0
        %6333 = vmatmul.mubr.bf16.gmra.mrb[0].mxu0 %v5644
        %v6334 = vpop.f32.mrb[0].mxu0
        %v6335 = vadd.f32 %v6046, %v6334
        %v6336 = vpop.f32.mrb[0].mxu0
        %v6337 = vpop.f32.mrb[0].mxu0
        %v6338 = vadd.f32 %v6049, %v6337
        %v6339 = vpop.f32.mrb[0].mxu0
        %6340 = vmatprep.mubr.bf16.mxu0 0
        %6341 = vmatmul.mubr.bf16.gmra.mrb[0].mxu0 %v5647
        %v6342 = vpop.f32.mrb[0].mxu0
        %v6343 = vadd.f32 %v6054, %v6342
        %v6344 = vpop.f32.mrb[0].mxu0
        %v6345 = vpop.f32.mrb[0].mxu0
        %v6346 = vadd.f32 %v6057, %v6345
        %v6347 = vpop.f32.mrb[0].mxu0
        %6348 = vmatprep.mubr.bf16.mxu0 0
        %6349 = vmatmul.mubr.bf16.gmra.mrb[0].mxu0 %v5650
        %v6350 = vpop.f32.mrb[0].mxu0
        %v6351 = vadd.f32 %v6062, %v6350
        %v6352 = vpop.f32.mrb[0].mxu0
        %v6353 = vpop.f32.mrb[0].mxu0
        %v6354 = vadd.f32 %v6065, %v6353
        %v6355 = vpop.f32.mrb[0].mxu0
        %6356 = vmatprep.mubr.bf16.mxu0 0
        %6357 = vmatmul.mubr.bf16.gmra.mrb[0].mxu0 %v5653
        %v6358 = vpop.f32.mrb[0].mxu0
        %v6359 = vadd.f32 %v6070, %v6358
        %v6360 = vpop.f32.mrb[0].mxu0
        %v6361 = vpop.f32.mrb[0].mxu0
        %v6362 = vadd.f32 %v6073, %v6361
        %v6363 = vpop.f32.mrb[0].mxu0
        %6364 = vmatprep.mubr.bf16.mxu0 0
        %6365 = vmatmul.mubr.bf16.gmra.mrb[0].mxu0 %v5656
        %v6366 = vpop.f32.mrb[0].mxu0
        %v6367 = vadd.f32 %v6078, %v6366
        %v6368 = vpop.f32.mrb[0].mxu0
        %v6369 = vpop.f32.mrb[0].mxu0
        %v6370 = vadd.f32 %v6081, %v6369
        %v6371 = vpop.f32.mrb[0].mxu0
        %6372 = vmatprep.mubr.bf16.mxu0 0
        %6373 = vmatmul.mubr.bf16.gmra.mrb[0].mxu0 %v5659
        %v6374 = vpop.f32.mrb[0].mxu0
        %v6375 = vadd.f32 %v6086, %v6374
        %v6376 = vpop.f32.mrb[0].mxu0
        %v6377 = vpop.f32.mrb[0].mxu0
        %v6378 = vadd.f32 %v6089, %v6377
        %v6379 = vpop.f32.mrb[0].mxu0
        %6380 = vmatprep.mubr.bf16.mxu0 0
        %6381 = vmatmul.mubr.bf16.gmra.mrb[0].mxu0 %v5662
        %v6382 = vpop.f32.mrb[0].mxu0
        %v6383 = vadd.f32 %v6094, %v6382
        %v6384 = vpop.f32.mrb[0].mxu0
        %v6385 = vpop.f32.mrb[0].mxu0
        %v6386 = vadd.f32 %v6097, %v6385
        %v6387 = vpop.f32.mrb[0].mxu0
        %6388 = vmatprep.mubr.bf16.mxu0 0
        %6389 = vmatmul.mubr.bf16.gmra.mrb[0].mxu0 %v5665
        %v6390 = vpop.f32.mrb[0].mxu0
        %v6391 = vadd.f32 %v6102, %v6390
        %v6392 = vpop.f32.mrb[0].mxu0
        %v6393 = vpop.f32.mrb[0].mxu0
        %v6394 = vadd.f32 %v6105, %v6393
        %v6395 = vpop.f32.mrb[0].mxu0
        %6396 = vmatprep.mubr.bf16.mxu0 0
        %6397 = vmatmul.mubr.bf16.gmra.mrb[0].mxu0 %v5668
        %v6398 = vpop.f32.mrb[0].mxu0
        %v6399 = vadd.f32 %v6110, %v6398
        %v6400 = vpop.f32.mrb[0].mxu0
        %v6401 = vpop.f32.mrb[0].mxu0
        %v6402 = vadd.f32 %v6113, %v6401
        %v6403 = vpop.f32.mrb[0].mxu0
        %6404 = vmatprep.mubr.bf16.mxu0 0
        %6405 = vmatmul.mubr.bf16.gmra.mrb[0].mxu0 %v5671
        %v6406 = vpop.f32.mrb[0].mxu0
        %v6407 = vadd.f32 %v6118, %v6406
        %v6408 = vpop.f32.mrb[0].mxu0
        %v6409 = vpop.f32.mrb[0].mxu0
        %v6410 = vadd.f32 %v6121, %v6409
        %v6411 = vpop.f32.mrb[0].mxu0
        %6412 = vmatprep.mubr.bf16.mxu0 0
        %6413 = vmatmul.mubr.bf16.gmra.mrb[0].mxu0 %v5674
        %v6414 = vpop.f32.mrb[0].mxu0
        %v6415 = vadd.f32 %v6126, %v6414
        %v6416 = vpop.f32.mrb[0].mxu0
        %v6417 = vpop.f32.mrb[0].mxu0
        %v6418 = vadd.f32 %v6129, %v6417
        %v6419 = vpop.f32.mrb[0].mxu0
        %6420 = vmatprep.mubr.bf16.mxu0 0
        %6421 = vmatmul.mubr.bf16.gmra.mrb[0].mxu0 %v5677
        %v6422 = vpop.f32.mrb[0].mxu0
        %v6423 = vadd.f32 %v6134, %v6422
        %v6424 = vpop.f32.mrb[0].mxu0
        %v6425 = vpop.f32.mrb[0].mxu0
        %v6426 = vadd.f32 %v6137, %v6425
        %v6427 = vpop.f32.mrb[0].mxu0
        %6428 = vmatprep.mubr.bf16.mxu0 0
        %6429 = vmatmul.mubr.bf16.gmra.mrb[0].mxu0 %v5680
        %v6430 = vpop.f32.mrb[0].mxu0
        %v6431 = vadd.f32 %v6142, %v6430
        %v6432 = vpop.f32.mrb[0].mxu0
        %v6433 = vpop.f32.mrb[0].mxu0
        %v6434 = vadd.f32 %v6145, %v6433
        %v6435 = vpop.f32.mrb[0].mxu0
        %6436 = vmatprep.mubr.bf16.mxu0 0
        %6437 = vmatmul.mubr.bf16.gmra.mrb[0].mxu0 %v5683
        %v6438 = vpop.f32.mrb[0].mxu0
        %v6439 = vadd.f32 %v6150, %v6438
        %v6440 = vpop.f32.mrb[0].mxu0
        %v6441 = vpop.f32.mrb[0].mxu0
        %v6442 = vadd.f32 %v6153, %v6441
        %v6443 = vpop.f32.mrb[0].mxu0
        %6444 = vmatprep.mubr.bf16.mxu0 0
        %6445 = vmatmul.mubr.bf16.gmra.mrb[0].mxu0 %v5686
        %v6446 = vpop.f32.mrb[0].mxu0
        %v6447 = vadd.f32 %v6158, %v6446
        %v6448 = vpop.f32.mrb[0].mxu0
        %v6449 = vpop.f32.mrb[0].mxu0
        %v6450 = vadd.f32 %v6161, %v6449
        %v6451 = vpop.f32.mrb[0].mxu0
        %6452 = vmatprep.mubr.bf16.mxu0 0
        %6453 = vmatmul.mubr.bf16.gmra.mrb[0].mxu0 %v5689
        %v6454 = vpop.f32.mrb[0].mxu0
        %v6455 = vadd.f32 %v6166, %v6454
        %v6456 = vpop.f32.mrb[0].mxu0
        %v6457 = vpop.f32.mrb[0].mxu0
        %v6458 = vadd.f32 %v6169, %v6457
        %v6459 = vpop.f32.mrb[0].mxu0
        %6460 = vdwg.mxu0
        %v6461 = vld [vmem:[#allocation4] sm:$0xff]
        %v6462 = vld [vmem:[#allocation4 + $0x8] sm:$0xff]
        %v6463 = vld [vmem:[#allocation4 + $0x10] sm:$0xff]
        %v6464 = vld [vmem:[#allocation4 + $0x18] sm:$0xff]
        %v6465 = vld [vmem:[#allocation4 + $0x20] sm:$0xff]
        %v6466 = vld [vmem:[#allocation4 + $0x28] sm:$0xff]
        %v6467 = vld [vmem:[#allocation4 + $0x30] sm:$0xff]
        %v6468 = vld [vmem:[#allocation4 + $0x38] sm:$0xff]
        %v6469 = vld [vmem:[#allocation4 + $0x40] sm:$0xff]
        %v6470 = vld [vmem:[#allocation4 + $0x48] sm:$0xff]
        %v6471 = vld [vmem:[#allocation4 + $0x50] sm:$0xff]
        %v6472 = vld [vmem:[#allocation4 + $0x58] sm:$0xff]
        %v6473 = vld [vmem:[#allocation4 + $0x60] sm:$0xff]
        %v6474 = vld [vmem:[#allocation4 + $0x68] sm:$0xff]
        %v6475 = vld [vmem:[#allocation4 + $0x70] sm:$0xff]
        %v6476 = vld [vmem:[#allocation4 + $0x78] sm:$0xff]
        %v6477 = vld [vmem:[#allocation4 + $0x80] sm:$0xff]
        %v6478 = vld [vmem:[#allocation4 + $0x88] sm:$0xff]
        %v6479 = vld [vmem:[#allocation4 + $0x90] sm:$0xff]
        %v6480 = vld [vmem:[#allocation4 + $0x98] sm:$0xff]
        %v6481 = vld [vmem:[#allocation4 + $0xa0] sm:$0xff]
        %v6482 = vld [vmem:[#allocation4 + $0xa8] sm:$0xff]
        %v6483 = vld [vmem:[#allocation4 + $0xb0] sm:$0xff]
        %v6484 = vld [vmem:[#allocation4 + $0xb8] sm:$0xff]
        %v6485 = vld [vmem:[#allocation4 + $0xc0] sm:$0xff]
        %v6486 = vld [vmem:[#allocation4 + $0xc8] sm:$0xff]
        %v6487 = vld [vmem:[#allocation4 + $0xd0] sm:$0xff]
        %v6488 = vld [vmem:[#allocation4 + $0xd8] sm:$0xff]
        %v6489 = vld [vmem:[#allocation4 + $0xe0] sm:$0xff]
        %v6490 = vld [vmem:[#allocation4 + $0xe8] sm:$0xff]
        %v6491 = vld [vmem:[#allocation4 + $0xf0] sm:$0xff]
        %v6492 = vld [vmem:[#allocation4 + $0xf8] sm:$0xff]
        %v6493 = vld [vmem:[#allocation4 + $0x100] sm:$0xff]
        %v6494 = vld [vmem:[#allocation4 + $0x108] sm:$0xff]
        %v6495 = vld [vmem:[#allocation4 + $0x110] sm:$0xff]
        %v6496 = vld [vmem:[#allocation4 + $0x118] sm:$0xff]
        %v6497 = vld [vmem:[#allocation4 + $0x120] sm:$0xff]
        %v6498 = vld [vmem:[#allocation4 + $0x128] sm:$0xff]
        %v6499 = vld [vmem:[#allocation4 + $0x130] sm:$0xff]
        %v6500 = vld [vmem:[#allocation4 + $0x138] sm:$0xff]
        %v6501 = vld [vmem:[#allocation4 + $0x140] sm:$0xff]
        %v6502 = vld [vmem:[#allocation4 + $0x148] sm:$0xff]
        %v6503 = vld [vmem:[#allocation4 + $0x150] sm:$0xff]
        %v6504 = vld [vmem:[#allocation4 + $0x158] sm:$0xff]
        %v6505 = vld [vmem:[#allocation4 + $0x160] sm:$0xff]
        %v6506 = vld [vmem:[#allocation4 + $0x168] sm:$0xff]
        %v6507 = vld [vmem:[#allocation4 + $0x170] sm:$0xff]
        %v6508 = vld [vmem:[#allocation4 + $0x178] sm:$0xff]
        %v6509 = vld [vmem:[#allocation4 + $0x180] sm:$0xff]
        %v6510 = vld [vmem:[#allocation4 + $0x188] sm:$0xff]
        %v6511 = vld [vmem:[#allocation4 + $0x190] sm:$0xff]
        %v6512 = vld [vmem:[#allocation4 + $0x198] sm:$0xff]
        %v6513 = vld [vmem:[#allocation4 + $0x1a0] sm:$0xff]
        %v6514 = vld [vmem:[#allocation4 + $0x1a8] sm:$0xff]
        %v6515 = vld [vmem:[#allocation4 + $0x1b0] sm:$0xff]
        %v6516 = vld [vmem:[#allocation4 + $0x1b8] sm:$0xff]
        %v6517 = vld [vmem:[#allocation4 + $0x1c0] sm:$0xff]
        %v6518 = vld [vmem:[#allocation4 + $0x1c8] sm:$0xff]
        %v6519 = vld [vmem:[#allocation4 + $0x1d0] sm:$0xff]
        %v6520 = vld [vmem:[#allocation4 + $0x1d8] sm:$0xff]
        %v6521 = vld [vmem:[#allocation4 + $0x1e0] sm:$0xff]
        %v6522 = vld [vmem:[#allocation4 + $0x1e8] sm:$0xff]
        %v6523 = vld [vmem:[#allocation4 + $0x1f0] sm:$0xff]
        %v6524 = vld [vmem:[#allocation4 + $0x1f8] sm:$0xff]
        %v6525 = vadd.f32 %v6461, %v6207
        %v6526 = vadd.f32 %v6462, %v6210
        %v6527 = vadd.f32 %v6463, %v6215
        %v6528 = vadd.f32 %v6464, %v6218
        %v6529 = vadd.f32 %v6465, %v6223
        %v6530 = vadd.f32 %v6466, %v6226
        %v6531 = vadd.f32 %v6467, %v6231
        %v6532 = vadd.f32 %v6468, %v6234
        %v6533 = vadd.f32 %v6469, %v6239
        %v6534 = vadd.f32 %v6470, %v6242
        %v6535 = vadd.f32 %v6471, %v6247
        %v6536 = vadd.f32 %v6472, %v6250
        %v6537 = vadd.f32 %v6473, %v6255
        %v6538 = vadd.f32 %v6474, %v6258
        %v6539 = vadd.f32 %v6475, %v6263
        %v6540 = vadd.f32 %v6476, %v6266
        %v6541 = vadd.f32 %v6477, %v6271
        %v6542 = vadd.f32 %v6478, %v6274
        %v6543 = vadd.f32 %v6479, %v6279
        %v6544 = vadd.f32 %v6480, %v6282
        %v6545 = vadd.f32 %v6481, %v6287
        %v6546 = vadd.f32 %v6482, %v6290
        %v6547 = vadd.f32 %v6483, %v6295
        %v6548 = vadd.f32 %v6484, %v6298
        %v6549 = vadd.f32 %v6485, %v6303
        %v6550 = vadd.f32 %v6486, %v6306
        %v6551 = vadd.f32 %v6487, %v6311
        %v6552 = vadd.f32 %v6488, %v6314
        %v6553 = vadd.f32 %v6489, %v6319
        %v6554 = vadd.f32 %v6490, %v6322
        %v6555 = vadd.f32 %v6491, %v6327
        %v6556 = vadd.f32 %v6492, %v6330
        %v6557 = vadd.f32 %v6493, %v6335
        %v6558 = vadd.f32 %v6494, %v6338
        %v6559 = vadd.f32 %v6495, %v6343
        %v6560 = vadd.f32 %v6496, %v6346
        %v6561 = vadd.f32 %v6497, %v6351
        %v6562 = vadd.f32 %v6498, %v6354
        %v6563 = vadd.f32 %v6499, %v6359
        %v6564 = vadd.f32 %v6500, %v6362
        %v6565 = vadd.f32 %v6501, %v6367
        %v6566 = vadd.f32 %v6502, %v6370
        %v6567 = vadd.f32 %v6503, %v6375
        %v6568 = vadd.f32 %v6504, %v6378
        %v6569 = vadd.f32 %v6505, %v6383
        %v6570 = vadd.f32 %v6506, %v6386
        %v6571 = vadd.f32 %v6507, %v6391
        %v6572 = vadd.f32 %v6508, %v6394
        %v6573 = vadd.f32 %v6509, %v6399
        %v6574 = vadd.f32 %v6510, %v6402
        %v6575 = vadd.f32 %v6511, %v6407
        %v6576 = vadd.f32 %v6512, %v6410
        %v6577 = vadd.f32 %v6513, %v6415
        %v6578 = vadd.f32 %v6514, %v6418
        %v6579 = vadd.f32 %v6515, %v6423
        %v6580 = vadd.f32 %v6516, %v6426
        %v6581 = vadd.f32 %v6517, %v6431
        %v6582 = vadd.f32 %v6518, %v6434
        %v6583 = vadd.f32 %v6519, %v6439
        %v6584 = vadd.f32 %v6520, %v6442
        %v6585 = vadd.f32 %v6521, %v6447
        %v6586 = vadd.f32 %v6522, %v6450
        %v6587 = vadd.f32 %v6523, %v6455
        %v6588 = vadd.f32 %v6524, %v6458
        %6589 = vst [vmem:[#allocation4] sm:$0xff] %v6525
        %6590 = vst [vmem:[#allocation4 + $0x8] sm:$0xff] %v6526
        %6591 = vst [vmem:[#allocation4 + $0x10] sm:$0xff] %v6527
        %6592 = vst [vmem:[#allocation4 + $0x18] sm:$0xff] %v6528
        %6593 = vst [vmem:[#allocation4 + $0x20] sm:$0xff] %v6529
        %6594 = vst [vmem:[#allocation4 + $0x28] sm:$0xff] %v6530
        %6595 = vst [vmem:[#allocation4 + $0x30] sm:$0xff] %v6531
        %6596 = vst [vmem:[#allocation4 + $0x38] sm:$0xff] %v6532
        %6597 = vst [vmem:[#allocation4 + $0x40] sm:$0xff] %v6533
        %6598 = vst [vmem:[#allocation4 + $0x48] sm:$0xff] %v6534
        %6599 = vst [vmem:[#allocation4 + $0x50] sm:$0xff] %v6535
        %6600 = vst [vmem:[#allocation4 + $0x58] sm:$0xff] %v6536
        %6601 = vst [vmem:[#allocation4 + $0x60] sm:$0xff] %v6537
        %6602 = vst [vmem:[#allocation4 + $0x68] sm:$0xff] %v6538
        %6603 = vst [vmem:[#allocation4 + $0x70] sm:$0xff] %v6539
        %6604 = vst [vmem:[#allocation4 + $0x78] sm:$0xff] %v6540
        %6605 = vst [vmem:[#allocation4 + $0x80] sm:$0xff] %v6541
        %6606 = vst [vmem:[#allocation4 + $0x88] sm:$0xff] %v6542
        %6607 = vst [vmem:[#allocation4 + $0x90] sm:$0xff] %v6543
        %6608 = vst [vmem:[#allocation4 + $0x98] sm:$0xff] %v6544
        %6609 = vst [vmem:[#allocation4 + $0xa0] sm:$0xff] %v6545
        %6610 = vst [vmem:[#allocation4 + $0xa8] sm:$0xff] %v6546
        %6611 = vst [vmem:[#allocation4 + $0xb0] sm:$0xff] %v6547
        %6612 = vst [vmem:[#allocation4 + $0xb8] sm:$0xff] %v6548
        %6613 = vst [vmem:[#allocation4 + $0xc0] sm:$0xff] %v6549
        %6614 = vst [vmem:[#allocation4 + $0xc8] sm:$0xff] %v6550
        %6615 = vst [vmem:[#allocation4 + $0xd0] sm:$0xff] %v6551
        %6616 = vst [vmem:[#allocation4 + $0xd8] sm:$0xff] %v6552
        %6617 = vst [vmem:[#allocation4 + $0xe0] sm:$0xff] %v6553
        %6618 = vst [vmem:[#allocation4 + $0xe8] sm:$0xff] %v6554
        %6619 = vst [vmem:[#allocation4 + $0xf0] sm:$0xff] %v6555
        %6620 = vst [vmem:[#allocation4 + $0xf8] sm:$0xff] %v6556
        %6621 = vst [vmem:[#allocation4 + $0x100] sm:$0xff] %v6557
        %6622 = vst [vmem:[#allocation4 + $0x108] sm:$0xff] %v6558
        %6623 = vst [vmem:[#allocation4 + $0x110] sm:$0xff] %v6559
        %6624 = vst [vmem:[#allocation4 + $0x118] sm:$0xff] %v6560
        %6625 = vst [vmem:[#allocation4 + $0x120] sm:$0xff] %v6561
        %6626 = vst [vmem:[#allocation4 + $0x128] sm:$0xff] %v6562
        %6627 = vst [vmem:[#allocation4 + $0x130] sm:$0xff] %v6563
        %6628 = vst [vmem:[#allocation4 + $0x138] sm:$0xff] %v6564
        %6629 = vst [vmem:[#allocation4 + $0x140] sm:$0xff] %v6565
        %6630 = vst [vmem:[#allocation4 + $0x148] sm:$0xff] %v6566
        %6631 = vst [vmem:[#allocation4 + $0x150] sm:$0xff] %v6567
        %6632 = vst [vmem:[#allocation4 + $0x158] sm:$0xff] %v6568
        %6633 = vst [vmem:[#allocation4 + $0x160] sm:$0xff] %v6569
        %6634 = vst [vmem:[#allocation4 + $0x168] sm:$0xff] %v6570
        %6635 = vst [vmem:[#allocation4 + $0x170] sm:$0xff] %v6571
        %6636 = vst [vmem:[#allocation4 + $0x178] sm:$0xff] %v6572
        %6637 = vst [vmem:[#allocation4 + $0x180] sm:$0xff] %v6573
        %6638 = vst [vmem:[#allocation4 + $0x188] sm:$0xff] %v6574
        %6639 = vst [vmem:[#allocation4 + $0x190] sm:$0xff] %v6575
        %6640 = vst [vmem:[#allocation4 + $0x198] sm:$0xff] %v6576
        %6641 = vst [vmem:[#allocation4 + $0x1a0] sm:$0xff] %v6577
        %6642 = vst [vmem:[#allocation4 + $0x1a8] sm:$0xff] %v6578
        %6643 = vst [vmem:[#allocation4 + $0x1b0] sm:$0xff] %v6579
        %6644 = vst [vmem:[#allocation4 + $0x1b8] sm:$0xff] %v6580
        %6645 = vst [vmem:[#allocation4 + $0x1c0] sm:$0xff] %v6581
        %6646 = vst [vmem:[#allocation4 + $0x1c8] sm:$0xff] %v6582
        %6647 = vst [vmem:[#allocation4 + $0x1d0] sm:$0xff] %v6583
        %6648 = vst [vmem:[#allocation4 + $0x1d8] sm:$0xff] %v6584
        %6649 = vst [vmem:[#allocation4 + $0x1e0] sm:$0xff] %v6585
        %6650 = vst [vmem:[#allocation4 + $0x1e8] sm:$0xff] %v6586
        %6651 = vst [vmem:[#allocation4 + $0x1f0] sm:$0xff] %v6587
        %6652 = vst [vmem:[#allocation4 + $0x1f8] sm:$0xff] %v6588
        %s6653 = scalar_lea.vmem [#allocation3], 48
        %v6654 = vld [vmem:[%s6653] sm:$0xff]
        %v6655 = vld [vmem:[%s6653 + $0x8] sm:$0xff]
        %v6656 = vld [vmem:[%s6653 + $0x10] sm:$0xff]
        %v6657 = vld [vmem:[%s6653 + $0x18] sm:$0xff]
        %v6658 = vld [vmem:[%s6653 + $0x20] sm:$0xff]
        %v6659 = vld [vmem:[%s6653 + $0x28] sm:$0xff]
        %v6660 = vld [vmem:[%s6653 + $0x30] sm:$0xff]
        %v6661 = vld [vmem:[%s6653 + $0x38] sm:$0xff]
        %v6662 = vld [vmem:[%s6653 + $0x40] sm:$0xff]
        %v6663 = vld [vmem:[%s6653 + $0x48] sm:$0xff]
        %v6664 = vld [vmem:[%s6653 + $0x50] sm:$0xff]
        %v6665 = vld [vmem:[%s6653 + $0x58] sm:$0xff]
        %v6666 = vld [vmem:[%s6653 + $0x60] sm:$0xff]
        %v6667 = vld [vmem:[%s6653 + $0x68] sm:$0xff]
        %v6668 = vld [vmem:[%s6653 + $0x70] sm:$0xff]
        %v6669 = vld [vmem:[%s6653 + $0x78] sm:$0xff]
        %v6670 = vld [vmem:[%s6653 + $0x80] sm:$0xff]
        %v6671 = vld [vmem:[%s6653 + $0x88] sm:$0xff]
        %v6672 = vld [vmem:[%s6653 + $0x90] sm:$0xff]
        %v6673 = vld [vmem:[%s6653 + $0x98] sm:$0xff]
        %v6674 = vld [vmem:[%s6653 + $0xa0] sm:$0xff]
        %v6675 = vld [vmem:[%s6653 + $0xa8] sm:$0xff]
        %v6676 = vld [vmem:[%s6653 + $0xb0] sm:$0xff]
        %v6677 = vld [vmem:[%s6653 + $0xb8] sm:$0xff]
        %v6678 = vld [vmem:[%s6653 + $0xc0] sm:$0xff]
        %v6679 = vld [vmem:[%s6653 + $0xc8] sm:$0xff]
        %v6680 = vld [vmem:[%s6653 + $0xd0] sm:$0xff]
        %v6681 = vld [vmem:[%s6653 + $0xd8] sm:$0xff]
        %v6682 = vld [vmem:[%s6653 + $0xe0] sm:$0xff]
        %v6683 = vld [vmem:[%s6653 + $0xe8] sm:$0xff]
        %v6684 = vld [vmem:[%s6653 + $0xf0] sm:$0xff]
        %v6685 = vld [vmem:[%s6653 + $0xf8] sm:$0xff]
        %v6686 = vld [vmem:[%s6653 + $0x100] sm:$0xff]
        %v6687 = vld [vmem:[%s6653 + $0x108] sm:$0xff]
        %v6688 = vld [vmem:[%s6653 + $0x110] sm:$0xff]
        %v6689 = vld [vmem:[%s6653 + $0x118] sm:$0xff]
        %v6690 = vld [vmem:[%s6653 + $0x120] sm:$0xff]
        %v6691 = vld [vmem:[%s6653 + $0x128] sm:$0xff]
        %v6692 = vld [vmem:[%s6653 + $0x130] sm:$0xff]
        %v6693 = vld [vmem:[%s6653 + $0x138] sm:$0xff]
        %v6694 = vld [vmem:[%s6653 + $0x140] sm:$0xff]
        %v6695 = vld [vmem:[%s6653 + $0x148] sm:$0xff]
        %v6696 = vld [vmem:[%s6653 + $0x150] sm:$0xff]
        %v6697 = vld [vmem:[%s6653 + $0x158] sm:$0xff]
        %v6698 = vld [vmem:[%s6653 + $0x160] sm:$0xff]
        %v6699 = vld [vmem:[%s6653 + $0x168] sm:$0xff]
        %v6700 = vld [vmem:[%s6653 + $0x170] sm:$0xff]
        %v6701 = vld [vmem:[%s6653 + $0x178] sm:$0xff]
        %v6702 = vld [vmem:[%s6653 + $0x1b0] sm:$0xff]
        %v6703 = vld [vmem:[%s6653 + $0x1b8] sm:$0xff]
        %v6704 = vld [vmem:[%s6653 + $0x1c0] sm:$0xff]
        %v6705 = vld [vmem:[%s6653 + $0x1c8] sm:$0xff]
        %v6706 = vld [vmem:[%s6653 + $0x1d0] sm:$0xff]
        %v6707 = vld [vmem:[%s6653 + $0x1d8] sm:$0xff]
        %v6708 = vld [vmem:[%s6653 + $0x1e0] sm:$0xff]
        %v6709 = vld [vmem:[%s6653 + $0x1e8] sm:$0xff]
        %v6710 = vld [vmem:[%s6653 + $0x1f0] sm:$0xff]
        %v6711 = vld [vmem:[%s6653 + $0x1f8] sm:$0xff]
        %v6712 = vld [vmem:[%s6653 + $0x200] sm:$0xff]
        %v6713 = vld [vmem:[%s6653 + $0x208] sm:$0xff]
        %v6714 = vld [vmem:[%s6653 + $0x210] sm:$0xff]
        %v6715 = vld [vmem:[%s6653 + $0x218] sm:$0xff]
        %v6716 = vld [vmem:[%s6653 + $0x220] sm:$0xff]
        %v6717 = vld [vmem:[%s6653 + $0x228] sm:$0xff]
        %v6718 = vld [vmem:[%s6653 + $0x230] sm:$0xff]
        %v6719 = vld [vmem:[%s6653 + $0x238] sm:$0xff]
        %v6720 = vld [vmem:[%s6653 + $0x240] sm:$0xff]
        %v6721 = vld [vmem:[%s6653 + $0x248] sm:$0xff]
        %v6722 = vld [vmem:[%s6653 + $0x250] sm:$0xff]
        %v6723 = vld [vmem:[%s6653 + $0x258] sm:$0xff]
        %v6724 = vld [vmem:[%s6653 + $0x260] sm:$0xff]
        %v6725 = vld [vmem:[%s6653 + $0x268] sm:$0xff]
        %v6726 = vld [vmem:[%s6653 + $0x270] sm:$0xff]
        %v6727 = vld [vmem:[%s6653 + $0x278] sm:$0xff]
        %v6728 = vld [vmem:[%s6653 + $0x280] sm:$0xff]
        %v6729 = vld [vmem:[%s6653 + $0x288] sm:$0xff]
        %v6730 = vld [vmem:[%s6653 + $0x290] sm:$0xff]
        %v6731 = vld [vmem:[%s6653 + $0x298] sm:$0xff]
        %v6732 = vld [vmem:[%s6653 + $0x2a0] sm:$0xff]
        %v6733 = vld [vmem:[%s6653 + $0x2a8] sm:$0xff]
        %v6734 = vld [vmem:[%s6653 + $0x2b0] sm:$0xff]
        %v6735 = vld [vmem:[%s6653 + $0x2b8] sm:$0xff]
        %v6736 = vld [vmem:[%s6653 + $0x2c0] sm:$0xff]
        %v6737 = vld [vmem:[%s6653 + $0x2c8] sm:$0xff]
        %v6738 = vld [vmem:[%s6653 + $0x2d0] sm:$0xff]
        %v6739 = vld [vmem:[%s6653 + $0x2d8] sm:$0xff]
        %v6740 = vld [vmem:[%s6653 + $0x2e0] sm:$0xff]
        %v6741 = vld [vmem:[%s6653 + $0x2e8] sm:$0xff]
        %v6742 = vld [vmem:[%s6653 + $0x2f0] sm:$0xff]
        %v6743 = vld [vmem:[%s6653 + $0x2f8] sm:$0xff]
        %v6744 = vld [vmem:[%s6653 + $0x300] sm:$0xff]
        %v6745 = vld [vmem:[%s6653 + $0x308] sm:$0xff]
        %v6746 = vld [vmem:[%s6653 + $0x310] sm:$0xff]
        %v6747 = vld [vmem:[%s6653 + $0x318] sm:$0xff]
        %v6748 = vld [vmem:[%s6653 + $0x320] sm:$0xff]
        %v6749 = vld [vmem:[%s6653 + $0x328] sm:$0xff]
        %s6750 = scalar_lea.vmem %s3, 384
        %v6751 = vld [vmem:[%s6750] sm:$0xf]
        %v6752 = vld [vmem:[%s6750 + $0x4] sm:$0xf]
        %v6753 = vld [vmem:[%s6750 + $0x8] sm:$0xf]
        %v6754 = vld [vmem:[%s6750 + $0xc] sm:$0xf]
        %v6755 = vld [vmem:[%s6750 + $0x10] sm:$0xf]
        %v6756 = vld [vmem:[%s6750 + $0x14] sm:$0xf]
        %v6757 = vld [vmem:[%s6750 + $0x18] sm:$0xf]
        %v6758 = vld [vmem:[%s6750 + $0x1c] sm:$0xf]
        %v6759 = vld [vmem:[%s6750 + $0x20] sm:$0xf]
        %v6760 = vld [vmem:[%s6750 + $0x24] sm:$0xf]
        %v6761 = vld [vmem:[%s6750 + $0x28] sm:$0xf]
        %v6762 = vld [vmem:[%s6750 + $0x2c] sm:$0xf]
        %v6763 = vld [vmem:[%s6750 + $0x30] sm:$0xf]
        %v6764 = vld [vmem:[%s6750 + $0x34] sm:$0xf]
        %v6765 = vld [vmem:[%s6750 + $0x38] sm:$0xf]
        %v6766 = vld [vmem:[%s6750 + $0x3c] sm:$0xf]
        %v6767 = vld [vmem:[%s6750 + $0x40] sm:$0xf]
        %v6768 = vld [vmem:[%s6750 + $0x44] sm:$0xf]
        %v6769 = vld [vmem:[%s6750 + $0x48] sm:$0xf]
        %v6770 = vld [vmem:[%s6750 + $0x4c] sm:$0xf]
        %v6771 = vld [vmem:[%s6750 + $0x50] sm:$0xf]
        %v6772 = vld [vmem:[%s6750 + $0x54] sm:$0xf]
        %v6773 = vld [vmem:[%s6750 + $0x58] sm:$0xf]
        %v6774 = vld [vmem:[%s6750 + $0x5c] sm:$0xf]
        %v6775 = vld [vmem:[%s6750 + $0x60] sm:$0xf]
        %v6776 = vld [vmem:[%s6750 + $0x64] sm:$0xf]
        %v6777 = vld [vmem:[%s6750 + $0x68] sm:$0xf]
        %v6778 = vld [vmem:[%s6750 + $0x6c] sm:$0xf]
        %v6779 = vld [vmem:[%s6750 + $0x70] sm:$0xf]
        %v6780 = vld [vmem:[%s6750 + $0x74] sm:$0xf]
        %v6781 = vld [vmem:[%s6750 + $0x78] sm:$0xf]
        %v6782 = vld [vmem:[%s6750 + $0x7c] sm:$0xf]
        %v6783 = vld [vmem:[%s6750 + $0x80] sm:$0xf]
        %v6784 = vld [vmem:[%s6750 + $0x84] sm:$0xf]
        %v6785 = vld [vmem:[%s6750 + $0x88] sm:$0xf]
        %v6786 = vld [vmem:[%s6750 + $0x8c] sm:$0xf]
        %v6787 = vld [vmem:[%s6750 + $0x90] sm:$0xf]
        %v6788 = vld [vmem:[%s6750 + $0x94] sm:$0xf]
        %v6789 = vld [vmem:[%s6750 + $0x98] sm:$0xf]
        %v6790 = vld [vmem:[%s6750 + $0x9c] sm:$0xf]
        %v6791 = vld [vmem:[%s6750 + $0xa0] sm:$0xf]
        %v6792 = vld [vmem:[%s6750 + $0xa4] sm:$0xf]
        %v6793 = vld [vmem:[%s6750 + $0xa8] sm:$0xf]
        %v6794 = vld [vmem:[%s6750 + $0xac] sm:$0xf]
        %v6795 = vld [vmem:[%s6750 + $0xb0] sm:$0xf]
        %v6796 = vld [vmem:[%s6750 + $0xb4] sm:$0xf]
        %v6797 = vld [vmem:[%s6750 + $0xb8] sm:$0xf]
        %v6798 = vld [vmem:[%s6750 + $0xbc] sm:$0xf]
        %v6847 = vunpack.c.l.b16 %v6751
        %v6848 = vunpack.c.l.b16 %v6752
        %v6849 = vunpack.c.l.b16 %v6753
        %v6850 = vunpack.c.l.b16 %v6754
        %v6851 = vunpack.c.l.b16 %v6755
        %v6852 = vunpack.c.l.b16 %v6756
        %v6853 = vunpack.c.l.b16 %v6757
        %v6854 = vunpack.c.l.b16 %v6758
        %v6855 = vunpack.c.l.b16 %v6759
        %v6856 = vunpack.c.l.b16 %v6760
        %v6857 = vunpack.c.l.b16 %v6761
        %v6858 = vunpack.c.l.b16 %v6762
        %v6859 = vunpack.c.l.b16 %v6763
        %v6860 = vunpack.c.l.b16 %v6764
        %v6861 = vunpack.c.l.b16 %v6765
        %v6862 = vunpack.c.l.b16 %v6766
        %v6863 = vunpack.c.l.b16 %v6767
        %v6864 = vunpack.c.l.b16 %v6768
        %v6865 = vunpack.c.l.b16 %v6769
        %v6866 = vunpack.c.l.b16 %v6770
        %v6867 = vunpack.c.l.b16 %v6771
        %v6868 = vunpack.c.l.b16 %v6772
        %v6869 = vunpack.c.l.b16 %v6773
        %v6870 = vunpack.c.l.b16 %v6774
        %v6871 = vunpack.c.l.b16 %v6775
        %v6872 = vunpack.c.l.b16 %v6776
        %v6873 = vunpack.c.l.b16 %v6777
        %v6874 = vunpack.c.l.b16 %v6778
        %v6875 = vunpack.c.l.b16 %v6779
        %v6876 = vunpack.c.l.b16 %v6780
        %v6877 = vunpack.c.l.b16 %v6781
        %v6878 = vunpack.c.l.b16 %v6782
        %v6879 = vunpack.c.l.b16 %v6783
        %v6880 = vunpack.c.l.b16 %v6784
        %v6881 = vunpack.c.l.b16 %v6785
        %v6882 = vunpack.c.l.b16 %v6786
        %v6883 = vunpack.c.l.b16 %v6787
        %v6884 = vunpack.c.l.b16 %v6788
        %v6885 = vunpack.c.l.b16 %v6789
        %v6886 = vunpack.c.l.b16 %v6790
        %v6887 = vunpack.c.l.b16 %v6791
        %v6888 = vunpack.c.l.b16 %v6792
        %v6889 = vunpack.c.l.b16 %v6793
        %v6890 = vunpack.c.l.b16 %v6794
        %v6891 = vunpack.c.l.b16 %v6795
        %v6892 = vunpack.c.l.b16 %v6796
        %v6893 = vunpack.c.l.b16 %v6797
        %v6894 = vunpack.c.l.b16 %v6798
        %v6895 = vpack.c.b16 %v6848, %v6847
        %v6896 = vpack.c.b16 %v6850, %v6849
        %v6897 = vpack.c.b16 %v6852, %v6851
        %v6898 = vpack.c.b16 %v6854, %v6853
        %v6899 = vpack.c.b16 %v6856, %v6855
        %v6900 = vpack.c.b16 %v6858, %v6857
        %v6901 = vpack.c.b16 %v6860, %v6859
        %v6902 = vpack.c.b16 %v6862, %v6861
        %v6903 = vpack.c.b16 %v6864, %v6863
        %v6904 = vpack.c.b16 %v6866, %v6865
        %v6905 = vpack.c.b16 %v6868, %v6867
        %v6906 = vpack.c.b16 %v6870, %v6869
        %v6907 = vpack.c.b16 %v6872, %v6871
        %v6908 = vpack.c.b16 %v6874, %v6873
        %v6909 = vpack.c.b16 %v6876, %v6875
        %v6910 = vpack.c.b16 %v6878, %v6877
        %v6911 = vpack.c.b16 %v6880, %v6879
        %v6912 = vpack.c.b16 %v6882, %v6881
        %v6913 = vpack.c.b16 %v6884, %v6883
        %v6914 = vpack.c.b16 %v6886, %v6885
        %v6915 = vpack.c.b16 %v6888, %v6887
        %v6916 = vpack.c.b16 %v6890, %v6889
        %v6917 = vpack.c.b16 %v6892, %v6891
        %v6918 = vpack.c.b16 %v6894, %v6893
        %6943 = vmatprep.subr.bf16.mxu0 0
        %6944 = vmatpush1.bf16.msra.mxu0 %v6895
        %6945 = vmatprep.subr.bf16.mxu0 0
        %6946 = vmatpush1.bf16.msra.mxu0 %v6896
        %6947 = vmatprep.subr.bf16.mxu0 0
        %6948 = vmatpush1.bf16.msra.mxu0 %v6897
        %6949 = vmatprep.subr.bf16.mxu0 0
        %6950 = vmatpush1.bf16.msra.mxu0 %v6898
        %6951 = vmatprep.subr.bf16.mxu0 0
        %6952 = vmatpush1.bf16.msra.mxu0 %v6899
        %6953 = vmatprep.subr.bf16.mxu0 0
        %6954 = vmatpush1.bf16.msra.mxu0 %v6900
        %6955 = vmatprep.subr.bf16.mxu0 0
        %6956 = vmatpush1.bf16.msra.mxu0 %v6901
        %6957 = vmatprep.subr.bf16.mxu0 0
        %6958 = vmatpush1.bf16.msra.mxu0 %v6902
        %6959 = vmatprep.subr.bf16.mxu0 0
        %6960 = vmatpush1.bf16.msra.mxu0 %v6903
        %6961 = vmatprep.subr.bf16.mxu0 0
        %6962 = vmatpush1.bf16.msra.mxu0 %v6904
        %6963 = vmatprep.subr.bf16.mxu0 0
        %6964 = vmatpush1.bf16.msra.mxu0 %v6905
        %6965 = vmatprep.subr.bf16.mxu0 0
        %6966 = vmatpush1.bf16.msra.mxu0 %v6906
        %6967 = vmatprep.subr.bf16.mxu0 0
        %6968 = vmatpush1.bf16.msra.mxu0 %v6907
        %6969 = vmatprep.subr.bf16.mxu0 0
        %6970 = vmatpush1.bf16.msra.mxu0 %v6908
        %6971 = vmatprep.subr.bf16.mxu0 0
        %6972 = vmatpush1.bf16.msra.mxu0 %v6909
        %6973 = vmatprep.subr.bf16.mxu0 0
        %6974 = vmatpush1.bf16.msra.mxu0 %v6910
        %6975 = vmatprep.mubr.bf16.mxu0 %v6655
        %6976 = vmatmul.mubr.bf16.gmra.mrb[0].mxu0 %v6654
        %v6977 = vpop.f32.mrb[0].mxu0
        %v6978 = vadd.f32 0.0, %v6977
        %v6979 = vpop.f32.mrb[0].mxu0
        %v6980 = vpop.f32.mrb[0].mxu0
        %v6981 = vadd.f32 0.0, %v6980
        %v6982 = vpop.f32.mrb[0].mxu0
        %6983 = vmatprep.mubr.bf16.mxu0 %v6658
        %6984 = vmatmul.mubr.bf16.gmra.mrb[0].mxu0 %v6657
        %v6985 = vpop.f32.mrb[0].mxu0
        %v6986 = vadd.f32 0.0, %v6985
        %v6987 = vpop.f32.mrb[0].mxu0
        %v6988 = vpop.f32.mrb[0].mxu0
        %v6989 = vadd.f32 0.0, %v6988
        %v6990 = vpop.f32.mrb[0].mxu0
        %6991 = vmatprep.mubr.bf16.mxu0 %v6661
        %6992 = vmatmul.mubr.bf16.gmra.mrb[0].mxu0 %v6660
        %v6993 = vpop.f32.mrb[0].mxu0
        %v6994 = vadd.f32 0.0, %v6993
        %v6995 = vpop.f32.mrb[0].mxu0
        %v6996 = vpop.f32.mrb[0].mxu0
        %v6997 = vadd.f32 0.0, %v6996
        %v6998 = vpop.f32.mrb[0].mxu0
        %6999 = vmatprep.mubr.bf16.mxu0 %v6664
        %7000 = vmatmul.mubr.bf16.gmra.mrb[0].mxu0 %v6663
        %v7001 = vpop.f32.mrb[0].mxu0
        %v7002 = vadd.f32 0.0, %v7001
        %v7003 = vpop.f32.mrb[0].mxu0
        %v7004 = vpop.f32.mrb[0].mxu0
        %v7005 = vadd.f32 0.0, %v7004
        %v7006 = vpop.f32.mrb[0].mxu0
        %7007 = vmatprep.mubr.bf16.mxu0 %v6667
        %7008 = vmatmul.mubr.bf16.gmra.mrb[0].mxu0 %v6666
        %v7009 = vpop.f32.mrb[0].mxu0
        %v7010 = vadd.f32 0.0, %v7009
        %v7011 = vpop.f32.mrb[0].mxu0
        %v7012 = vpop.f32.mrb[0].mxu0
        %v7013 = vadd.f32 0.0, %v7012
        %v7014 = vpop.f32.mrb[0].mxu0
        %7015 = vmatprep.mubr.bf16.mxu0 %v6670
        %7016 = vmatmul.mubr.bf16.gmra.mrb[0].mxu0 %v6669
        %v7017 = vpop.f32.mrb[0].mxu0
        %v7018 = vadd.f32 0.0, %v7017
        %v7019 = vpop.f32.mrb[0].mxu0
        %v7020 = vpop.f32.mrb[0].mxu0
        %v7021 = vadd.f32 0.0, %v7020
        %v7022 = vpop.f32.mrb[0].mxu0
        %7023 = vmatprep.mubr.bf16.mxu0 %v6673
        %7024 = vmatmul.mubr.bf16.gmra.mrb[0].mxu0 %v6672
        %v7025 = vpop.f32.mrb[0].mxu0
        %v7026 = vadd.f32 0.0, %v7025
        %v7027 = vpop.f32.mrb[0].mxu0
        %v7028 = vpop.f32.mrb[0].mxu0
        %v7029 = vadd.f32 0.0, %v7028
        %v7030 = vpop.f32.mrb[0].mxu0
        %7031 = vmatprep.mubr.bf16.mxu0 %v6676
        %7032 = vmatmul.mubr.bf16.gmra.mrb[0].mxu0 %v6675
        %v7033 = vpop.f32.mrb[0].mxu0
        %v7034 = vadd.f32 0.0, %v7033
        %v7035 = vpop.f32.mrb[0].mxu0
        %v7036 = vpop.f32.mrb[0].mxu0
        %v7037 = vadd.f32 0.0, %v7036
        %v7038 = vpop.f32.mrb[0].mxu0
        %7039 = vmatprep.mubr.bf16.mxu0 %v6679
        %7040 = vmatmul.mubr.bf16.gmra.mrb[0].mxu0 %v6678
        %v7041 = vpop.f32.mrb[0].mxu0
        %v7042 = vadd.f32 0.0, %v7041
        %v7043 = vpop.f32.mrb[0].mxu0
        %v7044 = vpop.f32.mrb[0].mxu0
        %v7045 = vadd.f32 0.0, %v7044
        %v7046 = vpop.f32.mrb[0].mxu0
        %7047 = vmatprep.mubr.bf16.mxu0 %v6682
        %7048 = vmatmul.mubr.bf16.gmra.mrb[0].mxu0 %v6681
        %v7049 = vpop.f32.mrb[0].mxu0
        %v7050 = vadd.f32 0.0, %v7049
        %v7051 = vpop.f32.mrb[0].mxu0
        %v7052 = vpop.f32.mrb[0].mxu0
        %v7053 = vadd.f32 0.0, %v7052
        %v7054 = vpop.f32.mrb[0].mxu0
        %7055 = vmatprep.mubr.bf16.mxu0 %v6685
        %7056 = vmatmul.mubr.bf16.gmra.mrb[0].mxu0 %v6684
        %v7057 = vpop.f32.mrb[0].mxu0
        %v7058 = vadd.f32 0.0, %v7057
        %v7059 = vpop.f32.mrb[0].mxu0
        %v7060 = vpop.f32.mrb[0].mxu0
        %v7061 = vadd.f32 0.0, %v7060
        %v7062 = vpop.f32.mrb[0].mxu0
        %7063 = vmatprep.mubr.bf16.mxu0 %v6688
        %7064 = vmatmul.mubr.bf16.gmra.mrb[0].mxu0 %v6687
        %v7065 = vpop.f32.mrb[0].mxu0
        %v7066 = vadd.f32 0.0, %v7065
        %v7067 = vpop.f32.mrb[0].mxu0
        %v7068 = vpop.f32.mrb[0].mxu0
        %v7069 = vadd.f32 0.0, %v7068
        %v7070 = vpop.f32.mrb[0].mxu0
        %7071 = vmatprep.mubr.bf16.mxu0 %v6691
        %7072 = vmatmul.mubr.bf16.gmra.mrb[0].mxu0 %v6690
        %v7073 = vpop.f32.mrb[0].mxu0
        %v7074 = vadd.f32 0.0, %v7073
        %v7075 = vpop.f32.mrb[0].mxu0
        %v7076 = vpop.f32.mrb[0].mxu0
        %v7077 = vadd.f32 0.0, %v7076
        %v7078 = vpop.f32.mrb[0].mxu0
        %7079 = vmatprep.mubr.bf16.mxu0 %v6694
        %7080 = vmatmul.mubr.bf16.gmra.mrb[0].mxu0 %v6693
        %v7081 = vpop.f32.mrb[0].mxu0
        %v7082 = vadd.f32 0.0, %v7081
        %v7083 = vpop.f32.mrb[0].mxu0
        %v7084 = vpop.f32.mrb[0].mxu0
        %v7085 = vadd.f32 0.0, %v7084
        %v7086 = vpop.f32.mrb[0].mxu0
        %7087 = vmatprep.mubr.bf16.mxu0 %v6697
        %7088 = vmatmul.mubr.bf16.gmra.mrb[0].mxu0 %v6696
        %v7089 = vpop.f32.mrb[0].mxu0
        %v7090 = vadd.f32 0.0, %v7089
        %v7091 = vpop.f32.mrb[0].mxu0
        %v7092 = vpop.f32.mrb[0].mxu0
        %v7093 = vadd.f32 0.0, %v7092
        %v7094 = vpop.f32.mrb[0].mxu0
        %7095 = vmatprep.mubr.bf16.mxu0 %v6700
        %7096 = vmatmul.mubr.bf16.gmra.mrb[0].mxu0 %v6699
        %v7097 = vpop.f32.mrb[0].mxu0
        %v7098 = vadd.f32 0.0, %v7097
        %v7099 = vpop.f32.mrb[0].mxu0
        %v7100 = vpop.f32.mrb[0].mxu0
        %v7101 = vadd.f32 0.0, %v7100
        %v7102 = vpop.f32.mrb[0].mxu0
        %7103 = vmatprep.mubr.bf16.mxu0 %v6703
        %7104 = vmatmul.mubr.bf16.gmra.mrb[0].mxu0 %v6702
        %v7105 = vpop.f32.mrb[0].mxu0
        %v7106 = vadd.f32 0.0, %v7105
        %v7107 = vpop.f32.mrb[0].mxu0
        %v7108 = vpop.f32.mrb[0].mxu0
        %v7109 = vadd.f32 0.0, %v7108
        %v7110 = vpop.f32.mrb[0].mxu0
        %7111 = vmatprep.mubr.bf16.mxu0 %v6706
        %7112 = vmatmul.mubr.bf16.gmra.mrb[0].mxu0 %v6705
        %v7113 = vpop.f32.mrb[0].mxu0
        %v7114 = vadd.f32 0.0, %v7113
        %v7115 = vpop.f32.mrb[0].mxu0
        %v7116 = vpop.f32.mrb[0].mxu0
        %v7117 = vadd.f32 0.0, %v7116
        %v7118 = vpop.f32.mrb[0].mxu0
        %7119 = vmatprep.mubr.bf16.mxu0 %v6709
        %7120 = vmatmul.mubr.bf16.gmra.mrb[0].mxu0 %v6708
        %v7121 = vpop.f32.mrb[0].mxu0
        %v7122 = vadd.f32 0.0, %v7121
        %v7123 = vpop.f32.mrb[0].mxu0
        %v7124 = vpop.f32.mrb[0].mxu0
        %v7125 = vadd.f32 0.0, %v7124
        %v7126 = vpop.f32.mrb[0].mxu0
        %7127 = vmatprep.mubr.bf16.mxu0 %v6712
        %7128 = vmatmul.mubr.bf16.gmra.mrb[0].mxu0 %v6711
        %v7129 = vpop.f32.mrb[0].mxu0
        %v7130 = vadd.f32 0.0, %v7129
        %v7131 = vpop.f32.mrb[0].mxu0
        %v7132 = vpop.f32.mrb[0].mxu0
        %v7133 = vadd.f32 0.0, %v7132
        %v7134 = vpop.f32.mrb[0].mxu0
        %7135 = vmatprep.mubr.bf16.mxu0 %v6715
        %7136 = vmatmul.mubr.bf16.gmra.mrb[0].mxu0 %v6714
        %v7137 = vpop.f32.mrb[0].mxu0
        %v7138 = vadd.f32 0.0, %v7137
        %v7139 = vpop.f32.mrb[0].mxu0
        %v7140 = vpop.f32.mrb[0].mxu0
        %v7141 = vadd.f32 0.0, %v7140
        %v7142 = vpop.f32.mrb[0].mxu0
        %7143 = vmatprep.mubr.bf16.mxu0 %v6718
        %7144 = vmatmul.mubr.bf16.gmra.mrb[0].mxu0 %v6717
        %v7145 = vpop.f32.mrb[0].mxu0
        %v7146 = vadd.f32 0.0, %v7145
        %v7147 = vpop.f32.mrb[0].mxu0
        %v7148 = vpop.f32.mrb[0].mxu0
        %v7149 = vadd.f32 0.0, %v7148
        %v7150 = vpop.f32.mrb[0].mxu0
        %7151 = vmatprep.mubr.bf16.mxu0 %v6721
        %7152 = vmatmul.mubr.bf16.gmra.mrb[0].mxu0 %v6720
        %v7153 = vpop.f32.mrb[0].mxu0
        %v7154 = vadd.f32 0.0, %v7153
        %v7155 = vpop.f32.mrb[0].mxu0
        %v7156 = vpop.f32.mrb[0].mxu0
        %v7157 = vadd.f32 0.0, %v7156
        %v7158 = vpop.f32.mrb[0].mxu0
        %7159 = vmatprep.mubr.bf16.mxu0 %v6724
        %7160 = vmatmul.mubr.bf16.gmra.mrb[0].mxu0 %v6723
        %v7161 = vpop.f32.mrb[0].mxu0
        %v7162 = vadd.f32 0.0, %v7161
        %v7163 = vpop.f32.mrb[0].mxu0
        %v7164 = vpop.f32.mrb[0].mxu0
        %v7165 = vadd.f32 0.0, %v7164
        %v7166 = vpop.f32.mrb[0].mxu0
        %7167 = vmatprep.mubr.bf16.mxu0 %v6727
        %7168 = vmatmul.mubr.bf16.gmra.mrb[0].mxu0 %v6726
        %v7169 = vpop.f32.mrb[0].mxu0
        %v7170 = vadd.f32 0.0, %v7169
        %v7171 = vpop.f32.mrb[0].mxu0
        %v7172 = vpop.f32.mrb[0].mxu0
        %v7173 = vadd.f32 0.0, %v7172
        %v7174 = vpop.f32.mrb[0].mxu0
        %7175 = vmatprep.mubr.bf16.mxu0 %v6730
        %7176 = vmatmul.mubr.bf16.gmra.mrb[0].mxu0 %v6729
        %v7177 = vpop.f32.mrb[0].mxu0
        %v7178 = vadd.f32 0.0, %v7177
        %v7179 = vpop.f32.mrb[0].mxu0
        %v7180 = vpop.f32.mrb[0].mxu0
        %v7181 = vadd.f32 0.0, %v7180
        %v7182 = vpop.f32.mrb[0].mxu0
        %7183 = vmatprep.mubr.bf16.mxu0 %v6733
        %7184 = vmatmul.mubr.bf16.gmra.mrb[0].mxu0 %v6732
        %v7185 = vpop.f32.mrb[0].mxu0
        %v7186 = vadd.f32 0.0, %v7185
        %v7187 = vpop.f32.mrb[0].mxu0
        %v7188 = vpop.f32.mrb[0].mxu0
        %v7189 = vadd.f32 0.0, %v7188
        %v7190 = vpop.f32.mrb[0].mxu0
        %7191 = vmatprep.mubr.bf16.mxu0 %v6736
        %7192 = vmatmul.mubr.bf16.gmra.mrb[0].mxu0 %v6735
        %v7193 = vpop.f32.mrb[0].mxu0
        %v7194 = vadd.f32 0.0, %v7193
        %v7195 = vpop.f32.mrb[0].mxu0
        %v7196 = vpop.f32.mrb[0].mxu0
        %v7197 = vadd.f32 0.0, %v7196
        %v7198 = vpop.f32.mrb[0].mxu0
        %7199 = vmatprep.mubr.bf16.mxu0 %v6739
        %7200 = vmatmul.mubr.bf16.gmra.mrb[0].mxu0 %v6738
        %v7201 = vpop.f32.mrb[0].mxu0
        %v7202 = vadd.f32 0.0, %v7201
        %v7203 = vpop.f32.mrb[0].mxu0
        %v7204 = vpop.f32.mrb[0].mxu0
        %v7205 = vadd.f32 0.0, %v7204
        %v7206 = vpop.f32.mrb[0].mxu0
        %7207 = vmatprep.mubr.bf16.mxu0 %v6742
        %7208 = vmatmul.mubr.bf16.gmra.mrb[0].mxu0 %v6741
        %v7209 = vpop.f32.mrb[0].mxu0
        %v7210 = vadd.f32 0.0, %v7209
        %v7211 = vpop.f32.mrb[0].mxu0
        %v7212 = vpop.f32.mrb[0].mxu0
        %v7213 = vadd.f32 0.0, %v7212
        %v7214 = vpop.f32.mrb[0].mxu0
        %7215 = vmatprep.mubr.bf16.mxu0 %v6745
        %7216 = vmatmul.mubr.bf16.gmra.mrb[0].mxu0 %v6744
        %v7217 = vpop.f32.mrb[0].mxu0
        %v7218 = vadd.f32 0.0, %v7217
        %v7219 = vpop.f32.mrb[0].mxu0
        %v7220 = vpop.f32.mrb[0].mxu0
        %v7221 = vadd.f32 0.0, %v7220
        %v7222 = vpop.f32.mrb[0].mxu0
        %7223 = vmatprep.mubr.bf16.mxu0 %v6748
        %7224 = vmatmul.mubr.bf16.gmra.mrb[0].mxu0 %v6747
        %v7225 = vpop.f32.mrb[0].mxu0
        %v7226 = vadd.f32 0.0, %v7225
        %v7227 = vpop.f32.mrb[0].mxu0
        %v7228 = vpop.f32.mrb[0].mxu0
        %v7229 = vadd.f32 0.0, %v7228
        %v7230 = vpop.f32.mrb[0].mxu0
        %7231 = vdwg.mxu0
        %7232 = vmatprep.subr.bf16.mxu0 0
        %7233 = vmatpush1.bf16.msra.mxu0 %v6911
        %7234 = vmatprep.subr.bf16.mxu0 0
        %7235 = vmatpush1.bf16.msra.mxu0 %v6912
        %7236 = vmatprep.subr.bf16.mxu0 0
        %7237 = vmatpush1.bf16.msra.mxu0 %v6913
        %7238 = vmatprep.subr.bf16.mxu0 0
        %7239 = vmatpush1.bf16.msra.mxu0 %v6914
        %7240 = vmatprep.subr.bf16.mxu0 0
        %7241 = vmatpush1.bf16.msra.mxu0 %v6915
        %7242 = vmatprep.subr.bf16.mxu0 0
        %7243 = vmatpush1.bf16.msra.mxu0 %v6916
        %7244 = vmatprep.subr.bf16.mxu0 0
        %7245 = vmatpush1.bf16.msra.mxu0 %v6917
        %7246 = vmatprep.subr.bf16.mxu0 0
        %7247 = vmatpush1.bf16.msra.mxu0 %v6918
        %7248 = vmatprep.subr.bf16.mxu0 0
        %7249 = vmatpush1.bf16.msra.mxu0 0
        %7250 = vmatprep.subr.bf16.mxu0 0
        %7251 = vmatpush1.bf16.msra.mxu0 0
        %7252 = vmatprep.subr.bf16.mxu0 0
        %7253 = vmatpush1.bf16.msra.mxu0 0
        %7254 = vmatprep.subr.bf16.mxu0 0
        %7255 = vmatpush1.bf16.msra.mxu0 0
        %7256 = vmatprep.subr.bf16.mxu0 0
        %7257 = vmatpush1.bf16.msra.mxu0 0
        %7258 = vmatprep.subr.bf16.mxu0 0
        %7259 = vmatpush1.bf16.msra.mxu0 0
        %7260 = vmatprep.subr.bf16.mxu0 0
        %7261 = vmatpush1.bf16.msra.mxu0 0
        %7262 = vmatprep.subr.bf16.mxu0 0
        %7263 = vmatpush1.bf16.msra.mxu0 0
        %7264 = vmatprep.mubr.bf16.mxu0 0
        %7265 = vmatmul.mubr.bf16.gmra.mrb[0].mxu0 %v6656
        %v7266 = vpop.f32.mrb[0].mxu0
        %v7267 = vadd.f32 %v6978, %v7266
        %v7268 = vpop.f32.mrb[0].mxu0
        %v7269 = vpop.f32.mrb[0].mxu0
        %v7270 = vadd.f32 %v6981, %v7269
        %v7271 = vpop.f32.mrb[0].mxu0
        %7272 = vmatprep.mubr.bf16.mxu0 0
        %7273 = vmatmul.mubr.bf16.gmra.mrb[0].mxu0 %v6659
        %v7274 = vpop.f32.mrb[0].mxu0
        %v7275 = vadd.f32 %v6986, %v7274
        %v7276 = vpop.f32.mrb[0].mxu0
        %v7277 = vpop.f32.mrb[0].mxu0
        %v7278 = vadd.f32 %v6989, %v7277
        %v7279 = vpop.f32.mrb[0].mxu0
        %7280 = vmatprep.mubr.bf16.mxu0 0
        %7281 = vmatmul.mubr.bf16.gmra.mrb[0].mxu0 %v6662
        %v7282 = vpop.f32.mrb[0].mxu0
        %v7283 = vadd.f32 %v6994, %v7282
        %v7284 = vpop.f32.mrb[0].mxu0
        %v7285 = vpop.f32.mrb[0].mxu0
        %v7286 = vadd.f32 %v6997, %v7285
        %v7287 = vpop.f32.mrb[0].mxu0
        %7288 = vmatprep.mubr.bf16.mxu0 0
        %7289 = vmatmul.mubr.bf16.gmra.mrb[0].mxu0 %v6665
        %v7290 = vpop.f32.mrb[0].mxu0
        %v7291 = vadd.f32 %v7002, %v7290
        %v7292 = vpop.f32.mrb[0].mxu0
        %v7293 = vpop.f32.mrb[0].mxu0
        %v7294 = vadd.f32 %v7005, %v7293
        %v7295 = vpop.f32.mrb[0].mxu0
        %7296 = vmatprep.mubr.bf16.mxu0 0
        %7297 = vmatmul.mubr.bf16.gmra.mrb[0].mxu0 %v6668
        %v7298 = vpop.f32.mrb[0].mxu0
        %v7299 = vadd.f32 %v7010, %v7298
        %v7300 = vpop.f32.mrb[0].mxu0
        %v7301 = vpop.f32.mrb[0].mxu0
        %v7302 = vadd.f32 %v7013, %v7301
        %v7303 = vpop.f32.mrb[0].mxu0
        %7304 = vmatprep.mubr.bf16.mxu0 0
        %7305 = vmatmul.mubr.bf16.gmra.mrb[0].mxu0 %v6671
        %v7306 = vpop.f32.mrb[0].mxu0
        %v7307 = vadd.f32 %v7018, %v7306
        %v7308 = vpop.f32.mrb[0].mxu0
        %v7309 = vpop.f32.mrb[0].mxu0
        %v7310 = vadd.f32 %v7021, %v7309
        %v7311 = vpop.f32.mrb[0].mxu0
        %7312 = vmatprep.mubr.bf16.mxu0 0
        %7313 = vmatmul.mubr.bf16.gmra.mrb[0].mxu0 %v6674
        %v7314 = vpop.f32.mrb[0].mxu0
        %v7315 = vadd.f32 %v7026, %v7314
        %v7316 = vpop.f32.mrb[0].mxu0
        %v7317 = vpop.f32.mrb[0].mxu0
        %v7318 = vadd.f32 %v7029, %v7317
        %v7319 = vpop.f32.mrb[0].mxu0
        %7320 = vmatprep.mubr.bf16.mxu0 0
        %7321 = vmatmul.mubr.bf16.gmra.mrb[0].mxu0 %v6677
        %v7322 = vpop.f32.mrb[0].mxu0
        %v7323 = vadd.f32 %v7034, %v7322
        %v7324 = vpop.f32.mrb[0].mxu0
        %v7325 = vpop.f32.mrb[0].mxu0
        %v7326 = vadd.f32 %v7037, %v7325
        %v7327 = vpop.f32.mrb[0].mxu0
        %7328 = vmatprep.mubr.bf16.mxu0 0
        %7329 = vmatmul.mubr.bf16.gmra.mrb[0].mxu0 %v6680
        %v7330 = vpop.f32.mrb[0].mxu0
        %v7331 = vadd.f32 %v7042, %v7330
        %v7332 = vpop.f32.mrb[0].mxu0
        %v7333 = vpop.f32.mrb[0].mxu0
        %v7334 = vadd.f32 %v7045, %v7333
        %v7335 = vpop.f32.mrb[0].mxu0
        %7336 = vmatprep.mubr.bf16.mxu0 0
        %7337 = vmatmul.mubr.bf16.gmra.mrb[0].mxu0 %v6683
        %v7338 = vpop.f32.mrb[0].mxu0
        %v7339 = vadd.f32 %v7050, %v7338
        %v7340 = vpop.f32.mrb[0].mxu0
        %v7341 = vpop.f32.mrb[0].mxu0
        %v7342 = vadd.f32 %v7053, %v7341
        %v7343 = vpop.f32.mrb[0].mxu0
        %7344 = vmatprep.mubr.bf16.mxu0 0
        %7345 = vmatmul.mubr.bf16.gmra.mrb[0].mxu0 %v6686
        %v7346 = vpop.f32.mrb[0].mxu0
        %v7347 = vadd.f32 %v7058, %v7346
        %v7348 = vpop.f32.mrb[0].mxu0
        %v7349 = vpop.f32.mrb[0].mxu0
        %v7350 = vadd.f32 %v7061, %v7349
        %v7351 = vpop.f32.mrb[0].mxu0
        %7352 = vmatprep.mubr.bf16.mxu0 0
        %7353 = vmatmul.mubr.bf16.gmra.mrb[0].mxu0 %v6689
        %v7354 = vpop.f32.mrb[0].mxu0
        %v7355 = vadd.f32 %v7066, %v7354
        %v7356 = vpop.f32.mrb[0].mxu0
        %v7357 = vpop.f32.mrb[0].mxu0
        %v7358 = vadd.f32 %v7069, %v7357
        %v7359 = vpop.f32.mrb[0].mxu0
        %7360 = vmatprep.mubr.bf16.mxu0 0
        %7361 = vmatmul.mubr.bf16.gmra.mrb[0].mxu0 %v6692
        %v7362 = vpop.f32.mrb[0].mxu0
        %v7363 = vadd.f32 %v7074, %v7362
        %v7364 = vpop.f32.mrb[0].mxu0
        %v7365 = vpop.f32.mrb[0].mxu0
        %v7366 = vadd.f32 %v7077, %v7365
        %v7367 = vpop.f32.mrb[0].mxu0
        %7368 = vmatprep.mubr.bf16.mxu0 0
        %7369 = vmatmul.mubr.bf16.gmra.mrb[0].mxu0 %v6695
        %v7370 = vpop.f32.mrb[0].mxu0
        %v7371 = vadd.f32 %v7082, %v7370
        %v7372 = vpop.f32.mrb[0].mxu0
        %v7373 = vpop.f32.mrb[0].mxu0
        %v7374 = vadd.f32 %v7085, %v7373
        %v7375 = vpop.f32.mrb[0].mxu0
        %7376 = vmatprep.mubr.bf16.mxu0 0
        %7377 = vmatmul.mubr.bf16.gmra.mrb[0].mxu0 %v6698
        %v7378 = vpop.f32.mrb[0].mxu0
        %v7379 = vadd.f32 %v7090, %v7378
        %v7380 = vpop.f32.mrb[0].mxu0
        %v7381 = vpop.f32.mrb[0].mxu0
        %v7382 = vadd.f32 %v7093, %v7381
        %v7383 = vpop.f32.mrb[0].mxu0
        %7384 = vmatprep.mubr.bf16.mxu0 0
        %7385 = vmatmul.mubr.bf16.gmra.mrb[0].mxu0 %v6701
        %v7386 = vpop.f32.mrb[0].mxu0
        %v7387 = vadd.f32 %v7098, %v7386
        %v7388 = vpop.f32.mrb[0].mxu0
        %v7389 = vpop.f32.mrb[0].mxu0
        %v7390 = vadd.f32 %v7101, %v7389
        %v7391 = vpop.f32.mrb[0].mxu0
        %7392 = vmatprep.mubr.bf16.mxu0 0
        %7393 = vmatmul.mubr.bf16.gmra.mrb[0].mxu0 %v6704
        %v7394 = vpop.f32.mrb[0].mxu0
        %v7395 = vadd.f32 %v7106, %v7394
        %v7396 = vpop.f32.mrb[0].mxu0
        %v7397 = vpop.f32.mrb[0].mxu0
        %v7398 = vadd.f32 %v7109, %v7397
        %v7399 = vpop.f32.mrb[0].mxu0
        %7400 = vmatprep.mubr.bf16.mxu0 0
        %7401 = vmatmul.mubr.bf16.gmra.mrb[0].mxu0 %v6707
        %v7402 = vpop.f32.mrb[0].mxu0
        %v7403 = vadd.f32 %v7114, %v7402
        %v7404 = vpop.f32.mrb[0].mxu0
        %v7405 = vpop.f32.mrb[0].mxu0
        %v7406 = vadd.f32 %v7117, %v7405
        %v7407 = vpop.f32.mrb[0].mxu0
        %7408 = vmatprep.mubr.bf16.mxu0 0
        %7409 = vmatmul.mubr.bf16.gmra.mrb[0].mxu0 %v6710
        %v7410 = vpop.f32.mrb[0].mxu0
        %v7411 = vadd.f32 %v7122, %v7410
        %v7412 = vpop.f32.mrb[0].mxu0
        %v7413 = vpop.f32.mrb[0].mxu0
        %v7414 = vadd.f32 %v7125, %v7413
        %v7415 = vpop.f32.mrb[0].mxu0
        %7416 = vmatprep.mubr.bf16.mxu0 0
        %7417 = vmatmul.mubr.bf16.gmra.mrb[0].mxu0 %v6713
        %v7418 = vpop.f32.mrb[0].mxu0
        %v7419 = vadd.f32 %v7130, %v7418
        %v7420 = vpop.f32.mrb[0].mxu0
        %v7421 = vpop.f32.mrb[0].mxu0
        %v7422 = vadd.f32 %v7133, %v7421
        %v7423 = vpop.f32.mrb[0].mxu0
        %7424 = vmatprep.mubr.bf16.mxu0 0
        %7425 = vmatmul.mubr.bf16.gmra.mrb[0].mxu0 %v6716
        %v7426 = vpop.f32.mrb[0].mxu0
        %v7427 = vadd.f32 %v7138, %v7426
        %v7428 = vpop.f32.mrb[0].mxu0
        %v7429 = vpop.f32.mrb[0].mxu0
        %v7430 = vadd.f32 %v7141, %v7429
        %v7431 = vpop.f32.mrb[0].mxu0
        %7432 = vmatprep.mubr.bf16.mxu0 0
        %7433 = vmatmul.mubr.bf16.gmra.mrb[0].mxu0 %v6719
        %v7434 = vpop.f32.mrb[0].mxu0
        %v7435 = vadd.f32 %v7146, %v7434
        %v7436 = vpop.f32.mrb[0].mxu0
        %v7437 = vpop.f32.mrb[0].mxu0
        %v7438 = vadd.f32 %v7149, %v7437
        %v7439 = vpop.f32.mrb[0].mxu0
        %7440 = vmatprep.mubr.bf16.mxu0 0
        %7441 = vmatmul.mubr.bf16.gmra.mrb[0].mxu0 %v6722
        %v7442 = vpop.f32.mrb[0].mxu0
        %v7443 = vadd.f32 %v7154, %v7442
        %v7444 = vpop.f32.mrb[0].mxu0
        %v7445 = vpop.f32.mrb[0].mxu0
        %v7446 = vadd.f32 %v7157, %v7445
        %v7447 = vpop.f32.mrb[0].mxu0
        %7448 = vmatprep.mubr.bf16.mxu0 0
        %7449 = vmatmul.mubr.bf16.gmra.mrb[0].mxu0 %v6725
        %v7450 = vpop.f32.mrb[0].mxu0
        %v7451 = vadd.f32 %v7162, %v7450
        %v7452 = vpop.f32.mrb[0].mxu0
        %v7453 = vpop.f32.mrb[0].mxu0
        %v7454 = vadd.f32 %v7165, %v7453
        %v7455 = vpop.f32.mrb[0].mxu0
        %7456 = vmatprep.mubr.bf16.mxu0 0
        %7457 = vmatmul.mubr.bf16.gmra.mrb[0].mxu0 %v6728
        %v7458 = vpop.f32.mrb[0].mxu0
        %v7459 = vadd.f32 %v7170, %v7458
        %v7460 = vpop.f32.mrb[0].mxu0
        %v7461 = vpop.f32.mrb[0].mxu0
        %v7462 = vadd.f32 %v7173, %v7461
        %v7463 = vpop.f32.mrb[0].mxu0
        %7464 = vmatprep.mubr.bf16.mxu0 0
        %7465 = vmatmul.mubr.bf16.gmra.mrb[0].mxu0 %v6731
        %v7466 = vpop.f32.mrb[0].mxu0
        %v7467 = vadd.f32 %v7178, %v7466
        %v7468 = vpop.f32.mrb[0].mxu0
        %v7469 = vpop.f32.mrb[0].mxu0
        %v7470 = vadd.f32 %v7181, %v7469
        %v7471 = vpop.f32.mrb[0].mxu0
        %7472 = vmatprep.mubr.bf16.mxu0 0
        %7473 = vmatmul.mubr.bf16.gmra.mrb[0].mxu0 %v6734
        %v7474 = vpop.f32.mrb[0].mxu0
        %v7475 = vadd.f32 %v7186, %v7474
        %v7476 = vpop.f32.mrb[0].mxu0
        %v7477 = vpop.f32.mrb[0].mxu0
        %v7478 = vadd.f32 %v7189, %v7477
        %v7479 = vpop.f32.mrb[0].mxu0
        %7480 = vmatprep.mubr.bf16.mxu0 0
        %7481 = vmatmul.mubr.bf16.gmra.mrb[0].mxu0 %v6737
        %v7482 = vpop.f32.mrb[0].mxu0
        %v7483 = vadd.f32 %v7194, %v7482
        %v7484 = vpop.f32.mrb[0].mxu0
        %v7485 = vpop.f32.mrb[0].mxu0
        %v7486 = vadd.f32 %v7197, %v7485
        %v7487 = vpop.f32.mrb[0].mxu0
        %7488 = vmatprep.mubr.bf16.mxu0 0
        %7489 = vmatmul.mubr.bf16.gmra.mrb[0].mxu0 %v6740
        %v7490 = vpop.f32.mrb[0].mxu0
        %v7491 = vadd.f32 %v7202, %v7490
        %v7492 = vpop.f32.mrb[0].mxu0
        %v7493 = vpop.f32.mrb[0].mxu0
        %v7494 = vadd.f32 %v7205, %v7493
        %v7495 = vpop.f32.mrb[0].mxu0
        %7496 = vmatprep.mubr.bf16.mxu0 0
        %7497 = vmatmul.mubr.bf16.gmra.mrb[0].mxu0 %v6743
        %v7498 = vpop.f32.mrb[0].mxu0
        %v7499 = vadd.f32 %v7210, %v7498
        %v7500 = vpop.f32.mrb[0].mxu0
        %v7501 = vpop.f32.mrb[0].mxu0
        %v7502 = vadd.f32 %v7213, %v7501
        %v7503 = vpop.f32.mrb[0].mxu0
        %7504 = vmatprep.mubr.bf16.mxu0 0
        %7505 = vmatmul.mubr.bf16.gmra.mrb[0].mxu0 %v6746
        %v7506 = vpop.f32.mrb[0].mxu0
        %v7507 = vadd.f32 %v7218, %v7506
        %v7508 = vpop.f32.mrb[0].mxu0
        %v7509 = vpop.f32.mrb[0].mxu0
        %v7510 = vadd.f32 %v7221, %v7509
        %v7511 = vpop.f32.mrb[0].mxu0
        %7512 = vmatprep.mubr.bf16.mxu0 0
        %7513 = vmatmul.mubr.bf16.gmra.mrb[0].mxu0 %v6749
        %v7514 = vpop.f32.mrb[0].mxu0
        %v7515 = vadd.f32 %v7226, %v7514
        %v7516 = vpop.f32.mrb[0].mxu0
        %v7517 = vpop.f32.mrb[0].mxu0
        %v7518 = vadd.f32 %v7229, %v7517
        %v7519 = vpop.f32.mrb[0].mxu0
        %7520 = vdwg.mxu0
        %v7521 = vld [vmem:[#allocation4] sm:$0xff]
        %v7522 = vld [vmem:[#allocation4 + $0x8] sm:$0xff]
        %v7523 = vld [vmem:[#allocation4 + $0x10] sm:$0xff]
        %v7524 = vld [vmem:[#allocation4 + $0x18] sm:$0xff]
        %v7525 = vld [vmem:[#allocation4 + $0x20] sm:$0xff]
        %v7526 = vld [vmem:[#allocation4 + $0x28] sm:$0xff]
        %v7527 = vld [vmem:[#allocation4 + $0x30] sm:$0xff]
        %v7528 = vld [vmem:[#allocation4 + $0x38] sm:$0xff]
        %v7529 = vld [vmem:[#allocation4 + $0x40] sm:$0xff]
        %v7530 = vld [vmem:[#allocation4 + $0x48] sm:$0xff]
        %v7531 = vld [vmem:[#allocation4 + $0x50] sm:$0xff]
        %v7532 = vld [vmem:[#allocation4 + $0x58] sm:$0xff]
        %v7533 = vld [vmem:[#allocation4 + $0x60] sm:$0xff]
        %v7534 = vld [vmem:[#allocation4 + $0x68] sm:$0xff]
        %v7535 = vld [vmem:[#allocation4 + $0x70] sm:$0xff]
        %v7536 = vld [vmem:[#allocation4 + $0x78] sm:$0xff]
        %v7537 = vld [vmem:[#allocation4 + $0x80] sm:$0xff]
        %v7538 = vld [vmem:[#allocation4 + $0x88] sm:$0xff]
        %v7539 = vld [vmem:[#allocation4 + $0x90] sm:$0xff]
        %v7540 = vld [vmem:[#allocation4 + $0x98] sm:$0xff]
        %v7541 = vld [vmem:[#allocation4 + $0xa0] sm:$0xff]
        %v7542 = vld [vmem:[#allocation4 + $0xa8] sm:$0xff]
        %v7543 = vld [vmem:[#allocation4 + $0xb0] sm:$0xff]
        %v7544 = vld [vmem:[#allocation4 + $0xb8] sm:$0xff]
        %v7545 = vld [vmem:[#allocation4 + $0xc0] sm:$0xff]
        %v7546 = vld [vmem:[#allocation4 + $0xc8] sm:$0xff]
        %v7547 = vld [vmem:[#allocation4 + $0xd0] sm:$0xff]
        %v7548 = vld [vmem:[#allocation4 + $0xd8] sm:$0xff]
        %v7549 = vld [vmem:[#allocation4 + $0xe0] sm:$0xff]
        %v7550 = vld [vmem:[#allocation4 + $0xe8] sm:$0xff]
        %v7551 = vld [vmem:[#allocation4 + $0xf0] sm:$0xff]
        %v7552 = vld [vmem:[#allocation4 + $0xf8] sm:$0xff]
        %v7553 = vld [vmem:[#allocation4 + $0x100] sm:$0xff]
        %v7554 = vld [vmem:[#allocation4 + $0x108] sm:$0xff]
        %v7555 = vld [vmem:[#allocation4 + $0x110] sm:$0xff]
        %v7556 = vld [vmem:[#allocation4 + $0x118] sm:$0xff]
        %v7557 = vld [vmem:[#allocation4 + $0x120] sm:$0xff]
        %v7558 = vld [vmem:[#allocation4 + $0x128] sm:$0xff]
        %v7559 = vld [vmem:[#allocation4 + $0x130] sm:$0xff]
        %v7560 = vld [vmem:[#allocation4 + $0x138] sm:$0xff]
        %v7561 = vld [vmem:[#allocation4 + $0x140] sm:$0xff]
        %v7562 = vld [vmem:[#allocation4 + $0x148] sm:$0xff]
        %v7563 = vld [vmem:[#allocation4 + $0x150] sm:$0xff]
        %v7564 = vld [vmem:[#allocation4 + $0x158] sm:$0xff]
        %v7565 = vld [vmem:[#allocation4 + $0x160] sm:$0xff]
        %v7566 = vld [vmem:[#allocation4 + $0x168] sm:$0xff]
        %v7567 = vld [vmem:[#allocation4 + $0x170] sm:$0xff]
        %v7568 = vld [vmem:[#allocation4 + $0x178] sm:$0xff]
        %v7569 = vld [vmem:[#allocation4 + $0x180] sm:$0xff]
        %v7570 = vld [vmem:[#allocation4 + $0x188] sm:$0xff]
        %v7571 = vld [vmem:[#allocation4 + $0x190] sm:$0xff]
        %v7572 = vld [vmem:[#allocation4 + $0x198] sm:$0xff]
        %v7573 = vld [vmem:[#allocation4 + $0x1a0] sm:$0xff]
        %v7574 = vld [vmem:[#allocation4 + $0x1a8] sm:$0xff]
        %v7575 = vld [vmem:[#allocation4 + $0x1b0] sm:$0xff]
        %v7576 = vld [vmem:[#allocation4 + $0x1b8] sm:$0xff]
        %v7577 = vld [vmem:[#allocation4 + $0x1c0] sm:$0xff]
        %v7578 = vld [vmem:[#allocation4 + $0x1c8] sm:$0xff]
        %v7579 = vld [vmem:[#allocation4 + $0x1d0] sm:$0xff]
        %v7580 = vld [vmem:[#allocation4 + $0x1d8] sm:$0xff]
        %v7581 = vld [vmem:[#allocation4 + $0x1e0] sm:$0xff]
        %v7582 = vld [vmem:[#allocation4 + $0x1e8] sm:$0xff]
        %v7583 = vld [vmem:[#allocation4 + $0x1f0] sm:$0xff]
        %v7584 = vld [vmem:[#allocation4 + $0x1f8] sm:$0xff]
        %v7585 = vadd.f32 %v7521, %v7267
        %v7586 = vadd.f32 %v7522, %v7270
        %v7587 = vadd.f32 %v7523, %v7275
        %v7588 = vadd.f32 %v7524, %v7278
        %v7589 = vadd.f32 %v7525, %v7283
        %v7590 = vadd.f32 %v7526, %v7286
        %v7591 = vadd.f32 %v7527, %v7291
        %v7592 = vadd.f32 %v7528, %v7294
        %v7593 = vadd.f32 %v7529, %v7299
        %v7594 = vadd.f32 %v7530, %v7302
        %v7595 = vadd.f32 %v7531, %v7307
        %v7596 = vadd.f32 %v7532, %v7310
        %v7597 = vadd.f32 %v7533, %v7315
        %v7598 = vadd.f32 %v7534, %v7318
        %v7599 = vadd.f32 %v7535, %v7323
        %v7600 = vadd.f32 %v7536, %v7326
        %v7601 = vadd.f32 %v7537, %v7331
        %v7602 = vadd.f32 %v7538, %v7334
        %v7603 = vadd.f32 %v7539, %v7339
        %v7604 = vadd.f32 %v7540, %v7342
        %v7605 = vadd.f32 %v7541, %v7347
        %v7606 = vadd.f32 %v7542, %v7350
        %v7607 = vadd.f32 %v7543, %v7355
        %v7608 = vadd.f32 %v7544, %v7358
        %v7609 = vadd.f32 %v7545, %v7363
        %v7610 = vadd.f32 %v7546, %v7366
        %v7611 = vadd.f32 %v7547, %v7371
        %v7612 = vadd.f32 %v7548, %v7374
        %v7613 = vadd.f32 %v7549, %v7379
        %v7614 = vadd.f32 %v7550, %v7382
        %v7615 = vadd.f32 %v7551, %v7387
        %v7616 = vadd.f32 %v7552, %v7390
        %v7617 = vadd.f32 %v7553, %v7395
        %v7618 = vadd.f32 %v7554, %v7398
        %v7619 = vadd.f32 %v7555, %v7403
        %v7620 = vadd.f32 %v7556, %v7406
        %v7621 = vadd.f32 %v7557, %v7411
        %v7622 = vadd.f32 %v7558, %v7414
        %v7623 = vadd.f32 %v7559, %v7419
        %v7624 = vadd.f32 %v7560, %v7422
        %v7625 = vadd.f32 %v7561, %v7427
        %v7626 = vadd.f32 %v7562, %v7430
        %v7627 = vadd.f32 %v7563, %v7435
        %v7628 = vadd.f32 %v7564, %v7438
        %v7629 = vadd.f32 %v7565, %v7443
        %v7630 = vadd.f32 %v7566, %v7446
        %v7631 = vadd.f32 %v7567, %v7451
        %v7632 = vadd.f32 %v7568, %v7454
        %v7633 = vadd.f32 %v7569, %v7459
        %v7634 = vadd.f32 %v7570, %v7462
        %v7635 = vadd.f32 %v7571, %v7467
        %v7636 = vadd.f32 %v7572, %v7470
        %v7637 = vadd.f32 %v7573, %v7475
        %v7638 = vadd.f32 %v7574, %v7478
        %v7639 = vadd.f32 %v7575, %v7483
        %v7640 = vadd.f32 %v7576, %v7486
        %v7641 = vadd.f32 %v7577, %v7491
        %v7642 = vadd.f32 %v7578, %v7494
        %v7643 = vadd.f32 %v7579, %v7499
        %v7644 = vadd.f32 %v7580, %v7502
        %v7645 = vadd.f32 %v7581, %v7507
        %v7646 = vadd.f32 %v7582, %v7510
        %v7647 = vadd.f32 %v7583, %v7515
        %v7648 = vadd.f32 %v7584, %v7518
        %7649 = vst [vmem:[#allocation4] sm:$0xff] %v7585
        %7650 = vst [vmem:[#allocation4 + $0x8] sm:$0xff] %v7586
        %7651 = vst [vmem:[#allocation4 + $0x10] sm:$0xff] %v7587
        %7652 = vst [vmem:[#allocation4 + $0x18] sm:$0xff] %v7588
        %7653 = vst [vmem:[#allocation4 + $0x20] sm:$0xff] %v7589
        %7654 = vst [vmem:[#allocation4 + $0x28] sm:$0xff] %v7590
        %7655 = vst [vmem:[#allocation4 + $0x30] sm:$0xff] %v7591
        %7656 = vst [vmem:[#allocation4 + $0x38] sm:$0xff] %v7592
        %7657 = vst [vmem:[#allocation4 + $0x40] sm:$0xff] %v7593
        %7658 = vst [vmem:[#allocation4 + $0x48] sm:$0xff] %v7594
        %7659 = vst [vmem:[#allocation4 + $0x50] sm:$0xff] %v7595
        %7660 = vst [vmem:[#allocation4 + $0x58] sm:$0xff] %v7596
        %7661 = vst [vmem:[#allocation4 + $0x60] sm:$0xff] %v7597
        %7662 = vst [vmem:[#allocation4 + $0x68] sm:$0xff] %v7598
        %7663 = vst [vmem:[#allocation4 + $0x70] sm:$0xff] %v7599
        %7664 = vst [vmem:[#allocation4 + $0x78] sm:$0xff] %v7600
        %7665 = vst [vmem:[#allocation4 + $0x80] sm:$0xff] %v7601
        %7666 = vst [vmem:[#allocation4 + $0x88] sm:$0xff] %v7602
        %7667 = vst [vmem:[#allocation4 + $0x90] sm:$0xff] %v7603
        %7668 = vst [vmem:[#allocation4 + $0x98] sm:$0xff] %v7604
        %7669 = vst [vmem:[#allocation4 + $0xa0] sm:$0xff] %v7605
        %7670 = vst [vmem:[#allocation4 + $0xa8] sm:$0xff] %v7606
        %7671 = vst [vmem:[#allocation4 + $0xb0] sm:$0xff] %v7607
        %7672 = vst [vmem:[#allocation4 + $0xb8] sm:$0xff] %v7608
        %7673 = vst [vmem:[#allocation4 + $0xc0] sm:$0xff] %v7609
        %7674 = vst [vmem:[#allocation4 + $0xc8] sm:$0xff] %v7610
        %7675 = vst [vmem:[#allocation4 + $0xd0] sm:$0xff] %v7611
        %7676 = vst [vmem:[#allocation4 + $0xd8] sm:$0xff] %v7612
        %7677 = vst [vmem:[#allocation4 + $0xe0] sm:$0xff] %v7613
        %7678 = vst [vmem:[#allocation4 + $0xe8] sm:$0xff] %v7614
        %7679 = vst [vmem:[#allocation4 + $0xf0] sm:$0xff] %v7615
        %7680 = vst [vmem:[#allocation4 + $0xf8] sm:$0xff] %v7616
        %7681 = vst [vmem:[#allocation4 + $0x100] sm:$0xff] %v7617
        %7682 = vst [vmem:[#allocation4 + $0x108] sm:$0xff] %v7618
        %7683 = vst [vmem:[#allocation4 + $0x110] sm:$0xff] %v7619
        %7684 = vst [vmem:[#allocation4 + $0x118] sm:$0xff] %v7620
        %7685 = vst [vmem:[#allocation4 + $0x120] sm:$0xff] %v7621
        %7686 = vst [vmem:[#allocation4 + $0x128] sm:$0xff] %v7622
        %7687 = vst [vmem:[#allocation4 + $0x130] sm:$0xff] %v7623
        %7688 = vst [vmem:[#allocation4 + $0x138] sm:$0xff] %v7624
        %7689 = vst [vmem:[#allocation4 + $0x140] sm:$0xff] %v7625
        %7690 = vst [vmem:[#allocation4 + $0x148] sm:$0xff] %v7626
        %7691 = vst [vmem:[#allocation4 + $0x150] sm:$0xff] %v7627
        %7692 = vst [vmem:[#allocation4 + $0x158] sm:$0xff] %v7628
        %7693 = vst [vmem:[#allocation4 + $0x160] sm:$0xff] %v7629
        %7694 = vst [vmem:[#allocation4 + $0x168] sm:$0xff] %v7630
        %7695 = vst [vmem:[#allocation4 + $0x170] sm:$0xff] %v7631
        %7696 = vst [vmem:[#allocation4 + $0x178] sm:$0xff] %v7632
        %7697 = vst [vmem:[#allocation4 + $0x180] sm:$0xff] %v7633
        %7698 = vst [vmem:[#allocation4 + $0x188] sm:$0xff] %v7634
        %7699 = vst [vmem:[#allocation4 + $0x190] sm:$0xff] %v7635
        %7700 = vst [vmem:[#allocation4 + $0x198] sm:$0xff] %v7636
        %7701 = vst [vmem:[#allocation4 + $0x1a0] sm:$0xff] %v7637
        %7702 = vst [vmem:[#allocation4 + $0x1a8] sm:$0xff] %v7638
        %7703 = vst [vmem:[#allocation4 + $0x1b0] sm:$0xff] %v7639
        %7704 = vst [vmem:[#allocation4 + $0x1b8] sm:$0xff] %v7640
        %7705 = vst [vmem:[#allocation4 + $0x1c0] sm:$0xff] %v7641
        %7706 = vst [vmem:[#allocation4 + $0x1c8] sm:$0xff] %v7642
        %7707 = vst [vmem:[#allocation4 + $0x1d0] sm:$0xff] %v7643
        %7708 = vst [vmem:[#allocation4 + $0x1d8] sm:$0xff] %v7644
        %7709 = vst [vmem:[#allocation4 + $0x1e0] sm:$0xff] %v7645
        %7710 = vst [vmem:[#allocation4 + $0x1e8] sm:$0xff] %v7646
        %7711 = vst [vmem:[#allocation4 + $0x1f0] sm:$0xff] %v7647
        %7712 = vst [vmem:[#allocation4 + $0x1f8] sm:$0xff] %v7648
        %v7713 = vld [vmem:[#allocation4] sm:$0xff]
        %v7714 = vld [vmem:[#allocation4 + $0x8] sm:$0xff]
        %v7715 = vld [vmem:[#allocation4 + $0x10] sm:$0xff]
        %v7716 = vld [vmem:[#allocation4 + $0x18] sm:$0xff]
        %v7717 = vld [vmem:[#allocation4 + $0x20] sm:$0xff]
        %v7718 = vld [vmem:[#allocation4 + $0x28] sm:$0xff]
        %v7719 = vld [vmem:[#allocation4 + $0x30] sm:$0xff]
        %v7720 = vld [vmem:[#allocation4 + $0x38] sm:$0xff]
        %v7721 = vld [vmem:[#allocation4 + $0x40] sm:$0xff]
        %v7722 = vld [vmem:[#allocation4 + $0x48] sm:$0xff]
        %v7723 = vld [vmem:[#allocation4 + $0x50] sm:$0xff]
        %v7724 = vld [vmem:[#allocation4 + $0x58] sm:$0xff]
        %v7725 = vld [vmem:[#allocation4 + $0x60] sm:$0xff]
        %v7726 = vld [vmem:[#allocation4 + $0x68] sm:$0xff]
        %v7727 = vld [vmem:[#allocation4 + $0x70] sm:$0xff]
        %v7728 = vld [vmem:[#allocation4 + $0x78] sm:$0xff]
        %v7729 = vld [vmem:[#allocation4 + $0x80] sm:$0xff]
        %v7730 = vld [vmem:[#allocation4 + $0x88] sm:$0xff]
        %v7731 = vld [vmem:[#allocation4 + $0x90] sm:$0xff]
        %v7732 = vld [vmem:[#allocation4 + $0x98] sm:$0xff]
        %v7733 = vld [vmem:[#allocation4 + $0xa0] sm:$0xff]
        %v7734 = vld [vmem:[#allocation4 + $0xa8] sm:$0xff]
        %v7735 = vld [vmem:[#allocation4 + $0xb0] sm:$0xff]
        %v7736 = vld [vmem:[#allocation4 + $0xb8] sm:$0xff]
        %v7737 = vld [vmem:[#allocation4 + $0xc0] sm:$0xff]
        %v7738 = vld [vmem:[#allocation4 + $0xc8] sm:$0xff]
        %v7739 = vld [vmem:[#allocation4 + $0xd0] sm:$0xff]
        %v7740 = vld [vmem:[#allocation4 + $0xd8] sm:$0xff]
        %v7741 = vld [vmem:[#allocation4 + $0xe0] sm:$0xff]
        %v7742 = vld [vmem:[#allocation4 + $0xe8] sm:$0xff]
        %v7743 = vld [vmem:[#allocation4 + $0xf0] sm:$0xff]
        %v7744 = vld [vmem:[#allocation4 + $0xf8] sm:$0xff]
        %v7745 = vld [vmem:[#allocation4 + $0x100] sm:$0xff]
        %v7746 = vld [vmem:[#allocation4 + $0x108] sm:$0xff]
        %v7747 = vld [vmem:[#allocation4 + $0x110] sm:$0xff]
        %v7748 = vld [vmem:[#allocation4 + $0x118] sm:$0xff]
        %v7749 = vld [vmem:[#allocation4 + $0x120] sm:$0xff]
        %v7750 = vld [vmem:[#allocation4 + $0x128] sm:$0xff]
        %v7751 = vld [vmem:[#allocation4 + $0x130] sm:$0xff]
        %v7752 = vld [vmem:[#allocation4 + $0x138] sm:$0xff]
        %v7753 = vld [vmem:[#allocation4 + $0x140] sm:$0xff]
        %v7754 = vld [vmem:[#allocation4 + $0x148] sm:$0xff]
        %v7755 = vld [vmem:[#allocation4 + $0x150] sm:$0xff]
        %v7756 = vld [vmem:[#allocation4 + $0x158] sm:$0xff]
        %v7757 = vld [vmem:[#allocation4 + $0x160] sm:$0xff]
        %v7758 = vld [vmem:[#allocation4 + $0x168] sm:$0xff]
        %v7759 = vld [vmem:[#allocation4 + $0x170] sm:$0xff]
        %v7760 = vld [vmem:[#allocation4 + $0x178] sm:$0xff]
        %v7761 = vld [vmem:[#allocation4 + $0x180] sm:$0xff]
        %v7762 = vld [vmem:[#allocation4 + $0x188] sm:$0xff]
        %v7763 = vld [vmem:[#allocation4 + $0x190] sm:$0xff]
        %v7764 = vld [vmem:[#allocation4 + $0x198] sm:$0xff]
        %v7765 = vld [vmem:[#allocation4 + $0x1a0] sm:$0xff]
        %v7766 = vld [vmem:[#allocation4 + $0x1a8] sm:$0xff]
        %v7767 = vld [vmem:[#allocation4 + $0x1b0] sm:$0xff]
        %v7768 = vld [vmem:[#allocation4 + $0x1b8] sm:$0xff]
        %v7769 = vld [vmem:[#allocation4 + $0x1c0] sm:$0xff]
        %v7770 = vld [vmem:[#allocation4 + $0x1c8] sm:$0xff]
        %v7771 = vld [vmem:[#allocation4 + $0x1d0] sm:$0xff]
        %v7772 = vld [vmem:[#allocation4 + $0x1d8] sm:$0xff]
        %v7773 = vld [vmem:[#allocation4 + $0x1e0] sm:$0xff]
        %v7774 = vld [vmem:[#allocation4 + $0x1e8] sm:$0xff]
        %v7775 = vld [vmem:[#allocation4 + $0x1f0] sm:$0xff]
        %v7776 = vld [vmem:[#allocation4 + $0x1f8] sm:$0xff]
        %v7777 = vld [vmem:[%s4] sm:$0x1]
        %v7779 = vlaneseq
        %v7780 = vshrl.u32 %v7779, 7
        %v7781 = vsub.s32 0, %v7780
        %v7782 = vrot.slane %v7777, %v7781
        %v7784 = vadd.f32 %v7713, %v7782
        %v7785 = vadd.f32 %v7714, %v7782
        %v7786 = vadd.f32 %v7715, %v7782
        %v7787 = vadd.f32 %v7716, %v7782
        %v7788 = vadd.f32 %v7717, %v7782
        %v7789 = vadd.f32 %v7718, %v7782
        %v7790 = vadd.f32 %v7719, %v7782
        %v7791 = vadd.f32 %v7720, %v7782
        %v7792 = vadd.f32 %v7721, %v7782
        %v7793 = vadd.f32 %v7722, %v7782
        %v7794 = vadd.f32 %v7723, %v7782
        %v7795 = vadd.f32 %v7724, %v7782
        %v7796 = vadd.f32 %v7725, %v7782
        %v7797 = vadd.f32 %v7726, %v7782
        %v7798 = vadd.f32 %v7727, %v7782
        %v7799 = vadd.f32 %v7728, %v7782
        %v7800 = vadd.f32 %v7729, %v7782
        %v7801 = vadd.f32 %v7730, %v7782
        %v7802 = vadd.f32 %v7731, %v7782
        %v7803 = vadd.f32 %v7732, %v7782
        %v7804 = vadd.f32 %v7733, %v7782
        %v7805 = vadd.f32 %v7734, %v7782
        %v7806 = vadd.f32 %v7735, %v7782
        %v7807 = vadd.f32 %v7736, %v7782
        %v7808 = vadd.f32 %v7737, %v7782
        %v7809 = vadd.f32 %v7738, %v7782
        %v7810 = vadd.f32 %v7739, %v7782
        %v7811 = vadd.f32 %v7740, %v7782
        %v7812 = vadd.f32 %v7741, %v7782
        %v7813 = vadd.f32 %v7742, %v7782
        %v7814 = vadd.f32 %v7743, %v7782
        %v7815 = vadd.f32 %v7744, %v7782
        %v7816 = vadd.f32 %v7745, %v7782
        %v7817 = vadd.f32 %v7746, %v7782
        %v7818 = vadd.f32 %v7747, %v7782
        %v7819 = vadd.f32 %v7748, %v7782
        %v7820 = vadd.f32 %v7749, %v7782
        %v7821 = vadd.f32 %v7750, %v7782
        %v7822 = vadd.f32 %v7751, %v7782
        %v7823 = vadd.f32 %v7752, %v7782
        %v7824 = vadd.f32 %v7753, %v7782
        %v7825 = vadd.f32 %v7754, %v7782
        %v7826 = vadd.f32 %v7755, %v7782
        %v7827 = vadd.f32 %v7756, %v7782
        %v7828 = vadd.f32 %v7757, %v7782
        %v7829 = vadd.f32 %v7758, %v7782
        %v7830 = vadd.f32 %v7759, %v7782
        %v7831 = vadd.f32 %v7760, %v7782
        %v7832 = vadd.f32 %v7761, %v7782
        %v7833 = vadd.f32 %v7762, %v7782
        %v7834 = vadd.f32 %v7763, %v7782
        %v7835 = vadd.f32 %v7764, %v7782
        %v7836 = vadd.f32 %v7765, %v7782
        %v7837 = vadd.f32 %v7766, %v7782
        %v7838 = vadd.f32 %v7767, %v7782
        %v7839 = vadd.f32 %v7768, %v7782
        %v7840 = vadd.f32 %v7769, %v7782
        %v7841 = vadd.f32 %v7770, %v7782
        %v7842 = vadd.f32 %v7771, %v7782
        %v7843 = vadd.f32 %v7772, %v7782
        %v7844 = vadd.f32 %v7773, %v7782
        %v7845 = vadd.f32 %v7774, %v7782
        %v7846 = vadd.f32 %v7775, %v7782
        %v7847 = vadd.f32 %v7776, %v7782
        %v7848 = vld [vmem:[%s226] sm:$0xff]
        %v7849 = vld [vmem:[%s226 + $0x8] sm:$0xff]
        %v7850 = vld [vmem:[%s226 + $0x10] sm:$0xff]
        %v7851 = vld [vmem:[%s226 + $0x18] sm:$0xff]
        %v7852 = vld [vmem:[%s226 + $0x20] sm:$0xff]
        %v7853 = vld [vmem:[%s226 + $0x28] sm:$0xff]
        %v7854 = vld [vmem:[%s226 + $0x30] sm:$0xff]
        %v7855 = vld [vmem:[%s226 + $0x38] sm:$0xff]
        %v7856 = vld [vmem:[%s226 + $0x40] sm:$0xff]
        %v7857 = vld [vmem:[%s226 + $0x48] sm:$0xff]
        %v7858 = vld [vmem:[%s226 + $0x50] sm:$0xff]
        %v7859 = vld [vmem:[%s226 + $0x58] sm:$0xff]
        %v7860 = vld [vmem:[%s226 + $0x60] sm:$0xff]
        %v7861 = vld [vmem:[%s226 + $0x68] sm:$0xff]
        %v7862 = vld [vmem:[%s226 + $0x70] sm:$0xff]
        %v7863 = vld [vmem:[%s226 + $0x78] sm:$0xff]
        %v7864 = vld [vmem:[%s226 + $0x80] sm:$0xff]
        %v7865 = vld [vmem:[%s226 + $0x88] sm:$0xff]
        %v7866 = vld [vmem:[%s226 + $0x90] sm:$0xff]
        %v7867 = vld [vmem:[%s226 + $0x98] sm:$0xff]
        %v7868 = vld [vmem:[%s226 + $0xa0] sm:$0xff]
        %v7869 = vld [vmem:[%s226 + $0xa8] sm:$0xff]
        %v7870 = vld [vmem:[%s226 + $0xb0] sm:$0xff]
        %v7871 = vld [vmem:[%s226 + $0xb8] sm:$0xff]
        %v7872 = vld [vmem:[%s226 + $0xc0] sm:$0xff]
        %v7873 = vld [vmem:[%s226 + $0xc8] sm:$0xff]
        %v7874 = vld [vmem:[%s226 + $0xd0] sm:$0xff]
        %v7875 = vld [vmem:[%s226 + $0xd8] sm:$0xff]
        %v7876 = vld [vmem:[%s226 + $0xe0] sm:$0xff]
        %v7877 = vld [vmem:[%s226 + $0xe8] sm:$0xff]
        %v7878 = vld [vmem:[%s226 + $0xf0] sm:$0xff]
        %v7879 = vld [vmem:[%s226 + $0xf8] sm:$0xff]
        %v7880 = vld [vmem:[%s226 + $0x100] sm:$0xff]
        %v7881 = vld [vmem:[%s226 + $0x108] sm:$0xff]
        %v7882 = vld [vmem:[%s226 + $0x110] sm:$0xff]
        %v7883 = vld [vmem:[%s226 + $0x118] sm:$0xff]
        %v7884 = vld [vmem:[%s226 + $0x120] sm:$0xff]
        %v7885 = vld [vmem:[%s226 + $0x128] sm:$0xff]
        %v7886 = vld [vmem:[%s226 + $0x130] sm:$0xff]
        %v7887 = vld [vmem:[%s226 + $0x138] sm:$0xff]
        %v7888 = vld [vmem:[%s226 + $0x140] sm:$0xff]
        %v7889 = vld [vmem:[%s226 + $0x148] sm:$0xff]
        %v7890 = vld [vmem:[%s226 + $0x150] sm:$0xff]
        %v7891 = vld [vmem:[%s226 + $0x158] sm:$0xff]
        %v7892 = vld [vmem:[%s226 + $0x160] sm:$0xff]
        %v7893 = vld [vmem:[%s226 + $0x168] sm:$0xff]
        %v7894 = vld [vmem:[%s226 + $0x170] sm:$0xff]
        %v7895 = vld [vmem:[%s226 + $0x178] sm:$0xff]
        %v7896 = vld [vmem:[%s226 + $0x180] sm:$0xff]
        %v7897 = vld [vmem:[%s226 + $0x188] sm:$0xff]
        %v7898 = vld [vmem:[%s226 + $0x190] sm:$0xff]
        %v7899 = vld [vmem:[%s226 + $0x198] sm:$0xff]
        %v7900 = vld [vmem:[%s226 + $0x1a0] sm:$0xff]
        %v7901 = vld [vmem:[%s226 + $0x1a8] sm:$0xff]
        %v7902 = vld [vmem:[%s226 + $0x1b0] sm:$0xff]
        %v7903 = vld [vmem:[%s226 + $0x1b8] sm:$0xff]
        %v7904 = vld [vmem:[%s226 + $0x1c0] sm:$0xff]
        %v7905 = vld [vmem:[%s226 + $0x1c8] sm:$0xff]
        %v7906 = vld [vmem:[%s226 + $0x1d0] sm:$0xff]
        %v7907 = vld [vmem:[%s226 + $0x1d8] sm:$0xff]
        %v7908 = vld [vmem:[%s226 + $0x1e0] sm:$0xff]
        %v7909 = vld [vmem:[%s226 + $0x1e8] sm:$0xff]
        %v7910 = vld [vmem:[%s226 + $0x1f0] sm:$0xff]
        %v7911 = vld [vmem:[%s226 + $0x1f8] sm:$0xff]
        %v7912 = vadd.f32 %v7784, %v7848
        %v7913 = vadd.f32 %v7785, %v7849
        %v7914 = vadd.f32 %v7786, %v7850
        %v7915 = vadd.f32 %v7787, %v7851
        %v7916 = vadd.f32 %v7788, %v7852
        %v7917 = vadd.f32 %v7789, %v7853
        %v7918 = vadd.f32 %v7790, %v7854
        %v7919 = vadd.f32 %v7791, %v7855
        %v7920 = vadd.f32 %v7792, %v7856
        %v7921 = vadd.f32 %v7793, %v7857
        %v7922 = vadd.f32 %v7794, %v7858
        %v7923 = vadd.f32 %v7795, %v7859
        %v7924 = vadd.f32 %v7796, %v7860
        %v7925 = vadd.f32 %v7797, %v7861
        %v7926 = vadd.f32 %v7798, %v7862
        %v7927 = vadd.f32 %v7799, %v7863
        %v7928 = vadd.f32 %v7800, %v7864
        %v7929 = vadd.f32 %v7801, %v7865
        %v7930 = vadd.f32 %v7802, %v7866
        %v7931 = vadd.f32 %v7803, %v7867
        %v7932 = vadd.f32 %v7804, %v7868
        %v7933 = vadd.f32 %v7805, %v7869
        %v7934 = vadd.f32 %v7806, %v7870
        %v7935 = vadd.f32 %v7807, %v7871
        %v7936 = vadd.f32 %v7808, %v7872
        %v7937 = vadd.f32 %v7809, %v7873
        %v7938 = vadd.f32 %v7810, %v7874
        %v7939 = vadd.f32 %v7811, %v7875
        %v7940 = vadd.f32 %v7812, %v7876
        %v7941 = vadd.f32 %v7813, %v7877
        %v7942 = vadd.f32 %v7814, %v7878
        %v7943 = vadd.f32 %v7815, %v7879
        %v7944 = vadd.f32 %v7816, %v7880
        %v7945 = vadd.f32 %v7817, %v7881
        %v7946 = vadd.f32 %v7818, %v7882
        %v7947 = vadd.f32 %v7819, %v7883
        %v7948 = vadd.f32 %v7820, %v7884
        %v7949 = vadd.f32 %v7821, %v7885
        %v7950 = vadd.f32 %v7822, %v7886
        %v7951 = vadd.f32 %v7823, %v7887
        %v7952 = vadd.f32 %v7824, %v7888
        %v7953 = vadd.f32 %v7825, %v7889
        %v7954 = vadd.f32 %v7826, %v7890
        %v7955 = vadd.f32 %v7827, %v7891
        %v7956 = vadd.f32 %v7828, %v7892
        %v7957 = vadd.f32 %v7829, %v7893
        %v7958 = vadd.f32 %v7830, %v7894
        %v7959 = vadd.f32 %v7831, %v7895
        %v7960 = vadd.f32 %v7832, %v7896
        %v7961 = vadd.f32 %v7833, %v7897
        %v7962 = vadd.f32 %v7834, %v7898
        %v7963 = vadd.f32 %v7835, %v7899
        %v7964 = vadd.f32 %v7836, %v7900
        %v7965 = vadd.f32 %v7837, %v7901
        %v7966 = vadd.f32 %v7838, %v7902
        %v7967 = vadd.f32 %v7839, %v7903
        %v7968 = vadd.f32 %v7840, %v7904
        %v7969 = vadd.f32 %v7841, %v7905
        %v7970 = vadd.f32 %v7842, %v7906
        %v7971 = vadd.f32 %v7843, %v7907
        %v7972 = vadd.f32 %v7844, %v7908
        %v7973 = vadd.f32 %v7845, %v7909
        %v7974 = vadd.f32 %v7846, %v7910
        %v7975 = vadd.f32 %v7847, %v7911
        %7976 = vst [vmem:[%s220] sm:$0xff] %v7912
        %7977 = vst [vmem:[%s220 + $0x8] sm:$0xff] %v7913
        %7978 = vst [vmem:[%s220 + $0x10] sm:$0xff] %v7914
        %7979 = vst [vmem:[%s220 + $0x18] sm:$0xff] %v7915
        %7980 = vst [vmem:[%s220 + $0x20] sm:$0xff] %v7916
        %7981 = vst [vmem:[%s220 + $0x28] sm:$0xff] %v7917
        %7982 = vst [vmem:[%s220 + $0x30] sm:$0xff] %v7918
        %7983 = vst [vmem:[%s220 + $0x38] sm:$0xff] %v7919
        %7984 = vst [vmem:[%s220 + $0x40] sm:$0xff] %v7920
        %7985 = vst [vmem:[%s220 + $0x48] sm:$0xff] %v7921
        %7986 = vst [vmem:[%s220 + $0x50] sm:$0xff] %v7922
        %7987 = vst [vmem:[%s220 + $0x58] sm:$0xff] %v7923
        %7988 = vst [vmem:[%s220 + $0x60] sm:$0xff] %v7924
        %7989 = vst [vmem:[%s220 + $0x68] sm:$0xff] %v7925
        %7990 = vst [vmem:[%s220 + $0x70] sm:$0xff] %v7926
        %7991 = vst [vmem:[%s220 + $0x78] sm:$0xff] %v7927
        %7992 = vst [vmem:[%s220 + $0x80] sm:$0xff] %v7928
        %7993 = vst [vmem:[%s220 + $0x88] sm:$0xff] %v7929
        %7994 = vst [vmem:[%s220 + $0x90] sm:$0xff] %v7930
        %7995 = vst [vmem:[%s220 + $0x98] sm:$0xff] %v7931
        %7996 = vst [vmem:[%s220 + $0xa0] sm:$0xff] %v7932
        %7997 = vst [vmem:[%s220 + $0xa8] sm:$0xff] %v7933
        %7998 = vst [vmem:[%s220 + $0xb0] sm:$0xff] %v7934
        %7999 = vst [vmem:[%s220 + $0xb8] sm:$0xff] %v7935
        %8000 = vst [vmem:[%s220 + $0xc0] sm:$0xff] %v7936
        %8001 = vst [vmem:[%s220 + $0xc8] sm:$0xff] %v7937
        %8002 = vst [vmem:[%s220 + $0xd0] sm:$0xff] %v7938
        %8003 = vst [vmem:[%s220 + $0xd8] sm:$0xff] %v7939
        %8004 = vst [vmem:[%s220 + $0xe0] sm:$0xff] %v7940
        %8005 = vst [vmem:[%s220 + $0xe8] sm:$0xff] %v7941
        %8006 = vst [vmem:[%s220 + $0xf0] sm:$0xff] %v7942
        %8007 = vst [vmem:[%s220 + $0xf8] sm:$0xff] %v7943
        %8008 = vst [vmem:[%s220 + $0x100] sm:$0xff] %v7944
        %8009 = vst [vmem:[%s220 + $0x108] sm:$0xff] %v7945
        %8010 = vst [vmem:[%s220 + $0x110] sm:$0xff] %v7946
        %8011 = vst [vmem:[%s220 + $0x118] sm:$0xff] %v7947
        %8012 = vst [vmem:[%s220 + $0x120] sm:$0xff] %v7948
        %8013 = vst [vmem:[%s220 + $0x128] sm:$0xff] %v7949
        %8014 = vst [vmem:[%s220 + $0x130] sm:$0xff] %v7950
        %8015 = vst [vmem:[%s220 + $0x138] sm:$0xff] %v7951
        %8016 = vst [vmem:[%s220 + $0x140] sm:$0xff] %v7952
        %8017 = vst [vmem:[%s220 + $0x148] sm:$0xff] %v7953
        %8018 = vst [vmem:[%s220 + $0x150] sm:$0xff] %v7954
        %8019 = vst [vmem:[%s220 + $0x158] sm:$0xff] %v7955
        %8020 = vst [vmem:[%s220 + $0x160] sm:$0xff] %v7956
        %8021 = vst [vmem:[%s220 + $0x168] sm:$0xff] %v7957
        %8022 = vst [vmem:[%s220 + $0x170] sm:$0xff] %v7958
        %8023 = vst [vmem:[%s220 + $0x178] sm:$0xff] %v7959
        %8024 = vst [vmem:[%s220 + $0x180] sm:$0xff] %v7960
        %8025 = vst [vmem:[%s220 + $0x188] sm:$0xff] %v7961
        %8026 = vst [vmem:[%s220 + $0x190] sm:$0xff] %v7962
        %8027 = vst [vmem:[%s220 + $0x198] sm:$0xff] %v7963
        %8028 = vst [vmem:[%s220 + $0x1a0] sm:$0xff] %v7964
        %8029 = vst [vmem:[%s220 + $0x1a8] sm:$0xff] %v7965
        %8030 = vst [vmem:[%s220 + $0x1b0] sm:$0xff] %v7966
        %8031 = vst [vmem:[%s220 + $0x1b8] sm:$0xff] %v7967
        %8032 = vst [vmem:[%s220 + $0x1c0] sm:$0xff] %v7968
        %8033 = vst [vmem:[%s220 + $0x1c8] sm:$0xff] %v7969
        %8034 = vst [vmem:[%s220 + $0x1d0] sm:$0xff] %v7970
        %8035 = vst [vmem:[%s220 + $0x1d8] sm:$0xff] %v7971
        %8036 = vst [vmem:[%s220 + $0x1e0] sm:$0xff] %v7972
        %8037 = vst [vmem:[%s220 + $0x1e8] sm:$0xff] %v7973
        %8038 = vst [vmem:[%s220 + $0x1f0] sm:$0xff] %v7974
        %8039 = vst [vmem:[%s220 + $0x1f8] sm:$0xff] %v7975
        %s8040 = sand.u32 %s137, 1
        %s8041 = scalar_lea.sflag [#allocation6], %s8040
        %s8042 = sand.u32 %s137, 1
        %s8043 = smul.addr %s8042, 512
        %s8044 = scalar_lea.vmem [#allocation5], %s8043
        // Predicated region
        $region41: #{resnet_block_forward.1} parent=39 // pred_check
          %p8045 = pneg %p147
        $region42: #{resnet_block_forward.1} parent=39 // pred_check_branch
          %8047 = sbr.rel (%p8045) target = $region44
        $region43: #{resnet_block_forward.1} parent=39 // pred_region
          %s8048 = smul.u32 2, %s19
          %s8050 = ssub.s32 8192, 8192
          %8051 = vsyncadd %s8041, %s8050
          %s8052 = smul.addr %s8048, 32
          %s8053 = smul.addr %s8052, 128
          %s8054 = scalar_lea.hbm %s5, %s8053
          %s8055 = sshll.u32 %s8044, 4
          %s8056 = int_to_ptr.vmem [resolvable:$true] %s8055
          %8061 = dma.vmem_to_hbm [thread:$0]  %s8056, 8192, %s8054, %s8041, 128, 128, 8
        $region44: #{resnet_block_forward.1} parent=39 // pred_fallthru
          _
      $region40: #{resnet_block_forward.1} parent=5 // pred_fallthru
        _
      %p8062 = scmp.le.s32.totalorder 2, %s14
      // Predicated region
      $region45: #{resnet_block_forward.1} parent=5 // pred_check
        %p8063 = pneg %p8062
      $region46: #{resnet_block_forward.1} parent=5 // pred_check_branch
        %8065 = sbr.rel (%p8063) target = $region48
      $region47: #{resnet_block_forward.1} parent=5 // pred_region
        %s8066 = ssub.s32 %s14, 2
        // Predicated region
        $region49: #{resnet_block_forward.1} parent=47 // pred_check
          %p8067 = pneg %p153
        $region50: #{resnet_block_forward.1} parent=47 // pred_check_branch
          %8069 = sbr.rel (%p8067) target = $region52
        $region51: #{resnet_block_forward.1} parent=47 // pred_region
          %s8070 = sand.u32 %s138, 1
          %s8071 = scalar_lea.sflag [#allocation6], %s8070
          %s8072 = sand.u32 %s138, 1
          %s8073 = smul.addr %s8072, 512
          %s8074 = scalar_lea.vmem [#allocation5], %s8073
          %8075 = dma.done %s8071, 8192
        $region52: #{resnet_block_forward.1} parent=47 // pred_fallthru
          _
      $region48: #{resnet_block_forward.1} parent=5 // pred_fallthru
        _
    $region6: #{resnet_block_forward.1} parent=1 // loop_footer
      %s18 = sadd.s32 1, %s14
    $region7: #{resnet_block_forward.1} parent=1 // loop_footer_branch
      %13 = sbr.rel target = $region3
    $region8: #{resnet_block_forward.1} parent=1 // loop_exit
      _
    %8076 = vsyncpa [#allocation6], 1
    %s8077 = scalar_lea.sflag [#allocation6], 1
    %8078 = vsyncpa %s8077, 1

</llo_original>
